<compile_context>
chip_gen: v5e
topology: v5e:2x2
jax: 0.10.0
libtpu: 0.0.40
codegen_flags: <defaults>
</compile_context>

<pallas_src>
import jax
import jax.numpy as jnp
from jax import lax
from jax.experimental import pallas as pl
from jax.experimental.pallas import tpu as pltpu


# ----------------------------- config ---------------------------------------
class Config:
    all_cat_columns = ["item_id", "price_rank", "city", "impression_index",
                       "action", "city_platform"]
    categorical_emb_dim = 32          # D
    hidden_dims = (64, 32)            # (h1, h2)
    num_embeddings = {"item_id": 128, "price_rank": 32, "city": 64,
                      "impression_index": 32, "action": 8, "city_platform": 16}
    transformed_dummy_item = 0
    continuous_size = 8               # C
    neighbor_size = 5                 # N
    sequence_length = 8               # L
    sess_length = 6                   # S


CFG = Config()
BATCH = 4
BATCH_TILE = 8                        # sublane-aligned batch tile
BN_EPS = 1e-5


# ----------------------------- the Pallas kernel -----------------------------
def net_kernel(
    # batch-tiled inputs
    emb_item_ref, emb_past_ref, emb_price_ref, emb_city_ref, emb_last_item_ref,
    emb_imp_ref, sess_item_ref, sess_act_ref, emb_lci_ref, emb_lcimp_ref,
    emb_lidx_ref, emb_cplat_ref, cont_ref, neigh_ref,
    # GRU weights: stacked per (direction, gate) on the leading axis (idx = dir*3+gate),
    # pre-transposed to (in, out), gate order (r, z, n)
    w0i_ref, w0a_ref, u0_ref, bi0_ref, bh0_ref,
    w1f_ref, w1r_ref, u1_ref, bi1_ref, bh1_ref,
    # dense weights: BatchNorm folded in, pre-transposed, pre-split per concat piece
    w1s_ref, w1sf_ref, w1sr_ref, b1_ref,
    w2c_ref, w2h_ref, w2ss_ref, w2sq_ref, w2so_ref, w2qc_ref, w2nb_ref, b2_ref,
    wo_ref, bo_ref,
    # output
    out_ref,
):
    f32 = jnp.float32
    S, BT, D = sess_item_ref.shape
    H = u0_ref.shape[-1]

    emb_item = emb_item_ref[...]                                  # (BT, D)
    pooled_inter = jnp.max(emb_past_ref[...], axis=1)             # (BT, D)
    emb_price = emb_price_ref[...]
    emb_city = emb_city_ref[...]
    emb_last_item = emb_last_item_ref[...]
    emb_imp = emb_imp_ref[...]
    emb_lci = emb_lci_ref[...]
    emb_lcimp = emb_lcimp_ref[...]
    emb_lidx = emb_lidx_ref[...]
    emb_cplat = emb_cplat_ref[...]
    cont = cont_ref[...]                                          # (BT, C)
    neigh = neigh_ref[...]                                        # (BT, N)

    # ---------------- 2-layer bidirectional GRU ----------------
    sess_item = sess_item_ref[...]                                # (S, BT, D)
    sess_act = sess_act_ref[...]

    def flatten_time(x3):
        # (S, BT, F) -> (S*BT, F), row order (t, b); 8-aligned sublane concat
        return jnp.concatenate([x3[t] for t in range(S)], axis=0)

    item_flat = flatten_time(sess_item)
    act_flat = flatten_time(sess_act)

    w0i = w0i_ref[...]; w0a = w0a_ref[...]; u0 = u0_ref[...]
    bi0 = bi0_ref[...]; bh0 = bh0_ref[...]
    w1f = w1f_ref[...]; w1r = w1r_ref[...]; u1 = u1_ref[...]
    bi1 = bi1_ref[...]; bh1 = bh1_ref[...]

    def hoist_gi(xa, xb, wa, wb, bi, d):
        # Input-to-hidden projections for all timesteps of one direction, hoisted
        # out of the recurrence: 2 matmuls per gate on (S*BT, In) inputs.
        # Returns [gate][t] -> (BT, H) via static, 8-aligned row slices.
        per_gate = []
        for g in range(3):
            gi = (jnp.dot(xa, wa[3 * d + g], preferred_element_type=f32)
                  + jnp.dot(xb, wb[3 * d + g], preferred_element_type=f32)
                  + bi[3 * d + g])                                # (S*BT, H)
            per_gate.append([gi[t * BT:(t + 1) * BT] for t in range(S)])
        return per_gate

    def gru_dir(gi, u, bh, d, reverse):
        # Only the truly sequential recurrence remains inside the loop.
        ur, uz, un = u[3 * d + 0], u[3 * d + 1], u[3 * d + 2]
        br, bz, bn = bh[3 * d + 0], bh[3 * d + 1], bh[3 * d + 2]
        h = jnp.zeros((BT, H), f32)
        outs = [None] * S
        order = range(S - 1, -1, -1) if reverse else range(S)
        for t in order:
            hr = jnp.dot(h, ur, preferred_element_type=f32) + br
            hz = jnp.dot(h, uz, preferred_element_type=f32) + bz
            hn = jnp.dot(h, un, preferred_element_type=f32) + bn
            r = jax.nn.sigmoid(gi[0][t] + hr)
            z = jax.nn.sigmoid(gi[1][t] + hz)
            n = jnp.tanh(gi[2][t] + r * hn)
            h = (1.0 - z) * n + z * h
            outs[t] = h
        return outs

    f0 = gru_dir(hoist_gi(item_flat, act_flat, w0i, w0a, bi0, 0), u0, bh0, 0, False)
    r0 = gru_dir(hoist_gi(item_flat, act_flat, w0i, w0a, bi0, 1), u0, bh0, 1, True)

    f0_flat = jnp.concatenate(f0, axis=0)                         # (S*BT, H), (t,b) order
    r0_flat = jnp.concatenate(r0, axis=0)

    f1 = gru_dir(hoist_gi(f0_flat, r0_flat, w1f, w1r, bi1, 0), u1, bh1, 0, False)
    r1 = gru_dir(hoist_gi(f0_flat, r0_flat, w1f, w1r, bi1, 1), u1, bh1, 1, True)

    # max-pool forward / reverse streams separately (no per-step concat)
    pooled_f = f1[0]
    pooled_r = r1[0]
    for t in range(1, S):
        pooled_f = jnp.maximum(pooled_f, f1[t])
        pooled_r = jnp.maximum(pooled_r, r1[t])

    # ---------------- pairwise interaction features ----------------
    item_inter = emb_item * pooled_inter
    item_last = emb_item * emb_last_item
    item_lci = emb_item * emb_lci
    imp_lidx = emb_imp * emb_lidx

    # ---------------- FM second-order terms (per-piece reductions, no concat) ----
    fm_pieces = (emb_item, pooled_inter, emb_price, emb_city, emb_last_item, emb_imp)
    tot = fm_pieces[0].sum(axis=1, keepdims=True)
    tot_sq = (fm_pieces[0] * fm_pieces[0]).sum(axis=1, keepdims=True)
    for p in fm_pieces[1:]:
        tot = tot + p.sum(axis=1, keepdims=True)
        tot_sq = tot_sq + (p * p).sum(axis=1, keepdims=True)
    sum_squared = tot * tot                                       # (BT, 1)
    squared_sum = tot_sq                                          # (BT, 1)
    second_order = 0.5 * (sum_squared - squared_sum)              # (BT, 1)
    squared_cont = cont * cont                                    # (BT, C)

    # ---------------- hidden1: BN folded in, per-piece MXU accumulation ----------
    pieces = (emb_item, pooled_inter, emb_price, emb_city, emb_last_item, emb_imp,
              item_inter, item_last, emb_lci, emb_lcimp, emb_lidx, item_lci,
              imp_lidx, emb_cplat)                                # 14 x (BT, D)
    w1s = w1s_ref[...]                                            # (14, D, h1)
    acc = jnp.dot(pieces[0], w1s[0], preferred_element_type=f32)
    for k in range(1, len(pieces)):
        acc = acc + jnp.dot(pieces[k], w1s[k], preferred_element_type=f32)
    acc = acc + jnp.dot(pooled_f, w1sf_ref[...], preferred_element_type=f32)
    acc = acc + jnp.dot(pooled_r, w1sr_ref[...], preferred_element_type=f32)
    hidden1 = jnp.maximum(acc + b1_ref[...], 0.0)                 # (BT, h1)

    # ---------------- hidden2: BN folded in, per-piece accumulation --------------
    acc2 = jnp.dot(cont, w2c_ref[...], preferred_element_type=f32)
    acc2 = acc2 + jnp.dot(hidden1, w2h_ref[...], preferred_element_type=f32)
    acc2 = acc2 + sum_squared * w2ss_ref[...]                     # (BT,1)*(1,h2)
    acc2 = acc2 + squared_sum * w2sq_ref[...]
    acc2 = acc2 + second_order * w2so_ref[...]
    acc2 = acc2 + jnp.dot(squared_cont, w2qc_ref[...], preferred_element_type=f32)
    acc2 = acc2 + jnp.dot(neigh, w2nb_ref[...], preferred_element_type=f32)
    hidden2 = jnp.maximum(acc2 + b2_ref[...], 0.0)                # (BT, h2)

    # ---------------- output head ----------------
    logits = jnp.dot(hidden2, wo_ref[...], preferred_element_type=f32) + bo_ref[...]
    out_ref[...] = jax.nn.sigmoid(logits)                         # (BT, 1)


# ----------------------------- parameters ------------------------------------
def init_params(key, cfg):
    D = cfg.categorical_emb_dim
    H = D // 2
    h1, h2 = cfg.hidden_dims
    C = cfg.continuous_size
    N = cfg.neighbor_size
    keys = iter(jax.random.split(key, 64))

    def rand(shape, scale=0.1):
        return scale * jax.random.normal(next(keys), shape, jnp.float32)

    p = {}
    emb = {}
    for col in cfg.all_cat_columns:
        tbl = rand((cfg.num_embeddings[col], D))
        if col == "item_id":
            tbl = tbl.at[cfg.transformed_dummy_item].set(0.0)     # padding_idx
        emb[col] = tbl
    p["emb"] = emb

    # GRU: 2 layers x 2 directions, torch layout (3H, In)/(3H, H), gate order (r,z,n)
    p["w_ih_l0"] = rand((2, 3 * H, 2 * D))
    p["w_hh_l0"] = rand((2, 3 * H, H))
    p["b_ih_l0"] = rand((2, 3 * H))
    p["b_hh_l0"] = rand((2, 3 * H))
    p["w_ih_l1"] = rand((2, 3 * H, 2 * H))
    p["w_hh_l1"] = rand((2, 3 * H, H))
    p["b_ih_l1"] = rand((2, 3 * H))
    p["b_hh_l1"] = rand((2, 3 * H))

    # dense layers (PyTorch convention: weight is (out, in))
    f2 = h1 + 2 * C + 3 + N
    p["w1"] = rand((h1, 15 * D)); p["b1"] = rand((1, h1))
    p["w2"] = rand((h2, f2));     p["b2"] = rand((1, h2))
    p["wo"] = rand((1, h2));      p["bo"] = rand((1, 1))

    # BatchNorm (eval mode; running stats)
    p["bn_g"] = 1.0 + rand((1, 15 * D));  p["bn_b"] = rand((1, 15 * D))
    p["bn_m"] = rand((1, 15 * D));        p["bn_v"] = 0.5 + jnp.abs(rand((1, 15 * D)))
    p["bnh_g"] = 1.0 + rand((1, f2));     p["bnh_b"] = rand((1, f2))
    p["bnh_m"] = rand((1, f2));           p["bnh_v"] = 0.5 + jnp.abs(rand((1, f2)))
    return p


# ----------------------------- weight preparation (outside the kernel) -------
def _fold_bn_into_linear(w, b, gamma, beta, mean, var):
    # Eval-mode BN followed by Linear: y = (x*s + t) @ W.T + b
    #   -> y = x @ (s[:,None]*W.T) + (b + t @ W.T)
    s = gamma * lax.rsqrt(var + BN_EPS)                   # (in,)
    t = beta - mean * s                                   # (in,)
    w_t = w.T * s[:, None]                                # (in, out)
    b_f = b + t[None, :] @ w.T                            # (1, out)
    return w_t, b_f


def prepare_kernel_weights(params, cfg):
    D = cfg.categorical_emb_dim
    H = D // 2
    h1, h2 = cfg.hidden_dims
    C = cfg.continuous_size
    N = cfg.neighbor_size

    def split_gru(w_ih, w_hh, b_ih, b_hh, in_a):
        # -> per-(dir,gate) stacks with leading dim 6 (idx = dir*3 + gate),
        #    weights pre-transposed to (in, H), gate order (r, z, n).
        wa, wb, u, bi, bh = [], [], [], [], []
        for d in range(2):
            for g in range(3):
                rows = slice(g * H, (g + 1) * H)
                wa.append(w_ih[d, rows, :in_a].T)
                wb.append(w_ih[d, rows, in_a:].T)
                u.append(w_hh[d, rows, :].T)
                bi.append(b_ih[d, rows].reshape(1, H))
                bh.append(b_hh[d, rows].reshape(1, H))
        stk = lambda xs: jnp.stack(xs, axis=0)
        return stk(wa), stk(wb), stk(u), stk(bi), stk(bh)

    w0i, w0a, u0, bi0, bh0 = split_gru(params["w_ih_l0"], params["w_hh_l0"],
                                       params["b_ih_l0"], params["b_hh_l0"], D)
    w1f, w1r, u1, bi1, bh1 = split_gru(params["w_ih_l1"], params["w_hh_l1"],
                                       params["b_ih_l1"], params["b_hh_l1"], H)

    # hidden1: fold bn, transpose, split into per-concat-piece blocks
    w1_t, b1_f = _fold_bn_into_linear(params["w1"], params["b1"],
                                      params["bn_g"][0], params["bn_b"][0],
                                      params["bn_m"][0], params["bn_v"][0])
    w1_blocks = w1_t.reshape(15, D, h1)
    keep = (0, 1, 2, 3, 4, 5, 6, 7, 9, 10, 11, 12, 13, 14)       # skip pooled_sess (8)
    w1s = jnp.stack([w1_blocks[k] for k in keep], axis=0)        # (14, D, h1)
    w1sf = w1_blocks[8, :H, :]                                   # pooled-sess fwd half
    w1sr = w1_blocks[8, H:, :]                                   # pooled-sess rev half

    # hidden2: fold bn_hidden, transpose, split per piece
    w2_t, b2_f = _fold_bn_into_linear(params["w2"], params["b2"],
                                      params["bnh_g"][0], params["bnh_b"][0],
                                      params["bnh_m"][0], params["bnh_v"][0])
    o = 0
    w2c = w2_t[o:o + C]; o += C
    w2h = w2_t[o:o + h1]; o += h1
    w2ss = w2_t[o:o + 1]; o += 1
    w2sq = w2_t[o:o + 1]; o += 1
    w2so = w2_t[o:o + 1]; o += 1
    w2qc = w2_t[o:o + C]; o += C
    w2nb = w2_t[o:o + N]; o += N

    return [w0i, w0a, u0, bi0, bh0, w1f, w1r, u1, bi1, bh1,
            w1s, w1sf, w1sr, b1_f,
            w2c, w2h, w2ss, w2sq, w2so, w2qc, w2nb, b2_f,
            params["wo"].T, params["bo"]]


# ----------------------------- wrapper ---------------------------------------
def net_forward(params, item_id, past_interactions, mask, price_rank, city,
                last_item, impression_index, cont_features,
                past_interactions_sess, past_actions_sess, last_click_item,
                last_click_impression, last_interact_index, neighbor_prices,
                city_platform):
    del mask  # unused by the reference forward as well
    cfg = CFG
    S = cfg.sess_length
    BT = BATCH_TILE
    B = item_id.shape[0]
    B_pad = ((B + BT - 1) // BT) * BT

    emb = params["emb"]
    take = lambda col, idx: jnp.take(emb[col], idx, axis=0)

    def pad_b(x):
        if B_pad == B:
            return x
        return jnp.pad(x, [(0, B_pad - B)] + [(0, 0)] * (x.ndim - 1))

    # Embedding gathers stay in XLA (data-dependent); sess sequences are passed
    # time-major (S, B, D) so the kernel's hoisted GRU matmuls need no relayout.
    emb_item = pad_b(take("item_id", item_id))
    emb_past = pad_b(take("item_id", past_interactions))                  # (Bp, L, D)
    emb_price = pad_b(take("price_rank", price_rank))
    emb_city = pad_b(take("city", city))
    emb_last_item = pad_b(take("item_id", last_item))
    emb_imp = pad_b(take("impression_index", impression_index))
    sess_item = jnp.transpose(pad_b(take("item_id", past_interactions_sess)), (1, 0, 2))
    sess_act = jnp.transpose(pad_b(take("action", past_actions_sess)), (1, 0, 2))
    emb_lci = pad_b(take("item_id", last_click_item))
    emb_lcimp = pad_b(take("impression_index", last_click_impression))
    emb_lidx = pad_b(take("impression_index", last_interact_index))
    emb_cplat = pad_b(take("city_platform", city_platform))
    cont = pad_b(cont_features.astype(jnp.float32))
    neigh = pad_b(neighbor_prices.astype(jnp.float32))

    weights = prepare_kernel_weights(params, cfg)

    batch_inputs = [emb_item, emb_past, emb_price, emb_city, emb_last_item, emb_imp,
                    sess_item, sess_act, emb_lci, emb_lcimp, emb_lidx, emb_cplat,
                    cont, neigh]

    def tile_b0(x):                     # batch on axis 0
        trailing = x.ndim - 1
        return pl.BlockSpec((BT,) + x.shape[1:],
                            lambda i, _t=trailing: (i,) + (0,) * _t)

    def tile_b1(x):                     # batch on axis 1 (time-major sess layout)
        trailing = x.ndim - 2
        return pl.BlockSpec((x.shape[0], BT) + x.shape[2:],
                            lambda i, _t=trailing: (0, i) + (0,) * _t)

    def rep_spec(x):                    # replicated weight: full block every tile
        nd = x.ndim
        return pl.BlockSpec(x.shape, lambda i, _nd=nd: (0,) * _nd)

    in_specs = ([tile_b0(emb_item), tile_b0(emb_past), tile_b0(emb_price),
                 tile_b0(emb_city), tile_b0(emb_last_item), tile_b0(emb_imp),
                 tile_b1(sess_item), tile_b1(sess_act),
                 tile_b0(emb_lci), tile_b0(emb_lcimp), tile_b0(emb_lidx),
                 tile_b0(emb_cplat), tile_b0(cont), tile_b0(neigh)]
                + [rep_spec(w) for w in weights])

    out = pl.pallas_call(
        net_kernel,
        out_shape=jax.ShapeDtypeStruct((B_pad, 1), jnp.float32),
        grid=(B_pad // BT,),
        in_specs=in_specs,
        out_specs=pl.BlockSpec((BT, 1), lambda i: (i, 0)),
        compiler_params=pltpu.CompilerParams(dimension_semantics=("parallel",)),
    )(*batch_inputs, *weights)
    return out[:B, 0]                   # matches torch .squeeze() -> (B,)


# ----------------------------- main ------------------------------------------
if __name__ == "__main__":
    cfg = CFG
    B, L, S = BATCH, cfg.sequence_length, cfg.sess_length
    C, N = cfg.continuous_size, cfg.neighbor_size

    params = init_params(jax.random.PRNGKey(0), cfg)

    ik = iter(jax.random.split(jax.random.PRNGKey(1), 32))
    ri = lambda shape, hi: jax.random.randint(next(ik), shape, 0, hi, jnp.int32)
    rf = lambda shape: jax.random.normal(next(ik), shape, jnp.float32)

    item_id = ri((B,), cfg.num_embeddings["item_id"])
    past_interactions = ri((B, L), cfg.num_embeddings["item_id"])
    mask = jnp.ones((B, L), jnp.float32)                       # unused by forward
    price_rank = ri((B,), cfg.num_embeddings["price_rank"])
    city = ri((B,), cfg.num_embeddings["city"])
    last_item = ri((B,), cfg.num_embeddings["item_id"])
    impression_index = ri((B,), cfg.num_embeddings["impression_index"])
    cont_features = rf((B, C))
    past_interactions_sess = ri((B, S), cfg.num_embeddings["item_id"])
    past_actions_sess = ri((B, S), cfg.num_embeddings["action"])
    last_click_item = ri((B,), cfg.num_embeddings["item_id"])
    last_click_impression = ri((B,), cfg.num_embeddings["impression_index"])
    last_interact_index = ri((B,), cfg.num_embeddings["impression_index"])
    neighbor_prices = rf((B, N))
    city_platform = ri((B,), cfg.num_embeddings["city_platform"])

    fwd = jax.jit(net_forward)
    out = fwd(params, item_id, past_interactions, mask, price_rank, city,
              last_item, impression_index, cont_features,
              past_interactions_sess, past_actions_sess, last_click_item,
              last_click_impression, last_interact_index, neighbor_prices,
              city_platform)
    out = jax.block_until_ready(out)
    assert out.shape == (B,) and bool(jnp.all(jnp.isfinite(out)))
    print("KERNEL_OK")
</pallas_src>

<mosaic_0001>
module attributes {stable_mosaic.version = 11 : i64} {
  func.func @net_kernel(%arg0: i32, %arg1: memref<8x32xf32, #tpu.memory_space<vmem>>, %arg2: memref<8x8x32xf32, #tpu.memory_space<vmem>>, %arg3: memref<8x32xf32, #tpu.memory_space<vmem>>, %arg4: memref<8x32xf32, #tpu.memory_space<vmem>>, %arg5: memref<8x32xf32, #tpu.memory_space<vmem>>, %arg6: memref<8x32xf32, #tpu.memory_space<vmem>>, %arg7: memref<6x8x32xf32, #tpu.memory_space<vmem>>, %arg8: memref<6x8x32xf32, #tpu.memory_space<vmem>>, %arg9: memref<8x32xf32, #tpu.memory_space<vmem>>, %arg10: memref<8x32xf32, #tpu.memory_space<vmem>>, %arg11: memref<8x32xf32, #tpu.memory_space<vmem>>, %arg12: memref<8x32xf32, #tpu.memory_space<vmem>>, %arg13: memref<8x8xf32, #tpu.memory_space<vmem>>, %arg14: memref<8x5xf32, #tpu.memory_space<vmem>>, %arg15: memref<6x32x16xf32, #tpu.memory_space<vmem>>, %arg16: memref<6x32x16xf32, #tpu.memory_space<vmem>>, %arg17: memref<6x16x16xf32, #tpu.memory_space<vmem>>, %arg18: memref<6x1x16xf32, #tpu.memory_space<vmem>>, %arg19: memref<6x1x16xf32, #tpu.memory_space<vmem>>, %arg20: memref<6x16x16xf32, #tpu.memory_space<vmem>>, %arg21: memref<6x16x16xf32, #tpu.memory_space<vmem>>, %arg22: memref<6x16x16xf32, #tpu.memory_space<vmem>>, %arg23: memref<6x1x16xf32, #tpu.memory_space<vmem>>, %arg24: memref<6x1x16xf32, #tpu.memory_space<vmem>>, %arg25: memref<14x32x64xf32, #tpu.memory_space<vmem>>, %arg26: memref<16x64xf32, #tpu.memory_space<vmem>>, %arg27: memref<16x64xf32, #tpu.memory_space<vmem>>, %arg28: memref<1x64xf32, #tpu.memory_space<vmem>>, %arg29: memref<8x32xf32, #tpu.memory_space<vmem>>, %arg30: memref<64x32xf32, #tpu.memory_space<vmem>>, %arg31: memref<1x32xf32, #tpu.memory_space<vmem>>, %arg32: memref<1x32xf32, #tpu.memory_space<vmem>>, %arg33: memref<1x32xf32, #tpu.memory_space<vmem>>, %arg34: memref<8x32xf32, #tpu.memory_space<vmem>>, %arg35: memref<5x32xf32, #tpu.memory_space<vmem>>, %arg36: memref<1x32xf32, #tpu.memory_space<vmem>>, %arg37: memref<32x1xf32, #tpu.memory_space<vmem>>, %arg38: memref<1x1xf32, #tpu.memory_space<vmem>>, %arg39: memref<8x1xf32, #tpu.memory_space<vmem>>) attributes {dimension_semantics = [#tpu.dimension_semantics<parallel>], iteration_bounds = array<i64: 1>, scalar_prefetch = 0 : i64, scratch_operands = 0 : i64, tpu.core_type = #tpu.core_type<tc>, window_params = [{transform_indices = @transform_0, window_bounds = array<i64: 8, 32>}, {transform_indices = @transform_1, window_bounds = array<i64: 8, 8, 32>}, {transform_indices = @transform_2, window_bounds = array<i64: 8, 32>}, {transform_indices = @transform_3, window_bounds = array<i64: 8, 32>}, {transform_indices = @transform_4, window_bounds = array<i64: 8, 32>}, {transform_indices = @transform_5, window_bounds = array<i64: 8, 32>}, {transform_indices = @transform_6, window_bounds = array<i64: 6, 8, 32>}, {transform_indices = @transform_7, window_bounds = array<i64: 6, 8, 32>}, {transform_indices = @transform_8, window_bounds = array<i64: 8, 32>}, {transform_indices = @transform_9, window_bounds = array<i64: 8, 32>}, {transform_indices = @transform_10, window_bounds = array<i64: 8, 32>}, {transform_indices = @transform_11, window_bounds = array<i64: 8, 32>}, {transform_indices = @transform_12, window_bounds = array<i64: 8, 8>}, {transform_indices = @transform_13, window_bounds = array<i64: 8, 5>}, {pipeline_mode = #tpu.pipeline_mode<synchronous>, transform_indices = @transform_14, window_bounds = array<i64: 6, 32, 16>}, {pipeline_mode = #tpu.pipeline_mode<synchronous>, transform_indices = @transform_15, window_bounds = array<i64: 6, 32, 16>}, {pipeline_mode = #tpu.pipeline_mode<synchronous>, transform_indices = @transform_16, window_bounds = array<i64: 6, 16, 16>}, {pipeline_mode = #tpu.pipeline_mode<synchronous>, transform_indices = @transform_17, window_bounds = array<i64: 6, 1, 16>}, {pipeline_mode = #tpu.pipeline_mode<synchronous>, transform_indices = @transform_18, window_bounds = array<i64: 6, 1, 16>}, {pipeline_mode = #tpu.pipeline_mode<synchronous>, transform_indices = @transform_19, window_bounds = array<i64: 6, 16, 16>}, {pipeline_mode = #tpu.pipeline_mode<synchronous>, transform_indices = @transform_20, window_bounds = array<i64: 6, 16, 16>}, {pipeline_mode = #tpu.pipeline_mode<synchronous>, transform_indices = @transform_21, window_bounds = array<i64: 6, 16, 16>}, {pipeline_mode = #tpu.pipeline_mode<synchronous>, transform_indices = @transform_22, window_bounds = array<i64: 6, 1, 16>}, {pipeline_mode = #tpu.pipeline_mode<synchronous>, transform_indices = @transform_23, window_bounds = array<i64: 6, 1, 16>}, {pipeline_mode = #tpu.pipeline_mode<synchronous>, transform_indices = @transform_24, window_bounds = array<i64: 14, 32, 64>}, {pipeline_mode = #tpu.pipeline_mode<synchronous>, transform_indices = @transform_25, window_bounds = array<i64: 16, 64>}, {pipeline_mode = #tpu.pipeline_mode<synchronous>, transform_indices = @transform_26, window_bounds = array<i64: 16, 64>}, {pipeline_mode = #tpu.pipeline_mode<synchronous>, transform_indices = @transform_27, window_bounds = array<i64: 1, 64>}, {pipeline_mode = #tpu.pipeline_mode<synchronous>, transform_indices = @transform_28, window_bounds = array<i64: 8, 32>}, {pipeline_mode = #tpu.pipeline_mode<synchronous>, transform_indices = @transform_29, window_bounds = array<i64: 64, 32>}, {pipeline_mode = #tpu.pipeline_mode<synchronous>, transform_indices = @transform_30, window_bounds = array<i64: 1, 32>}, {pipeline_mode = #tpu.pipeline_mode<synchronous>, transform_indices = @transform_31, window_bounds = array<i64: 1, 32>}, {pipeline_mode = #tpu.pipeline_mode<synchronous>, transform_indices = @transform_32, window_bounds = array<i64: 1, 32>}, {pipeline_mode = #tpu.pipeline_mode<synchronous>, transform_indices = @transform_33, window_bounds = array<i64: 8, 32>}, {pipeline_mode = #tpu.pipeline_mode<synchronous>, transform_indices = @transform_34, window_bounds = array<i64: 5, 32>}, {pipeline_mode = #tpu.pipeline_mode<synchronous>, transform_indices = @transform_35, window_bounds = array<i64: 1, 32>}, {pipeline_mode = #tpu.pipeline_mode<synchronous>, transform_indices = @transform_36, window_bounds = array<i64: 32, 1>}, {pipeline_mode = #tpu.pipeline_mode<synchronous>, transform_indices = @transform_37, window_bounds = array<i64: 1, 1>}, {transform_indices = @transform_38, window_bounds = array<i64: 8, 1>}]} {
    %c0 = arith.constant 0 : index
    %c0_0 = arith.constant 0 : index
    %0 = vector.load %arg1[%c0, %c0_0] : memref<8x32xf32, #tpu.memory_space<vmem>>, vector<8x32xf32>
    %c0_1 = arith.constant 0 : index
    %c0_2 = arith.constant 0 : index
    %c0_3 = arith.constant 0 : index
    %1 = vector.load %arg2[%c0_1, %c0_2, %c0_3] : memref<8x8x32xf32, #tpu.memory_space<vmem>>, vector<8x8x32xf32>
    %cst = arith.constant dense<0xFF800000> : vector<8x32xf32>
    %2 = vector.multi_reduction <maximumf>, %1, %cst [1] : vector<8x8x32xf32> to vector<8x32xf32>
    %c0_4 = arith.constant 0 : index
    %c0_5 = arith.constant 0 : index
    %3 = vector.load %arg3[%c0_4, %c0_5] : memref<8x32xf32, #tpu.memory_space<vmem>>, vector<8x32xf32>
    %c0_6 = arith.constant 0 : index
    %c0_7 = arith.constant 0 : index
    %4 = vector.load %arg4[%c0_6, %c0_7] : memref<8x32xf32, #tpu.memory_space<vmem>>, vector<8x32xf32>
    %c0_8 = arith.constant 0 : index
    %c0_9 = arith.constant 0 : index
    %5 = vector.load %arg5[%c0_8, %c0_9] : memref<8x32xf32, #tpu.memory_space<vmem>>, vector<8x32xf32>
    %c0_10 = arith.constant 0 : index
    %c0_11 = arith.constant 0 : index
    %6 = vector.load %arg6[%c0_10, %c0_11] : memref<8x32xf32, #tpu.memory_space<vmem>>, vector<8x32xf32>
    %c0_12 = arith.constant 0 : index
    %c0_13 = arith.constant 0 : index
    %7 = vector.load %arg9[%c0_12, %c0_13] : memref<8x32xf32, #tpu.memory_space<vmem>>, vector<8x32xf32>
    %c0_14 = arith.constant 0 : index
    %c0_15 = arith.constant 0 : index
    %8 = vector.load %arg10[%c0_14, %c0_15] : memref<8x32xf32, #tpu.memory_space<vmem>>, vector<8x32xf32>
    %c0_16 = arith.constant 0 : index
    %c0_17 = arith.constant 0 : index
    %9 = vector.load %arg11[%c0_16, %c0_17] : memref<8x32xf32, #tpu.memory_space<vmem>>, vector<8x32xf32>
    %c0_18 = arith.constant 0 : index
    %c0_19 = arith.constant 0 : index
    %10 = vector.load %arg12[%c0_18, %c0_19] : memref<8x32xf32, #tpu.memory_space<vmem>>, vector<8x32xf32>
    %c0_20 = arith.constant 0 : index
    %c0_21 = arith.constant 0 : index
    %11 = vector.load %arg13[%c0_20, %c0_21] : memref<8x8xf32, #tpu.memory_space<vmem>>, vector<8x8xf32>
    %c0_22 = arith.constant 0 : index
    %c0_23 = arith.constant 0 : index
    %12 = vector.load %arg14[%c0_22, %c0_23] : memref<8x5xf32, #tpu.memory_space<vmem>>, vector<8x5xf32>
    %c0_24 = arith.constant 0 : index
    %c0_25 = arith.constant 0 : index
    %c0_26 = arith.constant 0 : index
    %13 = vector.load %arg7[%c0_24, %c0_25, %c0_26] : memref<6x8x32xf32, #tpu.memory_space<vmem>>, vector<6x8x32xf32>
    %c0_27 = arith.constant 0 : index
    %c0_28 = arith.constant 0 : index
    %c0_29 = arith.constant 0 : index
    %14 = vector.load %arg8[%c0_27, %c0_28, %c0_29] : memref<6x8x32xf32, #tpu.memory_space<vmem>>, vector<6x8x32xf32>
    %15 = vector.extract_strided_slice %13 {offsets = [0, 0, 0], sizes = [1, 8, 32], strides = [1, 1, 1]} : vector<6x8x32xf32> to vector<1x8x32xf32>
    %16 = vector.shape_cast %15 : vector<1x8x32xf32> to vector<8x32xf32>
    %17 = vector.extract_strided_slice %13 {offsets = [1, 0, 0], sizes = [1, 8, 32], strides = [1, 1, 1]} : vector<6x8x32xf32> to vector<1x8x32xf32>
    %18 = vector.shape_cast %17 : vector<1x8x32xf32> to vector<8x32xf32>
    %19 = vector.extract_strided_slice %13 {offsets = [2, 0, 0], sizes = [1, 8, 32], strides = [1, 1, 1]} : vector<6x8x32xf32> to vector<1x8x32xf32>
    %20 = vector.shape_cast %19 : vector<1x8x32xf32> to vector<8x32xf32>
    %21 = vector.extract_strided_slice %13 {offsets = [3, 0, 0], sizes = [1, 8, 32], strides = [1, 1, 1]} : vector<6x8x32xf32> to vector<1x8x32xf32>
    %22 = vector.shape_cast %21 : vector<1x8x32xf32> to vector<8x32xf32>
    %23 = vector.extract_strided_slice %13 {offsets = [4, 0, 0], sizes = [1, 8, 32], strides = [1, 1, 1]} : vector<6x8x32xf32> to vector<1x8x32xf32>
    %24 = vector.shape_cast %23 : vector<1x8x32xf32> to vector<8x32xf32>
    %25 = vector.extract_strided_slice %13 {offsets = [5, 0, 0], sizes = [1, 8, 32], strides = [1, 1, 1]} : vector<6x8x32xf32> to vector<1x8x32xf32>
    %26 = vector.shape_cast %25 : vector<1x8x32xf32> to vector<8x32xf32>
    %27 = tpu.concatenate %16, %18, %20, %22, %24, %26 in 0 : vector<8x32xf32>, vector<8x32xf32>, vector<8x32xf32>, vector<8x32xf32>, vector<8x32xf32>, vector<8x32xf32> -> vector<48x32xf32>
    %28 = vector.extract_strided_slice %14 {offsets = [0, 0, 0], sizes = [1, 8, 32], strides = [1, 1, 1]} : vector<6x8x32xf32> to vector<1x8x32xf32>
    %29 = vector.shape_cast %28 : vector<1x8x32xf32> to vector<8x32xf32>
    %30 = vector.extract_strided_slice %14 {offsets = [1, 0, 0], sizes = [1, 8, 32], strides = [1, 1, 1]} : vector<6x8x32xf32> to vector<1x8x32xf32>
    %31 = vector.shape_cast %30 : vector<1x8x32xf32> to vector<8x32xf32>
    %32 = vector.extract_strided_slice %14 {offsets = [2, 0, 0], sizes = [1, 8, 32], strides = [1, 1, 1]} : vector<6x8x32xf32> to vector<1x8x32xf32>
    %33 = vector.shape_cast %32 : vector<1x8x32xf32> to vector<8x32xf32>
    %34 = vector.extract_strided_slice %14 {offsets = [3, 0, 0], sizes = [1, 8, 32], strides = [1, 1, 1]} : vector<6x8x32xf32> to vector<1x8x32xf32>
    %35 = vector.shape_cast %34 : vector<1x8x32xf32> to vector<8x32xf32>
    %36 = vector.extract_strided_slice %14 {offsets = [4, 0, 0], sizes = [1, 8, 32], strides = [1, 1, 1]} : vector<6x8x32xf32> to vector<1x8x32xf32>
    %37 = vector.shape_cast %36 : vector<1x8x32xf32> to vector<8x32xf32>
    %38 = vector.extract_strided_slice %14 {offsets = [5, 0, 0], sizes = [1, 8, 32], strides = [1, 1, 1]} : vector<6x8x32xf32> to vector<1x8x32xf32>
    %39 = vector.shape_cast %38 : vector<1x8x32xf32> to vector<8x32xf32>
    %40 = tpu.concatenate %29, %31, %33, %35, %37, %39 in 0 : vector<8x32xf32>, vector<8x32xf32>, vector<8x32xf32>, vector<8x32xf32>, vector<8x32xf32>, vector<8x32xf32> -> vector<48x32xf32>
    %c0_30 = arith.constant 0 : index
    %c0_31 = arith.constant 0 : index
    %c0_32 = arith.constant 0 : index
    %41 = vector.load %arg15[%c0_30, %c0_31, %c0_32] : memref<6x32x16xf32, #tpu.memory_space<vmem>>, vector<6x32x16xf32>
    %c0_33 = arith.constant 0 : index
    %c0_34 = arith.constant 0 : index
    %c0_35 = arith.constant 0 : index
    %42 = vector.load %arg16[%c0_33, %c0_34, %c0_35] : memref<6x32x16xf32, #tpu.memory_space<vmem>>, vector<6x32x16xf32>
    %c0_36 = arith.constant 0 : index
    %c0_37 = arith.constant 0 : index
    %c0_38 = arith.constant 0 : index
    %43 = vector.load %arg17[%c0_36, %c0_37, %c0_38] : memref<6x16x16xf32, #tpu.memory_space<vmem>>, vector<6x16x16xf32>
    %c0_39 = arith.constant 0 : index
    %c0_40 = arith.constant 0 : index
    %c0_41 = arith.constant 0 : index
    %44 = vector.load %arg18[%c0_39, %c0_40, %c0_41] : memref<6x1x16xf32, #tpu.memory_space<vmem>>, vector<6x1x16xf32>
    %c0_42 = arith.constant 0 : index
    %c0_43 = arith.constant 0 : index
    %c0_44 = arith.constant 0 : index
    %45 = vector.load %arg19[%c0_42, %c0_43, %c0_44] : memref<6x1x16xf32, #tpu.memory_space<vmem>>, vector<6x1x16xf32>
    %c0_45 = arith.constant 0 : index
    %c0_46 = arith.constant 0 : index
    %c0_47 = arith.constant 0 : index
    %46 = vector.load %arg20[%c0_45, %c0_46, %c0_47] : memref<6x16x16xf32, #tpu.memory_space<vmem>>, vector<6x16x16xf32>
    %c0_48 = arith.constant 0 : index
    %c0_49 = arith.constant 0 : index
    %c0_50 = arith.constant 0 : index
    %47 = vector.load %arg21[%c0_48, %c0_49, %c0_50] : memref<6x16x16xf32, #tpu.memory_space<vmem>>, vector<6x16x16xf32>
    %c0_51 = arith.constant 0 : index
    %c0_52 = arith.constant 0 : index
    %c0_53 = arith.constant 0 : index
    %48 = vector.load %arg22[%c0_51, %c0_52, %c0_53] : memref<6x16x16xf32, #tpu.memory_space<vmem>>, vector<6x16x16xf32>
    %c0_54 = arith.constant 0 : index
    %c0_55 = arith.constant 0 : index
    %c0_56 = arith.constant 0 : index
    %49 = vector.load %arg23[%c0_54, %c0_55, %c0_56] : memref<6x1x16xf32, #tpu.memory_space<vmem>>, vector<6x1x16xf32>
    %c0_57 = arith.constant 0 : index
    %c0_58 = arith.constant 0 : index
    %c0_59 = arith.constant 0 : index
    %50 = vector.load %arg24[%c0_57, %c0_58, %c0_59] : memref<6x1x16xf32, #tpu.memory_space<vmem>>, vector<6x1x16xf32>
    %51 = vector.extract_strided_slice %41 {offsets = [0, 0, 0], sizes = [1, 32, 16], strides = [1, 1, 1]} : vector<6x32x16xf32> to vector<1x32x16xf32>
    %52 = vector.shape_cast %51 : vector<1x32x16xf32> to vector<32x16xf32>
    %cst_60 = arith.constant dense<0.000000e+00> : vector<48x16xf32>
    %53 = tpu.matmul %27, %52, %cst_60 {dimension_numbers = #tpu.dot_dimension_numbers<[1], [0], [0], [1], [0, 0, 1, 1], [], []>} : vector<48x32xf32>, vector<32x16xf32>, vector<48x16xf32> -> vector<48x16xf32>
    %54 = vector.extract_strided_slice %42 {offsets = [0, 0, 0], sizes = [1, 32, 16], strides = [1, 1, 1]} : vector<6x32x16xf32> to vector<1x32x16xf32>
    %55 = vector.shape_cast %54 : vector<1x32x16xf32> to vector<32x16xf32>
    %cst_61 = arith.constant dense<0.000000e+00> : vector<48x16xf32>
    %56 = tpu.matmul %40, %55, %cst_61 {dimension_numbers = #tpu.dot_dimension_numbers<[1], [0], [0], [1], [0, 0, 1, 1], [], []>} : vector<48x32xf32>, vector<32x16xf32>, vector<48x16xf32> -> vector<48x16xf32>
    %57 = arith.addf %53, %56 : vector<48x16xf32>
    %58 = vector.extract_strided_slice %44 {offsets = [0, 0, 0], sizes = [1, 1, 16], strides = [1, 1, 1]} : vector<6x1x16xf32> to vector<1x1x16xf32>
    %59 = vector.shape_cast %58 : vector<1x1x16xf32> to vector<1x16xf32>
    %60 = vector.broadcast %59 : vector<1x16xf32> to vector<48x16xf32>
    %61 = arith.addf %57, %60 : vector<48x16xf32>
    %62 = vector.extract_strided_slice %61 {offsets = [0, 0], sizes = [8, 16], strides = [1, 1]} : vector<48x16xf32> to vector<8x16xf32>
    %63 = vector.extract_strided_slice %61 {offsets = [8, 0], sizes = [8, 16], strides = [1, 1]} : vector<48x16xf32> to vector<8x16xf32>
    %64 = vector.extract_strided_slice %61 {offsets = [16, 0], sizes = [8, 16], strides = [1, 1]} : vector<48x16xf32> to vector<8x16xf32>
    %65 = vector.extract_strided_slice %61 {offsets = [24, 0], sizes = [8, 16], strides = [1, 1]} : vector<48x16xf32> to vector<8x16xf32>
    %66 = vector.extract_strided_slice %61 {offsets = [32, 0], sizes = [8, 16], strides = [1, 1]} : vector<48x16xf32> to vector<8x16xf32>
    %67 = vector.extract_strided_slice %61 {offsets = [40, 0], sizes = [8, 16], strides = [1, 1]} : vector<48x16xf32> to vector<8x16xf32>
    %68 = vector.extract_strided_slice %41 {offsets = [1, 0, 0], sizes = [1, 32, 16], strides = [1, 1, 1]} : vector<6x32x16xf32> to vector<1x32x16xf32>
    %69 = vector.shape_cast %68 : vector<1x32x16xf32> to vector<32x16xf32>
    %cst_62 = arith.constant dense<0.000000e+00> : vector<48x16xf32>
    %70 = tpu.matmul %27, %69, %cst_62 {dimension_numbers = #tpu.dot_dimension_numbers<[1], [0], [0], [1], [0, 0, 1, 1], [], []>} : vector<48x32xf32>, vector<32x16xf32>, vector<48x16xf32> -> vector<48x16xf32>
    %71 = vector.extract_strided_slice %42 {offsets = [1, 0, 0], sizes = [1, 32, 16], strides = [1, 1, 1]} : vector<6x32x16xf32> to vector<1x32x16xf32>
    %72 = vector.shape_cast %71 : vector<1x32x16xf32> to vector<32x16xf32>
    %cst_63 = arith.constant dense<0.000000e+00> : vector<48x16xf32>
    %73 = tpu.matmul %40, %72, %cst_63 {dimension_numbers = #tpu.dot_dimension_numbers<[1], [0], [0], [1], [0, 0, 1, 1], [], []>} : vector<48x32xf32>, vector<32x16xf32>, vector<48x16xf32> -> vector<48x16xf32>
    %74 = arith.addf %70, %73 : vector<48x16xf32>
    %75 = vector.extract_strided_slice %44 {offsets = [1, 0, 0], sizes = [1, 1, 16], strides = [1, 1, 1]} : vector<6x1x16xf32> to vector<1x1x16xf32>
    %76 = vector.shape_cast %75 : vector<1x1x16xf32> to vector<1x16xf32>
    %77 = vector.broadcast %76 : vector<1x16xf32> to vector<48x16xf32>
    %78 = arith.addf %74, %77 : vector<48x16xf32>
    %79 = vector.extract_strided_slice %78 {offsets = [0, 0], sizes = [8, 16], strides = [1, 1]} : vector<48x16xf32> to vector<8x16xf32>
    %80 = vector.extract_strided_slice %78 {offsets = [8, 0], sizes = [8, 16], strides = [1, 1]} : vector<48x16xf32> to vector<8x16xf32>
    %81 = vector.extract_strided_slice %78 {offsets = [16, 0], sizes = [8, 16], strides = [1, 1]} : vector<48x16xf32> to vector<8x16xf32>
    %82 = vector.extract_strided_slice %78 {offsets = [24, 0], sizes = [8, 16], strides = [1, 1]} : vector<48x16xf32> to vector<8x16xf32>
    %83 = vector.extract_strided_slice %78 {offsets = [32, 0], sizes = [8, 16], strides = [1, 1]} : vector<48x16xf32> to vector<8x16xf32>
    %84 = vector.extract_strided_slice %78 {offsets = [40, 0], sizes = [8, 16], strides = [1, 1]} : vector<48x16xf32> to vector<8x16xf32>
    %85 = vector.extract_strided_slice %41 {offsets = [2, 0, 0], sizes = [1, 32, 16], strides = [1, 1, 1]} : vector<6x32x16xf32> to vector<1x32x16xf32>
    %86 = vector.shape_cast %85 : vector<1x32x16xf32> to vector<32x16xf32>
    %cst_64 = arith.constant dense<0.000000e+00> : vector<48x16xf32>
    %87 = tpu.matmul %27, %86, %cst_64 {dimension_numbers = #tpu.dot_dimension_numbers<[1], [0], [0], [1], [0, 0, 1, 1], [], []>} : vector<48x32xf32>, vector<32x16xf32>, vector<48x16xf32> -> vector<48x16xf32>
    %88 = vector.extract_strided_slice %42 {offsets = [2, 0, 0], sizes = [1, 32, 16], strides = [1, 1, 1]} : vector<6x32x16xf32> to vector<1x32x16xf32>
    %89 = vector.shape_cast %88 : vector<1x32x16xf32> to vector<32x16xf32>
    %cst_65 = arith.constant dense<0.000000e+00> : vector<48x16xf32>
    %90 = tpu.matmul %40, %89, %cst_65 {dimension_numbers = #tpu.dot_dimension_numbers<[1], [0], [0], [1], [0, 0, 1, 1], [], []>} : vector<48x32xf32>, vector<32x16xf32>, vector<48x16xf32> -> vector<48x16xf32>
    %91 = arith.addf %87, %90 : vector<48x16xf32>
    %92 = vector.extract_strided_slice %44 {offsets = [2, 0, 0], sizes = [1, 1, 16], strides = [1, 1, 1]} : vector<6x1x16xf32> to vector<1x1x16xf32>
    %93 = vector.shape_cast %92 : vector<1x1x16xf32> to vector<1x16xf32>
    %94 = vector.broadcast %93 : vector<1x16xf32> to vector<48x16xf32>
    %95 = arith.addf %91, %94 : vector<48x16xf32>
    %96 = vector.extract_strided_slice %95 {offsets = [0, 0], sizes = [8, 16], strides = [1, 1]} : vector<48x16xf32> to vector<8x16xf32>
    %97 = vector.extract_strided_slice %95 {offsets = [8, 0], sizes = [8, 16], strides = [1, 1]} : vector<48x16xf32> to vector<8x16xf32>
    %98 = vector.extract_strided_slice %95 {offsets = [16, 0], sizes = [8, 16], strides = [1, 1]} : vector<48x16xf32> to vector<8x16xf32>
    %99 = vector.extract_strided_slice %95 {offsets = [24, 0], sizes = [8, 16], strides = [1, 1]} : vector<48x16xf32> to vector<8x16xf32>
    %100 = vector.extract_strided_slice %95 {offsets = [32, 0], sizes = [8, 16], strides = [1, 1]} : vector<48x16xf32> to vector<8x16xf32>
    %101 = vector.extract_strided_slice %95 {offsets = [40, 0], sizes = [8, 16], strides = [1, 1]} : vector<48x16xf32> to vector<8x16xf32>
    %102 = vector.extract_strided_slice %43 {offsets = [0, 0, 0], sizes = [1, 16, 16], strides = [1, 1, 1]} : vector<6x16x16xf32> to vector<1x16x16xf32>
    %103 = vector.shape_cast %102 : vector<1x16x16xf32> to vector<16x16xf32>
    %104 = vector.extract_strided_slice %43 {offsets = [1, 0, 0], sizes = [1, 16, 16], strides = [1, 1, 1]} : vector<6x16x16xf32> to vector<1x16x16xf32>
    %105 = vector.shape_cast %104 : vector<1x16x16xf32> to vector<16x16xf32>
    %106 = vector.extract_strided_slice %43 {offsets = [2, 0, 0], sizes = [1, 16, 16], strides = [1, 1, 1]} : vector<6x16x16xf32> to vector<1x16x16xf32>
    %107 = vector.shape_cast %106 : vector<1x16x16xf32> to vector<16x16xf32>
    %108 = vector.extract_strided_slice %45 {offsets = [0, 0, 0], sizes = [1, 1, 16], strides = [1, 1, 1]} : vector<6x1x16xf32> to vector<1x1x16xf32>
    %109 = vector.shape_cast %108 : vector<1x1x16xf32> to vector<1x16xf32>
    %110 = vector.extract_strided_slice %45 {offsets = [1, 0, 0], sizes = [1, 1, 16], strides = [1, 1, 1]} : vector<6x1x16xf32> to vector<1x1x16xf32>
    %111 = vector.shape_cast %110 : vector<1x1x16xf32> to vector<1x16xf32>
    %112 = vector.extract_strided_slice %45 {offsets = [2, 0, 0], sizes = [1, 1, 16], strides = [1, 1, 1]} : vector<6x1x16xf32> to vector<1x1x16xf32>
    %113 = vector.shape_cast %112 : vector<1x1x16xf32> to vector<1x16xf32>
    %cst_66 = arith.constant 0.000000e+00 : f32
    %114 = vector.broadcast %cst_66 : f32 to vector<8x16xf32>
    %cst_67 = arith.constant dense<0.000000e+00> : vector<8x16xf32>
    %115 = tpu.matmul %114, %103, %cst_67 {dimension_numbers = #tpu.dot_dimension_numbers<[1], [0], [0], [1], [0, 0, 1, 1], [], []>} : vector<8x16xf32>, vector<16x16xf32>, vector<8x16xf32> -> vector<8x16xf32>
    %116 = vector.broadcast %109 : vector<1x16xf32> to vector<8x16xf32>
    %117 = arith.addf %115, %116 : vector<8x16xf32>
    %cst_68 = arith.constant dense<0.000000e+00> : vector<8x16xf32>
    %118 = tpu.matmul %114, %105, %cst_68 {dimension_numbers = #tpu.dot_dimension_numbers<[1], [0], [0], [1], [0, 0, 1, 1], [], []>} : vector<8x16xf32>, vector<16x16xf32>, vector<8x16xf32> -> vector<8x16xf32>
    %119 = vector.broadcast %111 : vector<1x16xf32> to vector<8x16xf32>
    %120 = arith.addf %118, %119 : vector<8x16xf32>
    %cst_69 = arith.constant dense<0.000000e+00> : vector<8x16xf32>
    %121 = tpu.matmul %114, %107, %cst_69 {dimension_numbers = #tpu.dot_dimension_numbers<[1], [0], [0], [1], [0, 0, 1, 1], [], []>} : vector<8x16xf32>, vector<16x16xf32>, vector<8x16xf32> -> vector<8x16xf32>
    %122 = vector.broadcast %113 : vector<1x16xf32> to vector<8x16xf32>
    %123 = arith.addf %121, %122 : vector<8x16xf32>
    %124 = arith.addf %62, %117 : vector<8x16xf32>
    %125 = arith.negf %124 : vector<8x16xf32>
    %126 = math.exp %125 : vector<8x16xf32>
    %cst_70 = arith.constant 1.000000e+00 : f32
    %127 = vector.broadcast %cst_70 : f32 to vector<8x16xf32>
    %128 = arith.addf %127, %126 : vector<8x16xf32>
    %129 = arith.divf %127, %128 : vector<8x16xf32>
    %130 = arith.addf %79, %120 : vector<8x16xf32>
    %131 = arith.negf %130 : vector<8x16xf32>
    %132 = math.exp %131 : vector<8x16xf32>
    %cst_71 = arith.constant 1.000000e+00 : f32
    %133 = vector.broadcast %cst_71 : f32 to vector<8x16xf32>
    %134 = arith.addf %133, %132 : vector<8x16xf32>
    %135 = arith.divf %133, %134 : vector<8x16xf32>
    %136 = arith.mulf %129, %123 : vector<8x16xf32>
    %137 = arith.addf %96, %136 : vector<8x16xf32>
    %138 = math.tanh %137 : vector<8x16xf32>
    %cst_72 = arith.constant 1.000000e+00 : f32
    %139 = vector.broadcast %cst_72 : f32 to vector<8x16xf32>
    %140 = arith.subf %139, %135 : vector<8x16xf32>
    %141 = arith.mulf %140, %138 : vector<8x16xf32>
    %142 = arith.mulf %135, %114 : vector<8x16xf32>
    %143 = arith.addf %141, %142 : vector<8x16xf32>
    %cst_73 = arith.constant dense<0.000000e+00> : vector<8x16xf32>
    %144 = tpu.matmul %143, %103, %cst_73 {dimension_numbers = #tpu.dot_dimension_numbers<[1], [0], [0], [1], [0, 0, 1, 1], [], []>} : vector<8x16xf32>, vector<16x16xf32>, vector<8x16xf32> -> vector<8x16xf32>
    %145 = vector.broadcast %109 : vector<1x16xf32> to vector<8x16xf32>
    %146 = arith.addf %144, %145 : vector<8x16xf32>
    %cst_74 = arith.constant dense<0.000000e+00> : vector<8x16xf32>
    %147 = tpu.matmul %143, %105, %cst_74 {dimension_numbers = #tpu.dot_dimension_numbers<[1], [0], [0], [1], [0, 0, 1, 1], [], []>} : vector<8x16xf32>, vector<16x16xf32>, vector<8x16xf32> -> vector<8x16xf32>
    %148 = vector.broadcast %111 : vector<1x16xf32> to vector<8x16xf32>
    %149 = arith.addf %147, %148 : vector<8x16xf32>
    %cst_75 = arith.constant dense<0.000000e+00> : vector<8x16xf32>
    %150 = tpu.matmul %143, %107, %cst_75 {dimension_numbers = #tpu.dot_dimension_numbers<[1], [0], [0], [1], [0, 0, 1, 1], [], []>} : vector<8x16xf32>, vector<16x16xf32>, vector<8x16xf32> -> vector<8x16xf32>
    %151 = vector.broadcast %113 : vector<1x16xf32> to vector<8x16xf32>
    %152 = arith.addf %150, %151 : vector<8x16xf32>
    %153 = arith.addf %63, %146 : vector<8x16xf32>
    %154 = arith.negf %153 : vector<8x16xf32>
    %155 = math.exp %154 : vector<8x16xf32>
    %cst_76 = arith.constant 1.000000e+00 : f32
    %156 = vector.broadcast %cst_76 : f32 to vector<8x16xf32>
    %157 = arith.addf %156, %155 : vector<8x16xf32>
    %158 = arith.divf %156, %157 : vector<8x16xf32>
    %159 = arith.addf %80, %149 : vector<8x16xf32>
    %160 = arith.negf %159 : vector<8x16xf32>
    %161 = math.exp %160 : vector<8x16xf32>
    %cst_77 = arith.constant 1.000000e+00 : f32
    %162 = vector.broadcast %cst_77 : f32 to vector<8x16xf32>
    %163 = arith.addf %162, %161 : vector<8x16xf32>
    %164 = arith.divf %162, %163 : vector<8x16xf32>
    %165 = arith.mulf %158, %152 : vector<8x16xf32>
    %166 = arith.addf %97, %165 : vector<8x16xf32>
    %167 = math.tanh %166 : vector<8x16xf32>
    %cst_78 = arith.constant 1.000000e+00 : f32
    %168 = vector.broadcast %cst_78 : f32 to vector<8x16xf32>
    %169 = arith.subf %168, %164 : vector<8x16xf32>
    %170 = arith.mulf %169, %167 : vector<8x16xf32>
    %171 = arith.mulf %164, %143 : vector<8x16xf32>
    %172 = arith.addf %170, %171 : vector<8x16xf32>
    %cst_79 = arith.constant dense<0.000000e+00> : vector<8x16xf32>
    %173 = tpu.matmul %172, %103, %cst_79 {dimension_numbers = #tpu.dot_dimension_numbers<[1], [0], [0], [1], [0, 0, 1, 1], [], []>} : vector<8x16xf32>, vector<16x16xf32>, vector<8x16xf32> -> vector<8x16xf32>
    %174 = vector.broadcast %109 : vector<1x16xf32> to vector<8x16xf32>
    %175 = arith.addf %173, %174 : vector<8x16xf32>
    %cst_80 = arith.constant dense<0.000000e+00> : vector<8x16xf32>
    %176 = tpu.matmul %172, %105, %cst_80 {dimension_numbers = #tpu.dot_dimension_numbers<[1], [0], [0], [1], [0, 0, 1, 1], [], []>} : vector<8x16xf32>, vector<16x16xf32>, vector<8x16xf32> -> vector<8x16xf32>
    %177 = vector.broadcast %111 : vector<1x16xf32> to vector<8x16xf32>
    %178 = arith.addf %176, %177 : vector<8x16xf32>
    %cst_81 = arith.constant dense<0.000000e+00> : vector<8x16xf32>
    %179 = tpu.matmul %172, %107, %cst_81 {dimension_numbers = #tpu.dot_dimension_numbers<[1], [0], [0], [1], [0, 0, 1, 1], [], []>} : vector<8x16xf32>, vector<16x16xf32>, vector<8x16xf32> -> vector<8x16xf32>
    %180 = vector.broadcast %113 : vector<1x16xf32> to vector<8x16xf32>
    %181 = arith.addf %179, %180 : vector<8x16xf32>
    %182 = arith.addf %64, %175 : vector<8x16xf32>
    %183 = arith.negf %182 : vector<8x16xf32>
    %184 = math.exp %183 : vector<8x16xf32>
    %cst_82 = arith.constant 1.000000e+00 : f32
    %185 = vector.broadcast %cst_82 : f32 to vector<8x16xf32>
    %186 = arith.addf %185, %184 : vector<8x16xf32>
    %187 = arith.divf %185, %186 : vector<8x16xf32>
    %188 = arith.addf %81, %178 : vector<8x16xf32>
    %189 = arith.negf %188 : vector<8x16xf32>
    %190 = math.exp %189 : vector<8x16xf32>
    %cst_83 = arith.constant 1.000000e+00 : f32
    %191 = vector.broadcast %cst_83 : f32 to vector<8x16xf32>
    %192 = arith.addf %191, %190 : vector<8x16xf32>
    %193 = arith.divf %191, %192 : vector<8x16xf32>
    %194 = arith.mulf %187, %181 : vector<8x16xf32>
    %195 = arith.addf %98, %194 : vector<8x16xf32>
    %196 = math.tanh %195 : vector<8x16xf32>
    %cst_84 = arith.constant 1.000000e+00 : f32
    %197 = vector.broadcast %cst_84 : f32 to vector<8x16xf32>
    %198 = arith.subf %197, %193 : vector<8x16xf32>
    %199 = arith.mulf %198, %196 : vector<8x16xf32>
    %200 = arith.mulf %193, %172 : vector<8x16xf32>
    %201 = arith.addf %199, %200 : vector<8x16xf32>
    %cst_85 = arith.constant dense<0.000000e+00> : vector<8x16xf32>
    %202 = tpu.matmul %201, %103, %cst_85 {dimension_numbers = #tpu.dot_dimension_numbers<[1], [0], [0], [1], [0, 0, 1, 1], [], []>} : vector<8x16xf32>, vector<16x16xf32>, vector<8x16xf32> -> vector<8x16xf32>
    %203 = vector.broadcast %109 : vector<1x16xf32> to vector<8x16xf32>
    %204 = arith.addf %202, %203 : vector<8x16xf32>
    %cst_86 = arith.constant dense<0.000000e+00> : vector<8x16xf32>
    %205 = tpu.matmul %201, %105, %cst_86 {dimension_numbers = #tpu.dot_dimension_numbers<[1], [0], [0], [1], [0, 0, 1, 1], [], []>} : vector<8x16xf32>, vector<16x16xf32>, vector<8x16xf32> -> vector<8x16xf32>
    %206 = vector.broadcast %111 : vector<1x16xf32> to vector<8x16xf32>
    %207 = arith.addf %205, %206 : vector<8x16xf32>
    %cst_87 = arith.constant dense<0.000000e+00> : vector<8x16xf32>
    %208 = tpu.matmul %201, %107, %cst_87 {dimension_numbers = #tpu.dot_dimension_numbers<[1], [0], [0], [1], [0, 0, 1, 1], [], []>} : vector<8x16xf32>, vector<16x16xf32>, vector<8x16xf32> -> vector<8x16xf32>
    %209 = vector.broadcast %113 : vector<1x16xf32> to vector<8x16xf32>
    %210 = arith.addf %208, %209 : vector<8x16xf32>
    %211 = arith.addf %65, %204 : vector<8x16xf32>
    %212 = arith.negf %211 : vector<8x16xf32>
    %213 = math.exp %212 : vector<8x16xf32>
    %cst_88 = arith.constant 1.000000e+00 : f32
    %214 = vector.broadcast %cst_88 : f32 to vector<8x16xf32>
    %215 = arith.addf %214, %213 : vector<8x16xf32>
    %216 = arith.divf %214, %215 : vector<8x16xf32>
    %217 = arith.addf %82, %207 : vector<8x16xf32>
    %218 = arith.negf %217 : vector<8x16xf32>
    %219 = math.exp %218 : vector<8x16xf32>
    %cst_89 = arith.constant 1.000000e+00 : f32
    %220 = vector.broadcast %cst_89 : f32 to vector<8x16xf32>
    %221 = arith.addf %220, %219 : vector<8x16xf32>
    %222 = arith.divf %220, %221 : vector<8x16xf32>
    %223 = arith.mulf %216, %210 : vector<8x16xf32>
    %224 = arith.addf %99, %223 : vector<8x16xf32>
    %225 = math.tanh %224 : vector<8x16xf32>
    %cst_90 = arith.constant 1.000000e+00 : f32
    %226 = vector.broadcast %cst_90 : f32 to vector<8x16xf32>
    %227 = arith.subf %226, %222 : vector<8x16xf32>
    %228 = arith.mulf %227, %225 : vector<8x16xf32>
    %229 = arith.mulf %222, %201 : vector<8x16xf32>
    %230 = arith.addf %228, %229 : vector<8x16xf32>
    %cst_91 = arith.constant dense<0.000000e+00> : vector<8x16xf32>
    %231 = tpu.matmul %230, %103, %cst_91 {dimension_numbers = #tpu.dot_dimension_numbers<[1], [0], [0], [1], [0, 0, 1, 1], [], []>} : vector<8x16xf32>, vector<16x16xf32>, vector<8x16xf32> -> vector<8x16xf32>
    %232 = vector.broadcast %109 : vector<1x16xf32> to vector<8x16xf32>
    %233 = arith.addf %231, %232 : vector<8x16xf32>
    %cst_92 = arith.constant dense<0.000000e+00> : vector<8x16xf32>
    %234 = tpu.matmul %230, %105, %cst_92 {dimension_numbers = #tpu.dot_dimension_numbers<[1], [0], [0], [1], [0, 0, 1, 1], [], []>} : vector<8x16xf32>, vector<16x16xf32>, vector<8x16xf32> -> vector<8x16xf32>
    %235 = vector.broadcast %111 : vector<1x16xf32> to vector<8x16xf32>
    %236 = arith.addf %234, %235 : vector<8x16xf32>
    %cst_93 = arith.constant dense<0.000000e+00> : vector<8x16xf32>
    %237 = tpu.matmul %230, %107, %cst_93 {dimension_numbers = #tpu.dot_dimension_numbers<[1], [0], [0], [1], [0, 0, 1, 1], [], []>} : vector<8x16xf32>, vector<16x16xf32>, vector<8x16xf32> -> vector<8x16xf32>
    %238 = vector.broadcast %113 : vector<1x16xf32> to vector<8x16xf32>
    %239 = arith.addf %237, %238 : vector<8x16xf32>
    %240 = arith.addf %66, %233 : vector<8x16xf32>
    %241 = arith.negf %240 : vector<8x16xf32>
    %242 = math.exp %241 : vector<8x16xf32>
    %cst_94 = arith.constant 1.000000e+00 : f32
    %243 = vector.broadcast %cst_94 : f32 to vector<8x16xf32>
    %244 = arith.addf %243, %242 : vector<8x16xf32>
    %245 = arith.divf %243, %244 : vector<8x16xf32>
    %246 = arith.addf %83, %236 : vector<8x16xf32>
    %247 = arith.negf %246 : vector<8x16xf32>
    %248 = math.exp %247 : vector<8x16xf32>
    %cst_95 = arith.constant 1.000000e+00 : f32
    %249 = vector.broadcast %cst_95 : f32 to vector<8x16xf32>
    %250 = arith.addf %249, %248 : vector<8x16xf32>
    %251 = arith.divf %249, %250 : vector<8x16xf32>
    %252 = arith.mulf %245, %239 : vector<8x16xf32>
    %253 = arith.addf %100, %252 : vector<8x16xf32>
    %254 = math.tanh %253 : vector<8x16xf32>
    %cst_96 = arith.constant 1.000000e+00 : f32
    %255 = vector.broadcast %cst_96 : f32 to vector<8x16xf32>
    %256 = arith.subf %255, %251 : vector<8x16xf32>
    %257 = arith.mulf %256, %254 : vector<8x16xf32>
    %258 = arith.mulf %251, %230 : vector<8x16xf32>
    %259 = arith.addf %257, %258 : vector<8x16xf32>
    %cst_97 = arith.constant dense<0.000000e+00> : vector<8x16xf32>
    %260 = tpu.matmul %259, %103, %cst_97 {dimension_numbers = #tpu.dot_dimension_numbers<[1], [0], [0], [1], [0, 0, 1, 1], [], []>} : vector<8x16xf32>, vector<16x16xf32>, vector<8x16xf32> -> vector<8x16xf32>
    %261 = vector.broadcast %109 : vector<1x16xf32> to vector<8x16xf32>
    %262 = arith.addf %260, %261 : vector<8x16xf32>
    %cst_98 = arith.constant dense<0.000000e+00> : vector<8x16xf32>
    %263 = tpu.matmul %259, %105, %cst_98 {dimension_numbers = #tpu.dot_dimension_numbers<[1], [0], [0], [1], [0, 0, 1, 1], [], []>} : vector<8x16xf32>, vector<16x16xf32>, vector<8x16xf32> -> vector<8x16xf32>
    %264 = vector.broadcast %111 : vector<1x16xf32> to vector<8x16xf32>
    %265 = arith.addf %263, %264 : vector<8x16xf32>
    %cst_99 = arith.constant dense<0.000000e+00> : vector<8x16xf32>
    %266 = tpu.matmul %259, %107, %cst_99 {dimension_numbers = #tpu.dot_dimension_numbers<[1], [0], [0], [1], [0, 0, 1, 1], [], []>} : vector<8x16xf32>, vector<16x16xf32>, vector<8x16xf32> -> vector<8x16xf32>
    %267 = vector.broadcast %113 : vector<1x16xf32> to vector<8x16xf32>
    %268 = arith.addf %266, %267 : vector<8x16xf32>
    %269 = arith.addf %67, %262 : vector<8x16xf32>
    %270 = arith.negf %269 : vector<8x16xf32>
    %271 = math.exp %270 : vector<8x16xf32>
    %cst_100 = arith.constant 1.000000e+00 : f32
    %272 = vector.broadcast %cst_100 : f32 to vector<8x16xf32>
    %273 = arith.addf %272, %271 : vector<8x16xf32>
    %274 = arith.divf %272, %273 : vector<8x16xf32>
    %275 = arith.addf %84, %265 : vector<8x16xf32>
    %276 = arith.negf %275 : vector<8x16xf32>
    %277 = math.exp %276 : vector<8x16xf32>
    %cst_101 = arith.constant 1.000000e+00 : f32
    %278 = vector.broadcast %cst_101 : f32 to vector<8x16xf32>
    %279 = arith.addf %278, %277 : vector<8x16xf32>
    %280 = arith.divf %278, %279 : vector<8x16xf32>
    %281 = arith.mulf %274, %268 : vector<8x16xf32>
    %282 = arith.addf %101, %281 : vector<8x16xf32>
    %283 = math.tanh %282 : vector<8x16xf32>
    %cst_102 = arith.constant 1.000000e+00 : f32
    %284 = vector.broadcast %cst_102 : f32 to vector<8x16xf32>
    %285 = arith.subf %284, %280 : vector<8x16xf32>
    %286 = arith.mulf %285, %283 : vector<8x16xf32>
    %287 = arith.mulf %280, %259 : vector<8x16xf32>
    %288 = arith.addf %286, %287 : vector<8x16xf32>
    %289 = vector.extract_strided_slice %41 {offsets = [3, 0, 0], sizes = [1, 32, 16], strides = [1, 1, 1]} : vector<6x32x16xf32> to vector<1x32x16xf32>
    %290 = vector.shape_cast %289 : vector<1x32x16xf32> to vector<32x16xf32>
    %cst_103 = arith.constant dense<0.000000e+00> : vector<48x16xf32>
    %291 = tpu.matmul %27, %290, %cst_103 {dimension_numbers = #tpu.dot_dimension_numbers<[1], [0], [0], [1], [0, 0, 1, 1], [], []>} : vector<48x32xf32>, vector<32x16xf32>, vector<48x16xf32> -> vector<48x16xf32>
    %292 = vector.extract_strided_slice %42 {offsets = [3, 0, 0], sizes = [1, 32, 16], strides = [1, 1, 1]} : vector<6x32x16xf32> to vector<1x32x16xf32>
    %293 = vector.shape_cast %292 : vector<1x32x16xf32> to vector<32x16xf32>
    %cst_104 = arith.constant dense<0.000000e+00> : vector<48x16xf32>
    %294 = tpu.matmul %40, %293, %cst_104 {dimension_numbers = #tpu.dot_dimension_numbers<[1], [0], [0], [1], [0, 0, 1, 1], [], []>} : vector<48x32xf32>, vector<32x16xf32>, vector<48x16xf32> -> vector<48x16xf32>
    %295 = arith.addf %291, %294 : vector<48x16xf32>
    %296 = vector.extract_strided_slice %44 {offsets = [3, 0, 0], sizes = [1, 1, 16], strides = [1, 1, 1]} : vector<6x1x16xf32> to vector<1x1x16xf32>
    %297 = vector.shape_cast %296 : vector<1x1x16xf32> to vector<1x16xf32>
    %298 = vector.broadcast %297 : vector<1x16xf32> to vector<48x16xf32>
    %299 = arith.addf %295, %298 : vector<48x16xf32>
    %300 = vector.extract_strided_slice %299 {offsets = [0, 0], sizes = [8, 16], strides = [1, 1]} : vector<48x16xf32> to vector<8x16xf32>
    %301 = vector.extract_strided_slice %299 {offsets = [8, 0], sizes = [8, 16], strides = [1, 1]} : vector<48x16xf32> to vector<8x16xf32>
    %302 = vector.extract_strided_slice %299 {offsets = [16, 0], sizes = [8, 16], strides = [1, 1]} : vector<48x16xf32> to vector<8x16xf32>
    %303 = vector.extract_strided_slice %299 {offsets = [24, 0], sizes = [8, 16], strides = [1, 1]} : vector<48x16xf32> to vector<8x16xf32>
    %304 = vector.extract_strided_slice %299 {offsets = [32, 0], sizes = [8, 16], strides = [1, 1]} : vector<48x16xf32> to vector<8x16xf32>
    %305 = vector.extract_strided_slice %299 {offsets = [40, 0], sizes = [8, 16], strides = [1, 1]} : vector<48x16xf32> to vector<8x16xf32>
    %306 = vector.extract_strided_slice %41 {offsets = [4, 0, 0], sizes = [1, 32, 16], strides = [1, 1, 1]} : vector<6x32x16xf32> to vector<1x32x16xf32>
    %307 = vector.shape_cast %306 : vector<1x32x16xf32> to vector<32x16xf32>
    %cst_105 = arith.constant dense<0.000000e+00> : vector<48x16xf32>
    %308 = tpu.matmul %27, %307, %cst_105 {dimension_numbers = #tpu.dot_dimension_numbers<[1], [0], [0], [1], [0, 0, 1, 1], [], []>} : vector<48x32xf32>, vector<32x16xf32>, vector<48x16xf32> -> vector<48x16xf32>
    %309 = vector.extract_strided_slice %42 {offsets = [4, 0, 0], sizes = [1, 32, 16], strides = [1, 1, 1]} : vector<6x32x16xf32> to vector<1x32x16xf32>
    %310 = vector.shape_cast %309 : vector<1x32x16xf32> to vector<32x16xf32>
    %cst_106 = arith.constant dense<0.000000e+00> : vector<48x16xf32>
    %311 = tpu.matmul %40, %310, %cst_106 {dimension_numbers = #tpu.dot_dimension_numbers<[1], [0], [0], [1], [0, 0, 1, 1], [], []>} : vector<48x32xf32>, vector<32x16xf32>, vector<48x16xf32> -> vector<48x16xf32>
    %312 = arith.addf %308, %311 : vector<48x16xf32>
    %313 = vector.extract_strided_slice %44 {offsets = [4, 0, 0], sizes = [1, 1, 16], strides = [1, 1, 1]} : vector<6x1x16xf32> to vector<1x1x16xf32>
    %314 = vector.shape_cast %313 : vector<1x1x16xf32> to vector<1x16xf32>
    %315 = vector.broadcast %314 : vector<1x16xf32> to vector<48x16xf32>
    %316 = arith.addf %312, %315 : vector<48x16xf32>
    %317 = vector.extract_strided_slice %316 {offsets = [0, 0], sizes = [8, 16], strides = [1, 1]} : vector<48x16xf32> to vector<8x16xf32>
    %318 = vector.extract_strided_slice %316 {offsets = [8, 0], sizes = [8, 16], strides = [1, 1]} : vector<48x16xf32> to vector<8x16xf32>
    %319 = vector.extract_strided_slice %316 {offsets = [16, 0], sizes = [8, 16], strides = [1, 1]} : vector<48x16xf32> to vector<8x16xf32>
    %320 = vector.extract_strided_slice %316 {offsets = [24, 0], sizes = [8, 16], strides = [1, 1]} : vector<48x16xf32> to vector<8x16xf32>
    %321 = vector.extract_strided_slice %316 {offsets = [32, 0], sizes = [8, 16], strides = [1, 1]} : vector<48x16xf32> to vector<8x16xf32>
    %322 = vector.extract_strided_slice %316 {offsets = [40, 0], sizes = [8, 16], strides = [1, 1]} : vector<48x16xf32> to vector<8x16xf32>
    %323 = vector.extract_strided_slice %41 {offsets = [5, 0, 0], sizes = [1, 32, 16], strides = [1, 1, 1]} : vector<6x32x16xf32> to vector<1x32x16xf32>
    %324 = vector.shape_cast %323 : vector<1x32x16xf32> to vector<32x16xf32>
    %cst_107 = arith.constant dense<0.000000e+00> : vector<48x16xf32>
    %325 = tpu.matmul %27, %324, %cst_107 {dimension_numbers = #tpu.dot_dimension_numbers<[1], [0], [0], [1], [0, 0, 1, 1], [], []>} : vector<48x32xf32>, vector<32x16xf32>, vector<48x16xf32> -> vector<48x16xf32>
    %326 = vector.extract_strided_slice %42 {offsets = [5, 0, 0], sizes = [1, 32, 16], strides = [1, 1, 1]} : vector<6x32x16xf32> to vector<1x32x16xf32>
    %327 = vector.shape_cast %326 : vector<1x32x16xf32> to vector<32x16xf32>
    %cst_108 = arith.constant dense<0.000000e+00> : vector<48x16xf32>
    %328 = tpu.matmul %40, %327, %cst_108 {dimension_numbers = #tpu.dot_dimension_numbers<[1], [0], [0], [1], [0, 0, 1, 1], [], []>} : vector<48x32xf32>, vector<32x16xf32>, vector<48x16xf32> -> vector<48x16xf32>
    %329 = arith.addf %325, %328 : vector<48x16xf32>
    %330 = vector.extract_strided_slice %44 {offsets = [5, 0, 0], sizes = [1, 1, 16], strides = [1, 1, 1]} : vector<6x1x16xf32> to vector<1x1x16xf32>
    %331 = vector.shape_cast %330 : vector<1x1x16xf32> to vector<1x16xf32>
    %332 = vector.broadcast %331 : vector<1x16xf32> to vector<48x16xf32>
    %333 = arith.addf %329, %332 : vector<48x16xf32>
    %334 = vector.extract_strided_slice %333 {offsets = [0, 0], sizes = [8, 16], strides = [1, 1]} : vector<48x16xf32> to vector<8x16xf32>
    %335 = vector.extract_strided_slice %333 {offsets = [8, 0], sizes = [8, 16], strides = [1, 1]} : vector<48x16xf32> to vector<8x16xf32>
    %336 = vector.extract_strided_slice %333 {offsets = [16, 0], sizes = [8, 16], strides = [1, 1]} : vector<48x16xf32> to vector<8x16xf32>
    %337 = vector.extract_strided_slice %333 {offsets = [24, 0], sizes = [8, 16], strides = [1, 1]} : vector<48x16xf32> to vector<8x16xf32>
    %338 = vector.extract_strided_slice %333 {offsets = [32, 0], sizes = [8, 16], strides = [1, 1]} : vector<48x16xf32> to vector<8x16xf32>
    %339 = vector.extract_strided_slice %333 {offsets = [40, 0], sizes = [8, 16], strides = [1, 1]} : vector<48x16xf32> to vector<8x16xf32>
    %340 = vector.extract_strided_slice %43 {offsets = [3, 0, 0], sizes = [1, 16, 16], strides = [1, 1, 1]} : vector<6x16x16xf32> to vector<1x16x16xf32>
    %341 = vector.shape_cast %340 : vector<1x16x16xf32> to vector<16x16xf32>
    %342 = vector.extract_strided_slice %43 {offsets = [4, 0, 0], sizes = [1, 16, 16], strides = [1, 1, 1]} : vector<6x16x16xf32> to vector<1x16x16xf32>
    %343 = vector.shape_cast %342 : vector<1x16x16xf32> to vector<16x16xf32>
    %344 = vector.extract_strided_slice %43 {offsets = [5, 0, 0], sizes = [1, 16, 16], strides = [1, 1, 1]} : vector<6x16x16xf32> to vector<1x16x16xf32>
    %345 = vector.shape_cast %344 : vector<1x16x16xf32> to vector<16x16xf32>
    %346 = vector.extract_strided_slice %45 {offsets = [3, 0, 0], sizes = [1, 1, 16], strides = [1, 1, 1]} : vector<6x1x16xf32> to vector<1x1x16xf32>
    %347 = vector.shape_cast %346 : vector<1x1x16xf32> to vector<1x16xf32>
    %348 = vector.extract_strided_slice %45 {offsets = [4, 0, 0], sizes = [1, 1, 16], strides = [1, 1, 1]} : vector<6x1x16xf32> to vector<1x1x16xf32>
    %349 = vector.shape_cast %348 : vector<1x1x16xf32> to vector<1x16xf32>
    %350 = vector.extract_strided_slice %45 {offsets = [5, 0, 0], sizes = [1, 1, 16], strides = [1, 1, 1]} : vector<6x1x16xf32> to vector<1x1x16xf32>
    %351 = vector.shape_cast %350 : vector<1x1x16xf32> to vector<1x16xf32>
    %cst_109 = arith.constant 0.000000e+00 : f32
    %352 = vector.broadcast %cst_109 : f32 to vector<8x16xf32>
    %cst_110 = arith.constant dense<0.000000e+00> : vector<8x16xf32>
    %353 = tpu.matmul %352, %341, %cst_110 {dimension_numbers = #tpu.dot_dimension_numbers<[1], [0], [0], [1], [0, 0, 1, 1], [], []>} : vector<8x16xf32>, vector<16x16xf32>, vector<8x16xf32> -> vector<8x16xf32>
    %354 = vector.broadcast %347 : vector<1x16xf32> to vector<8x16xf32>
    %355 = arith.addf %353, %354 : vector<8x16xf32>
    %cst_111 = arith.constant dense<0.000000e+00> : vector<8x16xf32>
    %356 = tpu.matmul %352, %343, %cst_111 {dimension_numbers = #tpu.dot_dimension_numbers<[1], [0], [0], [1], [0, 0, 1, 1], [], []>} : vector<8x16xf32>, vector<16x16xf32>, vector<8x16xf32> -> vector<8x16xf32>
    %357 = vector.broadcast %349 : vector<1x16xf32> to vector<8x16xf32>
    %358 = arith.addf %356, %357 : vector<8x16xf32>
    %cst_112 = arith.constant dense<0.000000e+00> : vector<8x16xf32>
    %359 = tpu.matmul %352, %345, %cst_112 {dimension_numbers = #tpu.dot_dimension_numbers<[1], [0], [0], [1], [0, 0, 1, 1], [], []>} : vector<8x16xf32>, vector<16x16xf32>, vector<8x16xf32> -> vector<8x16xf32>
    %360 = vector.broadcast %351 : vector<1x16xf32> to vector<8x16xf32>
    %361 = arith.addf %359, %360 : vector<8x16xf32>
    %362 = arith.addf %305, %355 : vector<8x16xf32>
    %363 = arith.negf %362 : vector<8x16xf32>
    %364 = math.exp %363 : vector<8x16xf32>
    %cst_113 = arith.constant 1.000000e+00 : f32
    %365 = vector.broadcast %cst_113 : f32 to vector<8x16xf32>
    %366 = arith.addf %365, %364 : vector<8x16xf32>
    %367 = arith.divf %365, %366 : vector<8x16xf32>
    %368 = arith.addf %322, %358 : vector<8x16xf32>
    %369 = arith.negf %368 : vector<8x16xf32>
    %370 = math.exp %369 : vector<8x16xf32>
    %cst_114 = arith.constant 1.000000e+00 : f32
    %371 = vector.broadcast %cst_114 : f32 to vector<8x16xf32>
    %372 = arith.addf %371, %370 : vector<8x16xf32>
    %373 = arith.divf %371, %372 : vector<8x16xf32>
    %374 = arith.mulf %367, %361 : vector<8x16xf32>
    %375 = arith.addf %339, %374 : vector<8x16xf32>
    %376 = math.tanh %375 : vector<8x16xf32>
    %cst_115 = arith.constant 1.000000e+00 : f32
    %377 = vector.broadcast %cst_115 : f32 to vector<8x16xf32>
    %378 = arith.subf %377, %373 : vector<8x16xf32>
    %379 = arith.mulf %378, %376 : vector<8x16xf32>
    %380 = arith.mulf %373, %352 : vector<8x16xf32>
    %381 = arith.addf %379, %380 : vector<8x16xf32>
    %cst_116 = arith.constant dense<0.000000e+00> : vector<8x16xf32>
    %382 = tpu.matmul %381, %341, %cst_116 {dimension_numbers = #tpu.dot_dimension_numbers<[1], [0], [0], [1], [0, 0, 1, 1], [], []>} : vector<8x16xf32>, vector<16x16xf32>, vector<8x16xf32> -> vector<8x16xf32>
    %383 = vector.broadcast %347 : vector<1x16xf32> to vector<8x16xf32>
    %384 = arith.addf %382, %383 : vector<8x16xf32>
    %cst_117 = arith.constant dense<0.000000e+00> : vector<8x16xf32>
    %385 = tpu.matmul %381, %343, %cst_117 {dimension_numbers = #tpu.dot_dimension_numbers<[1], [0], [0], [1], [0, 0, 1, 1], [], []>} : vector<8x16xf32>, vector<16x16xf32>, vector<8x16xf32> -> vector<8x16xf32>
    %386 = vector.broadcast %349 : vector<1x16xf32> to vector<8x16xf32>
    %387 = arith.addf %385, %386 : vector<8x16xf32>
    %cst_118 = arith.constant dense<0.000000e+00> : vector<8x16xf32>
    %388 = tpu.matmul %381, %345, %cst_118 {dimension_numbers = #tpu.dot_dimension_numbers<[1], [0], [0], [1], [0, 0, 1, 1], [], []>} : vector<8x16xf32>, vector<16x16xf32>, vector<8x16xf32> -> vector<8x16xf32>
    %389 = vector.broadcast %351 : vector<1x16xf32> to vector<8x16xf32>
    %390 = arith.addf %388, %389 : vector<8x16xf32>
    %391 = arith.addf %304, %384 : vector<8x16xf32>
    %392 = arith.negf %391 : vector<8x16xf32>
    %393 = math.exp %392 : vector<8x16xf32>
    %cst_119 = arith.constant 1.000000e+00 : f32
    %394 = vector.broadcast %cst_119 : f32 to vector<8x16xf32>
    %395 = arith.addf %394, %393 : vector<8x16xf32>
    %396 = arith.divf %394, %395 : vector<8x16xf32>
    %397 = arith.addf %321, %387 : vector<8x16xf32>
    %398 = arith.negf %397 : vector<8x16xf32>
    %399 = math.exp %398 : vector<8x16xf32>
    %cst_120 = arith.constant 1.000000e+00 : f32
    %400 = vector.broadcast %cst_120 : f32 to vector<8x16xf32>
    %401 = arith.addf %400, %399 : vector<8x16xf32>
    %402 = arith.divf %400, %401 : vector<8x16xf32>
    %403 = arith.mulf %396, %390 : vector<8x16xf32>
    %404 = arith.addf %338, %403 : vector<8x16xf32>
    %405 = math.tanh %404 : vector<8x16xf32>
    %cst_121 = arith.constant 1.000000e+00 : f32
    %406 = vector.broadcast %cst_121 : f32 to vector<8x16xf32>
    %407 = arith.subf %406, %402 : vector<8x16xf32>
    %408 = arith.mulf %407, %405 : vector<8x16xf32>
    %409 = arith.mulf %402, %381 : vector<8x16xf32>
    %410 = arith.addf %408, %409 : vector<8x16xf32>
    %cst_122 = arith.constant dense<0.000000e+00> : vector<8x16xf32>
    %411 = tpu.matmul %410, %341, %cst_122 {dimension_numbers = #tpu.dot_dimension_numbers<[1], [0], [0], [1], [0, 0, 1, 1], [], []>} : vector<8x16xf32>, vector<16x16xf32>, vector<8x16xf32> -> vector<8x16xf32>
    %412 = vector.broadcast %347 : vector<1x16xf32> to vector<8x16xf32>
    %413 = arith.addf %411, %412 : vector<8x16xf32>
    %cst_123 = arith.constant dense<0.000000e+00> : vector<8x16xf32>
    %414 = tpu.matmul %410, %343, %cst_123 {dimension_numbers = #tpu.dot_dimension_numbers<[1], [0], [0], [1], [0, 0, 1, 1], [], []>} : vector<8x16xf32>, vector<16x16xf32>, vector<8x16xf32> -> vector<8x16xf32>
    %415 = vector.broadcast %349 : vector<1x16xf32> to vector<8x16xf32>
    %416 = arith.addf %414, %415 : vector<8x16xf32>
    %cst_124 = arith.constant dense<0.000000e+00> : vector<8x16xf32>
    %417 = tpu.matmul %410, %345, %cst_124 {dimension_numbers = #tpu.dot_dimension_numbers<[1], [0], [0], [1], [0, 0, 1, 1], [], []>} : vector<8x16xf32>, vector<16x16xf32>, vector<8x16xf32> -> vector<8x16xf32>
    %418 = vector.broadcast %351 : vector<1x16xf32> to vector<8x16xf32>
    %419 = arith.addf %417, %418 : vector<8x16xf32>
    %420 = arith.addf %303, %413 : vector<8x16xf32>
    %421 = arith.negf %420 : vector<8x16xf32>
    %422 = math.exp %421 : vector<8x16xf32>
    %cst_125 = arith.constant 1.000000e+00 : f32
    %423 = vector.broadcast %cst_125 : f32 to vector<8x16xf32>
    %424 = arith.addf %423, %422 : vector<8x16xf32>
    %425 = arith.divf %423, %424 : vector<8x16xf32>
    %426 = arith.addf %320, %416 : vector<8x16xf32>
    %427 = arith.negf %426 : vector<8x16xf32>
    %428 = math.exp %427 : vector<8x16xf32>
    %cst_126 = arith.constant 1.000000e+00 : f32
    %429 = vector.broadcast %cst_126 : f32 to vector<8x16xf32>
    %430 = arith.addf %429, %428 : vector<8x16xf32>
    %431 = arith.divf %429, %430 : vector<8x16xf32>
    %432 = arith.mulf %425, %419 : vector<8x16xf32>
    %433 = arith.addf %337, %432 : vector<8x16xf32>
    %434 = math.tanh %433 : vector<8x16xf32>
    %cst_127 = arith.constant 1.000000e+00 : f32
    %435 = vector.broadcast %cst_127 : f32 to vector<8x16xf32>
    %436 = arith.subf %435, %431 : vector<8x16xf32>
    %437 = arith.mulf %436, %434 : vector<8x16xf32>
    %438 = arith.mulf %431, %410 : vector<8x16xf32>
    %439 = arith.addf %437, %438 : vector<8x16xf32>
    %cst_128 = arith.constant dense<0.000000e+00> : vector<8x16xf32>
    %440 = tpu.matmul %439, %341, %cst_128 {dimension_numbers = #tpu.dot_dimension_numbers<[1], [0], [0], [1], [0, 0, 1, 1], [], []>} : vector<8x16xf32>, vector<16x16xf32>, vector<8x16xf32> -> vector<8x16xf32>
    %441 = vector.broadcast %347 : vector<1x16xf32> to vector<8x16xf32>
    %442 = arith.addf %440, %441 : vector<8x16xf32>
    %cst_129 = arith.constant dense<0.000000e+00> : vector<8x16xf32>
    %443 = tpu.matmul %439, %343, %cst_129 {dimension_numbers = #tpu.dot_dimension_numbers<[1], [0], [0], [1], [0, 0, 1, 1], [], []>} : vector<8x16xf32>, vector<16x16xf32>, vector<8x16xf32> -> vector<8x16xf32>
    %444 = vector.broadcast %349 : vector<1x16xf32> to vector<8x16xf32>
    %445 = arith.addf %443, %444 : vector<8x16xf32>
    %cst_130 = arith.constant dense<0.000000e+00> : vector<8x16xf32>
    %446 = tpu.matmul %439, %345, %cst_130 {dimension_numbers = #tpu.dot_dimension_numbers<[1], [0], [0], [1], [0, 0, 1, 1], [], []>} : vector<8x16xf32>, vector<16x16xf32>, vector<8x16xf32> -> vector<8x16xf32>
    %447 = vector.broadcast %351 : vector<1x16xf32> to vector<8x16xf32>
    %448 = arith.addf %446, %447 : vector<8x16xf32>
    %449 = arith.addf %302, %442 : vector<8x16xf32>
    %450 = arith.negf %449 : vector<8x16xf32>
    %451 = math.exp %450 : vector<8x16xf32>
    %cst_131 = arith.constant 1.000000e+00 : f32
    %452 = vector.broadcast %cst_131 : f32 to vector<8x16xf32>
    %453 = arith.addf %452, %451 : vector<8x16xf32>
    %454 = arith.divf %452, %453 : vector<8x16xf32>
    %455 = arith.addf %319, %445 : vector<8x16xf32>
    %456 = arith.negf %455 : vector<8x16xf32>
    %457 = math.exp %456 : vector<8x16xf32>
    %cst_132 = arith.constant 1.000000e+00 : f32
    %458 = vector.broadcast %cst_132 : f32 to vector<8x16xf32>
    %459 = arith.addf %458, %457 : vector<8x16xf32>
    %460 = arith.divf %458, %459 : vector<8x16xf32>
    %461 = arith.mulf %454, %448 : vector<8x16xf32>
    %462 = arith.addf %336, %461 : vector<8x16xf32>
    %463 = math.tanh %462 : vector<8x16xf32>
    %cst_133 = arith.constant 1.000000e+00 : f32
    %464 = vector.broadcast %cst_133 : f32 to vector<8x16xf32>
    %465 = arith.subf %464, %460 : vector<8x16xf32>
    %466 = arith.mulf %465, %463 : vector<8x16xf32>
    %467 = arith.mulf %460, %439 : vector<8x16xf32>
    %468 = arith.addf %466, %467 : vector<8x16xf32>
    %cst_134 = arith.constant dense<0.000000e+00> : vector<8x16xf32>
    %469 = tpu.matmul %468, %341, %cst_134 {dimension_numbers = #tpu.dot_dimension_numbers<[1], [0], [0], [1], [0, 0, 1, 1], [], []>} : vector<8x16xf32>, vector<16x16xf32>, vector<8x16xf32> -> vector<8x16xf32>
    %470 = vector.broadcast %347 : vector<1x16xf32> to vector<8x16xf32>
    %471 = arith.addf %469, %470 : vector<8x16xf32>
    %cst_135 = arith.constant dense<0.000000e+00> : vector<8x16xf32>
    %472 = tpu.matmul %468, %343, %cst_135 {dimension_numbers = #tpu.dot_dimension_numbers<[1], [0], [0], [1], [0, 0, 1, 1], [], []>} : vector<8x16xf32>, vector<16x16xf32>, vector<8x16xf32> -> vector<8x16xf32>
    %473 = vector.broadcast %349 : vector<1x16xf32> to vector<8x16xf32>
    %474 = arith.addf %472, %473 : vector<8x16xf32>
    %cst_136 = arith.constant dense<0.000000e+00> : vector<8x16xf32>
    %475 = tpu.matmul %468, %345, %cst_136 {dimension_numbers = #tpu.dot_dimension_numbers<[1], [0], [0], [1], [0, 0, 1, 1], [], []>} : vector<8x16xf32>, vector<16x16xf32>, vector<8x16xf32> -> vector<8x16xf32>
    %476 = vector.broadcast %351 : vector<1x16xf32> to vector<8x16xf32>
    %477 = arith.addf %475, %476 : vector<8x16xf32>
    %478 = arith.addf %301, %471 : vector<8x16xf32>
    %479 = arith.negf %478 : vector<8x16xf32>
    %480 = math.exp %479 : vector<8x16xf32>
    %cst_137 = arith.constant 1.000000e+00 : f32
    %481 = vector.broadcast %cst_137 : f32 to vector<8x16xf32>
    %482 = arith.addf %481, %480 : vector<8x16xf32>
    %483 = arith.divf %481, %482 : vector<8x16xf32>
    %484 = arith.addf %318, %474 : vector<8x16xf32>
    %485 = arith.negf %484 : vector<8x16xf32>
    %486 = math.exp %485 : vector<8x16xf32>
    %cst_138 = arith.constant 1.000000e+00 : f32
    %487 = vector.broadcast %cst_138 : f32 to vector<8x16xf32>
    %488 = arith.addf %487, %486 : vector<8x16xf32>
    %489 = arith.divf %487, %488 : vector<8x16xf32>
    %490 = arith.mulf %483, %477 : vector<8x16xf32>
    %491 = arith.addf %335, %490 : vector<8x16xf32>
    %492 = math.tanh %491 : vector<8x16xf32>
    %cst_139 = arith.constant 1.000000e+00 : f32
    %493 = vector.broadcast %cst_139 : f32 to vector<8x16xf32>
    %494 = arith.subf %493, %489 : vector<8x16xf32>
    %495 = arith.mulf %494, %492 : vector<8x16xf32>
    %496 = arith.mulf %489, %468 : vector<8x16xf32>
    %497 = arith.addf %495, %496 : vector<8x16xf32>
    %cst_140 = arith.constant dense<0.000000e+00> : vector<8x16xf32>
    %498 = tpu.matmul %497, %341, %cst_140 {dimension_numbers = #tpu.dot_dimension_numbers<[1], [0], [0], [1], [0, 0, 1, 1], [], []>} : vector<8x16xf32>, vector<16x16xf32>, vector<8x16xf32> -> vector<8x16xf32>
    %499 = vector.broadcast %347 : vector<1x16xf32> to vector<8x16xf32>
    %500 = arith.addf %498, %499 : vector<8x16xf32>
    %cst_141 = arith.constant dense<0.000000e+00> : vector<8x16xf32>
    %501 = tpu.matmul %497, %343, %cst_141 {dimension_numbers = #tpu.dot_dimension_numbers<[1], [0], [0], [1], [0, 0, 1, 1], [], []>} : vector<8x16xf32>, vector<16x16xf32>, vector<8x16xf32> -> vector<8x16xf32>
    %502 = vector.broadcast %349 : vector<1x16xf32> to vector<8x16xf32>
    %503 = arith.addf %501, %502 : vector<8x16xf32>
    %cst_142 = arith.constant dense<0.000000e+00> : vector<8x16xf32>
    %504 = tpu.matmul %497, %345, %cst_142 {dimension_numbers = #tpu.dot_dimension_numbers<[1], [0], [0], [1], [0, 0, 1, 1], [], []>} : vector<8x16xf32>, vector<16x16xf32>, vector<8x16xf32> -> vector<8x16xf32>
    %505 = vector.broadcast %351 : vector<1x16xf32> to vector<8x16xf32>
    %506 = arith.addf %504, %505 : vector<8x16xf32>
    %507 = arith.addf %300, %500 : vector<8x16xf32>
    %508 = arith.negf %507 : vector<8x16xf32>
    %509 = math.exp %508 : vector<8x16xf32>
    %cst_143 = arith.constant 1.000000e+00 : f32
    %510 = vector.broadcast %cst_143 : f32 to vector<8x16xf32>
    %511 = arith.addf %510, %509 : vector<8x16xf32>
    %512 = arith.divf %510, %511 : vector<8x16xf32>
    %513 = arith.addf %317, %503 : vector<8x16xf32>
    %514 = arith.negf %513 : vector<8x16xf32>
    %515 = math.exp %514 : vector<8x16xf32>
    %cst_144 = arith.constant 1.000000e+00 : f32
    %516 = vector.broadcast %cst_144 : f32 to vector<8x16xf32>
    %517 = arith.addf %516, %515 : vector<8x16xf32>
    %518 = arith.divf %516, %517 : vector<8x16xf32>
    %519 = arith.mulf %512, %506 : vector<8x16xf32>
    %520 = arith.addf %334, %519 : vector<8x16xf32>
    %521 = math.tanh %520 : vector<8x16xf32>
    %cst_145 = arith.constant 1.000000e+00 : f32
    %522 = vector.broadcast %cst_145 : f32 to vector<8x16xf32>
    %523 = arith.subf %522, %518 : vector<8x16xf32>
    %524 = arith.mulf %523, %521 : vector<8x16xf32>
    %525 = arith.mulf %518, %497 : vector<8x16xf32>
    %526 = arith.addf %524, %525 : vector<8x16xf32>
    %527 = tpu.concatenate %143, %172, %201, %230, %259, %288 in 0 : vector<8x16xf32>, vector<8x16xf32>, vector<8x16xf32>, vector<8x16xf32>, vector<8x16xf32>, vector<8x16xf32> -> vector<48x16xf32>
    %528 = tpu.concatenate %526, %497, %468, %439, %410, %381 in 0 : vector<8x16xf32>, vector<8x16xf32>, vector<8x16xf32>, vector<8x16xf32>, vector<8x16xf32>, vector<8x16xf32> -> vector<48x16xf32>
    %529 = vector.extract_strided_slice %46 {offsets = [0, 0, 0], sizes = [1, 16, 16], strides = [1, 1, 1]} : vector<6x16x16xf32> to vector<1x16x16xf32>
    %530 = vector.shape_cast %529 : vector<1x16x16xf32> to vector<16x16xf32>
    %cst_146 = arith.constant dense<0.000000e+00> : vector<48x16xf32>
    %531 = tpu.matmul %527, %530, %cst_146 {dimension_numbers = #tpu.dot_dimension_numbers<[1], [0], [0], [1], [0, 0, 1, 1], [], []>} : vector<48x16xf32>, vector<16x16xf32>, vector<48x16xf32> -> vector<48x16xf32>
    %532 = vector.extract_strided_slice %47 {offsets = [0, 0, 0], sizes = [1, 16, 16], strides = [1, 1, 1]} : vector<6x16x16xf32> to vector<1x16x16xf32>
    %533 = vector.shape_cast %532 : vector<1x16x16xf32> to vector<16x16xf32>
    %cst_147 = arith.constant dense<0.000000e+00> : vector<48x16xf32>
    %534 = tpu.matmul %528, %533, %cst_147 {dimension_numbers = #tpu.dot_dimension_numbers<[1], [0], [0], [1], [0, 0, 1, 1], [], []>} : vector<48x16xf32>, vector<16x16xf32>, vector<48x16xf32> -> vector<48x16xf32>
    %535 = arith.addf %531, %534 : vector<48x16xf32>
    %536 = vector.extract_strided_slice %49 {offsets = [0, 0, 0], sizes = [1, 1, 16], strides = [1, 1, 1]} : vector<6x1x16xf32> to vector<1x1x16xf32>
    %537 = vector.shape_cast %536 : vector<1x1x16xf32> to vector<1x16xf32>
    %538 = vector.broadcast %537 : vector<1x16xf32> to vector<48x16xf32>
    %539 = arith.addf %535, %538 : vector<48x16xf32>
    %540 = vector.extract_strided_slice %539 {offsets = [0, 0], sizes = [8, 16], strides = [1, 1]} : vector<48x16xf32> to vector<8x16xf32>
    %541 = vector.extract_strided_slice %539 {offsets = [8, 0], sizes = [8, 16], strides = [1, 1]} : vector<48x16xf32> to vector<8x16xf32>
    %542 = vector.extract_strided_slice %539 {offsets = [16, 0], sizes = [8, 16], strides = [1, 1]} : vector<48x16xf32> to vector<8x16xf32>
    %543 = vector.extract_strided_slice %539 {offsets = [24, 0], sizes = [8, 16], strides = [1, 1]} : vector<48x16xf32> to vector<8x16xf32>
    %544 = vector.extract_strided_slice %539 {offsets = [32, 0], sizes = [8, 16], strides = [1, 1]} : vector<48x16xf32> to vector<8x16xf32>
    %545 = vector.extract_strided_slice %539 {offsets = [40, 0], sizes = [8, 16], strides = [1, 1]} : vector<48x16xf32> to vector<8x16xf32>
    %546 = vector.extract_strided_slice %46 {offsets = [1, 0, 0], sizes = [1, 16, 16], strides = [1, 1, 1]} : vector<6x16x16xf32> to vector<1x16x16xf32>
    %547 = vector.shape_cast %546 : vector<1x16x16xf32> to vector<16x16xf32>
    %cst_148 = arith.constant dense<0.000000e+00> : vector<48x16xf32>
    %548 = tpu.matmul %527, %547, %cst_148 {dimension_numbers = #tpu.dot_dimension_numbers<[1], [0], [0], [1], [0, 0, 1, 1], [], []>} : vector<48x16xf32>, vector<16x16xf32>, vector<48x16xf32> -> vector<48x16xf32>
    %549 = vector.extract_strided_slice %47 {offsets = [1, 0, 0], sizes = [1, 16, 16], strides = [1, 1, 1]} : vector<6x16x16xf32> to vector<1x16x16xf32>
    %550 = vector.shape_cast %549 : vector<1x16x16xf32> to vector<16x16xf32>
    %cst_149 = arith.constant dense<0.000000e+00> : vector<48x16xf32>
    %551 = tpu.matmul %528, %550, %cst_149 {dimension_numbers = #tpu.dot_dimension_numbers<[1], [0], [0], [1], [0, 0, 1, 1], [], []>} : vector<48x16xf32>, vector<16x16xf32>, vector<48x16xf32> -> vector<48x16xf32>
    %552 = arith.addf %548, %551 : vector<48x16xf32>
    %553 = vector.extract_strided_slice %49 {offsets = [1, 0, 0], sizes = [1, 1, 16], strides = [1, 1, 1]} : vector<6x1x16xf32> to vector<1x1x16xf32>
    %554 = vector.shape_cast %553 : vector<1x1x16xf32> to vector<1x16xf32>
    %555 = vector.broadcast %554 : vector<1x16xf32> to vector<48x16xf32>
    %556 = arith.addf %552, %555 : vector<48x16xf32>
    %557 = vector.extract_strided_slice %556 {offsets = [0, 0], sizes = [8, 16], strides = [1, 1]} : vector<48x16xf32> to vector<8x16xf32>
    %558 = vector.extract_strided_slice %556 {offsets = [8, 0], sizes = [8, 16], strides = [1, 1]} : vector<48x16xf32> to vector<8x16xf32>
    %559 = vector.extract_strided_slice %556 {offsets = [16, 0], sizes = [8, 16], strides = [1, 1]} : vector<48x16xf32> to vector<8x16xf32>
    %560 = vector.extract_strided_slice %556 {offsets = [24, 0], sizes = [8, 16], strides = [1, 1]} : vector<48x16xf32> to vector<8x16xf32>
    %561 = vector.extract_strided_slice %556 {offsets = [32, 0], sizes = [8, 16], strides = [1, 1]} : vector<48x16xf32> to vector<8x16xf32>
    %562 = vector.extract_strided_slice %556 {offsets = [40, 0], sizes = [8, 16], strides = [1, 1]} : vector<48x16xf32> to vector<8x16xf32>
    %563 = vector.extract_strided_slice %46 {offsets = [2, 0, 0], sizes = [1, 16, 16], strides = [1, 1, 1]} : vector<6x16x16xf32> to vector<1x16x16xf32>
    %564 = vector.shape_cast %563 : vector<1x16x16xf32> to vector<16x16xf32>
    %cst_150 = arith.constant dense<0.000000e+00> : vector<48x16xf32>
    %565 = tpu.matmul %527, %564, %cst_150 {dimension_numbers = #tpu.dot_dimension_numbers<[1], [0], [0], [1], [0, 0, 1, 1], [], []>} : vector<48x16xf32>, vector<16x16xf32>, vector<48x16xf32> -> vector<48x16xf32>
    %566 = vector.extract_strided_slice %47 {offsets = [2, 0, 0], sizes = [1, 16, 16], strides = [1, 1, 1]} : vector<6x16x16xf32> to vector<1x16x16xf32>
    %567 = vector.shape_cast %566 : vector<1x16x16xf32> to vector<16x16xf32>
    %cst_151 = arith.constant dense<0.000000e+00> : vector<48x16xf32>
    %568 = tpu.matmul %528, %567, %cst_151 {dimension_numbers = #tpu.dot_dimension_numbers<[1], [0], [0], [1], [0, 0, 1, 1], [], []>} : vector<48x16xf32>, vector<16x16xf32>, vector<48x16xf32> -> vector<48x16xf32>
    %569 = arith.addf %565, %568 : vector<48x16xf32>
    %570 = vector.extract_strided_slice %49 {offsets = [2, 0, 0], sizes = [1, 1, 16], strides = [1, 1, 1]} : vector<6x1x16xf32> to vector<1x1x16xf32>
    %571 = vector.shape_cast %570 : vector<1x1x16xf32> to vector<1x16xf32>
    %572 = vector.broadcast %571 : vector<1x16xf32> to vector<48x16xf32>
    %573 = arith.addf %569, %572 : vector<48x16xf32>
    %574 = vector.extract_strided_slice %573 {offsets = [0, 0], sizes = [8, 16], strides = [1, 1]} : vector<48x16xf32> to vector<8x16xf32>
    %575 = vector.extract_strided_slice %573 {offsets = [8, 0], sizes = [8, 16], strides = [1, 1]} : vector<48x16xf32> to vector<8x16xf32>
    %576 = vector.extract_strided_slice %573 {offsets = [16, 0], sizes = [8, 16], strides = [1, 1]} : vector<48x16xf32> to vector<8x16xf32>
    %577 = vector.extract_strided_slice %573 {offsets = [24, 0], sizes = [8, 16], strides = [1, 1]} : vector<48x16xf32> to vector<8x16xf32>
    %578 = vector.extract_strided_slice %573 {offsets = [32, 0], sizes = [8, 16], strides = [1, 1]} : vector<48x16xf32> to vector<8x16xf32>
    %579 = vector.extract_strided_slice %573 {offsets = [40, 0], sizes = [8, 16], strides = [1, 1]} : vector<48x16xf32> to vector<8x16xf32>
    %580 = vector.extract_strided_slice %48 {offsets = [0, 0, 0], sizes = [1, 16, 16], strides = [1, 1, 1]} : vector<6x16x16xf32> to vector<1x16x16xf32>
    %581 = vector.shape_cast %580 : vector<1x16x16xf32> to vector<16x16xf32>
    %582 = vector.extract_strided_slice %48 {offsets = [1, 0, 0], sizes = [1, 16, 16], strides = [1, 1, 1]} : vector<6x16x16xf32> to vector<1x16x16xf32>
    %583 = vector.shape_cast %582 : vector<1x16x16xf32> to vector<16x16xf32>
    %584 = vector.extract_strided_slice %48 {offsets = [2, 0, 0], sizes = [1, 16, 16], strides = [1, 1, 1]} : vector<6x16x16xf32> to vector<1x16x16xf32>
    %585 = vector.shape_cast %584 : vector<1x16x16xf32> to vector<16x16xf32>
    %586 = vector.extract_strided_slice %50 {offsets = [0, 0, 0], sizes = [1, 1, 16], strides = [1, 1, 1]} : vector<6x1x16xf32> to vector<1x1x16xf32>
    %587 = vector.shape_cast %586 : vector<1x1x16xf32> to vector<1x16xf32>
    %588 = vector.extract_strided_slice %50 {offsets = [1, 0, 0], sizes = [1, 1, 16], strides = [1, 1, 1]} : vector<6x1x16xf32> to vector<1x1x16xf32>
    %589 = vector.shape_cast %588 : vector<1x1x16xf32> to vector<1x16xf32>
    %590 = vector.extract_strided_slice %50 {offsets = [2, 0, 0], sizes = [1, 1, 16], strides = [1, 1, 1]} : vector<6x1x16xf32> to vector<1x1x16xf32>
    %591 = vector.shape_cast %590 : vector<1x1x16xf32> to vector<1x16xf32>
    %cst_152 = arith.constant 0.000000e+00 : f32
    %592 = vector.broadcast %cst_152 : f32 to vector<8x16xf32>
    %cst_153 = arith.constant dense<0.000000e+00> : vector<8x16xf32>
    %593 = tpu.matmul %592, %581, %cst_153 {dimension_numbers = #tpu.dot_dimension_numbers<[1], [0], [0], [1], [0, 0, 1, 1], [], []>} : vector<8x16xf32>, vector<16x16xf32>, vector<8x16xf32> -> vector<8x16xf32>
    %594 = vector.broadcast %587 : vector<1x16xf32> to vector<8x16xf32>
    %595 = arith.addf %593, %594 : vector<8x16xf32>
    %cst_154 = arith.constant dense<0.000000e+00> : vector<8x16xf32>
    %596 = tpu.matmul %592, %583, %cst_154 {dimension_numbers = #tpu.dot_dimension_numbers<[1], [0], [0], [1], [0, 0, 1, 1], [], []>} : vector<8x16xf32>, vector<16x16xf32>, vector<8x16xf32> -> vector<8x16xf32>
    %597 = vector.broadcast %589 : vector<1x16xf32> to vector<8x16xf32>
    %598 = arith.addf %596, %597 : vector<8x16xf32>
    %cst_155 = arith.constant dense<0.000000e+00> : vector<8x16xf32>
    %599 = tpu.matmul %592, %585, %cst_155 {dimension_numbers = #tpu.dot_dimension_numbers<[1], [0], [0], [1], [0, 0, 1, 1], [], []>} : vector<8x16xf32>, vector<16x16xf32>, vector<8x16xf32> -> vector<8x16xf32>
    %600 = vector.broadcast %591 : vector<1x16xf32> to vector<8x16xf32>
    %601 = arith.addf %599, %600 : vector<8x16xf32>
    %602 = arith.addf %540, %595 : vector<8x16xf32>
    %603 = arith.negf %602 : vector<8x16xf32>
    %604 = math.exp %603 : vector<8x16xf32>
    %cst_156 = arith.constant 1.000000e+00 : f32
    %605 = vector.broadcast %cst_156 : f32 to vector<8x16xf32>
    %606 = arith.addf %605, %604 : vector<8x16xf32>
    %607 = arith.divf %605, %606 : vector<8x16xf32>
    %608 = arith.addf %557, %598 : vector<8x16xf32>
    %609 = arith.negf %608 : vector<8x16xf32>
    %610 = math.exp %609 : vector<8x16xf32>
    %cst_157 = arith.constant 1.000000e+00 : f32
    %611 = vector.broadcast %cst_157 : f32 to vector<8x16xf32>
    %612 = arith.addf %611, %610 : vector<8x16xf32>
    %613 = arith.divf %611, %612 : vector<8x16xf32>
    %614 = arith.mulf %607, %601 : vector<8x16xf32>
    %615 = arith.addf %574, %614 : vector<8x16xf32>
    %616 = math.tanh %615 : vector<8x16xf32>
    %cst_158 = arith.constant 1.000000e+00 : f32
    %617 = vector.broadcast %cst_158 : f32 to vector<8x16xf32>
    %618 = arith.subf %617, %613 : vector<8x16xf32>
    %619 = arith.mulf %618, %616 : vector<8x16xf32>
    %620 = arith.mulf %613, %592 : vector<8x16xf32>
    %621 = arith.addf %619, %620 : vector<8x16xf32>
    %cst_159 = arith.constant dense<0.000000e+00> : vector<8x16xf32>
    %622 = tpu.matmul %621, %581, %cst_159 {dimension_numbers = #tpu.dot_dimension_numbers<[1], [0], [0], [1], [0, 0, 1, 1], [], []>} : vector<8x16xf32>, vector<16x16xf32>, vector<8x16xf32> -> vector<8x16xf32>
    %623 = vector.broadcast %587 : vector<1x16xf32> to vector<8x16xf32>
    %624 = arith.addf %622, %623 : vector<8x16xf32>
    %cst_160 = arith.constant dense<0.000000e+00> : vector<8x16xf32>
    %625 = tpu.matmul %621, %583, %cst_160 {dimension_numbers = #tpu.dot_dimension_numbers<[1], [0], [0], [1], [0, 0, 1, 1], [], []>} : vector<8x16xf32>, vector<16x16xf32>, vector<8x16xf32> -> vector<8x16xf32>
    %626 = vector.broadcast %589 : vector<1x16xf32> to vector<8x16xf32>
    %627 = arith.addf %625, %626 : vector<8x16xf32>
    %cst_161 = arith.constant dense<0.000000e+00> : vector<8x16xf32>
    %628 = tpu.matmul %621, %585, %cst_161 {dimension_numbers = #tpu.dot_dimension_numbers<[1], [0], [0], [1], [0, 0, 1, 1], [], []>} : vector<8x16xf32>, vector<16x16xf32>, vector<8x16xf32> -> vector<8x16xf32>
    %629 = vector.broadcast %591 : vector<1x16xf32> to vector<8x16xf32>
    %630 = arith.addf %628, %629 : vector<8x16xf32>
    %631 = arith.addf %541, %624 : vector<8x16xf32>
    %632 = arith.negf %631 : vector<8x16xf32>
    %633 = math.exp %632 : vector<8x16xf32>
    %cst_162 = arith.constant 1.000000e+00 : f32
    %634 = vector.broadcast %cst_162 : f32 to vector<8x16xf32>
    %635 = arith.addf %634, %633 : vector<8x16xf32>
    %636 = arith.divf %634, %635 : vector<8x16xf32>
    %637 = arith.addf %558, %627 : vector<8x16xf32>
    %638 = arith.negf %637 : vector<8x16xf32>
    %639 = math.exp %638 : vector<8x16xf32>
    %cst_163 = arith.constant 1.000000e+00 : f32
    %640 = vector.broadcast %cst_163 : f32 to vector<8x16xf32>
    %641 = arith.addf %640, %639 : vector<8x16xf32>
    %642 = arith.divf %640, %641 : vector<8x16xf32>
    %643 = arith.mulf %636, %630 : vector<8x16xf32>
    %644 = arith.addf %575, %643 : vector<8x16xf32>
    %645 = math.tanh %644 : vector<8x16xf32>
    %cst_164 = arith.constant 1.000000e+00 : f32
    %646 = vector.broadcast %cst_164 : f32 to vector<8x16xf32>
    %647 = arith.subf %646, %642 : vector<8x16xf32>
    %648 = arith.mulf %647, %645 : vector<8x16xf32>
    %649 = arith.mulf %642, %621 : vector<8x16xf32>
    %650 = arith.addf %648, %649 : vector<8x16xf32>
    %cst_165 = arith.constant dense<0.000000e+00> : vector<8x16xf32>
    %651 = tpu.matmul %650, %581, %cst_165 {dimension_numbers = #tpu.dot_dimension_numbers<[1], [0], [0], [1], [0, 0, 1, 1], [], []>} : vector<8x16xf32>, vector<16x16xf32>, vector<8x16xf32> -> vector<8x16xf32>
    %652 = vector.broadcast %587 : vector<1x16xf32> to vector<8x16xf32>
    %653 = arith.addf %651, %652 : vector<8x16xf32>
    %cst_166 = arith.constant dense<0.000000e+00> : vector<8x16xf32>
    %654 = tpu.matmul %650, %583, %cst_166 {dimension_numbers = #tpu.dot_dimension_numbers<[1], [0], [0], [1], [0, 0, 1, 1], [], []>} : vector<8x16xf32>, vector<16x16xf32>, vector<8x16xf32> -> vector<8x16xf32>
    %655 = vector.broadcast %589 : vector<1x16xf32> to vector<8x16xf32>
    %656 = arith.addf %654, %655 : vector<8x16xf32>
    %cst_167 = arith.constant dense<0.000000e+00> : vector<8x16xf32>
    %657 = tpu.matmul %650, %585, %cst_167 {dimension_numbers = #tpu.dot_dimension_numbers<[1], [0], [0], [1], [0, 0, 1, 1], [], []>} : vector<8x16xf32>, vector<16x16xf32>, vector<8x16xf32> -> vector<8x16xf32>
    %658 = vector.broadcast %591 : vector<1x16xf32> to vector<8x16xf32>
    %659 = arith.addf %657, %658 : vector<8x16xf32>
    %660 = arith.addf %542, %653 : vector<8x16xf32>
    %661 = arith.negf %660 : vector<8x16xf32>
    %662 = math.exp %661 : vector<8x16xf32>
    %cst_168 = arith.constant 1.000000e+00 : f32
    %663 = vector.broadcast %cst_168 : f32 to vector<8x16xf32>
    %664 = arith.addf %663, %662 : vector<8x16xf32>
    %665 = arith.divf %663, %664 : vector<8x16xf32>
    %666 = arith.addf %559, %656 : vector<8x16xf32>
    %667 = arith.negf %666 : vector<8x16xf32>
    %668 = math.exp %667 : vector<8x16xf32>
    %cst_169 = arith.constant 1.000000e+00 : f32
    %669 = vector.broadcast %cst_169 : f32 to vector<8x16xf32>
    %670 = arith.addf %669, %668 : vector<8x16xf32>
    %671 = arith.divf %669, %670 : vector<8x16xf32>
    %672 = arith.mulf %665, %659 : vector<8x16xf32>
    %673 = arith.addf %576, %672 : vector<8x16xf32>
    %674 = math.tanh %673 : vector<8x16xf32>
    %cst_170 = arith.constant 1.000000e+00 : f32
    %675 = vector.broadcast %cst_170 : f32 to vector<8x16xf32>
    %676 = arith.subf %675, %671 : vector<8x16xf32>
    %677 = arith.mulf %676, %674 : vector<8x16xf32>
    %678 = arith.mulf %671, %650 : vector<8x16xf32>
    %679 = arith.addf %677, %678 : vector<8x16xf32>
    %cst_171 = arith.constant dense<0.000000e+00> : vector<8x16xf32>
    %680 = tpu.matmul %679, %581, %cst_171 {dimension_numbers = #tpu.dot_dimension_numbers<[1], [0], [0], [1], [0, 0, 1, 1], [], []>} : vector<8x16xf32>, vector<16x16xf32>, vector<8x16xf32> -> vector<8x16xf32>
    %681 = vector.broadcast %587 : vector<1x16xf32> to vector<8x16xf32>
    %682 = arith.addf %680, %681 : vector<8x16xf32>
    %cst_172 = arith.constant dense<0.000000e+00> : vector<8x16xf32>
    %683 = tpu.matmul %679, %583, %cst_172 {dimension_numbers = #tpu.dot_dimension_numbers<[1], [0], [0], [1], [0, 0, 1, 1], [], []>} : vector<8x16xf32>, vector<16x16xf32>, vector<8x16xf32> -> vector<8x16xf32>
    %684 = vector.broadcast %589 : vector<1x16xf32> to vector<8x16xf32>
    %685 = arith.addf %683, %684 : vector<8x16xf32>
    %cst_173 = arith.constant dense<0.000000e+00> : vector<8x16xf32>
    %686 = tpu.matmul %679, %585, %cst_173 {dimension_numbers = #tpu.dot_dimension_numbers<[1], [0], [0], [1], [0, 0, 1, 1], [], []>} : vector<8x16xf32>, vector<16x16xf32>, vector<8x16xf32> -> vector<8x16xf32>
    %687 = vector.broadcast %591 : vector<1x16xf32> to vector<8x16xf32>
    %688 = arith.addf %686, %687 : vector<8x16xf32>
    %689 = arith.addf %543, %682 : vector<8x16xf32>
    %690 = arith.negf %689 : vector<8x16xf32>
    %691 = math.exp %690 : vector<8x16xf32>
    %cst_174 = arith.constant 1.000000e+00 : f32
    %692 = vector.broadcast %cst_174 : f32 to vector<8x16xf32>
    %693 = arith.addf %692, %691 : vector<8x16xf32>
    %694 = arith.divf %692, %693 : vector<8x16xf32>
    %695 = arith.addf %560, %685 : vector<8x16xf32>
    %696 = arith.negf %695 : vector<8x16xf32>
    %697 = math.exp %696 : vector<8x16xf32>
    %cst_175 = arith.constant 1.000000e+00 : f32
    %698 = vector.broadcast %cst_175 : f32 to vector<8x16xf32>
    %699 = arith.addf %698, %697 : vector<8x16xf32>
    %700 = arith.divf %698, %699 : vector<8x16xf32>
    %701 = arith.mulf %694, %688 : vector<8x16xf32>
    %702 = arith.addf %577, %701 : vector<8x16xf32>
    %703 = math.tanh %702 : vector<8x16xf32>
    %cst_176 = arith.constant 1.000000e+00 : f32
    %704 = vector.broadcast %cst_176 : f32 to vector<8x16xf32>
    %705 = arith.subf %704, %700 : vector<8x16xf32>
    %706 = arith.mulf %705, %703 : vector<8x16xf32>
    %707 = arith.mulf %700, %679 : vector<8x16xf32>
    %708 = arith.addf %706, %707 : vector<8x16xf32>
    %cst_177 = arith.constant dense<0.000000e+00> : vector<8x16xf32>
    %709 = tpu.matmul %708, %581, %cst_177 {dimension_numbers = #tpu.dot_dimension_numbers<[1], [0], [0], [1], [0, 0, 1, 1], [], []>} : vector<8x16xf32>, vector<16x16xf32>, vector<8x16xf32> -> vector<8x16xf32>
    %710 = vector.broadcast %587 : vector<1x16xf32> to vector<8x16xf32>
    %711 = arith.addf %709, %710 : vector<8x16xf32>
    %cst_178 = arith.constant dense<0.000000e+00> : vector<8x16xf32>
    %712 = tpu.matmul %708, %583, %cst_178 {dimension_numbers = #tpu.dot_dimension_numbers<[1], [0], [0], [1], [0, 0, 1, 1], [], []>} : vector<8x16xf32>, vector<16x16xf32>, vector<8x16xf32> -> vector<8x16xf32>
    %713 = vector.broadcast %589 : vector<1x16xf32> to vector<8x16xf32>
    %714 = arith.addf %712, %713 : vector<8x16xf32>
    %cst_179 = arith.constant dense<0.000000e+00> : vector<8x16xf32>
    %715 = tpu.matmul %708, %585, %cst_179 {dimension_numbers = #tpu.dot_dimension_numbers<[1], [0], [0], [1], [0, 0, 1, 1], [], []>} : vector<8x16xf32>, vector<16x16xf32>, vector<8x16xf32> -> vector<8x16xf32>
    %716 = vector.broadcast %591 : vector<1x16xf32> to vector<8x16xf32>
    %717 = arith.addf %715, %716 : vector<8x16xf32>
    %718 = arith.addf %544, %711 : vector<8x16xf32>
    %719 = arith.negf %718 : vector<8x16xf32>
    %720 = math.exp %719 : vector<8x16xf32>
    %cst_180 = arith.constant 1.000000e+00 : f32
    %721 = vector.broadcast %cst_180 : f32 to vector<8x16xf32>
    %722 = arith.addf %721, %720 : vector<8x16xf32>
    %723 = arith.divf %721, %722 : vector<8x16xf32>
    %724 = arith.addf %561, %714 : vector<8x16xf32>
    %725 = arith.negf %724 : vector<8x16xf32>
    %726 = math.exp %725 : vector<8x16xf32>
    %cst_181 = arith.constant 1.000000e+00 : f32
    %727 = vector.broadcast %cst_181 : f32 to vector<8x16xf32>
    %728 = arith.addf %727, %726 : vector<8x16xf32>
    %729 = arith.divf %727, %728 : vector<8x16xf32>
    %730 = arith.mulf %723, %717 : vector<8x16xf32>
    %731 = arith.addf %578, %730 : vector<8x16xf32>
    %732 = math.tanh %731 : vector<8x16xf32>
    %cst_182 = arith.constant 1.000000e+00 : f32
    %733 = vector.broadcast %cst_182 : f32 to vector<8x16xf32>
    %734 = arith.subf %733, %729 : vector<8x16xf32>
    %735 = arith.mulf %734, %732 : vector<8x16xf32>
    %736 = arith.mulf %729, %708 : vector<8x16xf32>
    %737 = arith.addf %735, %736 : vector<8x16xf32>
    %cst_183 = arith.constant dense<0.000000e+00> : vector<8x16xf32>
    %738 = tpu.matmul %737, %581, %cst_183 {dimension_numbers = #tpu.dot_dimension_numbers<[1], [0], [0], [1], [0, 0, 1, 1], [], []>} : vector<8x16xf32>, vector<16x16xf32>, vector<8x16xf32> -> vector<8x16xf32>
    %739 = vector.broadcast %587 : vector<1x16xf32> to vector<8x16xf32>
    %740 = arith.addf %738, %739 : vector<8x16xf32>
    %cst_184 = arith.constant dense<0.000000e+00> : vector<8x16xf32>
    %741 = tpu.matmul %737, %583, %cst_184 {dimension_numbers = #tpu.dot_dimension_numbers<[1], [0], [0], [1], [0, 0, 1, 1], [], []>} : vector<8x16xf32>, vector<16x16xf32>, vector<8x16xf32> -> vector<8x16xf32>
    %742 = vector.broadcast %589 : vector<1x16xf32> to vector<8x16xf32>
    %743 = arith.addf %741, %742 : vector<8x16xf32>
    %cst_185 = arith.constant dense<0.000000e+00> : vector<8x16xf32>
    %744 = tpu.matmul %737, %585, %cst_185 {dimension_numbers = #tpu.dot_dimension_numbers<[1], [0], [0], [1], [0, 0, 1, 1], [], []>} : vector<8x16xf32>, vector<16x16xf32>, vector<8x16xf32> -> vector<8x16xf32>
    %745 = vector.broadcast %591 : vector<1x16xf32> to vector<8x16xf32>
    %746 = arith.addf %744, %745 : vector<8x16xf32>
    %747 = arith.addf %545, %740 : vector<8x16xf32>
    %748 = arith.negf %747 : vector<8x16xf32>
    %749 = math.exp %748 : vector<8x16xf32>
    %cst_186 = arith.constant 1.000000e+00 : f32
    %750 = vector.broadcast %cst_186 : f32 to vector<8x16xf32>
    %751 = arith.addf %750, %749 : vector<8x16xf32>
    %752 = arith.divf %750, %751 : vector<8x16xf32>
    %753 = arith.addf %562, %743 : vector<8x16xf32>
    %754 = arith.negf %753 : vector<8x16xf32>
    %755 = math.exp %754 : vector<8x16xf32>
    %cst_187 = arith.constant 1.000000e+00 : f32
    %756 = vector.broadcast %cst_187 : f32 to vector<8x16xf32>
    %757 = arith.addf %756, %755 : vector<8x16xf32>
    %758 = arith.divf %756, %757 : vector<8x16xf32>
    %759 = arith.mulf %752, %746 : vector<8x16xf32>
    %760 = arith.addf %579, %759 : vector<8x16xf32>
    %761 = math.tanh %760 : vector<8x16xf32>
    %cst_188 = arith.constant 1.000000e+00 : f32
    %762 = vector.broadcast %cst_188 : f32 to vector<8x16xf32>
    %763 = arith.subf %762, %758 : vector<8x16xf32>
    %764 = arith.mulf %763, %761 : vector<8x16xf32>
    %765 = arith.mulf %758, %737 : vector<8x16xf32>
    %766 = arith.addf %764, %765 : vector<8x16xf32>
    %767 = vector.extract_strided_slice %46 {offsets = [3, 0, 0], sizes = [1, 16, 16], strides = [1, 1, 1]} : vector<6x16x16xf32> to vector<1x16x16xf32>
    %768 = vector.shape_cast %767 : vector<1x16x16xf32> to vector<16x16xf32>
    %cst_189 = arith.constant dense<0.000000e+00> : vector<48x16xf32>
    %769 = tpu.matmul %527, %768, %cst_189 {dimension_numbers = #tpu.dot_dimension_numbers<[1], [0], [0], [1], [0, 0, 1, 1], [], []>} : vector<48x16xf32>, vector<16x16xf32>, vector<48x16xf32> -> vector<48x16xf32>
    %770 = vector.extract_strided_slice %47 {offsets = [3, 0, 0], sizes = [1, 16, 16], strides = [1, 1, 1]} : vector<6x16x16xf32> to vector<1x16x16xf32>
    %771 = vector.shape_cast %770 : vector<1x16x16xf32> to vector<16x16xf32>
    %cst_190 = arith.constant dense<0.000000e+00> : vector<48x16xf32>
    %772 = tpu.matmul %528, %771, %cst_190 {dimension_numbers = #tpu.dot_dimension_numbers<[1], [0], [0], [1], [0, 0, 1, 1], [], []>} : vector<48x16xf32>, vector<16x16xf32>, vector<48x16xf32> -> vector<48x16xf32>
    %773 = arith.addf %769, %772 : vector<48x16xf32>
    %774 = vector.extract_strided_slice %49 {offsets = [3, 0, 0], sizes = [1, 1, 16], strides = [1, 1, 1]} : vector<6x1x16xf32> to vector<1x1x16xf32>
    %775 = vector.shape_cast %774 : vector<1x1x16xf32> to vector<1x16xf32>
    %776 = vector.broadcast %775 : vector<1x16xf32> to vector<48x16xf32>
    %777 = arith.addf %773, %776 : vector<48x16xf32>
    %778 = vector.extract_strided_slice %777 {offsets = [0, 0], sizes = [8, 16], strides = [1, 1]} : vector<48x16xf32> to vector<8x16xf32>
    %779 = vector.extract_strided_slice %777 {offsets = [8, 0], sizes = [8, 16], strides = [1, 1]} : vector<48x16xf32> to vector<8x16xf32>
    %780 = vector.extract_strided_slice %777 {offsets = [16, 0], sizes = [8, 16], strides = [1, 1]} : vector<48x16xf32> to vector<8x16xf32>
    %781 = vector.extract_strided_slice %777 {offsets = [24, 0], sizes = [8, 16], strides = [1, 1]} : vector<48x16xf32> to vector<8x16xf32>
    %782 = vector.extract_strided_slice %777 {offsets = [32, 0], sizes = [8, 16], strides = [1, 1]} : vector<48x16xf32> to vector<8x16xf32>
    %783 = vector.extract_strided_slice %777 {offsets = [40, 0], sizes = [8, 16], strides = [1, 1]} : vector<48x16xf32> to vector<8x16xf32>
    %784 = vector.extract_strided_slice %46 {offsets = [4, 0, 0], sizes = [1, 16, 16], strides = [1, 1, 1]} : vector<6x16x16xf32> to vector<1x16x16xf32>
    %785 = vector.shape_cast %784 : vector<1x16x16xf32> to vector<16x16xf32>
    %cst_191 = arith.constant dense<0.000000e+00> : vector<48x16xf32>
    %786 = tpu.matmul %527, %785, %cst_191 {dimension_numbers = #tpu.dot_dimension_numbers<[1], [0], [0], [1], [0, 0, 1, 1], [], []>} : vector<48x16xf32>, vector<16x16xf32>, vector<48x16xf32> -> vector<48x16xf32>
    %787 = vector.extract_strided_slice %47 {offsets = [4, 0, 0], sizes = [1, 16, 16], strides = [1, 1, 1]} : vector<6x16x16xf32> to vector<1x16x16xf32>
    %788 = vector.shape_cast %787 : vector<1x16x16xf32> to vector<16x16xf32>
    %cst_192 = arith.constant dense<0.000000e+00> : vector<48x16xf32>
    %789 = tpu.matmul %528, %788, %cst_192 {dimension_numbers = #tpu.dot_dimension_numbers<[1], [0], [0], [1], [0, 0, 1, 1], [], []>} : vector<48x16xf32>, vector<16x16xf32>, vector<48x16xf32> -> vector<48x16xf32>
    %790 = arith.addf %786, %789 : vector<48x16xf32>
    %791 = vector.extract_strided_slice %49 {offsets = [4, 0, 0], sizes = [1, 1, 16], strides = [1, 1, 1]} : vector<6x1x16xf32> to vector<1x1x16xf32>
    %792 = vector.shape_cast %791 : vector<1x1x16xf32> to vector<1x16xf32>
    %793 = vector.broadcast %792 : vector<1x16xf32> to vector<48x16xf32>
    %794 = arith.addf %790, %793 : vector<48x16xf32>
    %795 = vector.extract_strided_slice %794 {offsets = [0, 0], sizes = [8, 16], strides = [1, 1]} : vector<48x16xf32> to vector<8x16xf32>
    %796 = vector.extract_strided_slice %794 {offsets = [8, 0], sizes = [8, 16], strides = [1, 1]} : vector<48x16xf32> to vector<8x16xf32>
    %797 = vector.extract_strided_slice %794 {offsets = [16, 0], sizes = [8, 16], strides = [1, 1]} : vector<48x16xf32> to vector<8x16xf32>
    %798 = vector.extract_strided_slice %794 {offsets = [24, 0], sizes = [8, 16], strides = [1, 1]} : vector<48x16xf32> to vector<8x16xf32>
    %799 = vector.extract_strided_slice %794 {offsets = [32, 0], sizes = [8, 16], strides = [1, 1]} : vector<48x16xf32> to vector<8x16xf32>
    %800 = vector.extract_strided_slice %794 {offsets = [40, 0], sizes = [8, 16], strides = [1, 1]} : vector<48x16xf32> to vector<8x16xf32>
    %801 = vector.extract_strided_slice %46 {offsets = [5, 0, 0], sizes = [1, 16, 16], strides = [1, 1, 1]} : vector<6x16x16xf32> to vector<1x16x16xf32>
    %802 = vector.shape_cast %801 : vector<1x16x16xf32> to vector<16x16xf32>
    %cst_193 = arith.constant dense<0.000000e+00> : vector<48x16xf32>
    %803 = tpu.matmul %527, %802, %cst_193 {dimension_numbers = #tpu.dot_dimension_numbers<[1], [0], [0], [1], [0, 0, 1, 1], [], []>} : vector<48x16xf32>, vector<16x16xf32>, vector<48x16xf32> -> vector<48x16xf32>
    %804 = vector.extract_strided_slice %47 {offsets = [5, 0, 0], sizes = [1, 16, 16], strides = [1, 1, 1]} : vector<6x16x16xf32> to vector<1x16x16xf32>
    %805 = vector.shape_cast %804 : vector<1x16x16xf32> to vector<16x16xf32>
    %cst_194 = arith.constant dense<0.000000e+00> : vector<48x16xf32>
    %806 = tpu.matmul %528, %805, %cst_194 {dimension_numbers = #tpu.dot_dimension_numbers<[1], [0], [0], [1], [0, 0, 1, 1], [], []>} : vector<48x16xf32>, vector<16x16xf32>, vector<48x16xf32> -> vector<48x16xf32>
    %807 = arith.addf %803, %806 : vector<48x16xf32>
    %808 = vector.extract_strided_slice %49 {offsets = [5, 0, 0], sizes = [1, 1, 16], strides = [1, 1, 1]} : vector<6x1x16xf32> to vector<1x1x16xf32>
    %809 = vector.shape_cast %808 : vector<1x1x16xf32> to vector<1x16xf32>
    %810 = vector.broadcast %809 : vector<1x16xf32> to vector<48x16xf32>
    %811 = arith.addf %807, %810 : vector<48x16xf32>
    %812 = vector.extract_strided_slice %811 {offsets = [0, 0], sizes = [8, 16], strides = [1, 1]} : vector<48x16xf32> to vector<8x16xf32>
    %813 = vector.extract_strided_slice %811 {offsets = [8, 0], sizes = [8, 16], strides = [1, 1]} : vector<48x16xf32> to vector<8x16xf32>
    %814 = vector.extract_strided_slice %811 {offsets = [16, 0], sizes = [8, 16], strides = [1, 1]} : vector<48x16xf32> to vector<8x16xf32>
    %815 = vector.extract_strided_slice %811 {offsets = [24, 0], sizes = [8, 16], strides = [1, 1]} : vector<48x16xf32> to vector<8x16xf32>
    %816 = vector.extract_strided_slice %811 {offsets = [32, 0], sizes = [8, 16], strides = [1, 1]} : vector<48x16xf32> to vector<8x16xf32>
    %817 = vector.extract_strided_slice %811 {offsets = [40, 0], sizes = [8, 16], strides = [1, 1]} : vector<48x16xf32> to vector<8x16xf32>
    %818 = vector.extract_strided_slice %48 {offsets = [3, 0, 0], sizes = [1, 16, 16], strides = [1, 1, 1]} : vector<6x16x16xf32> to vector<1x16x16xf32>
    %819 = vector.shape_cast %818 : vector<1x16x16xf32> to vector<16x16xf32>
    %820 = vector.extract_strided_slice %48 {offsets = [4, 0, 0], sizes = [1, 16, 16], strides = [1, 1, 1]} : vector<6x16x16xf32> to vector<1x16x16xf32>
    %821 = vector.shape_cast %820 : vector<1x16x16xf32> to vector<16x16xf32>
    %822 = vector.extract_strided_slice %48 {offsets = [5, 0, 0], sizes = [1, 16, 16], strides = [1, 1, 1]} : vector<6x16x16xf32> to vector<1x16x16xf32>
    %823 = vector.shape_cast %822 : vector<1x16x16xf32> to vector<16x16xf32>
    %824 = vector.extract_strided_slice %50 {offsets = [3, 0, 0], sizes = [1, 1, 16], strides = [1, 1, 1]} : vector<6x1x16xf32> to vector<1x1x16xf32>
    %825 = vector.shape_cast %824 : vector<1x1x16xf32> to vector<1x16xf32>
    %826 = vector.extract_strided_slice %50 {offsets = [4, 0, 0], sizes = [1, 1, 16], strides = [1, 1, 1]} : vector<6x1x16xf32> to vector<1x1x16xf32>
    %827 = vector.shape_cast %826 : vector<1x1x16xf32> to vector<1x16xf32>
    %828 = vector.extract_strided_slice %50 {offsets = [5, 0, 0], sizes = [1, 1, 16], strides = [1, 1, 1]} : vector<6x1x16xf32> to vector<1x1x16xf32>
    %829 = vector.shape_cast %828 : vector<1x1x16xf32> to vector<1x16xf32>
    %cst_195 = arith.constant 0.000000e+00 : f32
    %830 = vector.broadcast %cst_195 : f32 to vector<8x16xf32>
    %cst_196 = arith.constant dense<0.000000e+00> : vector<8x16xf32>
    %831 = tpu.matmul %830, %819, %cst_196 {dimension_numbers = #tpu.dot_dimension_numbers<[1], [0], [0], [1], [0, 0, 1, 1], [], []>} : vector<8x16xf32>, vector<16x16xf32>, vector<8x16xf32> -> vector<8x16xf32>
    %832 = vector.broadcast %825 : vector<1x16xf32> to vector<8x16xf32>
    %833 = arith.addf %831, %832 : vector<8x16xf32>
    %cst_197 = arith.constant dense<0.000000e+00> : vector<8x16xf32>
    %834 = tpu.matmul %830, %821, %cst_197 {dimension_numbers = #tpu.dot_dimension_numbers<[1], [0], [0], [1], [0, 0, 1, 1], [], []>} : vector<8x16xf32>, vector<16x16xf32>, vector<8x16xf32> -> vector<8x16xf32>
    %835 = vector.broadcast %827 : vector<1x16xf32> to vector<8x16xf32>
    %836 = arith.addf %834, %835 : vector<8x16xf32>
    %cst_198 = arith.constant dense<0.000000e+00> : vector<8x16xf32>
    %837 = tpu.matmul %830, %823, %cst_198 {dimension_numbers = #tpu.dot_dimension_numbers<[1], [0], [0], [1], [0, 0, 1, 1], [], []>} : vector<8x16xf32>, vector<16x16xf32>, vector<8x16xf32> -> vector<8x16xf32>
    %838 = vector.broadcast %829 : vector<1x16xf32> to vector<8x16xf32>
    %839 = arith.addf %837, %838 : vector<8x16xf32>
    %840 = arith.addf %783, %833 : vector<8x16xf32>
    %841 = arith.negf %840 : vector<8x16xf32>
    %842 = math.exp %841 : vector<8x16xf32>
    %cst_199 = arith.constant 1.000000e+00 : f32
    %843 = vector.broadcast %cst_199 : f32 to vector<8x16xf32>
    %844 = arith.addf %843, %842 : vector<8x16xf32>
    %845 = arith.divf %843, %844 : vector<8x16xf32>
    %846 = arith.addf %800, %836 : vector<8x16xf32>
    %847 = arith.negf %846 : vector<8x16xf32>
    %848 = math.exp %847 : vector<8x16xf32>
    %cst_200 = arith.constant 1.000000e+00 : f32
    %849 = vector.broadcast %cst_200 : f32 to vector<8x16xf32>
    %850 = arith.addf %849, %848 : vector<8x16xf32>
    %851 = arith.divf %849, %850 : vector<8x16xf32>
    %852 = arith.mulf %845, %839 : vector<8x16xf32>
    %853 = arith.addf %817, %852 : vector<8x16xf32>
    %854 = math.tanh %853 : vector<8x16xf32>
    %cst_201 = arith.constant 1.000000e+00 : f32
    %855 = vector.broadcast %cst_201 : f32 to vector<8x16xf32>
    %856 = arith.subf %855, %851 : vector<8x16xf32>
    %857 = arith.mulf %856, %854 : vector<8x16xf32>
    %858 = arith.mulf %851, %830 : vector<8x16xf32>
    %859 = arith.addf %857, %858 : vector<8x16xf32>
    %cst_202 = arith.constant dense<0.000000e+00> : vector<8x16xf32>
    %860 = tpu.matmul %859, %819, %cst_202 {dimension_numbers = #tpu.dot_dimension_numbers<[1], [0], [0], [1], [0, 0, 1, 1], [], []>} : vector<8x16xf32>, vector<16x16xf32>, vector<8x16xf32> -> vector<8x16xf32>
    %861 = vector.broadcast %825 : vector<1x16xf32> to vector<8x16xf32>
    %862 = arith.addf %860, %861 : vector<8x16xf32>
    %cst_203 = arith.constant dense<0.000000e+00> : vector<8x16xf32>
    %863 = tpu.matmul %859, %821, %cst_203 {dimension_numbers = #tpu.dot_dimension_numbers<[1], [0], [0], [1], [0, 0, 1, 1], [], []>} : vector<8x16xf32>, vector<16x16xf32>, vector<8x16xf32> -> vector<8x16xf32>
    %864 = vector.broadcast %827 : vector<1x16xf32> to vector<8x16xf32>
    %865 = arith.addf %863, %864 : vector<8x16xf32>
    %cst_204 = arith.constant dense<0.000000e+00> : vector<8x16xf32>
    %866 = tpu.matmul %859, %823, %cst_204 {dimension_numbers = #tpu.dot_dimension_numbers<[1], [0], [0], [1], [0, 0, 1, 1], [], []>} : vector<8x16xf32>, vector<16x16xf32>, vector<8x16xf32> -> vector<8x16xf32>
    %867 = vector.broadcast %829 : vector<1x16xf32> to vector<8x16xf32>
    %868 = arith.addf %866, %867 : vector<8x16xf32>
    %869 = arith.addf %782, %862 : vector<8x16xf32>
    %870 = arith.negf %869 : vector<8x16xf32>
    %871 = math.exp %870 : vector<8x16xf32>
    %cst_205 = arith.constant 1.000000e+00 : f32
    %872 = vector.broadcast %cst_205 : f32 to vector<8x16xf32>
    %873 = arith.addf %872, %871 : vector<8x16xf32>
    %874 = arith.divf %872, %873 : vector<8x16xf32>
    %875 = arith.addf %799, %865 : vector<8x16xf32>
    %876 = arith.negf %875 : vector<8x16xf32>
    %877 = math.exp %876 : vector<8x16xf32>
    %cst_206 = arith.constant 1.000000e+00 : f32
    %878 = vector.broadcast %cst_206 : f32 to vector<8x16xf32>
    %879 = arith.addf %878, %877 : vector<8x16xf32>
    %880 = arith.divf %878, %879 : vector<8x16xf32>
    %881 = arith.mulf %874, %868 : vector<8x16xf32>
    %882 = arith.addf %816, %881 : vector<8x16xf32>
    %883 = math.tanh %882 : vector<8x16xf32>
    %cst_207 = arith.constant 1.000000e+00 : f32
    %884 = vector.broadcast %cst_207 : f32 to vector<8x16xf32>
    %885 = arith.subf %884, %880 : vector<8x16xf32>
    %886 = arith.mulf %885, %883 : vector<8x16xf32>
    %887 = arith.mulf %880, %859 : vector<8x16xf32>
    %888 = arith.addf %886, %887 : vector<8x16xf32>
    %cst_208 = arith.constant dense<0.000000e+00> : vector<8x16xf32>
    %889 = tpu.matmul %888, %819, %cst_208 {dimension_numbers = #tpu.dot_dimension_numbers<[1], [0], [0], [1], [0, 0, 1, 1], [], []>} : vector<8x16xf32>, vector<16x16xf32>, vector<8x16xf32> -> vector<8x16xf32>
    %890 = vector.broadcast %825 : vector<1x16xf32> to vector<8x16xf32>
    %891 = arith.addf %889, %890 : vector<8x16xf32>
    %cst_209 = arith.constant dense<0.000000e+00> : vector<8x16xf32>
    %892 = tpu.matmul %888, %821, %cst_209 {dimension_numbers = #tpu.dot_dimension_numbers<[1], [0], [0], [1], [0, 0, 1, 1], [], []>} : vector<8x16xf32>, vector<16x16xf32>, vector<8x16xf32> -> vector<8x16xf32>
    %893 = vector.broadcast %827 : vector<1x16xf32> to vector<8x16xf32>
    %894 = arith.addf %892, %893 : vector<8x16xf32>
    %cst_210 = arith.constant dense<0.000000e+00> : vector<8x16xf32>
    %895 = tpu.matmul %888, %823, %cst_210 {dimension_numbers = #tpu.dot_dimension_numbers<[1], [0], [0], [1], [0, 0, 1, 1], [], []>} : vector<8x16xf32>, vector<16x16xf32>, vector<8x16xf32> -> vector<8x16xf32>
    %896 = vector.broadcast %829 : vector<1x16xf32> to vector<8x16xf32>
    %897 = arith.addf %895, %896 : vector<8x16xf32>
    %898 = arith.addf %781, %891 : vector<8x16xf32>
    %899 = arith.negf %898 : vector<8x16xf32>
    %900 = math.exp %899 : vector<8x16xf32>
    %cst_211 = arith.constant 1.000000e+00 : f32
    %901 = vector.broadcast %cst_211 : f32 to vector<8x16xf32>
    %902 = arith.addf %901, %900 : vector<8x16xf32>
    %903 = arith.divf %901, %902 : vector<8x16xf32>
    %904 = arith.addf %798, %894 : vector<8x16xf32>
    %905 = arith.negf %904 : vector<8x16xf32>
    %906 = math.exp %905 : vector<8x16xf32>
    %cst_212 = arith.constant 1.000000e+00 : f32
    %907 = vector.broadcast %cst_212 : f32 to vector<8x16xf32>
    %908 = arith.addf %907, %906 : vector<8x16xf32>
    %909 = arith.divf %907, %908 : vector<8x16xf32>
    %910 = arith.mulf %903, %897 : vector<8x16xf32>
    %911 = arith.addf %815, %910 : vector<8x16xf32>
    %912 = math.tanh %911 : vector<8x16xf32>
    %cst_213 = arith.constant 1.000000e+00 : f32
    %913 = vector.broadcast %cst_213 : f32 to vector<8x16xf32>
    %914 = arith.subf %913, %909 : vector<8x16xf32>
    %915 = arith.mulf %914, %912 : vector<8x16xf32>
    %916 = arith.mulf %909, %888 : vector<8x16xf32>
    %917 = arith.addf %915, %916 : vector<8x16xf32>
    %cst_214 = arith.constant dense<0.000000e+00> : vector<8x16xf32>
    %918 = tpu.matmul %917, %819, %cst_214 {dimension_numbers = #tpu.dot_dimension_numbers<[1], [0], [0], [1], [0, 0, 1, 1], [], []>} : vector<8x16xf32>, vector<16x16xf32>, vector<8x16xf32> -> vector<8x16xf32>
    %919 = vector.broadcast %825 : vector<1x16xf32> to vector<8x16xf32>
    %920 = arith.addf %918, %919 : vector<8x16xf32>
    %cst_215 = arith.constant dense<0.000000e+00> : vector<8x16xf32>
    %921 = tpu.matmul %917, %821, %cst_215 {dimension_numbers = #tpu.dot_dimension_numbers<[1], [0], [0], [1], [0, 0, 1, 1], [], []>} : vector<8x16xf32>, vector<16x16xf32>, vector<8x16xf32> -> vector<8x16xf32>
    %922 = vector.broadcast %827 : vector<1x16xf32> to vector<8x16xf32>
    %923 = arith.addf %921, %922 : vector<8x16xf32>
    %cst_216 = arith.constant dense<0.000000e+00> : vector<8x16xf32>
    %924 = tpu.matmul %917, %823, %cst_216 {dimension_numbers = #tpu.dot_dimension_numbers<[1], [0], [0], [1], [0, 0, 1, 1], [], []>} : vector<8x16xf32>, vector<16x16xf32>, vector<8x16xf32> -> vector<8x16xf32>
    %925 = vector.broadcast %829 : vector<1x16xf32> to vector<8x16xf32>
    %926 = arith.addf %924, %925 : vector<8x16xf32>
    %927 = arith.addf %780, %920 : vector<8x16xf32>
    %928 = arith.negf %927 : vector<8x16xf32>
    %929 = math.exp %928 : vector<8x16xf32>
    %cst_217 = arith.constant 1.000000e+00 : f32
    %930 = vector.broadcast %cst_217 : f32 to vector<8x16xf32>
    %931 = arith.addf %930, %929 : vector<8x16xf32>
    %932 = arith.divf %930, %931 : vector<8x16xf32>
    %933 = arith.addf %797, %923 : vector<8x16xf32>
    %934 = arith.negf %933 : vector<8x16xf32>
    %935 = math.exp %934 : vector<8x16xf32>
    %cst_218 = arith.constant 1.000000e+00 : f32
    %936 = vector.broadcast %cst_218 : f32 to vector<8x16xf32>
    %937 = arith.addf %936, %935 : vector<8x16xf32>
    %938 = arith.divf %936, %937 : vector<8x16xf32>
    %939 = arith.mulf %932, %926 : vector<8x16xf32>
    %940 = arith.addf %814, %939 : vector<8x16xf32>
    %941 = math.tanh %940 : vector<8x16xf32>
    %cst_219 = arith.constant 1.000000e+00 : f32
    %942 = vector.broadcast %cst_219 : f32 to vector<8x16xf32>
    %943 = arith.subf %942, %938 : vector<8x16xf32>
    %944 = arith.mulf %943, %941 : vector<8x16xf32>
    %945 = arith.mulf %938, %917 : vector<8x16xf32>
    %946 = arith.addf %944, %945 : vector<8x16xf32>
    %cst_220 = arith.constant dense<0.000000e+00> : vector<8x16xf32>
    %947 = tpu.matmul %946, %819, %cst_220 {dimension_numbers = #tpu.dot_dimension_numbers<[1], [0], [0], [1], [0, 0, 1, 1], [], []>} : vector<8x16xf32>, vector<16x16xf32>, vector<8x16xf32> -> vector<8x16xf32>
    %948 = vector.broadcast %825 : vector<1x16xf32> to vector<8x16xf32>
    %949 = arith.addf %947, %948 : vector<8x16xf32>
    %cst_221 = arith.constant dense<0.000000e+00> : vector<8x16xf32>
    %950 = tpu.matmul %946, %821, %cst_221 {dimension_numbers = #tpu.dot_dimension_numbers<[1], [0], [0], [1], [0, 0, 1, 1], [], []>} : vector<8x16xf32>, vector<16x16xf32>, vector<8x16xf32> -> vector<8x16xf32>
    %951 = vector.broadcast %827 : vector<1x16xf32> to vector<8x16xf32>
    %952 = arith.addf %950, %951 : vector<8x16xf32>
    %cst_222 = arith.constant dense<0.000000e+00> : vector<8x16xf32>
    %953 = tpu.matmul %946, %823, %cst_222 {dimension_numbers = #tpu.dot_dimension_numbers<[1], [0], [0], [1], [0, 0, 1, 1], [], []>} : vector<8x16xf32>, vector<16x16xf32>, vector<8x16xf32> -> vector<8x16xf32>
    %954 = vector.broadcast %829 : vector<1x16xf32> to vector<8x16xf32>
    %955 = arith.addf %953, %954 : vector<8x16xf32>
    %956 = arith.addf %779, %949 : vector<8x16xf32>
    %957 = arith.negf %956 : vector<8x16xf32>
    %958 = math.exp %957 : vector<8x16xf32>
    %cst_223 = arith.constant 1.000000e+00 : f32
    %959 = vector.broadcast %cst_223 : f32 to vector<8x16xf32>
    %960 = arith.addf %959, %958 : vector<8x16xf32>
    %961 = arith.divf %959, %960 : vector<8x16xf32>
    %962 = arith.addf %796, %952 : vector<8x16xf32>
    %963 = arith.negf %962 : vector<8x16xf32>
    %964 = math.exp %963 : vector<8x16xf32>
    %cst_224 = arith.constant 1.000000e+00 : f32
    %965 = vector.broadcast %cst_224 : f32 to vector<8x16xf32>
    %966 = arith.addf %965, %964 : vector<8x16xf32>
    %967 = arith.divf %965, %966 : vector<8x16xf32>
    %968 = arith.mulf %961, %955 : vector<8x16xf32>
    %969 = arith.addf %813, %968 : vector<8x16xf32>
    %970 = math.tanh %969 : vector<8x16xf32>
    %cst_225 = arith.constant 1.000000e+00 : f32
    %971 = vector.broadcast %cst_225 : f32 to vector<8x16xf32>
    %972 = arith.subf %971, %967 : vector<8x16xf32>
    %973 = arith.mulf %972, %970 : vector<8x16xf32>
    %974 = arith.mulf %967, %946 : vector<8x16xf32>
    %975 = arith.addf %973, %974 : vector<8x16xf32>
    %cst_226 = arith.constant dense<0.000000e+00> : vector<8x16xf32>
    %976 = tpu.matmul %975, %819, %cst_226 {dimension_numbers = #tpu.dot_dimension_numbers<[1], [0], [0], [1], [0, 0, 1, 1], [], []>} : vector<8x16xf32>, vector<16x16xf32>, vector<8x16xf32> -> vector<8x16xf32>
    %977 = vector.broadcast %825 : vector<1x16xf32> to vector<8x16xf32>
    %978 = arith.addf %976, %977 : vector<8x16xf32>
    %cst_227 = arith.constant dense<0.000000e+00> : vector<8x16xf32>
    %979 = tpu.matmul %975, %821, %cst_227 {dimension_numbers = #tpu.dot_dimension_numbers<[1], [0], [0], [1], [0, 0, 1, 1], [], []>} : vector<8x16xf32>, vector<16x16xf32>, vector<8x16xf32> -> vector<8x16xf32>
    %980 = vector.broadcast %827 : vector<1x16xf32> to vector<8x16xf32>
    %981 = arith.addf %979, %980 : vector<8x16xf32>
    %cst_228 = arith.constant dense<0.000000e+00> : vector<8x16xf32>
    %982 = tpu.matmul %975, %823, %cst_228 {dimension_numbers = #tpu.dot_dimension_numbers<[1], [0], [0], [1], [0, 0, 1, 1], [], []>} : vector<8x16xf32>, vector<16x16xf32>, vector<8x16xf32> -> vector<8x16xf32>
    %983 = vector.broadcast %829 : vector<1x16xf32> to vector<8x16xf32>
    %984 = arith.addf %982, %983 : vector<8x16xf32>
    %985 = arith.addf %778, %978 : vector<8x16xf32>
    %986 = arith.negf %985 : vector<8x16xf32>
    %987 = math.exp %986 : vector<8x16xf32>
    %cst_229 = arith.constant 1.000000e+00 : f32
    %988 = vector.broadcast %cst_229 : f32 to vector<8x16xf32>
    %989 = arith.addf %988, %987 : vector<8x16xf32>
    %990 = arith.divf %988, %989 : vector<8x16xf32>
    %991 = arith.addf %795, %981 : vector<8x16xf32>
    %992 = arith.negf %991 : vector<8x16xf32>
    %993 = math.exp %992 : vector<8x16xf32>
    %cst_230 = arith.constant 1.000000e+00 : f32
    %994 = vector.broadcast %cst_230 : f32 to vector<8x16xf32>
    %995 = arith.addf %994, %993 : vector<8x16xf32>
    %996 = arith.divf %994, %995 : vector<8x16xf32>
    %997 = arith.mulf %990, %984 : vector<8x16xf32>
    %998 = arith.addf %812, %997 : vector<8x16xf32>
    %999 = math.tanh %998 : vector<8x16xf32>
    %cst_231 = arith.constant 1.000000e+00 : f32
    %1000 = vector.broadcast %cst_231 : f32 to vector<8x16xf32>
    %1001 = arith.subf %1000, %996 : vector<8x16xf32>
    %1002 = arith.mulf %1001, %999 : vector<8x16xf32>
    %1003 = arith.mulf %996, %975 : vector<8x16xf32>
    %1004 = arith.addf %1002, %1003 : vector<8x16xf32>
    %1005 = arith.maximumf %621, %650 : vector<8x16xf32>
    %1006 = arith.maximumf %1004, %975 : vector<8x16xf32>
    %1007 = arith.maximumf %1005, %679 : vector<8x16xf32>
    %1008 = arith.maximumf %1006, %946 : vector<8x16xf32>
    %1009 = arith.maximumf %1007, %708 : vector<8x16xf32>
    %1010 = arith.maximumf %1008, %917 : vector<8x16xf32>
    %1011 = arith.maximumf %1009, %737 : vector<8x16xf32>
    %1012 = arith.maximumf %1010, %888 : vector<8x16xf32>
    %1013 = arith.maximumf %1011, %766 : vector<8x16xf32>
    %1014 = arith.maximumf %1012, %859 : vector<8x16xf32>
    %1015 = arith.mulf %0, %2 : vector<8x32xf32>
    %1016 = arith.mulf %0, %5 : vector<8x32xf32>
    %1017 = arith.mulf %0, %7 : vector<8x32xf32>
    %1018 = arith.mulf %6, %9 : vector<8x32xf32>
    %cst_232 = arith.constant dense<0.000000e+00> : vector<8xf32>
    %1019 = vector.multi_reduction <add>, %0, %cst_232 [1] : vector<8x32xf32> to vector<8xf32>
    %1020 = vector.shape_cast %1019 : vector<8xf32> to vector<8x1xf32>
    %1021 = arith.mulf %0, %0 : vector<8x32xf32>
    %cst_233 = arith.constant dense<0.000000e+00> : vector<8xf32>
    %1022 = vector.multi_reduction <add>, %1021, %cst_233 [1] : vector<8x32xf32> to vector<8xf32>
    %1023 = vector.shape_cast %1022 : vector<8xf32> to vector<8x1xf32>
    %cst_234 = arith.constant dense<0.000000e+00> : vector<8xf32>
    %1024 = vector.multi_reduction <add>, %2, %cst_234 [1] : vector<8x32xf32> to vector<8xf32>
    %1025 = vector.shape_cast %1024 : vector<8xf32> to vector<8x1xf32>
    %1026 = arith.addf %1020, %1025 : vector<8x1xf32>
    %1027 = arith.mulf %2, %2 : vector<8x32xf32>
    %cst_235 = arith.constant dense<0.000000e+00> : vector<8xf32>
    %1028 = vector.multi_reduction <add>, %1027, %cst_235 [1] : vector<8x32xf32> to vector<8xf32>
    %1029 = vector.shape_cast %1028 : vector<8xf32> to vector<8x1xf32>
    %1030 = arith.addf %1023, %1029 : vector<8x1xf32>
    %cst_236 = arith.constant dense<0.000000e+00> : vector<8xf32>
    %1031 = vector.multi_reduction <add>, %3, %cst_236 [1] : vector<8x32xf32> to vector<8xf32>
    %1032 = vector.shape_cast %1031 : vector<8xf32> to vector<8x1xf32>
    %1033 = arith.addf %1026, %1032 : vector<8x1xf32>
    %1034 = arith.mulf %3, %3 : vector<8x32xf32>
    %cst_237 = arith.constant dense<0.000000e+00> : vector<8xf32>
    %1035 = vector.multi_reduction <add>, %1034, %cst_237 [1] : vector<8x32xf32> to vector<8xf32>
    %1036 = vector.shape_cast %1035 : vector<8xf32> to vector<8x1xf32>
    %1037 = arith.addf %1030, %1036 : vector<8x1xf32>
    %cst_238 = arith.constant dense<0.000000e+00> : vector<8xf32>
    %1038 = vector.multi_reduction <add>, %4, %cst_238 [1] : vector<8x32xf32> to vector<8xf32>
    %1039 = vector.shape_cast %1038 : vector<8xf32> to vector<8x1xf32>
    %1040 = arith.addf %1033, %1039 : vector<8x1xf32>
    %1041 = arith.mulf %4, %4 : vector<8x32xf32>
    %cst_239 = arith.constant dense<0.000000e+00> : vector<8xf32>
    %1042 = vector.multi_reduction <add>, %1041, %cst_239 [1] : vector<8x32xf32> to vector<8xf32>
    %1043 = vector.shape_cast %1042 : vector<8xf32> to vector<8x1xf32>
    %1044 = arith.addf %1037, %1043 : vector<8x1xf32>
    %cst_240 = arith.constant dense<0.000000e+00> : vector<8xf32>
    %1045 = vector.multi_reduction <add>, %5, %cst_240 [1] : vector<8x32xf32> to vector<8xf32>
    %1046 = vector.shape_cast %1045 : vector<8xf32> to vector<8x1xf32>
    %1047 = arith.addf %1040, %1046 : vector<8x1xf32>
    %1048 = arith.mulf %5, %5 : vector<8x32xf32>
    %cst_241 = arith.constant dense<0.000000e+00> : vector<8xf32>
    %1049 = vector.multi_reduction <add>, %1048, %cst_241 [1] : vector<8x32xf32> to vector<8xf32>
    %1050 = vector.shape_cast %1049 : vector<8xf32> to vector<8x1xf32>
    %1051 = arith.addf %1044, %1050 : vector<8x1xf32>
    %cst_242 = arith.constant dense<0.000000e+00> : vector<8xf32>
    %1052 = vector.multi_reduction <add>, %6, %cst_242 [1] : vector<8x32xf32> to vector<8xf32>
    %1053 = vector.shape_cast %1052 : vector<8xf32> to vector<8x1xf32>
    %1054 = arith.addf %1047, %1053 : vector<8x1xf32>
    %1055 = arith.mulf %6, %6 : vector<8x32xf32>
    %cst_243 = arith.constant dense<0.000000e+00> : vector<8xf32>
    %1056 = vector.multi_reduction <add>, %1055, %cst_243 [1] : vector<8x32xf32> to vector<8xf32>
    %1057 = vector.shape_cast %1056 : vector<8xf32> to vector<8x1xf32>
    %1058 = arith.addf %1051, %1057 : vector<8x1xf32>
    %1059 = arith.mulf %1054, %1054 : vector<8x1xf32>
    %1060 = arith.subf %1059, %1058 : vector<8x1xf32>
    %cst_244 = arith.constant 5.000000e-01 : f32
    %1061 = vector.broadcast %cst_244 : f32 to vector<8x1xf32>
    %1062 = arith.mulf %1061, %1060 : vector<8x1xf32>
    %1063 = arith.mulf %11, %11 : vector<8x8xf32>
    %c0_245 = arith.constant 0 : index
    %c0_246 = arith.constant 0 : index
    %c0_247 = arith.constant 0 : index
    %1064 = vector.load %arg25[%c0_245, %c0_246, %c0_247] : memref<14x32x64xf32, #tpu.memory_space<vmem>>, vector<14x32x64xf32>
    %1065 = vector.extract_strided_slice %1064 {offsets = [0, 0, 0], sizes = [1, 32, 64], strides = [1, 1, 1]} : vector<14x32x64xf32> to vector<1x32x64xf32>
    %1066 = vector.shape_cast %1065 : vector<1x32x64xf32> to vector<32x64xf32>
    %cst_248 = arith.constant dense<0.000000e+00> : vector<8x64xf32>
    %1067 = tpu.matmul %0, %1066, %cst_248 {dimension_numbers = #tpu.dot_dimension_numbers<[1], [0], [0], [1], [0, 0, 1, 1], [], []>} : vector<8x32xf32>, vector<32x64xf32>, vector<8x64xf32> -> vector<8x64xf32>
    %1068 = vector.extract_strided_slice %1064 {offsets = [1, 0, 0], sizes = [1, 32, 64], strides = [1, 1, 1]} : vector<14x32x64xf32> to vector<1x32x64xf32>
    %1069 = vector.shape_cast %1068 : vector<1x32x64xf32> to vector<32x64xf32>
    %cst_249 = arith.constant dense<0.000000e+00> : vector<8x64xf32>
    %1070 = tpu.matmul %2, %1069, %cst_249 {dimension_numbers = #tpu.dot_dimension_numbers<[1], [0], [0], [1], [0, 0, 1, 1], [], []>} : vector<8x32xf32>, vector<32x64xf32>, vector<8x64xf32> -> vector<8x64xf32>
    %1071 = arith.addf %1067, %1070 : vector<8x64xf32>
    %1072 = vector.extract_strided_slice %1064 {offsets = [2, 0, 0], sizes = [1, 32, 64], strides = [1, 1, 1]} : vector<14x32x64xf32> to vector<1x32x64xf32>
    %1073 = vector.shape_cast %1072 : vector<1x32x64xf32> to vector<32x64xf32>
    %cst_250 = arith.constant dense<0.000000e+00> : vector<8x64xf32>
    %1074 = tpu.matmul %3, %1073, %cst_250 {dimension_numbers = #tpu.dot_dimension_numbers<[1], [0], [0], [1], [0, 0, 1, 1], [], []>} : vector<8x32xf32>, vector<32x64xf32>, vector<8x64xf32> -> vector<8x64xf32>
    %1075 = arith.addf %1071, %1074 : vector<8x64xf32>
    %1076 = vector.extract_strided_slice %1064 {offsets = [3, 0, 0], sizes = [1, 32, 64], strides = [1, 1, 1]} : vector<14x32x64xf32> to vector<1x32x64xf32>
    %1077 = vector.shape_cast %1076 : vector<1x32x64xf32> to vector<32x64xf32>
    %cst_251 = arith.constant dense<0.000000e+00> : vector<8x64xf32>
    %1078 = tpu.matmul %4, %1077, %cst_251 {dimension_numbers = #tpu.dot_dimension_numbers<[1], [0], [0], [1], [0, 0, 1, 1], [], []>} : vector<8x32xf32>, vector<32x64xf32>, vector<8x64xf32> -> vector<8x64xf32>
    %1079 = arith.addf %1075, %1078 : vector<8x64xf32>
    %1080 = vector.extract_strided_slice %1064 {offsets = [4, 0, 0], sizes = [1, 32, 64], strides = [1, 1, 1]} : vector<14x32x64xf32> to vector<1x32x64xf32>
    %1081 = vector.shape_cast %1080 : vector<1x32x64xf32> to vector<32x64xf32>
    %cst_252 = arith.constant dense<0.000000e+00> : vector<8x64xf32>
    %1082 = tpu.matmul %5, %1081, %cst_252 {dimension_numbers = #tpu.dot_dimension_numbers<[1], [0], [0], [1], [0, 0, 1, 1], [], []>} : vector<8x32xf32>, vector<32x64xf32>, vector<8x64xf32> -> vector<8x64xf32>
    %1083 = arith.addf %1079, %1082 : vector<8x64xf32>
    %1084 = vector.extract_strided_slice %1064 {offsets = [5, 0, 0], sizes = [1, 32, 64], strides = [1, 1, 1]} : vector<14x32x64xf32> to vector<1x32x64xf32>
    %1085 = vector.shape_cast %1084 : vector<1x32x64xf32> to vector<32x64xf32>
    %cst_253 = arith.constant dense<0.000000e+00> : vector<8x64xf32>
    %1086 = tpu.matmul %6, %1085, %cst_253 {dimension_numbers = #tpu.dot_dimension_numbers<[1], [0], [0], [1], [0, 0, 1, 1], [], []>} : vector<8x32xf32>, vector<32x64xf32>, vector<8x64xf32> -> vector<8x64xf32>
    %1087 = arith.addf %1083, %1086 : vector<8x64xf32>
    %1088 = vector.extract_strided_slice %1064 {offsets = [6, 0, 0], sizes = [1, 32, 64], strides = [1, 1, 1]} : vector<14x32x64xf32> to vector<1x32x64xf32>
    %1089 = vector.shape_cast %1088 : vector<1x32x64xf32> to vector<32x64xf32>
    %cst_254 = arith.constant dense<0.000000e+00> : vector<8x64xf32>
    %1090 = tpu.matmul %1015, %1089, %cst_254 {dimension_numbers = #tpu.dot_dimension_numbers<[1], [0], [0], [1], [0, 0, 1, 1], [], []>} : vector<8x32xf32>, vector<32x64xf32>, vector<8x64xf32> -> vector<8x64xf32>
    %1091 = arith.addf %1087, %1090 : vector<8x64xf32>
    %1092 = vector.extract_strided_slice %1064 {offsets = [7, 0, 0], sizes = [1, 32, 64], strides = [1, 1, 1]} : vector<14x32x64xf32> to vector<1x32x64xf32>
    %1093 = vector.shape_cast %1092 : vector<1x32x64xf32> to vector<32x64xf32>
    %cst_255 = arith.constant dense<0.000000e+00> : vector<8x64xf32>
    %1094 = tpu.matmul %1016, %1093, %cst_255 {dimension_numbers = #tpu.dot_dimension_numbers<[1], [0], [0], [1], [0, 0, 1, 1], [], []>} : vector<8x32xf32>, vector<32x64xf32>, vector<8x64xf32> -> vector<8x64xf32>
    %1095 = arith.addf %1091, %1094 : vector<8x64xf32>
    %1096 = vector.extract_strided_slice %1064 {offsets = [8, 0, 0], sizes = [1, 32, 64], strides = [1, 1, 1]} : vector<14x32x64xf32> to vector<1x32x64xf32>
    %1097 = vector.shape_cast %1096 : vector<1x32x64xf32> to vector<32x64xf32>
    %cst_256 = arith.constant dense<0.000000e+00> : vector<8x64xf32>
    %1098 = tpu.matmul %7, %1097, %cst_256 {dimension_numbers = #tpu.dot_dimension_numbers<[1], [0], [0], [1], [0, 0, 1, 1], [], []>} : vector<8x32xf32>, vector<32x64xf32>, vector<8x64xf32> -> vector<8x64xf32>
    %1099 = arith.addf %1095, %1098 : vector<8x64xf32>
    %1100 = vector.extract_strided_slice %1064 {offsets = [9, 0, 0], sizes = [1, 32, 64], strides = [1, 1, 1]} : vector<14x32x64xf32> to vector<1x32x64xf32>
    %1101 = vector.shape_cast %1100 : vector<1x32x64xf32> to vector<32x64xf32>
    %cst_257 = arith.constant dense<0.000000e+00> : vector<8x64xf32>
    %1102 = tpu.matmul %8, %1101, %cst_257 {dimension_numbers = #tpu.dot_dimension_numbers<[1], [0], [0], [1], [0, 0, 1, 1], [], []>} : vector<8x32xf32>, vector<32x64xf32>, vector<8x64xf32> -> vector<8x64xf32>
    %1103 = arith.addf %1099, %1102 : vector<8x64xf32>
    %1104 = vector.extract_strided_slice %1064 {offsets = [10, 0, 0], sizes = [1, 32, 64], strides = [1, 1, 1]} : vector<14x32x64xf32> to vector<1x32x64xf32>
    %1105 = vector.shape_cast %1104 : vector<1x32x64xf32> to vector<32x64xf32>
    %cst_258 = arith.constant dense<0.000000e+00> : vector<8x64xf32>
    %1106 = tpu.matmul %9, %1105, %cst_258 {dimension_numbers = #tpu.dot_dimension_numbers<[1], [0], [0], [1], [0, 0, 1, 1], [], []>} : vector<8x32xf32>, vector<32x64xf32>, vector<8x64xf32> -> vector<8x64xf32>
    %1107 = arith.addf %1103, %1106 : vector<8x64xf32>
    %1108 = vector.extract_strided_slice %1064 {offsets = [11, 0, 0], sizes = [1, 32, 64], strides = [1, 1, 1]} : vector<14x32x64xf32> to vector<1x32x64xf32>
    %1109 = vector.shape_cast %1108 : vector<1x32x64xf32> to vector<32x64xf32>
    %cst_259 = arith.constant dense<0.000000e+00> : vector<8x64xf32>
    %1110 = tpu.matmul %1017, %1109, %cst_259 {dimension_numbers = #tpu.dot_dimension_numbers<[1], [0], [0], [1], [0, 0, 1, 1], [], []>} : vector<8x32xf32>, vector<32x64xf32>, vector<8x64xf32> -> vector<8x64xf32>
    %1111 = arith.addf %1107, %1110 : vector<8x64xf32>
    %1112 = vector.extract_strided_slice %1064 {offsets = [12, 0, 0], sizes = [1, 32, 64], strides = [1, 1, 1]} : vector<14x32x64xf32> to vector<1x32x64xf32>
    %1113 = vector.shape_cast %1112 : vector<1x32x64xf32> to vector<32x64xf32>
    %cst_260 = arith.constant dense<0.000000e+00> : vector<8x64xf32>
    %1114 = tpu.matmul %1018, %1113, %cst_260 {dimension_numbers = #tpu.dot_dimension_numbers<[1], [0], [0], [1], [0, 0, 1, 1], [], []>} : vector<8x32xf32>, vector<32x64xf32>, vector<8x64xf32> -> vector<8x64xf32>
    %1115 = arith.addf %1111, %1114 : vector<8x64xf32>
    %1116 = vector.extract_strided_slice %1064 {offsets = [13, 0, 0], sizes = [1, 32, 64], strides = [1, 1, 1]} : vector<14x32x64xf32> to vector<1x32x64xf32>
    %1117 = vector.shape_cast %1116 : vector<1x32x64xf32> to vector<32x64xf32>
    %cst_261 = arith.constant dense<0.000000e+00> : vector<8x64xf32>
    %1118 = tpu.matmul %10, %1117, %cst_261 {dimension_numbers = #tpu.dot_dimension_numbers<[1], [0], [0], [1], [0, 0, 1, 1], [], []>} : vector<8x32xf32>, vector<32x64xf32>, vector<8x64xf32> -> vector<8x64xf32>
    %1119 = arith.addf %1115, %1118 : vector<8x64xf32>
    %c0_262 = arith.constant 0 : index
    %c0_263 = arith.constant 0 : index
    %1120 = vector.load %arg26[%c0_262, %c0_263] : memref<16x64xf32, #tpu.memory_space<vmem>>, vector<16x64xf32>
    %cst_264 = arith.constant dense<0.000000e+00> : vector<8x64xf32>
    %1121 = tpu.matmul %1013, %1120, %cst_264 {dimension_numbers = #tpu.dot_dimension_numbers<[1], [0], [0], [1], [0, 0, 1, 1], [], []>} : vector<8x16xf32>, vector<16x64xf32>, vector<8x64xf32> -> vector<8x64xf32>
    %1122 = arith.addf %1119, %1121 : vector<8x64xf32>
    %c0_265 = arith.constant 0 : index
    %c0_266 = arith.constant 0 : index
    %1123 = vector.load %arg27[%c0_265, %c0_266] : memref<16x64xf32, #tpu.memory_space<vmem>>, vector<16x64xf32>
    %cst_267 = arith.constant dense<0.000000e+00> : vector<8x64xf32>
    %1124 = tpu.matmul %1014, %1123, %cst_267 {dimension_numbers = #tpu.dot_dimension_numbers<[1], [0], [0], [1], [0, 0, 1, 1], [], []>} : vector<8x16xf32>, vector<16x64xf32>, vector<8x64xf32> -> vector<8x64xf32>
    %1125 = arith.addf %1122, %1124 : vector<8x64xf32>
    %c0_268 = arith.constant 0 : index
    %c0_269 = arith.constant 0 : index
    %1126 = vector.load %arg28[%c0_268, %c0_269] : memref<1x64xf32, #tpu.memory_space<vmem>>, vector<1x64xf32>
    %1127 = vector.broadcast %1126 : vector<1x64xf32> to vector<8x64xf32>
    %1128 = arith.addf %1125, %1127 : vector<8x64xf32>
    %cst_270 = arith.constant 0.000000e+00 : f32
    %1129 = vector.broadcast %cst_270 : f32 to vector<8x64xf32>
    %1130 = arith.maximumf %1128, %1129 : vector<8x64xf32>
    %c0_271 = arith.constant 0 : index
    %c0_272 = arith.constant 0 : index
    %1131 = vector.load %arg29[%c0_271, %c0_272] : memref<8x32xf32, #tpu.memory_space<vmem>>, vector<8x32xf32>
    %cst_273 = arith.constant dense<0.000000e+00> : vector<8x32xf32>
    %1132 = tpu.matmul %11, %1131, %cst_273 {dimension_numbers = #tpu.dot_dimension_numbers<[1], [0], [0], [1], [0, 0, 1, 1], [], []>} : vector<8x8xf32>, vector<8x32xf32>, vector<8x32xf32> -> vector<8x32xf32>
    %c0_274 = arith.constant 0 : index
    %c0_275 = arith.constant 0 : index
    %1133 = vector.load %arg30[%c0_274, %c0_275] : memref<64x32xf32, #tpu.memory_space<vmem>>, vector<64x32xf32>
    %cst_276 = arith.constant dense<0.000000e+00> : vector<8x32xf32>
    %1134 = tpu.matmul %1130, %1133, %cst_276 {dimension_numbers = #tpu.dot_dimension_numbers<[1], [0], [0], [1], [0, 0, 1, 1], [], []>} : vector<8x64xf32>, vector<64x32xf32>, vector<8x32xf32> -> vector<8x32xf32>
    %1135 = arith.addf %1132, %1134 : vector<8x32xf32>
    %c0_277 = arith.constant 0 : index
    %c0_278 = arith.constant 0 : index
    %1136 = vector.load %arg31[%c0_277, %c0_278] : memref<1x32xf32, #tpu.memory_space<vmem>>, vector<1x32xf32>
    %1137 = vector.broadcast %1059 : vector<8x1xf32> to vector<8x32xf32>
    %1138 = vector.broadcast %1136 : vector<1x32xf32> to vector<8x32xf32>
    %1139 = arith.mulf %1137, %1138 : vector<8x32xf32>
    %1140 = arith.addf %1135, %1139 : vector<8x32xf32>
    %c0_279 = arith.constant 0 : index
    %c0_280 = arith.constant 0 : index
    %1141 = vector.load %arg32[%c0_279, %c0_280] : memref<1x32xf32, #tpu.memory_space<vmem>>, vector<1x32xf32>
    %1142 = vector.broadcast %1058 : vector<8x1xf32> to vector<8x32xf32>
    %1143 = vector.broadcast %1141 : vector<1x32xf32> to vector<8x32xf32>
    %1144 = arith.mulf %1142, %1143 : vector<8x32xf32>
    %1145 = arith.addf %1140, %1144 : vector<8x32xf32>
    %c0_281 = arith.constant 0 : index
    %c0_282 = arith.constant 0 : index
    %1146 = vector.load %arg33[%c0_281, %c0_282] : memref<1x32xf32, #tpu.memory_space<vmem>>, vector<1x32xf32>
    %1147 = vector.broadcast %1062 : vector<8x1xf32> to vector<8x32xf32>
    %1148 = vector.broadcast %1146 : vector<1x32xf32> to vector<8x32xf32>
    %1149 = arith.mulf %1147, %1148 : vector<8x32xf32>
    %1150 = arith.addf %1145, %1149 : vector<8x32xf32>
    %c0_283 = arith.constant 0 : index
    %c0_284 = arith.constant 0 : index
    %1151 = vector.load %arg34[%c0_283, %c0_284] : memref<8x32xf32, #tpu.memory_space<vmem>>, vector<8x32xf32>
    %cst_285 = arith.constant dense<0.000000e+00> : vector<8x32xf32>
    %1152 = tpu.matmul %1063, %1151, %cst_285 {dimension_numbers = #tpu.dot_dimension_numbers<[1], [0], [0], [1], [0, 0, 1, 1], [], []>} : vector<8x8xf32>, vector<8x32xf32>, vector<8x32xf32> -> vector<8x32xf32>
    %1153 = arith.addf %1150, %1152 : vector<8x32xf32>
    %c0_286 = arith.constant 0 : index
    %c0_287 = arith.constant 0 : index
    %1154 = vector.load %arg35[%c0_286, %c0_287] : memref<5x32xf32, #tpu.memory_space<vmem>>, vector<5x32xf32>
    %cst_288 = arith.constant dense<0.000000e+00> : vector<8x32xf32>
    %1155 = tpu.matmul %12, %1154, %cst_288 {dimension_numbers = #tpu.dot_dimension_numbers<[1], [0], [0], [1], [0, 0, 1, 1], [], []>} : vector<8x5xf32>, vector<5x32xf32>, vector<8x32xf32> -> vector<8x32xf32>
    %1156 = arith.addf %1153, %1155 : vector<8x32xf32>
    %c0_289 = arith.constant 0 : index
    %c0_290 = arith.constant 0 : index
    %1157 = vector.load %arg36[%c0_289, %c0_290] : memref<1x32xf32, #tpu.memory_space<vmem>>, vector<1x32xf32>
    %1158 = vector.broadcast %1157 : vector<1x32xf32> to vector<8x32xf32>
    %1159 = arith.addf %1156, %1158 : vector<8x32xf32>
    %cst_291 = arith.constant 0.000000e+00 : f32
    %1160 = vector.broadcast %cst_291 : f32 to vector<8x32xf32>
    %1161 = arith.maximumf %1159, %1160 : vector<8x32xf32>
    %c0_292 = arith.constant 0 : index
    %c0_293 = arith.constant 0 : index
    %1162 = vector.load %arg37[%c0_292, %c0_293] : memref<32x1xf32, #tpu.memory_space<vmem>>, vector<32x1xf32>
    %cst_294 = arith.constant dense<0.000000e+00> : vector<8x1xf32>
    %1163 = tpu.matmul %1161, %1162, %cst_294 {dimension_numbers = #tpu.dot_dimension_numbers<[1], [0], [0], [1], [0, 0, 1, 1], [], []>} : vector<8x32xf32>, vector<32x1xf32>, vector<8x1xf32> -> vector<8x1xf32>
    %c0_295 = arith.constant 0 : index
    %c0_296 = arith.constant 0 : index
    %1164 = vector.load %arg38[%c0_295, %c0_296] : memref<1x1xf32, #tpu.memory_space<vmem>>, vector<1x1xf32>
    %1165 = vector.broadcast %1164 : vector<1x1xf32> to vector<8x1xf32>
    %1166 = arith.addf %1163, %1165 : vector<8x1xf32>
    %1167 = arith.negf %1166 : vector<8x1xf32>
    %1168 = math.exp %1167 : vector<8x1xf32>
    %cst_297 = arith.constant 1.000000e+00 : f32
    %1169 = vector.broadcast %cst_297 : f32 to vector<8x1xf32>
    %1170 = arith.addf %1169, %1168 : vector<8x1xf32>
    %1171 = arith.divf %1169, %1170 : vector<8x1xf32>
    %c0_298 = arith.constant 0 : index
    %c0_299 = arith.constant 0 : index
    %1172 = vector.load %arg39[%c0_298, %c0_299] : memref<8x1xf32, #tpu.memory_space<vmem>>, vector<8x1xf32>
    tpu.vector_store %arg39[%c0_298, %c0_299], %1171 {strides = array<i32>} : memref<8x1xf32, #tpu.memory_space<vmem>>, vector<8x1xf32>,
    return
  }
  func.func @transform_0(%arg0: i32) -> (i32, i32) {
    %c0_i32 = arith.constant 0 : i32
    %c0_i32_0 = arith.constant 0 : i32
    return %arg0, %c0_i32 : i32, i32
  }
  func.func @transform_1(%arg0: i32) -> (i32, i32, i32) {
    %c0_i32 = arith.constant 0 : i32
    %c0_i32_0 = arith.constant 0 : i32
    %c0_i32_1 = arith.constant 0 : i32
    return %arg0, %c0_i32, %c0_i32_0 : i32, i32, i32
  }
  func.func @transform_2(%arg0: i32) -> (i32, i32) {
    %c0_i32 = arith.constant 0 : i32
    %c0_i32_0 = arith.constant 0 : i32
    return %arg0, %c0_i32 : i32, i32
  }
  func.func @transform_3(%arg0: i32) -> (i32, i32) {
    %c0_i32 = arith.constant 0 : i32
    %c0_i32_0 = arith.constant 0 : i32
    return %arg0, %c0_i32 : i32, i32
  }
  func.func @transform_4(%arg0: i32) -> (i32, i32) {
    %c0_i32 = arith.constant 0 : i32
    %c0_i32_0 = arith.constant 0 : i32
    return %arg0, %c0_i32 : i32, i32
  }
  func.func @transform_5(%arg0: i32) -> (i32, i32) {
    %c0_i32 = arith.constant 0 : i32
    %c0_i32_0 = arith.constant 0 : i32
    return %arg0, %c0_i32 : i32, i32
  }
  func.func @transform_6(%arg0: i32) -> (i32, i32, i32) {
    %c0_i32 = arith.constant 0 : i32
    %c0_i32_0 = arith.constant 0 : i32
    %c0_i32_1 = arith.constant 0 : i32
    return %c0_i32, %arg0, %c0_i32_0 : i32, i32, i32
  }
  func.func @transform_7(%arg0: i32) -> (i32, i32, i32) {
    %c0_i32 = arith.constant 0 : i32
    %c0_i32_0 = arith.constant 0 : i32
    %c0_i32_1 = arith.constant 0 : i32
    return %c0_i32, %arg0, %c0_i32_0 : i32, i32, i32
  }
  func.func @transform_8(%arg0: i32) -> (i32, i32) {
    %c0_i32 = arith.constant 0 : i32
    %c0_i32_0 = arith.constant 0 : i32
    return %arg0, %c0_i32 : i32, i32
  }
  func.func @transform_9(%arg0: i32) -> (i32, i32) {
    %c0_i32 = arith.constant 0 : i32
    %c0_i32_0 = arith.constant 0 : i32
    return %arg0, %c0_i32 : i32, i32
  }
  func.func @transform_10(%arg0: i32) -> (i32, i32) {
    %c0_i32 = arith.constant 0 : i32
    %c0_i32_0 = arith.constant 0 : i32
    return %arg0, %c0_i32 : i32, i32
  }
  func.func @transform_11(%arg0: i32) -> (i32, i32) {
    %c0_i32 = arith.constant 0 : i32
    %c0_i32_0 = arith.constant 0 : i32
    return %arg0, %c0_i32 : i32, i32
  }
  func.func @transform_12(%arg0: i32) -> (i32, i32) {
    %c0_i32 = arith.constant 0 : i32
    %c0_i32_0 = arith.constant 0 : i32
    return %arg0, %c0_i32 : i32, i32
  }
  func.func @transform_13(%arg0: i32) -> (i32, i32) {
    %c0_i32 = arith.constant 0 : i32
    %c0_i32_0 = arith.constant 0 : i32
    return %arg0, %c0_i32 : i32, i32
  }
  func.func @transform_14(%arg0: i32) -> (i32, i32, i32) {
    %c0_i32 = arith.constant 0 : i32
    %c0_i32_0 = arith.constant 0 : i32
    %c0_i32_1 = arith.constant 0 : i32
    %c0_i32_2 = arith.constant 0 : i32
    return %c0_i32, %c0_i32_0, %c0_i32_1 : i32, i32, i32
  }
  func.func @transform_15(%arg0: i32) -> (i32, i32, i32) {
    %c0_i32 = arith.constant 0 : i32
    %c0_i32_0 = arith.constant 0 : i32
    %c0_i32_1 = arith.constant 0 : i32
    %c0_i32_2 = arith.constant 0 : i32
    return %c0_i32, %c0_i32_0, %c0_i32_1 : i32, i32, i32
  }
  func.func @transform_16(%arg0: i32) -> (i32, i32, i32) {
    %c0_i32 = arith.constant 0 : i32
    %c0_i32_0 = arith.constant 0 : i32
    %c0_i32_1 = arith.constant 0 : i32
    %c0_i32_2 = arith.constant 0 : i32
    return %c0_i32, %c0_i32_0, %c0_i32_1 : i32, i32, i32
  }
  func.func @transform_17(%arg0: i32) -> (i32, i32, i32) {
    %c0_i32 = arith.constant 0 : i32
    %c0_i32_0 = arith.constant 0 : i32
    %c0_i32_1 = arith.constant 0 : i32
    %c0_i32_2 = arith.constant 0 : i32
    return %c0_i32, %c0_i32_0, %c0_i32_1 : i32, i32, i32
  }
  func.func @transform_18(%arg0: i32) -> (i32, i32, i32) {
    %c0_i32 = arith.constant 0 : i32
    %c0_i32_0 = arith.constant 0 : i32
    %c0_i32_1 = arith.constant 0 : i32
    %c0_i32_2 = arith.constant 0 : i32
    return %c0_i32, %c0_i32_0, %c0_i32_1 : i32, i32, i32
  }
  func.func @transform_19(%arg0: i32) -> (i32, i32, i32) {
    %c0_i32 = arith.constant 0 : i32
    %c0_i32_0 = arith.constant 0 : i32
    %c0_i32_1 = arith.constant 0 : i32
    %c0_i32_2 = arith.constant 0 : i32
    return %c0_i32, %c0_i32_0, %c0_i32_1 : i32, i32, i32
  }
  func.func @transform_20(%arg0: i32) -> (i32, i32, i32) {
    %c0_i32 = arith.constant 0 : i32
    %c0_i32_0 = arith.constant 0 : i32
    %c0_i32_1 = arith.constant 0 : i32
    %c0_i32_2 = arith.constant 0 : i32
    return %c0_i32, %c0_i32_0, %c0_i32_1 : i32, i32, i32
  }
  func.func @transform_21(%arg0: i32) -> (i32, i32, i32) {
    %c0_i32 = arith.constant 0 : i32
    %c0_i32_0 = arith.constant 0 : i32
    %c0_i32_1 = arith.constant 0 : i32
    %c0_i32_2 = arith.constant 0 : i32
    return %c0_i32, %c0_i32_0, %c0_i32_1 : i32, i32, i32
  }
  func.func @transform_22(%arg0: i32) -> (i32, i32, i32) {
    %c0_i32 = arith.constant 0 : i32
    %c0_i32_0 = arith.constant 0 : i32
    %c0_i32_1 = arith.constant 0 : i32
    %c0_i32_2 = arith.constant 0 : i32
    return %c0_i32, %c0_i32_0, %c0_i32_1 : i32, i32, i32
  }
  func.func @transform_23(%arg0: i32) -> (i32, i32, i32) {
    %c0_i32 = arith.constant 0 : i32
    %c0_i32_0 = arith.constant 0 : i32
    %c0_i32_1 = arith.constant 0 : i32
    %c0_i32_2 = arith.constant 0 : i32
    return %c0_i32, %c0_i32_0, %c0_i32_1 : i32, i32, i32
  }
  func.func @transform_24(%arg0: i32) -> (i32, i32, i32) {
    %c0_i32 = arith.constant 0 : i32
    %c0_i32_0 = arith.constant 0 : i32
    %c0_i32_1 = arith.constant 0 : i32
    %c0_i32_2 = arith.constant 0 : i32
    return %c0_i32, %c0_i32_0, %c0_i32_1 : i32, i32, i32
  }
  func.func @transform_25(%arg0: i32) -> (i32, i32) {
    %c0_i32 = arith.constant 0 : i32
    %c0_i32_0 = arith.constant 0 : i32
    %c0_i32_1 = arith.constant 0 : i32
    return %c0_i32, %c0_i32_0 : i32, i32
  }
  func.func @transform_26(%arg0: i32) -> (i32, i32) {
    %c0_i32 = arith.constant 0 : i32
    %c0_i32_0 = arith.constant 0 : i32
    %c0_i32_1 = arith.constant 0 : i32
    return %c0_i32, %c0_i32_0 : i32, i32
  }
  func.func @transform_27(%arg0: i32) -> (i32, i32) {
    %c0_i32 = arith.constant 0 : i32
    %c0_i32_0 = arith.constant 0 : i32
    %c0_i32_1 = arith.constant 0 : i32
    return %c0_i32, %c0_i32_0 : i32, i32
  }
  func.func @transform_28(%arg0: i32) -> (i32, i32) {
    %c0_i32 = arith.constant 0 : i32
    %c0_i32_0 = arith.constant 0 : i32
    %c0_i32_1 = arith.constant 0 : i32
    return %c0_i32, %c0_i32_0 : i32, i32
  }
  func.func @transform_29(%arg0: i32) -> (i32, i32) {
    %c0_i32 = arith.constant 0 : i32
    %c0_i32_0 = arith.constant 0 : i32
    %c0_i32_1 = arith.constant 0 : i32
    return %c0_i32, %c0_i32_0 : i32, i32
  }
  func.func @transform_30(%arg0: i32) -> (i32, i32) {
    %c0_i32 = arith.constant 0 : i32
    %c0_i32_0 = arith.constant 0 : i32
    %c0_i32_1 = arith.constant 0 : i32
    return %c0_i32, %c0_i32_0 : i32, i32
  }
  func.func @transform_31(%arg0: i32) -> (i32, i32) {
    %c0_i32 = arith.constant 0 : i32
    %c0_i32_0 = arith.constant 0 : i32
    %c0_i32_1 = arith.constant 0 : i32
    return %c0_i32, %c0_i32_0 : i32, i32
  }
  func.func @transform_32(%arg0: i32) -> (i32, i32) {
    %c0_i32 = arith.constant 0 : i32
    %c0_i32_0 = arith.constant 0 : i32
    %c0_i32_1 = arith.constant 0 : i32
    return %c0_i32, %c0_i32_0 : i32, i32
  }
  func.func @transform_33(%arg0: i32) -> (i32, i32) {
    %c0_i32 = arith.constant 0 : i32
    %c0_i32_0 = arith.constant 0 : i32
    %c0_i32_1 = arith.constant 0 : i32
    return %c0_i32, %c0_i32_0 : i32, i32
  }
  func.func @transform_34(%arg0: i32) -> (i32, i32) {
    %c0_i32 = arith.constant 0 : i32
    %c0_i32_0 = arith.constant 0 : i32
    %c0_i32_1 = arith.constant 0 : i32
    return %c0_i32, %c0_i32_0 : i32, i32
  }
  func.func @transform_35(%arg0: i32) -> (i32, i32) {
    %c0_i32 = arith.constant 0 : i32
    %c0_i32_0 = arith.constant 0 : i32
    %c0_i32_1 = arith.constant 0 : i32
    return %c0_i32, %c0_i32_0 : i32, i32
  }
  func.func @transform_36(%arg0: i32) -> (i32, i32) {
    %c0_i32 = arith.constant 0 : i32
    %c0_i32_0 = arith.constant 0 : i32
    %c0_i32_1 = arith.constant 0 : i32
    return %c0_i32, %c0_i32_0 : i32, i32
  }
  func.func @transform_37(%arg0: i32) -> (i32, i32) {
    %c0_i32 = arith.constant 0 : i32
    %c0_i32_0 = arith.constant 0 : i32
    %c0_i32_1 = arith.constant 0 : i32
    return %c0_i32, %c0_i32_0 : i32, i32
  }
  func.func @transform_38(%arg0: i32) -> (i32, i32) {
    %c0_i32 = arith.constant 0 : i32
    %c0_i32_0 = arith.constant 0 : i32
    return %arg0, %c0_i32 : i32, i32
  }
}

</mosaic_0001>

<llo_original>
// kernel: net_forward.1
$region0: #{net_forward.1}
  #allocation0 [shape = 'u32[]', space=smem, size = 0x4, offset = 0x4, fixed_abs, tag = 'smem constant byte address 0x4 - core index']
  #allocation1 [shape = 'u32[72,128]{1,0:T(1,128)}', space=vmem, size = 0x9000, scoped, tag = 'internal scratch']
  #allocation2 [shape = 'f32[1,1]{1,0:T(1,128)S(1)}', space=vmem, size = 0x200, scoped, tag = 'scoped memory for net_forward.1']
  %s0 = inlined_call_operand.smem [shape: u32[39], index: -1, kind: input, shape index: {}]
  %s1 = sld [smem:[%s0]]
  %s2 = scalar_lea.smem %s0, 1
  %s3 = sld [smem:[%s2]]
  %s4 = scalar_lea.smem %s0, 2
  %s5 = sld [smem:[%s4]]
  %s6 = scalar_lea.smem %s0, 3
  %s7 = sld [smem:[%s6]]
  %s8 = scalar_lea.smem %s0, 4
  %s9 = sld [smem:[%s8]]
  %s10 = scalar_lea.smem %s0, 5
  %s11 = sld [smem:[%s10]]
  %s12 = scalar_lea.smem %s0, 6
  %s13 = sld [smem:[%s12]]
  %s14 = scalar_lea.smem %s0, 7
  %s15 = sld [smem:[%s14]]
  %s16 = scalar_lea.smem %s0, 8
  %s17 = sld [smem:[%s16]]
  %s18 = scalar_lea.smem %s0, 9
  %s19 = sld [smem:[%s18]]
  %s20 = scalar_lea.smem %s0, 10
  %s21 = sld [smem:[%s20]]
  %s22 = scalar_lea.smem %s0, 11
  %s23 = sld [smem:[%s22]]
  %s24 = scalar_lea.smem %s0, 12
  %s25 = sld [smem:[%s24]]
  %s26 = scalar_lea.smem %s0, 13
  %s27 = sld [smem:[%s26]]
  %s28 = scalar_lea.smem %s0, 14
  %s29 = sld [smem:[%s28]]
  %s30 = scalar_lea.smem %s0, 15
  %s31 = sld [smem:[%s30]]
  %s32 = scalar_lea.smem %s0, 16
  %s33 = sld [smem:[%s32]]
  %s34 = scalar_lea.smem %s0, 17
  %s35 = sld [smem:[%s34]]
  %s36 = scalar_lea.smem %s0, 18
  %s37 = sld [smem:[%s36]]
  %s38 = scalar_lea.smem %s0, 19
  %s39 = sld [smem:[%s38]]
  %s40 = scalar_lea.smem %s0, 20
  %s41 = sld [smem:[%s40]]
  %s42 = scalar_lea.smem %s0, 21
  %s43 = sld [smem:[%s42]]
  %s44 = scalar_lea.smem %s0, 22
  %s45 = sld [smem:[%s44]]
  %s46 = scalar_lea.smem %s0, 23
  %s47 = sld [smem:[%s46]]
  %s48 = scalar_lea.smem %s0, 24
  %s49 = sld [smem:[%s48]]
  %s50 = scalar_lea.smem %s0, 25
  %s51 = sld [smem:[%s50]]
  %s52 = scalar_lea.smem %s0, 26
  %s53 = sld [smem:[%s52]]
  %s54 = scalar_lea.smem %s0, 27
  %s55 = sld [smem:[%s54]]
  %s56 = scalar_lea.smem %s0, 28
  %s57 = sld [smem:[%s56]]
  %s58 = scalar_lea.smem %s0, 29
  %s59 = sld [smem:[%s58]]
  %s60 = scalar_lea.smem %s0, 30
  %s61 = sld [smem:[%s60]]
  %s62 = scalar_lea.smem %s0, 31
  %s63 = sld [smem:[%s62]]
  %s64 = scalar_lea.smem %s0, 32
  %s65 = sld [smem:[%s64]]
  %s66 = scalar_lea.smem %s0, 33
  %s67 = sld [smem:[%s66]]
  %s68 = scalar_lea.smem %s0, 34
  %s69 = sld [smem:[%s68]]
  %s70 = scalar_lea.smem %s0, 35
  %s71 = sld [smem:[%s70]]
  %s72 = scalar_lea.smem %s0, 36
  %s73 = sld [smem:[%s72]]
  %s74 = scalar_lea.smem %s0, 37
  %s75 = sld [smem:[%s74]]
  %s76 = scalar_lea.smem %s0, 38
  %s77 = sld [smem:[%s76]]
  %s78 = sld [smem:[#allocation0]]
  $region162: #{net_forward.1} parent=0
    _
  %s80 = ssub.s32 1, %s78
  %s81 = scalar_select 0, %s80, %s78
  %v82 = vstv %s75
  %83 = vst [vmem:[#allocation2] sm:$0x1] %v82
  // Predicated region
  $region2: #{net_forward.1} parent=0 // pred_check
    _
  $region3: #{net_forward.1} parent=0 // pred_check_branch
    %85 = sbr.rel (0) target = $region5
  $region4: #{net_forward.1} parent=0 // pred_region
    _
  $region5: #{net_forward.1} parent=0 // pred_fallthru
    _
  // Predicated region
  $region6: #{net_forward.1} parent=0 // pred_check
    _
  $region7: #{net_forward.1} parent=0 // pred_check_branch
    %87 = sbr.rel (0) target = $region9
  $region8: #{net_forward.1} parent=0 // pred_region
    _
  $region9: #{net_forward.1} parent=0 // pred_fallthru
    _
  // Predicated region
  $region10: #{net_forward.1} parent=0 // pred_check
    _
  $region11: #{net_forward.1} parent=0 // pred_check_branch
    %89 = sbr.rel (0) target = $region13
  $region12: #{net_forward.1} parent=0 // pred_region
    _
  $region13: #{net_forward.1} parent=0 // pred_fallthru
    _
  // Predicated region
  $region14: #{net_forward.1} parent=0 // pred_check
    _
  $region15: #{net_forward.1} parent=0 // pred_check_branch
    %91 = sbr.rel (0) target = $region17
  $region16: #{net_forward.1} parent=0 // pred_region
    _
  $region17: #{net_forward.1} parent=0 // pred_fallthru
    _
  // Predicated region
  $region18: #{net_forward.1} parent=0 // pred_check
    _
  $region19: #{net_forward.1} parent=0 // pred_check_branch
    %93 = sbr.rel (0) target = $region21
  $region20: #{net_forward.1} parent=0 // pred_region
    _
  $region21: #{net_forward.1} parent=0 // pred_fallthru
    _
  // Predicated region
  $region22: #{net_forward.1} parent=0 // pred_check
    _
  $region23: #{net_forward.1} parent=0 // pred_check_branch
    %95 = sbr.rel (0) target = $region25
  $region24: #{net_forward.1} parent=0 // pred_region
    _
  $region25: #{net_forward.1} parent=0 // pred_fallthru
    _
  // Predicated region
  $region26: #{net_forward.1} parent=0 // pred_check
    _
  $region27: #{net_forward.1} parent=0 // pred_check_branch
    %97 = sbr.rel (0) target = $region29
  $region28: #{net_forward.1} parent=0 // pred_region
    _
  $region29: #{net_forward.1} parent=0 // pred_fallthru
    _
  // Predicated region
  $region30: #{net_forward.1} parent=0 // pred_check
    _
  $region31: #{net_forward.1} parent=0 // pred_check_branch
    %99 = sbr.rel (0) target = $region33
  $region32: #{net_forward.1} parent=0 // pred_region
    _
  $region33: #{net_forward.1} parent=0 // pred_fallthru
    _
  // Predicated region
  $region34: #{net_forward.1} parent=0 // pred_check
    _
  $region35: #{net_forward.1} parent=0 // pred_check_branch
    %101 = sbr.rel (0) target = $region37
  $region36: #{net_forward.1} parent=0 // pred_region
    _
  $region37: #{net_forward.1} parent=0 // pred_fallthru
    _
  // Predicated region
  $region38: #{net_forward.1} parent=0 // pred_check
    _
  $region39: #{net_forward.1} parent=0 // pred_check_branch
    %103 = sbr.rel (0) target = $region41
  $region40: #{net_forward.1} parent=0 // pred_region
    _
  $region41: #{net_forward.1} parent=0 // pred_fallthru
    _
  // Predicated region
  $region42: #{net_forward.1} parent=0 // pred_check
    _
  $region43: #{net_forward.1} parent=0 // pred_check_branch
    %105 = sbr.rel (0) target = $region45
  $region44: #{net_forward.1} parent=0 // pred_region
    _
  $region45: #{net_forward.1} parent=0 // pred_fallthru
    _
  // Predicated region
  $region46: #{net_forward.1} parent=0 // pred_check
    _
  $region47: #{net_forward.1} parent=0 // pred_check_branch
    %107 = sbr.rel (0) target = $region49
  $region48: #{net_forward.1} parent=0 // pred_region
    _
  $region49: #{net_forward.1} parent=0 // pred_fallthru
    _
  // Predicated region
  $region50: #{net_forward.1} parent=0 // pred_check
    _
  $region51: #{net_forward.1} parent=0 // pred_check_branch
    %109 = sbr.rel (0) target = $region53
  $region52: #{net_forward.1} parent=0 // pred_region
    _
  $region53: #{net_forward.1} parent=0 // pred_fallthru
    _
  // Predicated region
  $region54: #{net_forward.1} parent=0 // pred_check
    _
  $region55: #{net_forward.1} parent=0 // pred_check_branch
    %111 = sbr.rel (0) target = $region57
  $region56: #{net_forward.1} parent=0 // pred_region
    _
  $region57: #{net_forward.1} parent=0 // pred_fallthru
    _
  // Predicated region
  $region58: #{net_forward.1} parent=0 // pred_check
    _
  $region59: #{net_forward.1} parent=0 // pred_check_branch
    %113 = sbr.rel (0) target = $region61
  $region60: #{net_forward.1} parent=0 // pred_region
    _
  $region61: #{net_forward.1} parent=0 // pred_fallthru
    _
  // Predicated region
  $region62: #{net_forward.1} parent=0 // pred_check
    _
  $region63: #{net_forward.1} parent=0 // pred_check_branch
    %115 = sbr.rel (0) target = $region65
  $region64: #{net_forward.1} parent=0 // pred_region
    _
  $region65: #{net_forward.1} parent=0 // pred_fallthru
    _
  // Predicated region
  $region66: #{net_forward.1} parent=0 // pred_check
    _
  $region67: #{net_forward.1} parent=0 // pred_check_branch
    %117 = sbr.rel (0) target = $region69
  $region68: #{net_forward.1} parent=0 // pred_region
    _
  $region69: #{net_forward.1} parent=0 // pred_fallthru
    _
  // Predicated region
  $region70: #{net_forward.1} parent=0 // pred_check
    _
  $region71: #{net_forward.1} parent=0 // pred_check_branch
    %119 = sbr.rel (0) target = $region73
  $region72: #{net_forward.1} parent=0 // pred_region
    _
  $region73: #{net_forward.1} parent=0 // pred_fallthru
    _
  // Predicated region
  $region74: #{net_forward.1} parent=0 // pred_check
    _
  $region75: #{net_forward.1} parent=0 // pred_check_branch
    %121 = sbr.rel (0) target = $region77
  $region76: #{net_forward.1} parent=0 // pred_region
    _
  $region77: #{net_forward.1} parent=0 // pred_fallthru
    _
  // Predicated region
  $region78: #{net_forward.1} parent=0 // pred_check
    _
  $region79: #{net_forward.1} parent=0 // pred_check_branch
    %123 = sbr.rel (0) target = $region81
  $region80: #{net_forward.1} parent=0 // pred_region
    _
  $region81: #{net_forward.1} parent=0 // pred_fallthru
    _
  // Predicated region
  $region82: #{net_forward.1} parent=0 // pred_check
    _
  $region83: #{net_forward.1} parent=0 // pred_check_branch
    %125 = sbr.rel (0) target = $region85
  $region84: #{net_forward.1} parent=0 // pred_region
    _
  $region85: #{net_forward.1} parent=0 // pred_fallthru
    _
  // Predicated region
  $region86: #{net_forward.1} parent=0 // pred_check
    _
  $region87: #{net_forward.1} parent=0 // pred_check_branch
    %127 = sbr.rel (0) target = $region89
  $region88: #{net_forward.1} parent=0 // pred_region
    _
  $region89: #{net_forward.1} parent=0 // pred_fallthru
    _
  // Predicated region
  $region90: #{net_forward.1} parent=0 // pred_check
    _
  $region91: #{net_forward.1} parent=0 // pred_check_branch
    %129 = sbr.rel (0) target = $region93
  $region92: #{net_forward.1} parent=0 // pred_region
    _
  $region93: #{net_forward.1} parent=0 // pred_fallthru
    _
  // Predicated region
  $region94: #{net_forward.1} parent=0 // pred_check
    _
  $region95: #{net_forward.1} parent=0 // pred_check_branch
    %131 = sbr.rel (0) target = $region97
  $region96: #{net_forward.1} parent=0 // pred_region
    _
  $region97: #{net_forward.1} parent=0 // pred_fallthru
    _
  // Predicated region
  $region98: #{net_forward.1} parent=0 // pred_check
    _
  $region99: #{net_forward.1} parent=0 // pred_check_branch
    %133 = sbr.rel (0) target = $region101
  $region100: #{net_forward.1} parent=0 // pred_region
    _
  $region101: #{net_forward.1} parent=0 // pred_fallthru
    _
  // Predicated region
  $region102: #{net_forward.1} parent=0 // pred_check
    _
  $region103: #{net_forward.1} parent=0 // pred_check_branch
    %135 = sbr.rel (0) target = $region105
  $region104: #{net_forward.1} parent=0 // pred_region
    _
  $region105: #{net_forward.1} parent=0 // pred_fallthru
    _
  // Predicated region
  $region106: #{net_forward.1} parent=0 // pred_check
    _
  $region107: #{net_forward.1} parent=0 // pred_check_branch
    %137 = sbr.rel (0) target = $region109
  $region108: #{net_forward.1} parent=0 // pred_region
    _
  $region109: #{net_forward.1} parent=0 // pred_fallthru
    _
  // Predicated region
  $region110: #{net_forward.1} parent=0 // pred_check
    _
  $region111: #{net_forward.1} parent=0 // pred_check_branch
    %139 = sbr.rel (0) target = $region113
  $region112: #{net_forward.1} parent=0 // pred_region
    _
  $region113: #{net_forward.1} parent=0 // pred_fallthru
    _
  // Predicated region
  $region114: #{net_forward.1} parent=0 // pred_check
    _
  $region115: #{net_forward.1} parent=0 // pred_check_branch
    %141 = sbr.rel (0) target = $region117
  $region116: #{net_forward.1} parent=0 // pred_region
    _
  $region117: #{net_forward.1} parent=0 // pred_fallthru
    _
  // Predicated region
  $region118: #{net_forward.1} parent=0 // pred_check
    _
  $region119: #{net_forward.1} parent=0 // pred_check_branch
    %143 = sbr.rel (0) target = $region121
  $region120: #{net_forward.1} parent=0 // pred_region
    _
  $region121: #{net_forward.1} parent=0 // pred_fallthru
    _
  // Predicated region
  $region122: #{net_forward.1} parent=0 // pred_check
    _
  $region123: #{net_forward.1} parent=0 // pred_check_branch
    %145 = sbr.rel (0) target = $region125
  $region124: #{net_forward.1} parent=0 // pred_region
    _
  $region125: #{net_forward.1} parent=0 // pred_fallthru
    _
  // Predicated region
  $region126: #{net_forward.1} parent=0 // pred_check
    _
  $region127: #{net_forward.1} parent=0 // pred_check_branch
    %147 = sbr.rel (0) target = $region129
  $region128: #{net_forward.1} parent=0 // pred_region
    _
  $region129: #{net_forward.1} parent=0 // pred_fallthru
    _
  // Predicated region
  $region130: #{net_forward.1} parent=0 // pred_check
    _
  $region131: #{net_forward.1} parent=0 // pred_check_branch
    %149 = sbr.rel (0) target = $region133
  $region132: #{net_forward.1} parent=0 // pred_region
    _
  $region133: #{net_forward.1} parent=0 // pred_fallthru
    _
  // Predicated region
  $region134: #{net_forward.1} parent=0 // pred_check
    _
  $region135: #{net_forward.1} parent=0 // pred_check_branch
    %151 = sbr.rel (0) target = $region137
  $region136: #{net_forward.1} parent=0 // pred_region
    _
  $region137: #{net_forward.1} parent=0 // pred_fallthru
    _
  // Predicated region
  $region138: #{net_forward.1} parent=0 // pred_check
    _
  $region139: #{net_forward.1} parent=0 // pred_check_branch
    %153 = sbr.rel (0) target = $region141
  $region140: #{net_forward.1} parent=0 // pred_region
    _
  $region141: #{net_forward.1} parent=0 // pred_fallthru
    _
  // Predicated region
  $region142: #{net_forward.1} parent=0 // pred_check
    _
  $region143: #{net_forward.1} parent=0 // pred_check_branch
    %155 = sbr.rel (0) target = $region145
  $region144: #{net_forward.1} parent=0 // pred_region
    _
  $region145: #{net_forward.1} parent=0 // pred_fallthru
    _
  // Predicated region
  $region146: #{net_forward.1} parent=0 // pred_check
    _
  $region147: #{net_forward.1} parent=0 // pred_check_branch
    %157 = sbr.rel (0) target = $region149
  $region148: #{net_forward.1} parent=0 // pred_region
    _
  $region149: #{net_forward.1} parent=0 // pred_fallthru
    _
  // Predicated region
  $region150: #{net_forward.1} parent=0 // pred_check
    _
  $region151: #{net_forward.1} parent=0 // pred_check_branch
    %159 = sbr.rel (0) target = $region153
  $region152: #{net_forward.1} parent=0 // pred_region
    _
  $region153: #{net_forward.1} parent=0 // pred_fallthru
    _
  %v160 = vld [vmem:[%s1] sm:$0xff]
  %v161 = vld [vmem:[%s3] sm:$0xff]
  %v162 = vld [vmem:[%s3 + $0x8] sm:$0xff]
  %v163 = vld [vmem:[%s3 + $0x10] sm:$0xff]
  %v164 = vld [vmem:[%s3 + $0x18] sm:$0xff]
  %v165 = vld [vmem:[%s3 + $0x20] sm:$0xff]
  %v166 = vld [vmem:[%s3 + $0x28] sm:$0xff]
  %v167 = vld [vmem:[%s3 + $0x30] sm:$0xff]
  %v168 = vld [vmem:[%s3 + $0x38] sm:$0xff]
  %vm169 = vcmask 261120
  %v170 = vsel %vm169, %v161, -inf
  %v171 = vrot.slane %v170, 4
  %v172 = vmax.f32 %v170, %v171
  %v173 = vrot.slane %v172, 2
  %v174 = vmax.f32 %v172, %v173
  %v175 = vrot.slane %v174, 1
  %v176 = vmax.f32 %v174, %v175
  %v177 = vsel %vm169, %v162, -inf
  %v178 = vrot.slane %v177, 4
  %v179 = vmax.f32 %v177, %v178
  %v180 = vrot.slane %v179, 2
  %v181 = vmax.f32 %v179, %v180
  %v182 = vrot.slane %v181, 1
  %v183 = vmax.f32 %v181, %v182
  %v184 = vsel %vm169, %v163, -inf
  %v185 = vrot.slane %v184, 4
  %v186 = vmax.f32 %v184, %v185
  %v187 = vrot.slane %v186, 2
  %v188 = vmax.f32 %v186, %v187
  %v189 = vrot.slane %v188, 1
  %v190 = vmax.f32 %v188, %v189
  %v191 = vsel %vm169, %v164, -inf
  %v192 = vrot.slane %v191, 4
  %v193 = vmax.f32 %v191, %v192
  %v194 = vrot.slane %v193, 2
  %v195 = vmax.f32 %v193, %v194
  %v196 = vrot.slane %v195, 1
  %v197 = vmax.f32 %v195, %v196
  %v198 = vsel %vm169, %v165, -inf
  %v199 = vrot.slane %v198, 4
  %v200 = vmax.f32 %v198, %v199
  %v201 = vrot.slane %v200, 2
  %v202 = vmax.f32 %v200, %v201
  %v203 = vrot.slane %v202, 1
  %v204 = vmax.f32 %v202, %v203
  %v205 = vsel %vm169, %v166, -inf
  %v206 = vrot.slane %v205, 4
  %v207 = vmax.f32 %v205, %v206
  %v208 = vrot.slane %v207, 2
  %v209 = vmax.f32 %v207, %v208
  %v210 = vrot.slane %v209, 1
  %v211 = vmax.f32 %v209, %v210
  %v212 = vsel %vm169, %v167, -inf
  %v213 = vrot.slane %v212, 4
  %v214 = vmax.f32 %v212, %v213
  %v215 = vrot.slane %v214, 2
  %v216 = vmax.f32 %v214, %v215
  %v217 = vrot.slane %v216, 1
  %v218 = vmax.f32 %v216, %v217
  %v219 = vsel %vm169, %v168, -inf
  %v220 = vrot.slane %v219, 4
  %v221 = vmax.f32 %v219, %v220
  %v222 = vrot.slane %v221, 2
  %v223 = vmax.f32 %v221, %v222
  %v224 = vrot.slane %v223, 1
  %v225 = vmax.f32 %v223, %v224
  %v226 = vld [vmem:[%s5] sm:$0xff]
  %v227 = vld [vmem:[%s7] sm:$0xff]
  %v228 = vld [vmem:[%s9] sm:$0xff]
  %v229 = vld [vmem:[%s11] sm:$0xff]
  %v230 = vld [vmem:[%s17] sm:$0xff]
  %v231 = vld [vmem:[%s19] sm:$0xff]
  %v232 = vld [vmem:[%s21] sm:$0xff]
  %v233 = vld [vmem:[%s23] sm:$0xff]
  %v234 = vld [vmem:[%s25] sm:$0xff]
  %v235 = vld [vmem:[%s27] sm:$0xff]
  %v236 = vld [vmem:[%s13] sm:$0xff]
  %v237 = vld [vmem:[%s13 + $0x8] sm:$0xff]
  %v238 = vld [vmem:[%s13 + $0x10] sm:$0xff]
  %v239 = vld [vmem:[%s13 + $0x18] sm:$0xff]
  %v240 = vld [vmem:[%s13 + $0x20] sm:$0xff]
  %v241 = vld [vmem:[%s13 + $0x28] sm:$0xff]
  %v242 = vld [vmem:[%s15] sm:$0xff]
  %v243 = vld [vmem:[%s15 + $0x8] sm:$0xff]
  %v244 = vld [vmem:[%s15 + $0x10] sm:$0xff]
  %v245 = vld [vmem:[%s15 + $0x18] sm:$0xff]
  %v246 = vld [vmem:[%s15 + $0x20] sm:$0xff]
  %v247 = vld [vmem:[%s15 + $0x28] sm:$0xff]
  %v248 = vld [vmem:[%s29] sm:$0xff]
  %v249 = vld [vmem:[%s29 + $0x8] sm:$0xff]
  %v250 = vld [vmem:[%s29 + $0x10] sm:$0xff]
  %v251 = vld [vmem:[%s29 + $0x18] sm:$0xff]
  %v252 = vld [vmem:[%s29 + $0x20] sm:$0xff]
  %v253 = vld [vmem:[%s29 + $0x28] sm:$0xff]
  %v254 = vld [vmem:[%s29 + $0x30] sm:$0xff]
  %v255 = vld [vmem:[%s29 + $0x38] sm:$0xff]
  %v256 = vld [vmem:[%s29 + $0x40] sm:$0xff]
  %v257 = vld [vmem:[%s29 + $0x48] sm:$0xff]
  %v258 = vld [vmem:[%s29 + $0x50] sm:$0xff]
  %v259 = vld [vmem:[%s29 + $0x58] sm:$0xff]
  %v260 = vld [vmem:[%s29 + $0x60] sm:$0xff]
  %v261 = vld [vmem:[%s29 + $0x68] sm:$0xff]
  %v262 = vld [vmem:[%s29 + $0x70] sm:$0xff]
  %v263 = vld [vmem:[%s29 + $0x78] sm:$0xff]
  %v264 = vld [vmem:[%s29 + $0x80] sm:$0xff]
  %v265 = vld [vmem:[%s29 + $0x88] sm:$0xff]
  %v266 = vld [vmem:[%s29 + $0x90] sm:$0xff]
  %v267 = vld [vmem:[%s29 + $0x98] sm:$0xff]
  %v268 = vld [vmem:[%s29 + $0xa0] sm:$0xff]
  %v269 = vld [vmem:[%s29 + $0xa8] sm:$0xff]
  %v270 = vld [vmem:[%s29 + $0xb0] sm:$0xff]
  %v271 = vld [vmem:[%s29 + $0xb8] sm:$0xff]
  %v272 = vld [vmem:[%s31] sm:$0xff]
  %v273 = vld [vmem:[%s31 + $0x8] sm:$0xff]
  %v274 = vld [vmem:[%s31 + $0x10] sm:$0xff]
  %v275 = vld [vmem:[%s31 + $0x18] sm:$0xff]
  %v276 = vld [vmem:[%s31 + $0x20] sm:$0xff]
  %v277 = vld [vmem:[%s31 + $0x28] sm:$0xff]
  %v278 = vld [vmem:[%s31 + $0x30] sm:$0xff]
  %v279 = vld [vmem:[%s31 + $0x38] sm:$0xff]
  %v280 = vld [vmem:[%s31 + $0x40] sm:$0xff]
  %v281 = vld [vmem:[%s31 + $0x48] sm:$0xff]
  %v282 = vld [vmem:[%s31 + $0x50] sm:$0xff]
  %v283 = vld [vmem:[%s31 + $0x58] sm:$0xff]
  %v284 = vld [vmem:[%s31 + $0x60] sm:$0xff]
  %v285 = vld [vmem:[%s31 + $0x68] sm:$0xff]
  %v286 = vld [vmem:[%s31 + $0x70] sm:$0xff]
  %v287 = vld [vmem:[%s31 + $0x78] sm:$0xff]
  %v288 = vld [vmem:[%s31 + $0x80] sm:$0xff]
  %v289 = vld [vmem:[%s31 + $0x88] sm:$0xff]
  %v290 = vld [vmem:[%s31 + $0x90] sm:$0xff]
  %v291 = vld [vmem:[%s31 + $0x98] sm:$0xff]
  %v292 = vld [vmem:[%s31 + $0xa0] sm:$0xff]
  %v293 = vld [vmem:[%s31 + $0xa8] sm:$0xff]
  %v294 = vld [vmem:[%s31 + $0xb0] sm:$0xff]
  %v295 = vld [vmem:[%s31 + $0xb8] sm:$0xff]
  %v296 = vld [vmem:[%s33] sm:$0xff]
  %v297 = vld [vmem:[%s33 + $0x8] sm:$0xff]
  %v298 = vld [vmem:[%s33 + $0x10] sm:$0xff]
  %v299 = vld [vmem:[%s33 + $0x18] sm:$0xff]
  %v300 = vld [vmem:[%s33 + $0x20] sm:$0xff]
  %v301 = vld [vmem:[%s33 + $0x28] sm:$0xff]
  %v302 = vld [vmem:[%s33 + $0x30] sm:$0xff]
  %v303 = vld [vmem:[%s33 + $0x38] sm:$0xff]
  %v304 = vld [vmem:[%s33 + $0x40] sm:$0xff]
  %v305 = vld [vmem:[%s33 + $0x48] sm:$0xff]
  %v306 = vld [vmem:[%s33 + $0x50] sm:$0xff]
  %v307 = vld [vmem:[%s33 + $0x58] sm:$0xff]
  %v308 = vld [vmem:[%s35] sm:$0x1]
  %v309 = vld [vmem:[%s35 + $0x1] sm:$0x1]
  %v310 = vld [vmem:[%s35 + $0x2] sm:$0x1]
  %v311 = vld [vmem:[%s35 + $0x3] sm:$0x1]
  %v312 = vld [vmem:[%s35 + $0x4] sm:$0x1]
  %v313 = vld [vmem:[%s35 + $0x5] sm:$0x1]
  %v314 = vld [vmem:[%s37] sm:$0x1]
  %v315 = vld [vmem:[%s37 + $0x1] sm:$0x1]
  %v316 = vld [vmem:[%s37 + $0x2] sm:$0x1]
  %v317 = vld [vmem:[%s37 + $0x3] sm:$0x1]
  %v318 = vld [vmem:[%s37 + $0x4] sm:$0x1]
  %v319 = vld [vmem:[%s37 + $0x5] sm:$0x1]
  %v320 = vld [vmem:[%s39] sm:$0xff]
  %v321 = vld [vmem:[%s39 + $0x8] sm:$0xff]
  %v322 = vld [vmem:[%s39 + $0x10] sm:$0xff]
  %v323 = vld [vmem:[%s39 + $0x18] sm:$0xff]
  %v324 = vld [vmem:[%s39 + $0x20] sm:$0xff]
  %v325 = vld [vmem:[%s39 + $0x28] sm:$0xff]
  %v326 = vld [vmem:[%s39 + $0x30] sm:$0xff]
  %v327 = vld [vmem:[%s39 + $0x38] sm:$0xff]
  %v328 = vld [vmem:[%s39 + $0x40] sm:$0xff]
  %v329 = vld [vmem:[%s39 + $0x48] sm:$0xff]
  %v330 = vld [vmem:[%s39 + $0x50] sm:$0xff]
  %v331 = vld [vmem:[%s39 + $0x58] sm:$0xff]
  %v332 = vld [vmem:[%s41] sm:$0xff]
  %v333 = vld [vmem:[%s41 + $0x8] sm:$0xff]
  %v334 = vld [vmem:[%s41 + $0x10] sm:$0xff]
  %v335 = vld [vmem:[%s41 + $0x18] sm:$0xff]
  %v336 = vld [vmem:[%s41 + $0x20] sm:$0xff]
  %v337 = vld [vmem:[%s41 + $0x28] sm:$0xff]
  %v338 = vld [vmem:[%s41 + $0x30] sm:$0xff]
  %v339 = vld [vmem:[%s41 + $0x38] sm:$0xff]
  %v340 = vld [vmem:[%s41 + $0x40] sm:$0xff]
  %v341 = vld [vmem:[%s41 + $0x48] sm:$0xff]
  %v342 = vld [vmem:[%s41 + $0x50] sm:$0xff]
  %v343 = vld [vmem:[%s41 + $0x58] sm:$0xff]
  %v344 = vld [vmem:[%s43] sm:$0xff]
  %v345 = vld [vmem:[%s43 + $0x8] sm:$0xff]
  %v346 = vld [vmem:[%s43 + $0x10] sm:$0xff]
  %v347 = vld [vmem:[%s43 + $0x18] sm:$0xff]
  %v348 = vld [vmem:[%s43 + $0x20] sm:$0xff]
  %v349 = vld [vmem:[%s43 + $0x28] sm:$0xff]
  %v350 = vld [vmem:[%s43 + $0x30] sm:$0xff]
  %v351 = vld [vmem:[%s43 + $0x38] sm:$0xff]
  %v352 = vld [vmem:[%s43 + $0x40] sm:$0xff]
  %v353 = vld [vmem:[%s43 + $0x48] sm:$0xff]
  %v354 = vld [vmem:[%s43 + $0x50] sm:$0xff]
  %v355 = vld [vmem:[%s43 + $0x58] sm:$0xff]
  %v356 = vld [vmem:[%s45] sm:$0x1]
  %v357 = vld [vmem:[%s45 + $0x1] sm:$0x1]
  %v358 = vld [vmem:[%s45 + $0x2] sm:$0x1]
  %v359 = vld [vmem:[%s45 + $0x3] sm:$0x1]
  %v360 = vld [vmem:[%s45 + $0x4] sm:$0x1]
  %v361 = vld [vmem:[%s45 + $0x5] sm:$0x1]
  %v362 = vld [vmem:[%s47] sm:$0x1]
  %v363 = vld [vmem:[%s47 + $0x1] sm:$0x1]
  %v364 = vld [vmem:[%s47 + $0x2] sm:$0x1]
  %v365 = vld [vmem:[%s47 + $0x3] sm:$0x1]
  %v366 = vld [vmem:[%s47 + $0x4] sm:$0x1]
  %v367 = vld [vmem:[%s47 + $0x5] sm:$0x1]
  %v369 = vsel %vm169, %v242, 0
  %v372 = vsel %vm169, %v243, 0
  %v375 = vsel %vm169, %v244, 0
  %v378 = vsel %vm169, %v245, 0
  %v381 = vsel %vm169, %v246, 0
  %v384 = vsel %vm169, %v247, 0
  %386 = vmatpush.msra.mxu0 0.0
  %387 = vmatpush.msra.mxu0 0.0
  %388 = vmatpush.msra.mxu0 0.0
  %389 = vmatpush.msra.mxu0 0.0
  %390 = vmatpush.msra.mxu0 0.0
  %391 = vmatpush.msra.mxu0 0.0
  %392 = vmatpush.msra.mxu0 0.0
  %393 = vmatpush.msra.mxu0 0.0
  %394 = vmatpush.msra.mxu0 0.0
  %395 = vmatpush.msra.mxu0 0.0
  %396 = vmatpush.msra.mxu0 0.0
  %397 = vmatpush.msra.mxu0 0.0
  %398 = vmatpush.msra.mxu0 %v275
  %399 = vmatpush.msra.mxu0 %v274
  %400 = vmatpush.msra.mxu0 %v273
  %401 = vmatpush.msra.mxu0 %v272
  %402 = vmatmul.f32.gmra.mxu0 %v369
  %v403 = vpop.f32.mrf.mxu0
  %v404 = vadd.f32 0.0, %v403
  %405 = vmatmul.f32.gmra.mxu0 %v372
  %v406 = vpop.f32.mrf.mxu0
  %v407 = vadd.f32 0.0, %v406
  %408 = vmatmul.f32.gmra.mxu0 %v375
  %v409 = vpop.f32.mrf.mxu0
  %v410 = vadd.f32 0.0, %v409
  %411 = vmatmul.f32.gmra.mxu0 %v378
  %v412 = vpop.f32.mrf.mxu0
  %v413 = vadd.f32 0.0, %v412
  %414 = vmatmul.f32.gmra.mxu0 %v381
  %v415 = vpop.f32.mrf.mxu0
  %v416 = vadd.f32 0.0, %v415
  %417 = vmatmul.f32.gmra.mxu0 %v384
  %v418 = vpop.f32.mrf.mxu0
  %v419 = vadd.f32 0.0, %v418
  %420 = vdwg.mxu0
  %v422 = vsel %vm169, %v236, 0
  %v425 = vsel %vm169, %v237, 0
  %v428 = vsel %vm169, %v238, 0
  %v431 = vsel %vm169, %v239, 0
  %v434 = vsel %vm169, %v240, 0
  %v437 = vsel %vm169, %v241, 0
  %439 = vmatpush.msra.mxu0 0.0
  %440 = vmatpush.msra.mxu0 0.0
  %441 = vmatpush.msra.mxu0 0.0
  %442 = vmatpush.msra.mxu0 0.0
  %443 = vmatpush.msra.mxu0 0.0
  %444 = vmatpush.msra.mxu0 0.0
  %445 = vmatpush.msra.mxu0 0.0
  %446 = vmatpush.msra.mxu0 0.0
  %447 = vmatpush.msra.mxu0 0.0
  %448 = vmatpush.msra.mxu0 0.0
  %449 = vmatpush.msra.mxu0 0.0
  %450 = vmatpush.msra.mxu0 0.0
  %451 = vmatpush.msra.mxu0 %v251
  %452 = vmatpush.msra.mxu0 %v250
  %453 = vmatpush.msra.mxu0 %v249
  %454 = vmatpush.msra.mxu0 %v248
  %455 = vmatmul.f32.gmra.mxu0 %v422
  %v456 = vpop.f32.mrf.mxu0
  %v457 = vadd.f32 %v404, %v456
  %458 = vmatmul.f32.gmra.mxu0 %v425
  %v459 = vpop.f32.mrf.mxu0
  %v460 = vadd.f32 %v407, %v459
  %461 = vmatmul.f32.gmra.mxu0 %v428
  %v462 = vpop.f32.mrf.mxu0
  %v463 = vadd.f32 %v410, %v462
  %464 = vmatmul.f32.gmra.mxu0 %v431
  %v465 = vpop.f32.mrf.mxu0
  %v466 = vadd.f32 %v413, %v465
  %467 = vmatmul.f32.gmra.mxu0 %v434
  %v468 = vpop.f32.mrf.mxu0
  %v469 = vadd.f32 %v416, %v468
  %470 = vmatmul.f32.gmra.mxu0 %v437
  %v471 = vpop.f32.mrf.mxu0
  %v472 = vadd.f32 %v419, %v471
  %473 = vdwg.mxu0
  %v475 = vperm.slane %v308, 0
  %v477 = vadd.f32 %v457, %v475
  %v478 = vadd.f32 %v460, %v475
  %v479 = vadd.f32 %v463, %v475
  %v480 = vadd.f32 %v466, %v475
  %v481 = vadd.f32 %v469, %v475
  %v482 = vadd.f32 %v472, %v475
  %483 = vmatpush.msra.mxu0 0.0
  %484 = vmatpush.msra.mxu0 0.0
  %485 = vmatpush.msra.mxu0 0.0
  %486 = vmatpush.msra.mxu0 0.0
  %487 = vmatpush.msra.mxu0 0.0
  %488 = vmatpush.msra.mxu0 0.0
  %489 = vmatpush.msra.mxu0 0.0
  %490 = vmatpush.msra.mxu0 0.0
  %491 = vmatpush.msra.mxu0 0.0
  %492 = vmatpush.msra.mxu0 0.0
  %493 = vmatpush.msra.mxu0 0.0
  %494 = vmatpush.msra.mxu0 0.0
  %495 = vmatpush.msra.mxu0 %v279
  %496 = vmatpush.msra.mxu0 %v278
  %497 = vmatpush.msra.mxu0 %v277
  %498 = vmatpush.msra.mxu0 %v276
  %499 = vmatmul.f32.gmra.mxu0 %v369
  %v500 = vpop.f32.mrf.mxu0
  %v501 = vadd.f32 0.0, %v500
  %502 = vmatmul.f32.gmra.mxu0 %v372
  %v503 = vpop.f32.mrf.mxu0
  %v504 = vadd.f32 0.0, %v503
  %505 = vmatmul.f32.gmra.mxu0 %v375
  %v506 = vpop.f32.mrf.mxu0
  %v507 = vadd.f32 0.0, %v506
  %508 = vmatmul.f32.gmra.mxu0 %v378
  %v509 = vpop.f32.mrf.mxu0
  %v510 = vadd.f32 0.0, %v509
  %511 = vmatmul.f32.gmra.mxu0 %v381
  %v512 = vpop.f32.mrf.mxu0
  %v513 = vadd.f32 0.0, %v512
  %514 = vmatmul.f32.gmra.mxu0 %v384
  %v515 = vpop.f32.mrf.mxu0
  %v516 = vadd.f32 0.0, %v515
  %517 = vdwg.mxu0
  %518 = vmatpush.msra.mxu0 0.0
  %519 = vmatpush.msra.mxu0 0.0
  %520 = vmatpush.msra.mxu0 0.0
  %521 = vmatpush.msra.mxu0 0.0
  %522 = vmatpush.msra.mxu0 0.0
  %523 = vmatpush.msra.mxu0 0.0
  %524 = vmatpush.msra.mxu0 0.0
  %525 = vmatpush.msra.mxu0 0.0
  %526 = vmatpush.msra.mxu0 0.0
  %527 = vmatpush.msra.mxu0 0.0
  %528 = vmatpush.msra.mxu0 0.0
  %529 = vmatpush.msra.mxu0 0.0
  %530 = vmatpush.msra.mxu0 %v255
  %531 = vmatpush.msra.mxu0 %v254
  %532 = vmatpush.msra.mxu0 %v253
  %533 = vmatpush.msra.mxu0 %v252
  %534 = vmatmul.f32.gmra.mxu0 %v422
  %v535 = vpop.f32.mrf.mxu0
  %v536 = vadd.f32 %v501, %v535
  %537 = vmatmul.f32.gmra.mxu0 %v425
  %v538 = vpop.f32.mrf.mxu0
  %v539 = vadd.f32 %v504, %v538
  %540 = vmatmul.f32.gmra.mxu0 %v428
  %v541 = vpop.f32.mrf.mxu0
  %v542 = vadd.f32 %v507, %v541
  %543 = vmatmul.f32.gmra.mxu0 %v431
  %v544 = vpop.f32.mrf.mxu0
  %v545 = vadd.f32 %v510, %v544
  %546 = vmatmul.f32.gmra.mxu0 %v434
  %v547 = vpop.f32.mrf.mxu0
  %v548 = vadd.f32 %v513, %v547
  %549 = vmatmul.f32.gmra.mxu0 %v437
  %v550 = vpop.f32.mrf.mxu0
  %v551 = vadd.f32 %v516, %v550
  %552 = vdwg.mxu0
  %v554 = vperm.slane %v309, 0
  %v556 = vadd.f32 %v536, %v554
  %v557 = vadd.f32 %v539, %v554
  %v558 = vadd.f32 %v542, %v554
  %v559 = vadd.f32 %v545, %v554
  %v560 = vadd.f32 %v548, %v554
  %v561 = vadd.f32 %v551, %v554
  %562 = vmatpush.msra.mxu0 0.0
  %563 = vmatpush.msra.mxu0 0.0
  %564 = vmatpush.msra.mxu0 0.0
  %565 = vmatpush.msra.mxu0 0.0
  %566 = vmatpush.msra.mxu0 0.0
  %567 = vmatpush.msra.mxu0 0.0
  %568 = vmatpush.msra.mxu0 0.0
  %569 = vmatpush.msra.mxu0 0.0
  %570 = vmatpush.msra.mxu0 0.0
  %571 = vmatpush.msra.mxu0 0.0
  %572 = vmatpush.msra.mxu0 0.0
  %573 = vmatpush.msra.mxu0 0.0
  %574 = vmatpush.msra.mxu0 %v283
  %575 = vmatpush.msra.mxu0 %v282
  %576 = vmatpush.msra.mxu0 %v281
  %577 = vmatpush.msra.mxu0 %v280
  %578 = vmatmul.f32.gmra.mxu0 %v369
  %v579 = vpop.f32.mrf.mxu0
  %v580 = vadd.f32 0.0, %v579
  %581 = vmatmul.f32.gmra.mxu0 %v372
  %v582 = vpop.f32.mrf.mxu0
  %v583 = vadd.f32 0.0, %v582
  %584 = vmatmul.f32.gmra.mxu0 %v375
  %v585 = vpop.f32.mrf.mxu0
  %v586 = vadd.f32 0.0, %v585
  %587 = vmatmul.f32.gmra.mxu0 %v378
  %v588 = vpop.f32.mrf.mxu0
  %v589 = vadd.f32 0.0, %v588
  %590 = vmatmul.f32.gmra.mxu0 %v381
  %v591 = vpop.f32.mrf.mxu0
  %v592 = vadd.f32 0.0, %v591
  %593 = vmatmul.f32.gmra.mxu0 %v384
  %v594 = vpop.f32.mrf.mxu0
  %v595 = vadd.f32 0.0, %v594
  %596 = vdwg.mxu0
  %597 = vmatpush.msra.mxu0 0.0
  %598 = vmatpush.msra.mxu0 0.0
  %599 = vmatpush.msra.mxu0 0.0
  %600 = vmatpush.msra.mxu0 0.0
  %601 = vmatpush.msra.mxu0 0.0
  %602 = vmatpush.msra.mxu0 0.0
  %603 = vmatpush.msra.mxu0 0.0
  %604 = vmatpush.msra.mxu0 0.0
  %605 = vmatpush.msra.mxu0 0.0
  %606 = vmatpush.msra.mxu0 0.0
  %607 = vmatpush.msra.mxu0 0.0
  %608 = vmatpush.msra.mxu0 0.0
  %609 = vmatpush.msra.mxu0 %v259
  %610 = vmatpush.msra.mxu0 %v258
  %611 = vmatpush.msra.mxu0 %v257
  %612 = vmatpush.msra.mxu0 %v256
  %613 = vmatmul.f32.gmra.mxu0 %v422
  %v614 = vpop.f32.mrf.mxu0
  %v615 = vadd.f32 %v580, %v614
  %616 = vmatmul.f32.gmra.mxu0 %v425
  %v617 = vpop.f32.mrf.mxu0
  %v618 = vadd.f32 %v583, %v617
  %619 = vmatmul.f32.gmra.mxu0 %v428
  %v620 = vpop.f32.mrf.mxu0
  %v621 = vadd.f32 %v586, %v620
  %622 = vmatmul.f32.gmra.mxu0 %v431
  %v623 = vpop.f32.mrf.mxu0
  %v624 = vadd.f32 %v589, %v623
  %625 = vmatmul.f32.gmra.mxu0 %v434
  %v626 = vpop.f32.mrf.mxu0
  %v627 = vadd.f32 %v592, %v626
  %628 = vmatmul.f32.gmra.mxu0 %v437
  %v629 = vpop.f32.mrf.mxu0
  %v630 = vadd.f32 %v595, %v629
  %631 = vdwg.mxu0
  %v633 = vperm.slane %v310, 0
  %v635 = vadd.f32 %v615, %v633
  %v636 = vadd.f32 %v618, %v633
  %v637 = vadd.f32 %v621, %v633
  %v638 = vadd.f32 %v624, %v633
  %v639 = vadd.f32 %v627, %v633
  %v640 = vadd.f32 %v630, %v633
  %v642 = vperm.slane %v314, 0
  %vm644 = vcmask 130048
  %v646 = vsel %vm644, 0.0, 0
  %648 = vmatpush.msra.mxu0 0.0
  %649 = vmatpush.msra.mxu0 0.0
  %650 = vmatpush.msra.mxu0 0.0
  %651 = vmatpush.msra.mxu0 0.0
  %652 = vmatpush.msra.mxu0 0.0
  %653 = vmatpush.msra.mxu0 0.0
  %654 = vmatpush.msra.mxu0 0.0
  %655 = vmatpush.msra.mxu0 0.0
  %656 = vmatpush.msra.mxu0 0.0
  %657 = vmatpush.msra.mxu0 0.0
  %658 = vmatpush.msra.mxu0 0.0
  %659 = vmatpush.msra.mxu0 0.0
  %660 = vmatpush.msra.mxu0 0.0
  %661 = vmatpush.msra.mxu0 0.0
  %662 = vmatpush.msra.mxu0 %v297
  %663 = vmatpush.msra.mxu0 %v296
  %664 = vmatmul.f32.gmra.mxu0 %v646
  %v665 = vpop.f32.mrf.mxu0
  %v666 = vadd.f32 %v642, %v665
  %667 = vdwg.mxu0
  %v669 = vperm.slane %v315, 0
  %671 = vmatpush.msra.mxu0 0.0
  %672 = vmatpush.msra.mxu0 0.0
  %673 = vmatpush.msra.mxu0 0.0
  %674 = vmatpush.msra.mxu0 0.0
  %675 = vmatpush.msra.mxu0 0.0
  %676 = vmatpush.msra.mxu0 0.0
  %677 = vmatpush.msra.mxu0 0.0
  %678 = vmatpush.msra.mxu0 0.0
  %679 = vmatpush.msra.mxu0 0.0
  %680 = vmatpush.msra.mxu0 0.0
  %681 = vmatpush.msra.mxu0 0.0
  %682 = vmatpush.msra.mxu0 0.0
  %683 = vmatpush.msra.mxu0 0.0
  %684 = vmatpush.msra.mxu0 0.0
  %685 = vmatpush.msra.mxu0 %v299
  %686 = vmatpush.msra.mxu0 %v298
  %687 = vmatmul.f32.gmra.mxu0 %v646
  %v688 = vpop.f32.mrf.mxu0
  %v689 = vadd.f32 %v669, %v688
  %690 = vdwg.mxu0
  %v692 = vperm.slane %v316, 0
  %694 = vmatpush.msra.mxu0 0.0
  %695 = vmatpush.msra.mxu0 0.0
  %696 = vmatpush.msra.mxu0 0.0
  %697 = vmatpush.msra.mxu0 0.0
  %698 = vmatpush.msra.mxu0 0.0
  %699 = vmatpush.msra.mxu0 0.0
  %700 = vmatpush.msra.mxu0 0.0
  %701 = vmatpush.msra.mxu0 0.0
  %702 = vmatpush.msra.mxu0 0.0
  %703 = vmatpush.msra.mxu0 0.0
  %704 = vmatpush.msra.mxu0 0.0
  %705 = vmatpush.msra.mxu0 0.0
  %706 = vmatpush.msra.mxu0 0.0
  %707 = vmatpush.msra.mxu0 0.0
  %708 = vmatpush.msra.mxu0 %v301
  %709 = vmatpush.msra.mxu0 %v300
  %710 = vmatmul.f32.gmra.mxu0 %v646
  %v711 = vpop.f32.mrf.mxu0
  %v712 = vadd.f32 %v692, %v711
  %713 = vdwg.mxu0
  %v714 = vadd.f32 %v477, %v666
  %v715 = vxor.u32 %v714, 2147483648
  %v716 = vmul.f32 %v715, 1.442695
  %v717 = vpow.pop %v716
  %v718 = vadd.f32 %v717, 1.0
  %v719 = vrcp.pop %v718
  %v720 = vmul.f32 %v718, %v719
  %v721 = vsub.f32 1.0, %v720
  %v722 = vmul.f32 %v719, %v721
  %v723 = vadd.f32 %v719, %v722
  %vm724 = vweird.f32 %v718
  %vm725 = vweird.f32 %v719
  %vm726 = vmor %vm724, %vm725
  %v727 = vsel %vm726, %v719, %v723
  %v728 = vand.u32 2147483647, %v718
  %vm729 = vcmp.eq.f32.partialorder %v728, 8.507059e+37
  %v730 = vand.u32 %v718, 2147483648
  %v731 = vor.u32 1.1754944e-38, %v730
  %v732 = vsel %vm729, %v731, %v727
  %v733 = vmul.f32 1.0, %v732
  %v734 = vadd.f32 %v556, %v689
  %v735 = vxor.u32 %v734, 2147483648
  %v736 = vmul.f32 %v735, 1.442695
  %v737 = vpow.pop %v736
  %v738 = vadd.f32 %v737, 1.0
  %v739 = vrcp.pop %v738
  %v740 = vmul.f32 %v738, %v739
  %v741 = vsub.f32 1.0, %v740
  %v742 = vmul.f32 %v739, %v741
  %v743 = vadd.f32 %v739, %v742
  %vm744 = vweird.f32 %v738
  %vm745 = vweird.f32 %v739
  %vm746 = vmor %vm744, %vm745
  %v747 = vsel %vm746, %v739, %v743
  %v748 = vand.u32 2147483647, %v738
  %vm749 = vcmp.eq.f32.partialorder %v748, 8.507059e+37
  %v750 = vand.u32 %v738, 2147483648
  %v751 = vor.u32 1.1754944e-38, %v750
  %v752 = vsel %vm749, %v751, %v747
  %v753 = vmul.f32 1.0, %v752
  %v754 = vmul.f32 %v733, %v712
  %v755 = vadd.f32 %v635, %v754
  %v756 = vtanh.pop %v755
  %v757 = vsub.f32 1.0, %v753
  %v758 = vmul.f32 %v757, %v756
  %v759 = vmul.f32 %v753, 0.0
  %v760 = vadd.f32 %v758, %v759
  %v762 = vsel %vm644, %v760, 0
  %764 = vmatpush.msra.mxu0 0.0
  %765 = vmatpush.msra.mxu0 0.0
  %766 = vmatpush.msra.mxu0 0.0
  %767 = vmatpush.msra.mxu0 0.0
  %768 = vmatpush.msra.mxu0 0.0
  %769 = vmatpush.msra.mxu0 0.0
  %770 = vmatpush.msra.mxu0 0.0
  %771 = vmatpush.msra.mxu0 0.0
  %772 = vmatpush.msra.mxu0 0.0
  %773 = vmatpush.msra.mxu0 0.0
  %774 = vmatpush.msra.mxu0 0.0
  %775 = vmatpush.msra.mxu0 0.0
  %776 = vmatpush.msra.mxu0 0.0
  %777 = vmatpush.msra.mxu0 0.0
  %778 = vmatpush.msra.mxu0 %v297
  %779 = vmatpush.msra.mxu0 %v296
  %780 = vmatmul.f32.gmra.mxu0 %v762
  %v781 = vpop.f32.mrf.mxu0
  %v782 = vadd.f32 %v642, %v781
  %783 = vdwg.mxu0
  %784 = vmatpush.msra.mxu0 0.0
  %785 = vmatpush.msra.mxu0 0.0
  %786 = vmatpush.msra.mxu0 0.0
  %787 = vmatpush.msra.mxu0 0.0
  %788 = vmatpush.msra.mxu0 0.0
  %789 = vmatpush.msra.mxu0 0.0
  %790 = vmatpush.msra.mxu0 0.0
  %791 = vmatpush.msra.mxu0 0.0
  %792 = vmatpush.msra.mxu0 0.0
  %793 = vmatpush.msra.mxu0 0.0
  %794 = vmatpush.msra.mxu0 0.0
  %795 = vmatpush.msra.mxu0 0.0
  %796 = vmatpush.msra.mxu0 0.0
  %797 = vmatpush.msra.mxu0 0.0
  %798 = vmatpush.msra.mxu0 %v299
  %799 = vmatpush.msra.mxu0 %v298
  %800 = vmatmul.f32.gmra.mxu0 %v762
  %v801 = vpop.f32.mrf.mxu0
  %v802 = vadd.f32 %v669, %v801
  %803 = vdwg.mxu0
  %804 = vmatpush.msra.mxu0 0.0
  %805 = vmatpush.msra.mxu0 0.0
  %806 = vmatpush.msra.mxu0 0.0
  %807 = vmatpush.msra.mxu0 0.0
  %808 = vmatpush.msra.mxu0 0.0
  %809 = vmatpush.msra.mxu0 0.0
  %810 = vmatpush.msra.mxu0 0.0
  %811 = vmatpush.msra.mxu0 0.0
  %812 = vmatpush.msra.mxu0 0.0
  %813 = vmatpush.msra.mxu0 0.0
  %814 = vmatpush.msra.mxu0 0.0
  %815 = vmatpush.msra.mxu0 0.0
  %816 = vmatpush.msra.mxu0 0.0
  %817 = vmatpush.msra.mxu0 0.0
  %818 = vmatpush.msra.mxu0 %v301
  %819 = vmatpush.msra.mxu0 %v300
  %820 = vmatmul.f32.gmra.mxu0 %v762
  %v821 = vpop.f32.mrf.mxu0
  %v822 = vadd.f32 %v692, %v821
  %823 = vdwg.mxu0
  %v824 = vadd.f32 %v478, %v782
  %v825 = vxor.u32 %v824, 2147483648
  %v826 = vmul.f32 %v825, 1.442695
  %v827 = vpow.pop %v826
  %v828 = vadd.f32 %v827, 1.0
  %v829 = vrcp.pop %v828
  %v830 = vmul.f32 %v828, %v829
  %v831 = vsub.f32 1.0, %v830
  %v832 = vmul.f32 %v829, %v831
  %v833 = vadd.f32 %v829, %v832
  %vm834 = vweird.f32 %v828
  %vm835 = vweird.f32 %v829
  %vm836 = vmor %vm834, %vm835
  %v837 = vsel %vm836, %v829, %v833
  %v838 = vand.u32 2147483647, %v828
  %vm839 = vcmp.eq.f32.partialorder %v838, 8.507059e+37
  %v840 = vand.u32 %v828, 2147483648
  %v841 = vor.u32 1.1754944e-38, %v840
  %v842 = vsel %vm839, %v841, %v837
  %v843 = vmul.f32 1.0, %v842
  %v844 = vadd.f32 %v557, %v802
  %v845 = vxor.u32 %v844, 2147483648
  %v846 = vmul.f32 %v845, 1.442695
  %v847 = vpow.pop %v846
  %v848 = vadd.f32 %v847, 1.0
  %v849 = vrcp.pop %v848
  %v850 = vmul.f32 %v848, %v849
  %v851 = vsub.f32 1.0, %v850
  %v852 = vmul.f32 %v849, %v851
  %v853 = vadd.f32 %v849, %v852
  %vm854 = vweird.f32 %v848
  %vm855 = vweird.f32 %v849
  %vm856 = vmor %vm854, %vm855
  %v857 = vsel %vm856, %v849, %v853
  %v858 = vand.u32 2147483647, %v848
  %vm859 = vcmp.eq.f32.partialorder %v858, 8.507059e+37
  %v860 = vand.u32 %v848, 2147483648
  %v861 = vor.u32 1.1754944e-38, %v860
  %v862 = vsel %vm859, %v861, %v857
  %v863 = vmul.f32 1.0, %v862
  %v864 = vmul.f32 %v843, %v822
  %v865 = vadd.f32 %v636, %v864
  %v866 = vtanh.pop %v865
  %v867 = vsub.f32 1.0, %v863
  %v868 = vmul.f32 %v867, %v866
  %v869 = vmul.f32 %v863, %v760
  %v870 = vadd.f32 %v868, %v869
  %v872 = vsel %vm644, %v870, 0
  %874 = vmatpush.msra.mxu0 0.0
  %875 = vmatpush.msra.mxu0 0.0
  %876 = vmatpush.msra.mxu0 0.0
  %877 = vmatpush.msra.mxu0 0.0
  %878 = vmatpush.msra.mxu0 0.0
  %879 = vmatpush.msra.mxu0 0.0
  %880 = vmatpush.msra.mxu0 0.0
  %881 = vmatpush.msra.mxu0 0.0
  %882 = vmatpush.msra.mxu0 0.0
  %883 = vmatpush.msra.mxu0 0.0
  %884 = vmatpush.msra.mxu0 0.0
  %885 = vmatpush.msra.mxu0 0.0
  %886 = vmatpush.msra.mxu0 0.0
  %887 = vmatpush.msra.mxu0 0.0
  %888 = vmatpush.msra.mxu0 %v297
  %889 = vmatpush.msra.mxu0 %v296
  %890 = vmatmul.f32.gmra.mxu0 %v872
  %v891 = vpop.f32.mrf.mxu0
  %v892 = vadd.f32 %v642, %v891
  %893 = vdwg.mxu0
  %894 = vmatpush.msra.mxu0 0.0
  %895 = vmatpush.msra.mxu0 0.0
  %896 = vmatpush.msra.mxu0 0.0
  %897 = vmatpush.msra.mxu0 0.0
  %898 = vmatpush.msra.mxu0 0.0
  %899 = vmatpush.msra.mxu0 0.0
  %900 = vmatpush.msra.mxu0 0.0
  %901 = vmatpush.msra.mxu0 0.0
  %902 = vmatpush.msra.mxu0 0.0
  %903 = vmatpush.msra.mxu0 0.0
  %904 = vmatpush.msra.mxu0 0.0
  %905 = vmatpush.msra.mxu0 0.0
  %906 = vmatpush.msra.mxu0 0.0
  %907 = vmatpush.msra.mxu0 0.0
  %908 = vmatpush.msra.mxu0 %v299
  %909 = vmatpush.msra.mxu0 %v298
  %910 = vmatmul.f32.gmra.mxu0 %v872
  %v911 = vpop.f32.mrf.mxu0
  %v912 = vadd.f32 %v669, %v911
  %913 = vdwg.mxu0
  %914 = vmatpush.msra.mxu0 0.0
  %915 = vmatpush.msra.mxu0 0.0
  %916 = vmatpush.msra.mxu0 0.0
  %917 = vmatpush.msra.mxu0 0.0
  %918 = vmatpush.msra.mxu0 0.0
  %919 = vmatpush.msra.mxu0 0.0
  %920 = vmatpush.msra.mxu0 0.0
  %921 = vmatpush.msra.mxu0 0.0
  %922 = vmatpush.msra.mxu0 0.0
  %923 = vmatpush.msra.mxu0 0.0
  %924 = vmatpush.msra.mxu0 0.0
  %925 = vmatpush.msra.mxu0 0.0
  %926 = vmatpush.msra.mxu0 0.0
  %927 = vmatpush.msra.mxu0 0.0
  %928 = vmatpush.msra.mxu0 %v301
  %929 = vmatpush.msra.mxu0 %v300
  %930 = vmatmul.f32.gmra.mxu0 %v872
  %v931 = vpop.f32.mrf.mxu0
  %v932 = vadd.f32 %v692, %v931
  %933 = vdwg.mxu0
  %v934 = vadd.f32 %v479, %v892
  %v935 = vxor.u32 %v934, 2147483648
  %v936 = vmul.f32 %v935, 1.442695
  %v937 = vpow.pop %v936
  %v938 = vadd.f32 %v937, 1.0
  %v939 = vrcp.pop %v938
  %v940 = vmul.f32 %v938, %v939
  %v941 = vsub.f32 1.0, %v940
  %v942 = vmul.f32 %v939, %v941
  %v943 = vadd.f32 %v939, %v942
  %vm944 = vweird.f32 %v938
  %vm945 = vweird.f32 %v939
  %vm946 = vmor %vm944, %vm945
  %v947 = vsel %vm946, %v939, %v943
  %v948 = vand.u32 2147483647, %v938
  %vm949 = vcmp.eq.f32.partialorder %v948, 8.507059e+37
  %v950 = vand.u32 %v938, 2147483648
  %v951 = vor.u32 1.1754944e-38, %v950
  %v952 = vsel %vm949, %v951, %v947
  %v953 = vmul.f32 1.0, %v952
  %v954 = vadd.f32 %v558, %v912
  %v955 = vxor.u32 %v954, 2147483648
  %v956 = vmul.f32 %v955, 1.442695
  %v957 = vpow.pop %v956
  %v958 = vadd.f32 %v957, 1.0
  %v959 = vrcp.pop %v958
  %v960 = vmul.f32 %v958, %v959
  %v961 = vsub.f32 1.0, %v960
  %v962 = vmul.f32 %v959, %v961
  %v963 = vadd.f32 %v959, %v962
  %vm964 = vweird.f32 %v958
  %vm965 = vweird.f32 %v959
  %vm966 = vmor %vm964, %vm965
  %v967 = vsel %vm966, %v959, %v963
  %v968 = vand.u32 2147483647, %v958
  %vm969 = vcmp.eq.f32.partialorder %v968, 8.507059e+37
  %v970 = vand.u32 %v958, 2147483648
  %v971 = vor.u32 1.1754944e-38, %v970
  %v972 = vsel %vm969, %v971, %v967
  %v973 = vmul.f32 1.0, %v972
  %v974 = vmul.f32 %v953, %v932
  %v975 = vadd.f32 %v637, %v974
  %v976 = vtanh.pop %v975
  %v977 = vsub.f32 1.0, %v973
  %v978 = vmul.f32 %v977, %v976
  %v979 = vmul.f32 %v973, %v870
  %v980 = vadd.f32 %v978, %v979
  %v982 = vsel %vm644, %v980, 0
  %984 = vmatpush.msra.mxu0 0.0
  %985 = vmatpush.msra.mxu0 0.0
  %986 = vmatpush.msra.mxu0 0.0
  %987 = vmatpush.msra.mxu0 0.0
  %988 = vmatpush.msra.mxu0 0.0
  %989 = vmatpush.msra.mxu0 0.0
  %990 = vmatpush.msra.mxu0 0.0
  %991 = vmatpush.msra.mxu0 0.0
  %992 = vmatpush.msra.mxu0 0.0
  %993 = vmatpush.msra.mxu0 0.0
  %994 = vmatpush.msra.mxu0 0.0
  %995 = vmatpush.msra.mxu0 0.0
  %996 = vmatpush.msra.mxu0 0.0
  %997 = vmatpush.msra.mxu0 0.0
  %998 = vmatpush.msra.mxu0 %v297
  %999 = vmatpush.msra.mxu0 %v296
  %1000 = vmatmul.f32.gmra.mxu0 %v982
  %v1001 = vpop.f32.mrf.mxu0
  %v1002 = vadd.f32 %v642, %v1001
  %1003 = vdwg.mxu0
  %1004 = vmatpush.msra.mxu0 0.0
  %1005 = vmatpush.msra.mxu0 0.0
  %1006 = vmatpush.msra.mxu0 0.0
  %1007 = vmatpush.msra.mxu0 0.0
  %1008 = vmatpush.msra.mxu0 0.0
  %1009 = vmatpush.msra.mxu0 0.0
  %1010 = vmatpush.msra.mxu0 0.0
  %1011 = vmatpush.msra.mxu0 0.0
  %1012 = vmatpush.msra.mxu0 0.0
  %1013 = vmatpush.msra.mxu0 0.0
  %1014 = vmatpush.msra.mxu0 0.0
  %1015 = vmatpush.msra.mxu0 0.0
  %1016 = vmatpush.msra.mxu0 0.0
  %1017 = vmatpush.msra.mxu0 0.0
  %1018 = vmatpush.msra.mxu0 %v299
  %1019 = vmatpush.msra.mxu0 %v298
  %1020 = vmatmul.f32.gmra.mxu0 %v982
  %v1021 = vpop.f32.mrf.mxu0
  %v1022 = vadd.f32 %v669, %v1021
  %1023 = vdwg.mxu0
  %1024 = vmatpush.msra.mxu0 0.0
  %1025 = vmatpush.msra.mxu0 0.0
  %1026 = vmatpush.msra.mxu0 0.0
  %1027 = vmatpush.msra.mxu0 0.0
  %1028 = vmatpush.msra.mxu0 0.0
  %1029 = vmatpush.msra.mxu0 0.0
  %1030 = vmatpush.msra.mxu0 0.0
  %1031 = vmatpush.msra.mxu0 0.0
  %1032 = vmatpush.msra.mxu0 0.0
  %1033 = vmatpush.msra.mxu0 0.0
  %1034 = vmatpush.msra.mxu0 0.0
  %1035 = vmatpush.msra.mxu0 0.0
  %1036 = vmatpush.msra.mxu0 0.0
  %1037 = vmatpush.msra.mxu0 0.0
  %1038 = vmatpush.msra.mxu0 %v301
  %1039 = vmatpush.msra.mxu0 %v300
  %1040 = vmatmul.f32.gmra.mxu0 %v982
  %v1041 = vpop.f32.mrf.mxu0
  %v1042 = vadd.f32 %v692, %v1041
  %1043 = vdwg.mxu0
  %v1044 = vadd.f32 %v480, %v1002
  %v1045 = vxor.u32 %v1044, 2147483648
  %v1046 = vmul.f32 %v1045, 1.442695
  %v1047 = vpow.pop %v1046
  %v1048 = vadd.f32 %v1047, 1.0
  %v1049 = vrcp.pop %v1048
  %v1050 = vmul.f32 %v1048, %v1049
  %v1051 = vsub.f32 1.0, %v1050
  %v1052 = vmul.f32 %v1049, %v1051
  %v1053 = vadd.f32 %v1049, %v1052
  %vm1054 = vweird.f32 %v1048
  %vm1055 = vweird.f32 %v1049
  %vm1056 = vmor %vm1054, %vm1055
  %v1057 = vsel %vm1056, %v1049, %v1053
  %v1058 = vand.u32 2147483647, %v1048
  %vm1059 = vcmp.eq.f32.partialorder %v1058, 8.507059e+37
  %v1060 = vand.u32 %v1048, 2147483648
  %v1061 = vor.u32 1.1754944e-38, %v1060
  %v1062 = vsel %vm1059, %v1061, %v1057
  %v1063 = vmul.f32 1.0, %v1062
  %v1064 = vadd.f32 %v559, %v1022
  %v1065 = vxor.u32 %v1064, 2147483648
  %v1066 = vmul.f32 %v1065, 1.442695
  %v1067 = vpow.pop %v1066
  %v1068 = vadd.f32 %v1067, 1.0
  %v1069 = vrcp.pop %v1068
  %v1070 = vmul.f32 %v1068, %v1069
  %v1071 = vsub.f32 1.0, %v1070
  %v1072 = vmul.f32 %v1069, %v1071
  %v1073 = vadd.f32 %v1069, %v1072
  %vm1074 = vweird.f32 %v1068
  %vm1075 = vweird.f32 %v1069
  %vm1076 = vmor %vm1074, %vm1075
  %v1077 = vsel %vm1076, %v1069, %v1073
  %v1078 = vand.u32 2147483647, %v1068
  %vm1079 = vcmp.eq.f32.partialorder %v1078, 8.507059e+37
  %v1080 = vand.u32 %v1068, 2147483648
  %v1081 = vor.u32 1.1754944e-38, %v1080
  %v1082 = vsel %vm1079, %v1081, %v1077
  %v1083 = vmul.f32 1.0, %v1082
  %v1084 = vmul.f32 %v1063, %v1042
  %v1085 = vadd.f32 %v638, %v1084
  %v1086 = vtanh.pop %v1085
  %v1087 = vsub.f32 1.0, %v1083
  %v1088 = vmul.f32 %v1087, %v1086
  %v1089 = vmul.f32 %v1083, %v980
  %v1090 = vadd.f32 %v1088, %v1089
  %v1092 = vsel %vm644, %v1090, 0
  %1094 = vmatpush.msra.mxu0 0.0
  %1095 = vmatpush.msra.mxu0 0.0
  %1096 = vmatpush.msra.mxu0 0.0
  %1097 = vmatpush.msra.mxu0 0.0
  %1098 = vmatpush.msra.mxu0 0.0
  %1099 = vmatpush.msra.mxu0 0.0
  %1100 = vmatpush.msra.mxu0 0.0
  %1101 = vmatpush.msra.mxu0 0.0
  %1102 = vmatpush.msra.mxu0 0.0
  %1103 = vmatpush.msra.mxu0 0.0
  %1104 = vmatpush.msra.mxu0 0.0
  %1105 = vmatpush.msra.mxu0 0.0
  %1106 = vmatpush.msra.mxu0 0.0
  %1107 = vmatpush.msra.mxu0 0.0
  %1108 = vmatpush.msra.mxu0 %v297
  %1109 = vmatpush.msra.mxu0 %v296
  %1110 = vmatmul.f32.gmra.mxu0 %v1092
  %v1111 = vpop.f32.mrf.mxu0
  %v1112 = vadd.f32 %v642, %v1111
  %1113 = vdwg.mxu0
  %1114 = vmatpush.msra.mxu0 0.0
  %1115 = vmatpush.msra.mxu0 0.0
  %1116 = vmatpush.msra.mxu0 0.0
  %1117 = vmatpush.msra.mxu0 0.0
  %1118 = vmatpush.msra.mxu0 0.0
  %1119 = vmatpush.msra.mxu0 0.0
  %1120 = vmatpush.msra.mxu0 0.0
  %1121 = vmatpush.msra.mxu0 0.0
  %1122 = vmatpush.msra.mxu0 0.0
  %1123 = vmatpush.msra.mxu0 0.0
  %1124 = vmatpush.msra.mxu0 0.0
  %1125 = vmatpush.msra.mxu0 0.0
  %1126 = vmatpush.msra.mxu0 0.0
  %1127 = vmatpush.msra.mxu0 0.0
  %1128 = vmatpush.msra.mxu0 %v299
  %1129 = vmatpush.msra.mxu0 %v298
  %1130 = vmatmul.f32.gmra.mxu0 %v1092
  %v1131 = vpop.f32.mrf.mxu0
  %v1132 = vadd.f32 %v669, %v1131
  %1133 = vdwg.mxu0
  %1134 = vmatpush.msra.mxu0 0.0
  %1135 = vmatpush.msra.mxu0 0.0
  %1136 = vmatpush.msra.mxu0 0.0
  %1137 = vmatpush.msra.mxu0 0.0
  %1138 = vmatpush.msra.mxu0 0.0
  %1139 = vmatpush.msra.mxu0 0.0
  %1140 = vmatpush.msra.mxu0 0.0
  %1141 = vmatpush.msra.mxu0 0.0
  %1142 = vmatpush.msra.mxu0 0.0
  %1143 = vmatpush.msra.mxu0 0.0
  %1144 = vmatpush.msra.mxu0 0.0
  %1145 = vmatpush.msra.mxu0 0.0
  %1146 = vmatpush.msra.mxu0 0.0
  %1147 = vmatpush.msra.mxu0 0.0
  %1148 = vmatpush.msra.mxu0 %v301
  %1149 = vmatpush.msra.mxu0 %v300
  %1150 = vmatmul.f32.gmra.mxu0 %v1092
  %v1151 = vpop.f32.mrf.mxu0
  %v1152 = vadd.f32 %v692, %v1151
  %1153 = vdwg.mxu0
  %v1154 = vadd.f32 %v481, %v1112
  %v1155 = vxor.u32 %v1154, 2147483648
  %v1156 = vmul.f32 %v1155, 1.442695
  %v1157 = vpow.pop %v1156
  %v1158 = vadd.f32 %v1157, 1.0
  %v1159 = vrcp.pop %v1158
  %v1160 = vmul.f32 %v1158, %v1159
  %v1161 = vsub.f32 1.0, %v1160
  %v1162 = vmul.f32 %v1159, %v1161
  %v1163 = vadd.f32 %v1159, %v1162
  %vm1164 = vweird.f32 %v1158
  %vm1165 = vweird.f32 %v1159
  %vm1166 = vmor %vm1164, %vm1165
  %v1167 = vsel %vm1166, %v1159, %v1163
  %v1168 = vand.u32 2147483647, %v1158
  %vm1169 = vcmp.eq.f32.partialorder %v1168, 8.507059e+37
  %v1170 = vand.u32 %v1158, 2147483648
  %v1171 = vor.u32 1.1754944e-38, %v1170
  %v1172 = vsel %vm1169, %v1171, %v1167
  %v1173 = vmul.f32 1.0, %v1172
  %v1174 = vadd.f32 %v560, %v1132
  %v1175 = vxor.u32 %v1174, 2147483648
  %v1176 = vmul.f32 %v1175, 1.442695
  %v1177 = vpow.pop %v1176
  %v1178 = vadd.f32 %v1177, 1.0
  %v1179 = vrcp.pop %v1178
  %v1180 = vmul.f32 %v1178, %v1179
  %v1181 = vsub.f32 1.0, %v1180
  %v1182 = vmul.f32 %v1179, %v1181
  %v1183 = vadd.f32 %v1179, %v1182
  %vm1184 = vweird.f32 %v1178
  %vm1185 = vweird.f32 %v1179
  %vm1186 = vmor %vm1184, %vm1185
  %v1187 = vsel %vm1186, %v1179, %v1183
  %v1188 = vand.u32 2147483647, %v1178
  %vm1189 = vcmp.eq.f32.partialorder %v1188, 8.507059e+37
  %v1190 = vand.u32 %v1178, 2147483648
  %v1191 = vor.u32 1.1754944e-38, %v1190
  %v1192 = vsel %vm1189, %v1191, %v1187
  %v1193 = vmul.f32 1.0, %v1192
  %v1194 = vmul.f32 %v1173, %v1152
  %v1195 = vadd.f32 %v639, %v1194
  %v1196 = vtanh.pop %v1195
  %v1197 = vsub.f32 1.0, %v1193
  %v1198 = vmul.f32 %v1197, %v1196
  %v1199 = vmul.f32 %v1193, %v1090
  %v1200 = vadd.f32 %v1198, %v1199
  %v1202 = vsel %vm644, %v1200, 0
  %1204 = vmatpush.msra.mxu0 0.0
  %1205 = vmatpush.msra.mxu0 0.0
  %1206 = vmatpush.msra.mxu0 0.0
  %1207 = vmatpush.msra.mxu0 0.0
  %1208 = vmatpush.msra.mxu0 0.0
  %1209 = vmatpush.msra.mxu0 0.0
  %1210 = vmatpush.msra.mxu0 0.0
  %1211 = vmatpush.msra.mxu0 0.0
  %1212 = vmatpush.msra.mxu0 0.0
  %1213 = vmatpush.msra.mxu0 0.0
  %1214 = vmatpush.msra.mxu0 0.0
  %1215 = vmatpush.msra.mxu0 0.0
  %1216 = vmatpush.msra.mxu0 0.0
  %1217 = vmatpush.msra.mxu0 0.0
  %1218 = vmatpush.msra.mxu0 %v297
  %1219 = vmatpush.msra.mxu0 %v296
  %1220 = vmatmul.f32.gmra.mxu0 %v1202
  %v1221 = vpop.f32.mrf.mxu0
  %v1222 = vadd.f32 %v642, %v1221
  %1223 = vdwg.mxu0
  %1224 = vmatpush.msra.mxu0 0.0
  %1225 = vmatpush.msra.mxu0 0.0
  %1226 = vmatpush.msra.mxu0 0.0
  %1227 = vmatpush.msra.mxu0 0.0
  %1228 = vmatpush.msra.mxu0 0.0
  %1229 = vmatpush.msra.mxu0 0.0
  %1230 = vmatpush.msra.mxu0 0.0
  %1231 = vmatpush.msra.mxu0 0.0
  %1232 = vmatpush.msra.mxu0 0.0
  %1233 = vmatpush.msra.mxu0 0.0
  %1234 = vmatpush.msra.mxu0 0.0
  %1235 = vmatpush.msra.mxu0 0.0
  %1236 = vmatpush.msra.mxu0 0.0
  %1237 = vmatpush.msra.mxu0 0.0
  %1238 = vmatpush.msra.mxu0 %v299
  %1239 = vmatpush.msra.mxu0 %v298
  %1240 = vmatmul.f32.gmra.mxu0 %v1202
  %v1241 = vpop.f32.mrf.mxu0
  %v1242 = vadd.f32 %v669, %v1241
  %1243 = vdwg.mxu0
  %1244 = vmatpush.msra.mxu0 0.0
  %1245 = vmatpush.msra.mxu0 0.0
  %1246 = vmatpush.msra.mxu0 0.0
  %1247 = vmatpush.msra.mxu0 0.0
  %1248 = vmatpush.msra.mxu0 0.0
  %1249 = vmatpush.msra.mxu0 0.0
  %1250 = vmatpush.msra.mxu0 0.0
  %1251 = vmatpush.msra.mxu0 0.0
  %1252 = vmatpush.msra.mxu0 0.0
  %1253 = vmatpush.msra.mxu0 0.0
  %1254 = vmatpush.msra.mxu0 0.0
  %1255 = vmatpush.msra.mxu0 0.0
  %1256 = vmatpush.msra.mxu0 0.0
  %1257 = vmatpush.msra.mxu0 0.0
  %1258 = vmatpush.msra.mxu0 %v301
  %1259 = vmatpush.msra.mxu0 %v300
  %1260 = vmatmul.f32.gmra.mxu0 %v1202
  %v1261 = vpop.f32.mrf.mxu0
  %v1262 = vadd.f32 %v692, %v1261
  %1263 = vdwg.mxu0
  %v1264 = vadd.f32 %v482, %v1222
  %v1265 = vxor.u32 %v1264, 2147483648
  %v1266 = vmul.f32 %v1265, 1.442695
  %v1267 = vpow.pop %v1266
  %v1268 = vadd.f32 %v1267, 1.0
  %v1269 = vrcp.pop %v1268
  %v1270 = vmul.f32 %v1268, %v1269
  %v1271 = vsub.f32 1.0, %v1270
  %v1272 = vmul.f32 %v1269, %v1271
  %v1273 = vadd.f32 %v1269, %v1272
  %vm1274 = vweird.f32 %v1268
  %vm1275 = vweird.f32 %v1269
  %vm1276 = vmor %vm1274, %vm1275
  %v1277 = vsel %vm1276, %v1269, %v1273
  %v1278 = vand.u32 2147483647, %v1268
  %vm1279 = vcmp.eq.f32.partialorder %v1278, 8.507059e+37
  %v1280 = vand.u32 %v1268, 2147483648
  %v1281 = vor.u32 1.1754944e-38, %v1280
  %v1282 = vsel %vm1279, %v1281, %v1277
  %v1283 = vmul.f32 1.0, %v1282
  %v1284 = vadd.f32 %v561, %v1242
  %v1285 = vxor.u32 %v1284, 2147483648
  %v1286 = vmul.f32 %v1285, 1.442695
  %v1287 = vpow.pop %v1286
  %v1288 = vadd.f32 %v1287, 1.0
  %v1289 = vrcp.pop %v1288
  %v1290 = vmul.f32 %v1288, %v1289
  %v1291 = vsub.f32 1.0, %v1290
  %v1292 = vmul.f32 %v1289, %v1291
  %v1293 = vadd.f32 %v1289, %v1292
  %vm1294 = vweird.f32 %v1288
  %vm1295 = vweird.f32 %v1289
  %vm1296 = vmor %vm1294, %vm1295
  %v1297 = vsel %vm1296, %v1289, %v1293
  %v1298 = vand.u32 2147483647, %v1288
  %vm1299 = vcmp.eq.f32.partialorder %v1298, 8.507059e+37
  %v1300 = vand.u32 %v1288, 2147483648
  %v1301 = vor.u32 1.1754944e-38, %v1300
  %v1302 = vsel %vm1299, %v1301, %v1297
  %v1303 = vmul.f32 1.0, %v1302
  %v1304 = vmul.f32 %v1283, %v1262
  %v1305 = vadd.f32 %v640, %v1304
  %v1306 = vtanh.pop %v1305
  %v1307 = vsub.f32 1.0, %v1303
  %v1308 = vmul.f32 %v1307, %v1306
  %v1309 = vmul.f32 %v1303, %v1200
  %v1310 = vadd.f32 %v1308, %v1309
  %1311 = vmatpush.msra.mxu0 0.0
  %1312 = vmatpush.msra.mxu0 0.0
  %1313 = vmatpush.msra.mxu0 0.0
  %1314 = vmatpush.msra.mxu0 0.0
  %1315 = vmatpush.msra.mxu0 0.0
  %1316 = vmatpush.msra.mxu0 0.0
  %1317 = vmatpush.msra.mxu0 0.0
  %1318 = vmatpush.msra.mxu0 0.0
  %1319 = vmatpush.msra.mxu0 0.0
  %1320 = vmatpush.msra.mxu0 0.0
  %1321 = vmatpush.msra.mxu0 0.0
  %1322 = vmatpush.msra.mxu0 0.0
  %1323 = vmatpush.msra.mxu0 %v287
  %1324 = vmatpush.msra.mxu0 %v286
  %1325 = vmatpush.msra.mxu0 %v285
  %1326 = vmatpush.msra.mxu0 %v284
  %1327 = vmatmul.f32.gmra.mxu0 %v369
  %v1328 = vpop.f32.mrf.mxu0
  %v1329 = vadd.f32 0.0, %v1328
  %1330 = vmatmul.f32.gmra.mxu0 %v372
  %v1331 = vpop.f32.mrf.mxu0
  %v1332 = vadd.f32 0.0, %v1331
  %1333 = vmatmul.f32.gmra.mxu0 %v375
  %v1334 = vpop.f32.mrf.mxu0
  %v1335 = vadd.f32 0.0, %v1334
  %1336 = vmatmul.f32.gmra.mxu0 %v378
  %v1337 = vpop.f32.mrf.mxu0
  %v1338 = vadd.f32 0.0, %v1337
  %1339 = vmatmul.f32.gmra.mxu0 %v381
  %v1340 = vpop.f32.mrf.mxu0
  %v1341 = vadd.f32 0.0, %v1340
  %1342 = vmatmul.f32.gmra.mxu0 %v384
  %v1343 = vpop.f32.mrf.mxu0
  %v1344 = vadd.f32 0.0, %v1343
  %1345 = vdwg.mxu0
  %1346 = vmatpush.msra.mxu0 0.0
  %1347 = vmatpush.msra.mxu0 0.0
  %1348 = vmatpush.msra.mxu0 0.0
  %1349 = vmatpush.msra.mxu0 0.0
  %1350 = vmatpush.msra.mxu0 0.0
  %1351 = vmatpush.msra.mxu0 0.0
  %1352 = vmatpush.msra.mxu0 0.0
  %1353 = vmatpush.msra.mxu0 0.0
  %1354 = vmatpush.msra.mxu0 0.0
  %1355 = vmatpush.msra.mxu0 0.0
  %1356 = vmatpush.msra.mxu0 0.0
  %1357 = vmatpush.msra.mxu0 0.0
  %1358 = vmatpush.msra.mxu0 %v263
  %1359 = vmatpush.msra.mxu0 %v262
  %1360 = vmatpush.msra.mxu0 %v261
  %1361 = vmatpush.msra.mxu0 %v260
  %1362 = vmatmul.f32.gmra.mxu0 %v422
  %v1363 = vpop.f32.mrf.mxu0
  %v1364 = vadd.f32 %v1329, %v1363
  %1365 = vmatmul.f32.gmra.mxu0 %v425
  %v1366 = vpop.f32.mrf.mxu0
  %v1367 = vadd.f32 %v1332, %v1366
  %1368 = vmatmul.f32.gmra.mxu0 %v428
  %v1369 = vpop.f32.mrf.mxu0
  %v1370 = vadd.f32 %v1335, %v1369
  %1371 = vmatmul.f32.gmra.mxu0 %v431
  %v1372 = vpop.f32.mrf.mxu0
  %v1373 = vadd.f32 %v1338, %v1372
  %1374 = vmatmul.f32.gmra.mxu0 %v434
  %v1375 = vpop.f32.mrf.mxu0
  %v1376 = vadd.f32 %v1341, %v1375
  %1377 = vmatmul.f32.gmra.mxu0 %v437
  %v1378 = vpop.f32.mrf.mxu0
  %v1379 = vadd.f32 %v1344, %v1378
  %1380 = vdwg.mxu0
  %v1382 = vperm.slane %v311, 0
  %v1384 = vadd.f32 %v1364, %v1382
  %v1385 = vadd.f32 %v1367, %v1382
  %v1386 = vadd.f32 %v1370, %v1382
  %v1387 = vadd.f32 %v1373, %v1382
  %v1388 = vadd.f32 %v1376, %v1382
  %v1389 = vadd.f32 %v1379, %v1382
  %1390 = vmatpush.msra.mxu0 0.0
  %1391 = vmatpush.msra.mxu0 0.0
  %1392 = vmatpush.msra.mxu0 0.0
  %1393 = vmatpush.msra.mxu0 0.0
  %1394 = vmatpush.msra.mxu0 0.0
  %1395 = vmatpush.msra.mxu0 0.0
  %1396 = vmatpush.msra.mxu0 0.0
  %1397 = vmatpush.msra.mxu0 0.0
  %1398 = vmatpush.msra.mxu0 0.0
  %1399 = vmatpush.msra.mxu0 0.0
  %1400 = vmatpush.msra.mxu0 0.0
  %1401 = vmatpush.msra.mxu0 0.0
  %1402 = vmatpush.msra.mxu0 %v291
  %1403 = vmatpush.msra.mxu0 %v290
  %1404 = vmatpush.msra.mxu0 %v289
  %1405 = vmatpush.msra.mxu0 %v288
  %1406 = vmatmul.f32.gmra.mxu0 %v369
  %v1407 = vpop.f32.mrf.mxu0
  %v1408 = vadd.f32 0.0, %v1407
  %1409 = vmatmul.f32.gmra.mxu0 %v372
  %v1410 = vpop.f32.mrf.mxu0
  %v1411 = vadd.f32 0.0, %v1410
  %1412 = vmatmul.f32.gmra.mxu0 %v375
  %v1413 = vpop.f32.mrf.mxu0
  %v1414 = vadd.f32 0.0, %v1413
  %1415 = vmatmul.f32.gmra.mxu0 %v378
  %v1416 = vpop.f32.mrf.mxu0
  %v1417 = vadd.f32 0.0, %v1416
  %1418 = vmatmul.f32.gmra.mxu0 %v381
  %v1419 = vpop.f32.mrf.mxu0
  %v1420 = vadd.f32 0.0, %v1419
  %1421 = vmatmul.f32.gmra.mxu0 %v384
  %v1422 = vpop.f32.mrf.mxu0
  %v1423 = vadd.f32 0.0, %v1422
  %1424 = vdwg.mxu0
  %1425 = vmatpush.msra.mxu0 0.0
  %1426 = vmatpush.msra.mxu0 0.0
  %1427 = vmatpush.msra.mxu0 0.0
  %1428 = vmatpush.msra.mxu0 0.0
  %1429 = vmatpush.msra.mxu0 0.0
  %1430 = vmatpush.msra.mxu0 0.0
  %1431 = vmatpush.msra.mxu0 0.0
  %1432 = vmatpush.msra.mxu0 0.0
  %1433 = vmatpush.msra.mxu0 0.0
  %1434 = vmatpush.msra.mxu0 0.0
  %1435 = vmatpush.msra.mxu0 0.0
  %1436 = vmatpush.msra.mxu0 0.0
  %1437 = vmatpush.msra.mxu0 %v267
  %1438 = vmatpush.msra.mxu0 %v266
  %1439 = vmatpush.msra.mxu0 %v265
  %1440 = vmatpush.msra.mxu0 %v264
  %1441 = vmatmul.f32.gmra.mxu0 %v422
  %v1442 = vpop.f32.mrf.mxu0
  %v1443 = vadd.f32 %v1408, %v1442
  %1444 = vmatmul.f32.gmra.mxu0 %v425
  %v1445 = vpop.f32.mrf.mxu0
  %v1446 = vadd.f32 %v1411, %v1445
  %1447 = vmatmul.f32.gmra.mxu0 %v428
  %v1448 = vpop.f32.mrf.mxu0
  %v1449 = vadd.f32 %v1414, %v1448
  %1450 = vmatmul.f32.gmra.mxu0 %v431
  %v1451 = vpop.f32.mrf.mxu0
  %v1452 = vadd.f32 %v1417, %v1451
  %1453 = vmatmul.f32.gmra.mxu0 %v434
  %v1454 = vpop.f32.mrf.mxu0
  %v1455 = vadd.f32 %v1420, %v1454
  %1456 = vmatmul.f32.gmra.mxu0 %v437
  %v1457 = vpop.f32.mrf.mxu0
  %v1458 = vadd.f32 %v1423, %v1457
  %1459 = vdwg.mxu0
  %v1461 = vperm.slane %v312, 0
  %v1463 = vadd.f32 %v1443, %v1461
  %v1464 = vadd.f32 %v1446, %v1461
  %v1465 = vadd.f32 %v1449, %v1461
  %v1466 = vadd.f32 %v1452, %v1461
  %v1467 = vadd.f32 %v1455, %v1461
  %v1468 = vadd.f32 %v1458, %v1461
  %1469 = vmatpush.msra.mxu0 0.0
  %1470 = vmatpush.msra.mxu0 0.0
  %1471 = vmatpush.msra.mxu0 0.0
  %1472 = vmatpush.msra.mxu0 0.0
  %1473 = vmatpush.msra.mxu0 0.0
  %1474 = vmatpush.msra.mxu0 0.0
  %1475 = vmatpush.msra.mxu0 0.0
  %1476 = vmatpush.msra.mxu0 0.0
  %1477 = vmatpush.msra.mxu0 0.0
  %1478 = vmatpush.msra.mxu0 0.0
  %1479 = vmatpush.msra.mxu0 0.0
  %1480 = vmatpush.msra.mxu0 0.0
  %1481 = vmatpush.msra.mxu0 %v295
  %1482 = vmatpush.msra.mxu0 %v294
  %1483 = vmatpush.msra.mxu0 %v293
  %1484 = vmatpush.msra.mxu0 %v292
  %1485 = vmatmul.f32.gmra.mxu0 %v369
  %v1486 = vpop.f32.mrf.mxu0
  %v1487 = vadd.f32 0.0, %v1486
  %1488 = vmatmul.f32.gmra.mxu0 %v372
  %v1489 = vpop.f32.mrf.mxu0
  %v1490 = vadd.f32 0.0, %v1489
  %1491 = vmatmul.f32.gmra.mxu0 %v375
  %v1492 = vpop.f32.mrf.mxu0
  %v1493 = vadd.f32 0.0, %v1492
  %1494 = vmatmul.f32.gmra.mxu0 %v378
  %v1495 = vpop.f32.mrf.mxu0
  %v1496 = vadd.f32 0.0, %v1495
  %1497 = vmatmul.f32.gmra.mxu0 %v381
  %v1498 = vpop.f32.mrf.mxu0
  %v1499 = vadd.f32 0.0, %v1498
  %1500 = vmatmul.f32.gmra.mxu0 %v384
  %v1501 = vpop.f32.mrf.mxu0
  %v1502 = vadd.f32 0.0, %v1501
  %1503 = vdwg.mxu0
  %1504 = vmatpush.msra.mxu0 0.0
  %1505 = vmatpush.msra.mxu0 0.0
  %1506 = vmatpush.msra.mxu0 0.0
  %1507 = vmatpush.msra.mxu0 0.0
  %1508 = vmatpush.msra.mxu0 0.0
  %1509 = vmatpush.msra.mxu0 0.0
  %1510 = vmatpush.msra.mxu0 0.0
  %1511 = vmatpush.msra.mxu0 0.0
  %1512 = vmatpush.msra.mxu0 0.0
  %1513 = vmatpush.msra.mxu0 0.0
  %1514 = vmatpush.msra.mxu0 0.0
  %1515 = vmatpush.msra.mxu0 0.0
  %1516 = vmatpush.msra.mxu0 %v271
  %1517 = vmatpush.msra.mxu0 %v270
  %1518 = vmatpush.msra.mxu0 %v269
  %1519 = vmatpush.msra.mxu0 %v268
  %1520 = vmatmul.f32.gmra.mxu0 %v422
  %v1521 = vpop.f32.mrf.mxu0
  %v1522 = vadd.f32 %v1487, %v1521
  %1523 = vmatmul.f32.gmra.mxu0 %v425
  %v1524 = vpop.f32.mrf.mxu0
  %v1525 = vadd.f32 %v1490, %v1524
  %1526 = vmatmul.f32.gmra.mxu0 %v428
  %v1527 = vpop.f32.mrf.mxu0
  %v1528 = vadd.f32 %v1493, %v1527
  %1529 = vmatmul.f32.gmra.mxu0 %v431
  %v1530 = vpop.f32.mrf.mxu0
  %v1531 = vadd.f32 %v1496, %v1530
  %1532 = vmatmul.f32.gmra.mxu0 %v434
  %v1533 = vpop.f32.mrf.mxu0
  %v1534 = vadd.f32 %v1499, %v1533
  %1535 = vmatmul.f32.gmra.mxu0 %v437
  %v1536 = vpop.f32.mrf.mxu0
  %v1537 = vadd.f32 %v1502, %v1536
  %1538 = vdwg.mxu0
  %v1540 = vperm.slane %v313, 0
  %v1542 = vadd.f32 %v1522, %v1540
  %v1543 = vadd.f32 %v1525, %v1540
  %v1544 = vadd.f32 %v1528, %v1540
  %v1545 = vadd.f32 %v1531, %v1540
  %v1546 = vadd.f32 %v1534, %v1540
  %v1547 = vadd.f32 %v1537, %v1540
  %v1549 = vperm.slane %v317, 0
  %1551 = vmatpush.msra.mxu0 0.0
  %1552 = vmatpush.msra.mxu0 0.0
  %1553 = vmatpush.msra.mxu0 0.0
  %1554 = vmatpush.msra.mxu0 0.0
  %1555 = vmatpush.msra.mxu0 0.0
  %1556 = vmatpush.msra.mxu0 0.0
  %1557 = vmatpush.msra.mxu0 0.0
  %1558 = vmatpush.msra.mxu0 0.0
  %1559 = vmatpush.msra.mxu0 0.0
  %1560 = vmatpush.msra.mxu0 0.0
  %1561 = vmatpush.msra.mxu0 0.0
  %1562 = vmatpush.msra.mxu0 0.0
  %1563 = vmatpush.msra.mxu0 0.0
  %1564 = vmatpush.msra.mxu0 0.0
  %1565 = vmatpush.msra.mxu0 %v303
  %1566 = vmatpush.msra.mxu0 %v302
  %1567 = vmatmul.f32.gmra.mxu0 %v646
  %v1568 = vpop.f32.mrf.mxu0
  %v1569 = vadd.f32 %v1549, %v1568
  %1570 = vdwg.mxu0
  %v1572 = vperm.slane %v318, 0
  %1574 = vmatpush.msra.mxu0 0.0
  %1575 = vmatpush.msra.mxu0 0.0
  %1576 = vmatpush.msra.mxu0 0.0
  %1577 = vmatpush.msra.mxu0 0.0
  %1578 = vmatpush.msra.mxu0 0.0
  %1579 = vmatpush.msra.mxu0 0.0
  %1580 = vmatpush.msra.mxu0 0.0
  %1581 = vmatpush.msra.mxu0 0.0
  %1582 = vmatpush.msra.mxu0 0.0
  %1583 = vmatpush.msra.mxu0 0.0
  %1584 = vmatpush.msra.mxu0 0.0
  %1585 = vmatpush.msra.mxu0 0.0
  %1586 = vmatpush.msra.mxu0 0.0
  %1587 = vmatpush.msra.mxu0 0.0
  %1588 = vmatpush.msra.mxu0 %v305
  %1589 = vmatpush.msra.mxu0 %v304
  %1590 = vmatmul.f32.gmra.mxu0 %v646
  %v1591 = vpop.f32.mrf.mxu0
  %v1592 = vadd.f32 %v1572, %v1591
  %1593 = vdwg.mxu0
  %v1595 = vperm.slane %v319, 0
  %1597 = vmatpush.msra.mxu0 0.0
  %1598 = vmatpush.msra.mxu0 0.0
  %1599 = vmatpush.msra.mxu0 0.0
  %1600 = vmatpush.msra.mxu0 0.0
  %1601 = vmatpush.msra.mxu0 0.0
  %1602 = vmatpush.msra.mxu0 0.0
  %1603 = vmatpush.msra.mxu0 0.0
  %1604 = vmatpush.msra.mxu0 0.0
  %1605 = vmatpush.msra.mxu0 0.0
  %1606 = vmatpush.msra.mxu0 0.0
  %1607 = vmatpush.msra.mxu0 0.0
  %1608 = vmatpush.msra.mxu0 0.0
  %1609 = vmatpush.msra.mxu0 0.0
  %1610 = vmatpush.msra.mxu0 0.0
  %1611 = vmatpush.msra.mxu0 %v307
  %1612 = vmatpush.msra.mxu0 %v306
  %1613 = vmatmul.f32.gmra.mxu0 %v646
  %v1614 = vpop.f32.mrf.mxu0
  %v1615 = vadd.f32 %v1595, %v1614
  %1616 = vdwg.mxu0
  %v1617 = vadd.f32 %v1389, %v1569
  %v1618 = vxor.u32 %v1617, 2147483648
  %v1619 = vmul.f32 %v1618, 1.442695
  %v1620 = vpow.pop %v1619
  %v1621 = vadd.f32 %v1620, 1.0
  %v1622 = vrcp.pop %v1621
  %v1623 = vmul.f32 %v1621, %v1622
  %v1624 = vsub.f32 1.0, %v1623
  %v1625 = vmul.f32 %v1622, %v1624
  %v1626 = vadd.f32 %v1622, %v1625
  %vm1627 = vweird.f32 %v1621
  %vm1628 = vweird.f32 %v1622
  %vm1629 = vmor %vm1627, %vm1628
  %v1630 = vsel %vm1629, %v1622, %v1626
  %v1631 = vand.u32 2147483647, %v1621
  %vm1632 = vcmp.eq.f32.partialorder %v1631, 8.507059e+37
  %v1633 = vand.u32 %v1621, 2147483648
  %v1634 = vor.u32 1.1754944e-38, %v1633
  %v1635 = vsel %vm1632, %v1634, %v1630
  %v1636 = vmul.f32 1.0, %v1635
  %v1637 = vadd.f32 %v1468, %v1592
  %v1638 = vxor.u32 %v1637, 2147483648
  %v1639 = vmul.f32 %v1638, 1.442695
  %v1640 = vpow.pop %v1639
  %v1641 = vadd.f32 %v1640, 1.0
  %v1642 = vrcp.pop %v1641
  %v1643 = vmul.f32 %v1641, %v1642
  %v1644 = vsub.f32 1.0, %v1643
  %v1645 = vmul.f32 %v1642, %v1644
  %v1646 = vadd.f32 %v1642, %v1645
  %vm1647 = vweird.f32 %v1641
  %vm1648 = vweird.f32 %v1642
  %vm1649 = vmor %vm1647, %vm1648
  %v1650 = vsel %vm1649, %v1642, %v1646
  %v1651 = vand.u32 2147483647, %v1641
  %vm1652 = vcmp.eq.f32.partialorder %v1651, 8.507059e+37
  %v1653 = vand.u32 %v1641, 2147483648
  %v1654 = vor.u32 1.1754944e-38, %v1653
  %v1655 = vsel %vm1652, %v1654, %v1650
  %v1656 = vmul.f32 1.0, %v1655
  %v1657 = vmul.f32 %v1636, %v1615
  %v1658 = vadd.f32 %v1547, %v1657
  %v1659 = vtanh.pop %v1658
  %v1660 = vsub.f32 1.0, %v1656
  %v1661 = vmul.f32 %v1660, %v1659
  %v1662 = vmul.f32 %v1656, 0.0
  %v1663 = vadd.f32 %v1661, %v1662
  %v1665 = vsel %vm644, %v1663, 0
  %1667 = vmatpush.msra.mxu0 0.0
  %1668 = vmatpush.msra.mxu0 0.0
  %1669 = vmatpush.msra.mxu0 0.0
  %1670 = vmatpush.msra.mxu0 0.0
  %1671 = vmatpush.msra.mxu0 0.0
  %1672 = vmatpush.msra.mxu0 0.0
  %1673 = vmatpush.msra.mxu0 0.0
  %1674 = vmatpush.msra.mxu0 0.0
  %1675 = vmatpush.msra.mxu0 0.0
  %1676 = vmatpush.msra.mxu0 0.0
  %1677 = vmatpush.msra.mxu0 0.0
  %1678 = vmatpush.msra.mxu0 0.0
  %1679 = vmatpush.msra.mxu0 0.0
  %1680 = vmatpush.msra.mxu0 0.0
  %1681 = vmatpush.msra.mxu0 %v303
  %1682 = vmatpush.msra.mxu0 %v302
  %1683 = vmatmul.f32.gmra.mxu0 %v1665
  %v1684 = vpop.f32.mrf.mxu0
  %v1685 = vadd.f32 %v1549, %v1684
  %1686 = vdwg.mxu0
  %1687 = vmatpush.msra.mxu0 0.0
  %1688 = vmatpush.msra.mxu0 0.0
  %1689 = vmatpush.msra.mxu0 0.0
  %1690 = vmatpush.msra.mxu0 0.0
  %1691 = vmatpush.msra.mxu0 0.0
  %1692 = vmatpush.msra.mxu0 0.0
  %1693 = vmatpush.msra.mxu0 0.0
  %1694 = vmatpush.msra.mxu0 0.0
  %1695 = vmatpush.msra.mxu0 0.0
  %1696 = vmatpush.msra.mxu0 0.0
  %1697 = vmatpush.msra.mxu0 0.0
  %1698 = vmatpush.msra.mxu0 0.0
  %1699 = vmatpush.msra.mxu0 0.0
  %1700 = vmatpush.msra.mxu0 0.0
  %1701 = vmatpush.msra.mxu0 %v305
  %1702 = vmatpush.msra.mxu0 %v304
  %1703 = vmatmul.f32.gmra.mxu0 %v1665
  %v1704 = vpop.f32.mrf.mxu0
  %v1705 = vadd.f32 %v1572, %v1704
  %1706 = vdwg.mxu0
  %1707 = vmatpush.msra.mxu0 0.0
  %1708 = vmatpush.msra.mxu0 0.0
  %1709 = vmatpush.msra.mxu0 0.0
  %1710 = vmatpush.msra.mxu0 0.0
  %1711 = vmatpush.msra.mxu0 0.0
  %1712 = vmatpush.msra.mxu0 0.0
  %1713 = vmatpush.msra.mxu0 0.0
  %1714 = vmatpush.msra.mxu0 0.0
  %1715 = vmatpush.msra.mxu0 0.0
  %1716 = vmatpush.msra.mxu0 0.0
  %1717 = vmatpush.msra.mxu0 0.0
  %1718 = vmatpush.msra.mxu0 0.0
  %1719 = vmatpush.msra.mxu0 0.0
  %1720 = vmatpush.msra.mxu0 0.0
  %1721 = vmatpush.msra.mxu0 %v307
  %1722 = vmatpush.msra.mxu0 %v306
  %1723 = vmatmul.f32.gmra.mxu0 %v1665
  %v1724 = vpop.f32.mrf.mxu0
  %v1725 = vadd.f32 %v1595, %v1724
  %1726 = vdwg.mxu0
  %v1727 = vadd.f32 %v1388, %v1685
  %v1728 = vxor.u32 %v1727, 2147483648
  %v1729 = vmul.f32 %v1728, 1.442695
  %v1730 = vpow.pop %v1729
  %v1731 = vadd.f32 %v1730, 1.0
  %v1732 = vrcp.pop %v1731
  %v1733 = vmul.f32 %v1731, %v1732
  %v1734 = vsub.f32 1.0, %v1733
  %v1735 = vmul.f32 %v1732, %v1734
  %v1736 = vadd.f32 %v1732, %v1735
  %vm1737 = vweird.f32 %v1731
  %vm1738 = vweird.f32 %v1732
  %vm1739 = vmor %vm1737, %vm1738
  %v1740 = vsel %vm1739, %v1732, %v1736
  %v1741 = vand.u32 2147483647, %v1731
  %vm1742 = vcmp.eq.f32.partialorder %v1741, 8.507059e+37
  %v1743 = vand.u32 %v1731, 2147483648
  %v1744 = vor.u32 1.1754944e-38, %v1743
  %v1745 = vsel %vm1742, %v1744, %v1740
  %v1746 = vmul.f32 1.0, %v1745
  %v1747 = vadd.f32 %v1467, %v1705
  %v1748 = vxor.u32 %v1747, 2147483648
  %v1749 = vmul.f32 %v1748, 1.442695
  %v1750 = vpow.pop %v1749
  %v1751 = vadd.f32 %v1750, 1.0
  %v1752 = vrcp.pop %v1751
  %v1753 = vmul.f32 %v1751, %v1752
  %v1754 = vsub.f32 1.0, %v1753
  %v1755 = vmul.f32 %v1752, %v1754
  %v1756 = vadd.f32 %v1752, %v1755
  %vm1757 = vweird.f32 %v1751
  %vm1758 = vweird.f32 %v1752
  %vm1759 = vmor %vm1757, %vm1758
  %v1760 = vsel %vm1759, %v1752, %v1756
  %v1761 = vand.u32 2147483647, %v1751
  %vm1762 = vcmp.eq.f32.partialorder %v1761, 8.507059e+37
  %v1763 = vand.u32 %v1751, 2147483648
  %v1764 = vor.u32 1.1754944e-38, %v1763
  %v1765 = vsel %vm1762, %v1764, %v1760
  %v1766 = vmul.f32 1.0, %v1765
  %v1767 = vmul.f32 %v1746, %v1725
  %v1768 = vadd.f32 %v1546, %v1767
  %v1769 = vtanh.pop %v1768
  %v1770 = vsub.f32 1.0, %v1766
  %v1771 = vmul.f32 %v1770, %v1769
  %v1772 = vmul.f32 %v1766, %v1663
  %v1773 = vadd.f32 %v1771, %v1772
  %v1775 = vsel %vm644, %v1773, 0
  %1777 = vmatpush.msra.mxu0 0.0
  %1778 = vmatpush.msra.mxu0 0.0
  %1779 = vmatpush.msra.mxu0 0.0
  %1780 = vmatpush.msra.mxu0 0.0
  %1781 = vmatpush.msra.mxu0 0.0
  %1782 = vmatpush.msra.mxu0 0.0
  %1783 = vmatpush.msra.mxu0 0.0
  %1784 = vmatpush.msra.mxu0 0.0
  %1785 = vmatpush.msra.mxu0 0.0
  %1786 = vmatpush.msra.mxu0 0.0
  %1787 = vmatpush.msra.mxu0 0.0
  %1788 = vmatpush.msra.mxu0 0.0
  %1789 = vmatpush.msra.mxu0 0.0
  %1790 = vmatpush.msra.mxu0 0.0
  %1791 = vmatpush.msra.mxu0 %v303
  %1792 = vmatpush.msra.mxu0 %v302
  %1793 = vmatmul.f32.gmra.mxu0 %v1775
  %v1794 = vpop.f32.mrf.mxu0
  %v1795 = vadd.f32 %v1549, %v1794
  %1796 = vdwg.mxu0
  %1797 = vmatpush.msra.mxu0 0.0
  %1798 = vmatpush.msra.mxu0 0.0
  %1799 = vmatpush.msra.mxu0 0.0
  %1800 = vmatpush.msra.mxu0 0.0
  %1801 = vmatpush.msra.mxu0 0.0
  %1802 = vmatpush.msra.mxu0 0.0
  %1803 = vmatpush.msra.mxu0 0.0
  %1804 = vmatpush.msra.mxu0 0.0
  %1805 = vmatpush.msra.mxu0 0.0
  %1806 = vmatpush.msra.mxu0 0.0
  %1807 = vmatpush.msra.mxu0 0.0
  %1808 = vmatpush.msra.mxu0 0.0
  %1809 = vmatpush.msra.mxu0 0.0
  %1810 = vmatpush.msra.mxu0 0.0
  %1811 = vmatpush.msra.mxu0 %v305
  %1812 = vmatpush.msra.mxu0 %v304
  %1813 = vmatmul.f32.gmra.mxu0 %v1775
  %v1814 = vpop.f32.mrf.mxu0
  %v1815 = vadd.f32 %v1572, %v1814
  %1816 = vdwg.mxu0
  %1817 = vmatpush.msra.mxu0 0.0
  %1818 = vmatpush.msra.mxu0 0.0
  %1819 = vmatpush.msra.mxu0 0.0
  %1820 = vmatpush.msra.mxu0 0.0
  %1821 = vmatpush.msra.mxu0 0.0
  %1822 = vmatpush.msra.mxu0 0.0
  %1823 = vmatpush.msra.mxu0 0.0
  %1824 = vmatpush.msra.mxu0 0.0
  %1825 = vmatpush.msra.mxu0 0.0
  %1826 = vmatpush.msra.mxu0 0.0
  %1827 = vmatpush.msra.mxu0 0.0
  %1828 = vmatpush.msra.mxu0 0.0
  %1829 = vmatpush.msra.mxu0 0.0
  %1830 = vmatpush.msra.mxu0 0.0
  %1831 = vmatpush.msra.mxu0 %v307
  %1832 = vmatpush.msra.mxu0 %v306
  %1833 = vmatmul.f32.gmra.mxu0 %v1775
  %v1834 = vpop.f32.mrf.mxu0
  %v1835 = vadd.f32 %v1595, %v1834
  %1836 = vdwg.mxu0
  %v1837 = vadd.f32 %v1387, %v1795
  %v1838 = vxor.u32 %v1837, 2147483648
  %v1839 = vmul.f32 %v1838, 1.442695
  %v1840 = vpow.pop %v1839
  %v1841 = vadd.f32 %v1840, 1.0
  %v1842 = vrcp.pop %v1841
  %v1843 = vmul.f32 %v1841, %v1842
  %v1844 = vsub.f32 1.0, %v1843
  %v1845 = vmul.f32 %v1842, %v1844
  %v1846 = vadd.f32 %v1842, %v1845
  %vm1847 = vweird.f32 %v1841
  %vm1848 = vweird.f32 %v1842
  %vm1849 = vmor %vm1847, %vm1848
  %v1850 = vsel %vm1849, %v1842, %v1846
  %v1851 = vand.u32 2147483647, %v1841
  %vm1852 = vcmp.eq.f32.partialorder %v1851, 8.507059e+37
  %v1853 = vand.u32 %v1841, 2147483648
  %v1854 = vor.u32 1.1754944e-38, %v1853
  %v1855 = vsel %vm1852, %v1854, %v1850
  %v1856 = vmul.f32 1.0, %v1855
  %v1857 = vadd.f32 %v1466, %v1815
  %v1858 = vxor.u32 %v1857, 2147483648
  %v1859 = vmul.f32 %v1858, 1.442695
  %v1860 = vpow.pop %v1859
  %v1861 = vadd.f32 %v1860, 1.0
  %v1862 = vrcp.pop %v1861
  %v1863 = vmul.f32 %v1861, %v1862
  %v1864 = vsub.f32 1.0, %v1863
  %v1865 = vmul.f32 %v1862, %v1864
  %v1866 = vadd.f32 %v1862, %v1865
  %vm1867 = vweird.f32 %v1861
  %vm1868 = vweird.f32 %v1862
  %vm1869 = vmor %vm1867, %vm1868
  %v1870 = vsel %vm1869, %v1862, %v1866
  %v1871 = vand.u32 2147483647, %v1861
  %vm1872 = vcmp.eq.f32.partialorder %v1871, 8.507059e+37
  %v1873 = vand.u32 %v1861, 2147483648
  %v1874 = vor.u32 1.1754944e-38, %v1873
  %v1875 = vsel %vm1872, %v1874, %v1870
  %v1876 = vmul.f32 1.0, %v1875
  %v1877 = vmul.f32 %v1856, %v1835
  %v1878 = vadd.f32 %v1545, %v1877
  %v1879 = vtanh.pop %v1878
  %v1880 = vsub.f32 1.0, %v1876
  %v1881 = vmul.f32 %v1880, %v1879
  %v1882 = vmul.f32 %v1876, %v1773
  %v1883 = vadd.f32 %v1881, %v1882
  %v1885 = vsel %vm644, %v1883, 0
  %1887 = vmatpush.msra.mxu0 0.0
  %1888 = vmatpush.msra.mxu0 0.0
  %1889 = vmatpush.msra.mxu0 0.0
  %1890 = vmatpush.msra.mxu0 0.0
  %1891 = vmatpush.msra.mxu0 0.0
  %1892 = vmatpush.msra.mxu0 0.0
  %1893 = vmatpush.msra.mxu0 0.0
  %1894 = vmatpush.msra.mxu0 0.0
  %1895 = vmatpush.msra.mxu0 0.0
  %1896 = vmatpush.msra.mxu0 0.0
  %1897 = vmatpush.msra.mxu0 0.0
  %1898 = vmatpush.msra.mxu0 0.0
  %1899 = vmatpush.msra.mxu0 0.0
  %1900 = vmatpush.msra.mxu0 0.0
  %1901 = vmatpush.msra.mxu0 %v303
  %1902 = vmatpush.msra.mxu0 %v302
  %1903 = vmatmul.f32.gmra.mxu0 %v1885
  %v1904 = vpop.f32.mrf.mxu0
  %v1905 = vadd.f32 %v1549, %v1904
  %1906 = vdwg.mxu0
  %1907 = vmatpush.msra.mxu0 0.0
  %1908 = vmatpush.msra.mxu0 0.0
  %1909 = vmatpush.msra.mxu0 0.0
  %1910 = vmatpush.msra.mxu0 0.0
  %1911 = vmatpush.msra.mxu0 0.0
  %1912 = vmatpush.msra.mxu0 0.0
  %1913 = vmatpush.msra.mxu0 0.0
  %1914 = vmatpush.msra.mxu0 0.0
  %1915 = vmatpush.msra.mxu0 0.0
  %1916 = vmatpush.msra.mxu0 0.0
  %1917 = vmatpush.msra.mxu0 0.0
  %1918 = vmatpush.msra.mxu0 0.0
  %1919 = vmatpush.msra.mxu0 0.0
  %1920 = vmatpush.msra.mxu0 0.0
  %1921 = vmatpush.msra.mxu0 %v305
  %1922 = vmatpush.msra.mxu0 %v304
  %1923 = vmatmul.f32.gmra.mxu0 %v1885
  %v1924 = vpop.f32.mrf.mxu0
  %v1925 = vadd.f32 %v1572, %v1924
  %1926 = vdwg.mxu0
  %1927 = vmatpush.msra.mxu0 0.0
  %1928 = vmatpush.msra.mxu0 0.0
  %1929 = vmatpush.msra.mxu0 0.0
  %1930 = vmatpush.msra.mxu0 0.0
  %1931 = vmatpush.msra.mxu0 0.0
  %1932 = vmatpush.msra.mxu0 0.0
  %1933 = vmatpush.msra.mxu0 0.0
  %1934 = vmatpush.msra.mxu0 0.0
  %1935 = vmatpush.msra.mxu0 0.0
  %1936 = vmatpush.msra.mxu0 0.0
  %1937 = vmatpush.msra.mxu0 0.0
  %1938 = vmatpush.msra.mxu0 0.0
  %1939 = vmatpush.msra.mxu0 0.0
  %1940 = vmatpush.msra.mxu0 0.0
  %1941 = vmatpush.msra.mxu0 %v307
  %1942 = vmatpush.msra.mxu0 %v306
  %1943 = vmatmul.f32.gmra.mxu0 %v1885
  %v1944 = vpop.f32.mrf.mxu0
  %v1945 = vadd.f32 %v1595, %v1944
  %1946 = vdwg.mxu0
  %v1947 = vadd.f32 %v1386, %v1905
  %v1948 = vxor.u32 %v1947, 2147483648
  %v1949 = vmul.f32 %v1948, 1.442695
  %v1950 = vpow.pop %v1949
  %v1951 = vadd.f32 %v1950, 1.0
  %v1952 = vrcp.pop %v1951
  %v1953 = vmul.f32 %v1951, %v1952
  %v1954 = vsub.f32 1.0, %v1953
  %v1955 = vmul.f32 %v1952, %v1954
  %v1956 = vadd.f32 %v1952, %v1955
  %vm1957 = vweird.f32 %v1951
  %vm1958 = vweird.f32 %v1952
  %vm1959 = vmor %vm1957, %vm1958
  %v1960 = vsel %vm1959, %v1952, %v1956
  %v1961 = vand.u32 2147483647, %v1951
  %vm1962 = vcmp.eq.f32.partialorder %v1961, 8.507059e+37
  %v1963 = vand.u32 %v1951, 2147483648
  %v1964 = vor.u32 1.1754944e-38, %v1963
  %v1965 = vsel %vm1962, %v1964, %v1960
  %v1966 = vmul.f32 1.0, %v1965
  %v1967 = vadd.f32 %v1465, %v1925
  %v1968 = vxor.u32 %v1967, 2147483648
  %v1969 = vmul.f32 %v1968, 1.442695
  %v1970 = vpow.pop %v1969
  %v1971 = vadd.f32 %v1970, 1.0
  %v1972 = vrcp.pop %v1971
  %v1973 = vmul.f32 %v1971, %v1972
  %v1974 = vsub.f32 1.0, %v1973
  %v1975 = vmul.f32 %v1972, %v1974
  %v1976 = vadd.f32 %v1972, %v1975
  %vm1977 = vweird.f32 %v1971
  %vm1978 = vweird.f32 %v1972
  %vm1979 = vmor %vm1977, %vm1978
  %v1980 = vsel %vm1979, %v1972, %v1976
  %v1981 = vand.u32 2147483647, %v1971
  %vm1982 = vcmp.eq.f32.partialorder %v1981, 8.507059e+37
  %v1983 = vand.u32 %v1971, 2147483648
  %v1984 = vor.u32 1.1754944e-38, %v1983
  %v1985 = vsel %vm1982, %v1984, %v1980
  %v1986 = vmul.f32 1.0, %v1985
  %v1987 = vmul.f32 %v1966, %v1945
  %v1988 = vadd.f32 %v1544, %v1987
  %v1989 = vtanh.pop %v1988
  %v1990 = vsub.f32 1.0, %v1986
  %v1991 = vmul.f32 %v1990, %v1989
  %v1992 = vmul.f32 %v1986, %v1883
  %v1993 = vadd.f32 %v1991, %v1992
  %v1995 = vsel %vm644, %v1993, 0
  %1997 = vmatpush.msra.mxu0 0.0
  %1998 = vmatpush.msra.mxu0 0.0
  %1999 = vmatpush.msra.mxu0 0.0
  %2000 = vmatpush.msra.mxu0 0.0
  %2001 = vmatpush.msra.mxu0 0.0
  %2002 = vmatpush.msra.mxu0 0.0
  %2003 = vmatpush.msra.mxu0 0.0
  %2004 = vmatpush.msra.mxu0 0.0
  %2005 = vmatpush.msra.mxu0 0.0
  %2006 = vmatpush.msra.mxu0 0.0
  %2007 = vmatpush.msra.mxu0 0.0
  %2008 = vmatpush.msra.mxu0 0.0
  %2009 = vmatpush.msra.mxu0 0.0
  %2010 = vmatpush.msra.mxu0 0.0
  %2011 = vmatpush.msra.mxu0 %v303
  %2012 = vmatpush.msra.mxu0 %v302
  %2013 = vmatmul.f32.gmra.mxu0 %v1995
  %v2014 = vpop.f32.mrf.mxu0
  %v2015 = vadd.f32 %v1549, %v2014
  %2016 = vdwg.mxu0
  %2017 = vmatpush.msra.mxu0 0.0
  %2018 = vmatpush.msra.mxu0 0.0
  %2019 = vmatpush.msra.mxu0 0.0
  %2020 = vmatpush.msra.mxu0 0.0
  %2021 = vmatpush.msra.mxu0 0.0
  %2022 = vmatpush.msra.mxu0 0.0
  %2023 = vmatpush.msra.mxu0 0.0
  %2024 = vmatpush.msra.mxu0 0.0
  %2025 = vmatpush.msra.mxu0 0.0
  %2026 = vmatpush.msra.mxu0 0.0
  %2027 = vmatpush.msra.mxu0 0.0
  %2028 = vmatpush.msra.mxu0 0.0
  %2029 = vmatpush.msra.mxu0 0.0
  %2030 = vmatpush.msra.mxu0 0.0
  %2031 = vmatpush.msra.mxu0 %v305
  %2032 = vmatpush.msra.mxu0 %v304
  %2033 = vmatmul.f32.gmra.mxu0 %v1995
  %v2034 = vpop.f32.mrf.mxu0
  %v2035 = vadd.f32 %v1572, %v2034
  %2036 = vdwg.mxu0
  %2037 = vmatpush.msra.mxu0 0.0
  %2038 = vmatpush.msra.mxu0 0.0
  %2039 = vmatpush.msra.mxu0 0.0
  %2040 = vmatpush.msra.mxu0 0.0
  %2041 = vmatpush.msra.mxu0 0.0
  %2042 = vmatpush.msra.mxu0 0.0
  %2043 = vmatpush.msra.mxu0 0.0
  %2044 = vmatpush.msra.mxu0 0.0
  %2045 = vmatpush.msra.mxu0 0.0
  %2046 = vmatpush.msra.mxu0 0.0
  %2047 = vmatpush.msra.mxu0 0.0
  %2048 = vmatpush.msra.mxu0 0.0
  %2049 = vmatpush.msra.mxu0 0.0
  %2050 = vmatpush.msra.mxu0 0.0
  %2051 = vmatpush.msra.mxu0 %v307
  %2052 = vmatpush.msra.mxu0 %v306
  %2053 = vmatmul.f32.gmra.mxu0 %v1995
  %v2054 = vpop.f32.mrf.mxu0
  %v2055 = vadd.f32 %v1595, %v2054
  %2056 = vdwg.mxu0
  %v2057 = vadd.f32 %v1385, %v2015
  %v2058 = vxor.u32 %v2057, 2147483648
  %v2059 = vmul.f32 %v2058, 1.442695
  %v2060 = vpow.pop %v2059
  %v2061 = vadd.f32 %v2060, 1.0
  %v2062 = vrcp.pop %v2061
  %v2063 = vmul.f32 %v2061, %v2062
  %v2064 = vsub.f32 1.0, %v2063
  %v2065 = vmul.f32 %v2062, %v2064
  %v2066 = vadd.f32 %v2062, %v2065
  %vm2067 = vweird.f32 %v2061
  %vm2068 = vweird.f32 %v2062
  %vm2069 = vmor %vm2067, %vm2068
  %v2070 = vsel %vm2069, %v2062, %v2066
  %v2071 = vand.u32 2147483647, %v2061
  %vm2072 = vcmp.eq.f32.partialorder %v2071, 8.507059e+37
  %v2073 = vand.u32 %v2061, 2147483648
  %v2074 = vor.u32 1.1754944e-38, %v2073
  %v2075 = vsel %vm2072, %v2074, %v2070
  %v2076 = vmul.f32 1.0, %v2075
  %v2077 = vadd.f32 %v1464, %v2035
  %v2078 = vxor.u32 %v2077, 2147483648
  %v2079 = vmul.f32 %v2078, 1.442695
  %v2080 = vpow.pop %v2079
  %v2081 = vadd.f32 %v2080, 1.0
  %v2082 = vrcp.pop %v2081
  %v2083 = vmul.f32 %v2081, %v2082
  %v2084 = vsub.f32 1.0, %v2083
  %v2085 = vmul.f32 %v2082, %v2084
  %v2086 = vadd.f32 %v2082, %v2085
  %vm2087 = vweird.f32 %v2081
  %vm2088 = vweird.f32 %v2082
  %vm2089 = vmor %vm2087, %vm2088
  %v2090 = vsel %vm2089, %v2082, %v2086
  %v2091 = vand.u32 2147483647, %v2081
  %vm2092 = vcmp.eq.f32.partialorder %v2091, 8.507059e+37
  %v2093 = vand.u32 %v2081, 2147483648
  %v2094 = vor.u32 1.1754944e-38, %v2093
  %v2095 = vsel %vm2092, %v2094, %v2090
  %v2096 = vmul.f32 1.0, %v2095
  %v2097 = vmul.f32 %v2076, %v2055
  %v2098 = vadd.f32 %v1543, %v2097
  %v2099 = vtanh.pop %v2098
  %v2100 = vsub.f32 1.0, %v2096
  %v2101 = vmul.f32 %v2100, %v2099
  %v2102 = vmul.f32 %v2096, %v1993
  %v2103 = vadd.f32 %v2101, %v2102
  %v2105 = vsel %vm644, %v2103, 0
  %2107 = vmatpush.msra.mxu0 0.0
  %2108 = vmatpush.msra.mxu0 0.0
  %2109 = vmatpush.msra.mxu0 0.0
  %2110 = vmatpush.msra.mxu0 0.0
  %2111 = vmatpush.msra.mxu0 0.0
  %2112 = vmatpush.msra.mxu0 0.0
  %2113 = vmatpush.msra.mxu0 0.0
  %2114 = vmatpush.msra.mxu0 0.0
  %2115 = vmatpush.msra.mxu0 0.0
  %2116 = vmatpush.msra.mxu0 0.0
  %2117 = vmatpush.msra.mxu0 0.0
  %2118 = vmatpush.msra.mxu0 0.0
  %2119 = vmatpush.msra.mxu0 0.0
  %2120 = vmatpush.msra.mxu0 0.0
  %2121 = vmatpush.msra.mxu0 %v303
  %2122 = vmatpush.msra.mxu0 %v302
  %2123 = vmatmul.f32.gmra.mxu0 %v2105
  %v2124 = vpop.f32.mrf.mxu0
  %v2125 = vadd.f32 %v1549, %v2124
  %2126 = vdwg.mxu0
  %2127 = vmatpush.msra.mxu0 0.0
  %2128 = vmatpush.msra.mxu0 0.0
  %2129 = vmatpush.msra.mxu0 0.0
  %2130 = vmatpush.msra.mxu0 0.0
  %2131 = vmatpush.msra.mxu0 0.0
  %2132 = vmatpush.msra.mxu0 0.0
  %2133 = vmatpush.msra.mxu0 0.0
  %2134 = vmatpush.msra.mxu0 0.0
  %2135 = vmatpush.msra.mxu0 0.0
  %2136 = vmatpush.msra.mxu0 0.0
  %2137 = vmatpush.msra.mxu0 0.0
  %2138 = vmatpush.msra.mxu0 0.0
  %2139 = vmatpush.msra.mxu0 0.0
  %2140 = vmatpush.msra.mxu0 0.0
  %2141 = vmatpush.msra.mxu0 %v305
  %2142 = vmatpush.msra.mxu0 %v304
  %2143 = vmatmul.f32.gmra.mxu0 %v2105
  %v2144 = vpop.f32.mrf.mxu0
  %v2145 = vadd.f32 %v1572, %v2144
  %2146 = vdwg.mxu0
  %2147 = vmatpush.msra.mxu0 0.0
  %2148 = vmatpush.msra.mxu0 0.0
  %2149 = vmatpush.msra.mxu0 0.0
  %2150 = vmatpush.msra.mxu0 0.0
  %2151 = vmatpush.msra.mxu0 0.0
  %2152 = vmatpush.msra.mxu0 0.0
  %2153 = vmatpush.msra.mxu0 0.0
  %2154 = vmatpush.msra.mxu0 0.0
  %2155 = vmatpush.msra.mxu0 0.0
  %2156 = vmatpush.msra.mxu0 0.0
  %2157 = vmatpush.msra.mxu0 0.0
  %2158 = vmatpush.msra.mxu0 0.0
  %2159 = vmatpush.msra.mxu0 0.0
  %2160 = vmatpush.msra.mxu0 0.0
  %2161 = vmatpush.msra.mxu0 %v307
  %2162 = vmatpush.msra.mxu0 %v306
  %2163 = vmatmul.f32.gmra.mxu0 %v2105
  %v2164 = vpop.f32.mrf.mxu0
  %v2165 = vadd.f32 %v1595, %v2164
  %2166 = vdwg.mxu0
  %v2167 = vadd.f32 %v1384, %v2125
  %v2168 = vxor.u32 %v2167, 2147483648
  %v2169 = vmul.f32 %v2168, 1.442695
  %v2170 = vpow.pop %v2169
  %v2171 = vadd.f32 %v2170, 1.0
  %v2172 = vrcp.pop %v2171
  %v2173 = vmul.f32 %v2171, %v2172
  %v2174 = vsub.f32 1.0, %v2173
  %v2175 = vmul.f32 %v2172, %v2174
  %v2176 = vadd.f32 %v2172, %v2175
  %vm2177 = vweird.f32 %v2171
  %vm2178 = vweird.f32 %v2172
  %vm2179 = vmor %vm2177, %vm2178
  %v2180 = vsel %vm2179, %v2172, %v2176
  %v2181 = vand.u32 2147483647, %v2171
  %vm2182 = vcmp.eq.f32.partialorder %v2181, 8.507059e+37
  %v2183 = vand.u32 %v2171, 2147483648
  %v2184 = vor.u32 1.1754944e-38, %v2183
  %v2185 = vsel %vm2182, %v2184, %v2180
  %v2186 = vmul.f32 1.0, %v2185
  %v2187 = vadd.f32 %v1463, %v2145
  %v2188 = vxor.u32 %v2187, 2147483648
  %v2189 = vmul.f32 %v2188, 1.442695
  %v2190 = vpow.pop %v2189
  %v2191 = vadd.f32 %v2190, 1.0
  %v2192 = vrcp.pop %v2191
  %v2193 = vmul.f32 %v2191, %v2192
  %v2194 = vsub.f32 1.0, %v2193
  %v2195 = vmul.f32 %v2192, %v2194
  %v2196 = vadd.f32 %v2192, %v2195
  %vm2197 = vweird.f32 %v2191
  %vm2198 = vweird.f32 %v2192
  %vm2199 = vmor %vm2197, %vm2198
  %v2200 = vsel %vm2199, %v2192, %v2196
  %v2201 = vand.u32 2147483647, %v2191
  %vm2202 = vcmp.eq.f32.partialorder %v2201, 8.507059e+37
  %v2203 = vand.u32 %v2191, 2147483648
  %v2204 = vor.u32 1.1754944e-38, %v2203
  %v2205 = vsel %vm2202, %v2204, %v2200
  %v2206 = vmul.f32 1.0, %v2205
  %v2207 = vmul.f32 %v2186, %v2165
  %v2208 = vadd.f32 %v1542, %v2207
  %v2209 = vtanh.pop %v2208
  %v2210 = vsub.f32 1.0, %v2206
  %v2211 = vmul.f32 %v2210, %v2209
  %v2212 = vmul.f32 %v2206, %v2103
  %v2213 = vadd.f32 %v2211, %v2212
  %v2215 = vsel %vm644, %v2213, 0
  %2217 = vmatpush.msra.mxu0 0.0
  %2218 = vmatpush.msra.mxu0 0.0
  %2219 = vmatpush.msra.mxu0 0.0
  %2220 = vmatpush.msra.mxu0 0.0
  %2221 = vmatpush.msra.mxu0 0.0
  %2222 = vmatpush.msra.mxu0 0.0
  %2223 = vmatpush.msra.mxu0 0.0
  %2224 = vmatpush.msra.mxu0 0.0
  %2225 = vmatpush.msra.mxu0 0.0
  %2226 = vmatpush.msra.mxu0 0.0
  %2227 = vmatpush.msra.mxu0 0.0
  %2228 = vmatpush.msra.mxu0 0.0
  %2229 = vmatpush.msra.mxu0 0.0
  %2230 = vmatpush.msra.mxu0 0.0
  %2231 = vmatpush.msra.mxu0 %v333
  %2232 = vmatpush.msra.mxu0 %v332
  %2233 = vmatmul.f32.gmra.mxu0 %v2215
  %v2234 = vpop.f32.mrf.mxu0
  %v2235 = vadd.f32 0.0, %v2234
  %2236 = vmatmul.f32.gmra.mxu0 %v2105
  %v2237 = vpop.f32.mrf.mxu0
  %v2238 = vadd.f32 0.0, %v2237
  %2239 = vmatmul.f32.gmra.mxu0 %v1995
  %v2240 = vpop.f32.mrf.mxu0
  %v2241 = vadd.f32 0.0, %v2240
  %2242 = vmatmul.f32.gmra.mxu0 %v1885
  %v2243 = vpop.f32.mrf.mxu0
  %v2244 = vadd.f32 0.0, %v2243
  %2245 = vmatmul.f32.gmra.mxu0 %v1775
  %v2246 = vpop.f32.mrf.mxu0
  %v2247 = vadd.f32 0.0, %v2246
  %2248 = vmatmul.f32.gmra.mxu0 %v1665
  %v2249 = vpop.f32.mrf.mxu0
  %v2250 = vadd.f32 0.0, %v2249
  %2251 = vdwg.mxu0
  %v2253 = vsel %vm644, %v1310, 0
  %2255 = vmatpush.msra.mxu0 0.0
  %2256 = vmatpush.msra.mxu0 0.0
  %2257 = vmatpush.msra.mxu0 0.0
  %2258 = vmatpush.msra.mxu0 0.0
  %2259 = vmatpush.msra.mxu0 0.0
  %2260 = vmatpush.msra.mxu0 0.0
  %2261 = vmatpush.msra.mxu0 0.0
  %2262 = vmatpush.msra.mxu0 0.0
  %2263 = vmatpush.msra.mxu0 0.0
  %2264 = vmatpush.msra.mxu0 0.0
  %2265 = vmatpush.msra.mxu0 0.0
  %2266 = vmatpush.msra.mxu0 0.0
  %2267 = vmatpush.msra.mxu0 0.0
  %2268 = vmatpush.msra.mxu0 0.0
  %2269 = vmatpush.msra.mxu0 %v321
  %2270 = vmatpush.msra.mxu0 %v320
  %2271 = vmatmul.f32.gmra.mxu0 %v762
  %v2272 = vpop.f32.mrf.mxu0
  %v2273 = vadd.f32 %v2235, %v2272
  %2274 = vmatmul.f32.gmra.mxu0 %v872
  %v2275 = vpop.f32.mrf.mxu0
  %v2276 = vadd.f32 %v2238, %v2275
  %2277 = vmatmul.f32.gmra.mxu0 %v982
  %v2278 = vpop.f32.mrf.mxu0
  %v2279 = vadd.f32 %v2241, %v2278
  %2280 = vmatmul.f32.gmra.mxu0 %v1092
  %v2281 = vpop.f32.mrf.mxu0
  %v2282 = vadd.f32 %v2244, %v2281
  %2283 = vmatmul.f32.gmra.mxu0 %v1202
  %v2284 = vpop.f32.mrf.mxu0
  %v2285 = vadd.f32 %v2247, %v2284
  %2286 = vmatmul.f32.gmra.mxu0 %v2253
  %v2287 = vpop.f32.mrf.mxu0
  %v2288 = vadd.f32 %v2250, %v2287
  %2289 = vdwg.mxu0
  %v2291 = vperm.slane %v356, 0
  %v2293 = vadd.f32 %v2273, %v2291
  %v2294 = vadd.f32 %v2276, %v2291
  %v2295 = vadd.f32 %v2279, %v2291
  %v2296 = vadd.f32 %v2282, %v2291
  %v2297 = vadd.f32 %v2285, %v2291
  %v2298 = vadd.f32 %v2288, %v2291
  %2299 = vmatpush.msra.mxu0 0.0
  %2300 = vmatpush.msra.mxu0 0.0
  %2301 = vmatpush.msra.mxu0 0.0
  %2302 = vmatpush.msra.mxu0 0.0
  %2303 = vmatpush.msra.mxu0 0.0
  %2304 = vmatpush.msra.mxu0 0.0
  %2305 = vmatpush.msra.mxu0 0.0
  %2306 = vmatpush.msra.mxu0 0.0
  %2307 = vmatpush.msra.mxu0 0.0
  %2308 = vmatpush.msra.mxu0 0.0
  %2309 = vmatpush.msra.mxu0 0.0
  %2310 = vmatpush.msra.mxu0 0.0
  %2311 = vmatpush.msra.mxu0 0.0
  %2312 = vmatpush.msra.mxu0 0.0
  %2313 = vmatpush.msra.mxu0 %v335
  %2314 = vmatpush.msra.mxu0 %v334
  %2315 = vmatmul.f32.gmra.mxu0 %v2215
  %v2316 = vpop.f32.mrf.mxu0
  %v2317 = vadd.f32 0.0, %v2316
  %2318 = vmatmul.f32.gmra.mxu0 %v2105
  %v2319 = vpop.f32.mrf.mxu0
  %v2320 = vadd.f32 0.0, %v2319
  %2321 = vmatmul.f32.gmra.mxu0 %v1995
  %v2322 = vpop.f32.mrf.mxu0
  %v2323 = vadd.f32 0.0, %v2322
  %2324 = vmatmul.f32.gmra.mxu0 %v1885
  %v2325 = vpop.f32.mrf.mxu0
  %v2326 = vadd.f32 0.0, %v2325
  %2327 = vmatmul.f32.gmra.mxu0 %v1775
  %v2328 = vpop.f32.mrf.mxu0
  %v2329 = vadd.f32 0.0, %v2328
  %2330 = vmatmul.f32.gmra.mxu0 %v1665
  %v2331 = vpop.f32.mrf.mxu0
  %v2332 = vadd.f32 0.0, %v2331
  %2333 = vdwg.mxu0
  %2334 = vmatpush.msra.mxu0 0.0
  %2335 = vmatpush.msra.mxu0 0.0
  %2336 = vmatpush.msra.mxu0 0.0
  %2337 = vmatpush.msra.mxu0 0.0
  %2338 = vmatpush.msra.mxu0 0.0
  %2339 = vmatpush.msra.mxu0 0.0
  %2340 = vmatpush.msra.mxu0 0.0
  %2341 = vmatpush.msra.mxu0 0.0
  %2342 = vmatpush.msra.mxu0 0.0
  %2343 = vmatpush.msra.mxu0 0.0
  %2344 = vmatpush.msra.mxu0 0.0
  %2345 = vmatpush.msra.mxu0 0.0
  %2346 = vmatpush.msra.mxu0 0.0
  %2347 = vmatpush.msra.mxu0 0.0
  %2348 = vmatpush.msra.mxu0 %v323
  %2349 = vmatpush.msra.mxu0 %v322
  %2350 = vmatmul.f32.gmra.mxu0 %v762
  %v2351 = vpop.f32.mrf.mxu0
  %v2352 = vadd.f32 %v2317, %v2351
  %2353 = vmatmul.f32.gmra.mxu0 %v872
  %v2354 = vpop.f32.mrf.mxu0
  %v2355 = vadd.f32 %v2320, %v2354
  %2356 = vmatmul.f32.gmra.mxu0 %v982
  %v2357 = vpop.f32.mrf.mxu0
  %v2358 = vadd.f32 %v2323, %v2357
  %2359 = vmatmul.f32.gmra.mxu0 %v1092
  %v2360 = vpop.f32.mrf.mxu0
  %v2361 = vadd.f32 %v2326, %v2360
  %2362 = vmatmul.f32.gmra.mxu0 %v1202
  %v2363 = vpop.f32.mrf.mxu0
  %v2364 = vadd.f32 %v2329, %v2363
  %2365 = vmatmul.f32.gmra.mxu0 %v2253
  %v2366 = vpop.f32.mrf.mxu0
  %v2367 = vadd.f32 %v2332, %v2366
  %2368 = vdwg.mxu0
  %v2370 = vperm.slane %v357, 0
  %v2372 = vadd.f32 %v2352, %v2370
  %v2373 = vadd.f32 %v2355, %v2370
  %v2374 = vadd.f32 %v2358, %v2370
  %v2375 = vadd.f32 %v2361, %v2370
  %v2376 = vadd.f32 %v2364, %v2370
  %v2377 = vadd.f32 %v2367, %v2370
  %2378 = vmatpush.msra.mxu0 0.0
  %2379 = vmatpush.msra.mxu0 0.0
  %2380 = vmatpush.msra.mxu0 0.0
  %2381 = vmatpush.msra.mxu0 0.0
  %2382 = vmatpush.msra.mxu0 0.0
  %2383 = vmatpush.msra.mxu0 0.0
  %2384 = vmatpush.msra.mxu0 0.0
  %2385 = vmatpush.msra.mxu0 0.0
  %2386 = vmatpush.msra.mxu0 0.0
  %2387 = vmatpush.msra.mxu0 0.0
  %2388 = vmatpush.msra.mxu0 0.0
  %2389 = vmatpush.msra.mxu0 0.0
  %2390 = vmatpush.msra.mxu0 0.0
  %2391 = vmatpush.msra.mxu0 0.0
  %2392 = vmatpush.msra.mxu0 %v337
  %2393 = vmatpush.msra.mxu0 %v336
  %2394 = vmatmul.f32.gmra.mxu0 %v2215
  %v2395 = vpop.f32.mrf.mxu0
  %v2396 = vadd.f32 0.0, %v2395
  %2397 = vmatmul.f32.gmra.mxu0 %v2105
  %v2398 = vpop.f32.mrf.mxu0
  %v2399 = vadd.f32 0.0, %v2398
  %2400 = vmatmul.f32.gmra.mxu0 %v1995
  %v2401 = vpop.f32.mrf.mxu0
  %v2402 = vadd.f32 0.0, %v2401
  %2403 = vmatmul.f32.gmra.mxu0 %v1885
  %v2404 = vpop.f32.mrf.mxu0
  %v2405 = vadd.f32 0.0, %v2404
  %2406 = vmatmul.f32.gmra.mxu0 %v1775
  %v2407 = vpop.f32.mrf.mxu0
  %v2408 = vadd.f32 0.0, %v2407
  %2409 = vmatmul.f32.gmra.mxu0 %v1665
  %v2410 = vpop.f32.mrf.mxu0
  %v2411 = vadd.f32 0.0, %v2410
  %2412 = vdwg.mxu0
  %2413 = vmatpush.msra.mxu0 0.0
  %2414 = vmatpush.msra.mxu0 0.0
  %2415 = vmatpush.msra.mxu0 0.0
  %2416 = vmatpush.msra.mxu0 0.0
  %2417 = vmatpush.msra.mxu0 0.0
  %2418 = vmatpush.msra.mxu0 0.0
  %2419 = vmatpush.msra.mxu0 0.0
  %2420 = vmatpush.msra.mxu0 0.0
  %2421 = vmatpush.msra.mxu0 0.0
  %2422 = vmatpush.msra.mxu0 0.0
  %2423 = vmatpush.msra.mxu0 0.0
  %2424 = vmatpush.msra.mxu0 0.0
  %2425 = vmatpush.msra.mxu0 0.0
  %2426 = vmatpush.msra.mxu0 0.0
  %2427 = vmatpush.msra.mxu0 %v325
  %2428 = vmatpush.msra.mxu0 %v324
  %2429 = vmatmul.f32.gmra.mxu0 %v762
  %v2430 = vpop.f32.mrf.mxu0
  %v2431 = vadd.f32 %v2396, %v2430
  %2432 = vmatmul.f32.gmra.mxu0 %v872
  %v2433 = vpop.f32.mrf.mxu0
  %v2434 = vadd.f32 %v2399, %v2433
  %2435 = vmatmul.f32.gmra.mxu0 %v982
  %v2436 = vpop.f32.mrf.mxu0
  %v2437 = vadd.f32 %v2402, %v2436
  %2438 = vmatmul.f32.gmra.mxu0 %v1092
  %v2439 = vpop.f32.mrf.mxu0
  %v2440 = vadd.f32 %v2405, %v2439
  %2441 = vmatmul.f32.gmra.mxu0 %v1202
  %v2442 = vpop.f32.mrf.mxu0
  %v2443 = vadd.f32 %v2408, %v2442
  %2444 = vmatmul.f32.gmra.mxu0 %v2253
  %v2445 = vpop.f32.mrf.mxu0
  %v2446 = vadd.f32 %v2411, %v2445
  %2447 = vdwg.mxu0
  %v2449 = vperm.slane %v358, 0
  %v2451 = vadd.f32 %v2431, %v2449
  %v2452 = vadd.f32 %v2434, %v2449
  %v2453 = vadd.f32 %v2437, %v2449
  %v2454 = vadd.f32 %v2440, %v2449
  %v2455 = vadd.f32 %v2443, %v2449
  %v2456 = vadd.f32 %v2446, %v2449
  %v2458 = vperm.slane %v362, 0
  %2460 = vmatpush.msra.mxu0 0.0
  %2461 = vmatpush.msra.mxu0 0.0
  %2462 = vmatpush.msra.mxu0 0.0
  %2463 = vmatpush.msra.mxu0 0.0
  %2464 = vmatpush.msra.mxu0 0.0
  %2465 = vmatpush.msra.mxu0 0.0
  %2466 = vmatpush.msra.mxu0 0.0
  %2467 = vmatpush.msra.mxu0 0.0
  %2468 = vmatpush.msra.mxu0 0.0
  %2469 = vmatpush.msra.mxu0 0.0
  %2470 = vmatpush.msra.mxu0 0.0
  %2471 = vmatpush.msra.mxu0 0.0
  %2472 = vmatpush.msra.mxu0 0.0
  %2473 = vmatpush.msra.mxu0 0.0
  %2474 = vmatpush.msra.mxu0 %v345
  %2475 = vmatpush.msra.mxu0 %v344
  %2476 = vmatmul.f32.gmra.mxu0 %v646
  %v2477 = vpop.f32.mrf.mxu0
  %v2478 = vadd.f32 %v2458, %v2477
  %2479 = vdwg.mxu0
  %v2481 = vperm.slane %v363, 0
  %2483 = vmatpush.msra.mxu0 0.0
  %2484 = vmatpush.msra.mxu0 0.0
  %2485 = vmatpush.msra.mxu0 0.0
  %2486 = vmatpush.msra.mxu0 0.0
  %2487 = vmatpush.msra.mxu0 0.0
  %2488 = vmatpush.msra.mxu0 0.0
  %2489 = vmatpush.msra.mxu0 0.0
  %2490 = vmatpush.msra.mxu0 0.0
  %2491 = vmatpush.msra.mxu0 0.0
  %2492 = vmatpush.msra.mxu0 0.0
  %2493 = vmatpush.msra.mxu0 0.0
  %2494 = vmatpush.msra.mxu0 0.0
  %2495 = vmatpush.msra.mxu0 0.0
  %2496 = vmatpush.msra.mxu0 0.0
  %2497 = vmatpush.msra.mxu0 %v347
  %2498 = vmatpush.msra.mxu0 %v346
  %2499 = vmatmul.f32.gmra.mxu0 %v646
  %v2500 = vpop.f32.mrf.mxu0
  %v2501 = vadd.f32 %v2481, %v2500
  %2502 = vdwg.mxu0
  %v2504 = vperm.slane %v364, 0
  %2506 = vmatpush.msra.mxu0 0.0
  %2507 = vmatpush.msra.mxu0 0.0
  %2508 = vmatpush.msra.mxu0 0.0
  %2509 = vmatpush.msra.mxu0 0.0
  %2510 = vmatpush.msra.mxu0 0.0
  %2511 = vmatpush.msra.mxu0 0.0
  %2512 = vmatpush.msra.mxu0 0.0
  %2513 = vmatpush.msra.mxu0 0.0
  %2514 = vmatpush.msra.mxu0 0.0
  %2515 = vmatpush.msra.mxu0 0.0
  %2516 = vmatpush.msra.mxu0 0.0
  %2517 = vmatpush.msra.mxu0 0.0
  %2518 = vmatpush.msra.mxu0 0.0
  %2519 = vmatpush.msra.mxu0 0.0
  %2520 = vmatpush.msra.mxu0 %v349
  %2521 = vmatpush.msra.mxu0 %v348
  %2522 = vmatmul.f32.gmra.mxu0 %v646
  %v2523 = vpop.f32.mrf.mxu0
  %v2524 = vadd.f32 %v2504, %v2523
  %2525 = vdwg.mxu0
  %v2526 = vadd.f32 %v2293, %v2478
  %v2527 = vxor.u32 %v2526, 2147483648
  %v2528 = vmul.f32 %v2527, 1.442695
  %v2529 = vpow.pop %v2528
  %v2530 = vadd.f32 %v2529, 1.0
  %v2531 = vrcp.pop %v2530
  %v2532 = vmul.f32 %v2530, %v2531
  %v2533 = vsub.f32 1.0, %v2532
  %v2534 = vmul.f32 %v2531, %v2533
  %v2535 = vadd.f32 %v2531, %v2534
  %vm2536 = vweird.f32 %v2530
  %vm2537 = vweird.f32 %v2531
  %vm2538 = vmor %vm2536, %vm2537
  %v2539 = vsel %vm2538, %v2531, %v2535
  %v2540 = vand.u32 2147483647, %v2530
  %vm2541 = vcmp.eq.f32.partialorder %v2540, 8.507059e+37
  %v2542 = vand.u32 %v2530, 2147483648
  %v2543 = vor.u32 1.1754944e-38, %v2542
  %v2544 = vsel %vm2541, %v2543, %v2539
  %v2545 = vmul.f32 1.0, %v2544
  %v2546 = vadd.f32 %v2372, %v2501
  %v2547 = vxor.u32 %v2546, 2147483648
  %v2548 = vmul.f32 %v2547, 1.442695
  %v2549 = vpow.pop %v2548
  %v2550 = vadd.f32 %v2549, 1.0
  %v2551 = vrcp.pop %v2550
  %v2552 = vmul.f32 %v2550, %v2551
  %v2553 = vsub.f32 1.0, %v2552
  %v2554 = vmul.f32 %v2551, %v2553
  %v2555 = vadd.f32 %v2551, %v2554
  %vm2556 = vweird.f32 %v2550
  %vm2557 = vweird.f32 %v2551
  %vm2558 = vmor %vm2556, %vm2557
  %v2559 = vsel %vm2558, %v2551, %v2555
  %v2560 = vand.u32 2147483647, %v2550
  %vm2561 = vcmp.eq.f32.partialorder %v2560, 8.507059e+37
  %v2562 = vand.u32 %v2550, 2147483648
  %v2563 = vor.u32 1.1754944e-38, %v2562
  %v2564 = vsel %vm2561, %v2563, %v2559
  %v2565 = vmul.f32 1.0, %v2564
  %v2566 = vmul.f32 %v2545, %v2524
  %v2567 = vadd.f32 %v2451, %v2566
  %v2568 = vtanh.pop %v2567
  %v2569 = vsub.f32 1.0, %v2565
  %v2570 = vmul.f32 %v2569, %v2568
  %v2571 = vmul.f32 %v2565, 0.0
  %v2572 = vadd.f32 %v2570, %v2571
  %v2574 = vsel %vm644, %v2572, 0
  %2576 = vmatpush.msra.mxu0 0.0
  %2577 = vmatpush.msra.mxu0 0.0
  %2578 = vmatpush.msra.mxu0 0.0
  %2579 = vmatpush.msra.mxu0 0.0
  %2580 = vmatpush.msra.mxu0 0.0
  %2581 = vmatpush.msra.mxu0 0.0
  %2582 = vmatpush.msra.mxu0 0.0
  %2583 = vmatpush.msra.mxu0 0.0
  %2584 = vmatpush.msra.mxu0 0.0
  %2585 = vmatpush.msra.mxu0 0.0
  %2586 = vmatpush.msra.mxu0 0.0
  %2587 = vmatpush.msra.mxu0 0.0
  %2588 = vmatpush.msra.mxu0 0.0
  %2589 = vmatpush.msra.mxu0 0.0
  %2590 = vmatpush.msra.mxu0 %v345
  %2591 = vmatpush.msra.mxu0 %v344
  %2592 = vmatmul.f32.gmra.mxu0 %v2574
  %v2593 = vpop.f32.mrf.mxu0
  %v2594 = vadd.f32 %v2458, %v2593
  %2595 = vdwg.mxu0
  %2596 = vmatpush.msra.mxu0 0.0
  %2597 = vmatpush.msra.mxu0 0.0
  %2598 = vmatpush.msra.mxu0 0.0
  %2599 = vmatpush.msra.mxu0 0.0
  %2600 = vmatpush.msra.mxu0 0.0
  %2601 = vmatpush.msra.mxu0 0.0
  %2602 = vmatpush.msra.mxu0 0.0
  %2603 = vmatpush.msra.mxu0 0.0
  %2604 = vmatpush.msra.mxu0 0.0
  %2605 = vmatpush.msra.mxu0 0.0
  %2606 = vmatpush.msra.mxu0 0.0
  %2607 = vmatpush.msra.mxu0 0.0
  %2608 = vmatpush.msra.mxu0 0.0
  %2609 = vmatpush.msra.mxu0 0.0
  %2610 = vmatpush.msra.mxu0 %v347
  %2611 = vmatpush.msra.mxu0 %v346
  %2612 = vmatmul.f32.gmra.mxu0 %v2574
  %v2613 = vpop.f32.mrf.mxu0
  %v2614 = vadd.f32 %v2481, %v2613
  %2615 = vdwg.mxu0
  %2616 = vmatpush.msra.mxu0 0.0
  %2617 = vmatpush.msra.mxu0 0.0
  %2618 = vmatpush.msra.mxu0 0.0
  %2619 = vmatpush.msra.mxu0 0.0
  %2620 = vmatpush.msra.mxu0 0.0
  %2621 = vmatpush.msra.mxu0 0.0
  %2622 = vmatpush.msra.mxu0 0.0
  %2623 = vmatpush.msra.mxu0 0.0
  %2624 = vmatpush.msra.mxu0 0.0
  %2625 = vmatpush.msra.mxu0 0.0
  %2626 = vmatpush.msra.mxu0 0.0
  %2627 = vmatpush.msra.mxu0 0.0
  %2628 = vmatpush.msra.mxu0 0.0
  %2629 = vmatpush.msra.mxu0 0.0
  %2630 = vmatpush.msra.mxu0 %v349
  %2631 = vmatpush.msra.mxu0 %v348
  %2632 = vmatmul.f32.gmra.mxu0 %v2574
  %v2633 = vpop.f32.mrf.mxu0
  %v2634 = vadd.f32 %v2504, %v2633
  %2635 = vdwg.mxu0
  %v2636 = vadd.f32 %v2294, %v2594
  %v2637 = vxor.u32 %v2636, 2147483648
  %v2638 = vmul.f32 %v2637, 1.442695
  %v2639 = vpow.pop %v2638
  %v2640 = vadd.f32 %v2639, 1.0
  %v2641 = vrcp.pop %v2640
  %v2642 = vmul.f32 %v2640, %v2641
  %v2643 = vsub.f32 1.0, %v2642
  %v2644 = vmul.f32 %v2641, %v2643
  %v2645 = vadd.f32 %v2641, %v2644
  %vm2646 = vweird.f32 %v2640
  %vm2647 = vweird.f32 %v2641
  %vm2648 = vmor %vm2646, %vm2647
  %v2649 = vsel %vm2648, %v2641, %v2645
  %v2650 = vand.u32 2147483647, %v2640
  %vm2651 = vcmp.eq.f32.partialorder %v2650, 8.507059e+37
  %v2652 = vand.u32 %v2640, 2147483648
  %v2653 = vor.u32 1.1754944e-38, %v2652
  %v2654 = vsel %vm2651, %v2653, %v2649
  %v2655 = vmul.f32 1.0, %v2654
  %v2656 = vadd.f32 %v2373, %v2614
  %v2657 = vxor.u32 %v2656, 2147483648
  %v2658 = vmul.f32 %v2657, 1.442695
  %v2659 = vpow.pop %v2658
  %v2660 = vadd.f32 %v2659, 1.0
  %v2661 = vrcp.pop %v2660
  %v2662 = vmul.f32 %v2660, %v2661
  %v2663 = vsub.f32 1.0, %v2662
  %v2664 = vmul.f32 %v2661, %v2663
  %v2665 = vadd.f32 %v2661, %v2664
  %vm2666 = vweird.f32 %v2660
  %vm2667 = vweird.f32 %v2661
  %vm2668 = vmor %vm2666, %vm2667
  %v2669 = vsel %vm2668, %v2661, %v2665
  %v2670 = vand.u32 2147483647, %v2660
  %vm2671 = vcmp.eq.f32.partialorder %v2670, 8.507059e+37
  %v2672 = vand.u32 %v2660, 2147483648
  %v2673 = vor.u32 1.1754944e-38, %v2672
  %v2674 = vsel %vm2671, %v2673, %v2669
  %v2675 = vmul.f32 1.0, %v2674
  %v2676 = vmul.f32 %v2655, %v2634
  %v2677 = vadd.f32 %v2452, %v2676
  %v2678 = vtanh.pop %v2677
  %v2679 = vsub.f32 1.0, %v2675
  %v2680 = vmul.f32 %v2679, %v2678
  %v2681 = vmul.f32 %v2675, %v2572
  %v2682 = vadd.f32 %v2680, %v2681
  %v2684 = vsel %vm644, %v2682, 0
  %2686 = vmatpush.msra.mxu0 0.0
  %2687 = vmatpush.msra.mxu0 0.0
  %2688 = vmatpush.msra.mxu0 0.0
  %2689 = vmatpush.msra.mxu0 0.0
  %2690 = vmatpush.msra.mxu0 0.0
  %2691 = vmatpush.msra.mxu0 0.0
  %2692 = vmatpush.msra.mxu0 0.0
  %2693 = vmatpush.msra.mxu0 0.0
  %2694 = vmatpush.msra.mxu0 0.0
  %2695 = vmatpush.msra.mxu0 0.0
  %2696 = vmatpush.msra.mxu0 0.0
  %2697 = vmatpush.msra.mxu0 0.0
  %2698 = vmatpush.msra.mxu0 0.0
  %2699 = vmatpush.msra.mxu0 0.0
  %2700 = vmatpush.msra.mxu0 %v345
  %2701 = vmatpush.msra.mxu0 %v344
  %2702 = vmatmul.f32.gmra.mxu0 %v2684
  %v2703 = vpop.f32.mrf.mxu0
  %v2704 = vadd.f32 %v2458, %v2703
  %2705 = vdwg.mxu0
  %2706 = vmatpush.msra.mxu0 0.0
  %2707 = vmatpush.msra.mxu0 0.0
  %2708 = vmatpush.msra.mxu0 0.0
  %2709 = vmatpush.msra.mxu0 0.0
  %2710 = vmatpush.msra.mxu0 0.0
  %2711 = vmatpush.msra.mxu0 0.0
  %2712 = vmatpush.msra.mxu0 0.0
  %2713 = vmatpush.msra.mxu0 0.0
  %2714 = vmatpush.msra.mxu0 0.0
  %2715 = vmatpush.msra.mxu0 0.0
  %2716 = vmatpush.msra.mxu0 0.0
  %2717 = vmatpush.msra.mxu0 0.0
  %2718 = vmatpush.msra.mxu0 0.0
  %2719 = vmatpush.msra.mxu0 0.0
  %2720 = vmatpush.msra.mxu0 %v347
  %2721 = vmatpush.msra.mxu0 %v346
  %2722 = vmatmul.f32.gmra.mxu0 %v2684
  %v2723 = vpop.f32.mrf.mxu0
  %v2724 = vadd.f32 %v2481, %v2723
  %2725 = vdwg.mxu0
  %2726 = vmatpush.msra.mxu0 0.0
  %2727 = vmatpush.msra.mxu0 0.0
  %2728 = vmatpush.msra.mxu0 0.0
  %2729 = vmatpush.msra.mxu0 0.0
  %2730 = vmatpush.msra.mxu0 0.0
  %2731 = vmatpush.msra.mxu0 0.0
  %2732 = vmatpush.msra.mxu0 0.0
  %2733 = vmatpush.msra.mxu0 0.0
  %2734 = vmatpush.msra.mxu0 0.0
  %2735 = vmatpush.msra.mxu0 0.0
  %2736 = vmatpush.msra.mxu0 0.0
  %2737 = vmatpush.msra.mxu0 0.0
  %2738 = vmatpush.msra.mxu0 0.0
  %2739 = vmatpush.msra.mxu0 0.0
  %2740 = vmatpush.msra.mxu0 %v349
  %2741 = vmatpush.msra.mxu0 %v348
  %2742 = vmatmul.f32.gmra.mxu0 %v2684
  %v2743 = vpop.f32.mrf.mxu0
  %v2744 = vadd.f32 %v2504, %v2743
  %2745 = vdwg.mxu0
  %v2746 = vadd.f32 %v2295, %v2704
  %v2747 = vxor.u32 %v2746, 2147483648
  %v2748 = vmul.f32 %v2747, 1.442695
  %v2749 = vpow.pop %v2748
  %v2750 = vadd.f32 %v2749, 1.0
  %v2751 = vrcp.pop %v2750
  %v2752 = vmul.f32 %v2750, %v2751
  %v2753 = vsub.f32 1.0, %v2752
  %v2754 = vmul.f32 %v2751, %v2753
  %v2755 = vadd.f32 %v2751, %v2754
  %vm2756 = vweird.f32 %v2750
  %vm2757 = vweird.f32 %v2751
  %vm2758 = vmor %vm2756, %vm2757
  %v2759 = vsel %vm2758, %v2751, %v2755
  %v2760 = vand.u32 2147483647, %v2750
  %vm2761 = vcmp.eq.f32.partialorder %v2760, 8.507059e+37
  %v2762 = vand.u32 %v2750, 2147483648
  %v2763 = vor.u32 1.1754944e-38, %v2762
  %v2764 = vsel %vm2761, %v2763, %v2759
  %v2765 = vmul.f32 1.0, %v2764
  %v2766 = vadd.f32 %v2374, %v2724
  %v2767 = vxor.u32 %v2766, 2147483648
  %v2768 = vmul.f32 %v2767, 1.442695
  %v2769 = vpow.pop %v2768
  %v2770 = vadd.f32 %v2769, 1.0
  %v2771 = vrcp.pop %v2770
  %v2772 = vmul.f32 %v2770, %v2771
  %v2773 = vsub.f32 1.0, %v2772
  %v2774 = vmul.f32 %v2771, %v2773
  %v2775 = vadd.f32 %v2771, %v2774
  %vm2776 = vweird.f32 %v2770
  %vm2777 = vweird.f32 %v2771
  %vm2778 = vmor %vm2776, %vm2777
  %v2779 = vsel %vm2778, %v2771, %v2775
  %v2780 = vand.u32 2147483647, %v2770
  %vm2781 = vcmp.eq.f32.partialorder %v2780, 8.507059e+37
  %v2782 = vand.u32 %v2770, 2147483648
  %v2783 = vor.u32 1.1754944e-38, %v2782
  %v2784 = vsel %vm2781, %v2783, %v2779
  %v2785 = vmul.f32 1.0, %v2784
  %v2786 = vmul.f32 %v2765, %v2744
  %v2787 = vadd.f32 %v2453, %v2786
  %v2788 = vtanh.pop %v2787
  %v2789 = vsub.f32 1.0, %v2785
  %v2790 = vmul.f32 %v2789, %v2788
  %v2791 = vmul.f32 %v2785, %v2682
  %v2792 = vadd.f32 %v2790, %v2791
  %v2794 = vsel %vm644, %v2792, 0
  %2796 = vmatpush.msra.mxu0 0.0
  %2797 = vmatpush.msra.mxu0 0.0
  %2798 = vmatpush.msra.mxu0 0.0
  %2799 = vmatpush.msra.mxu0 0.0
  %2800 = vmatpush.msra.mxu0 0.0
  %2801 = vmatpush.msra.mxu0 0.0
  %2802 = vmatpush.msra.mxu0 0.0
  %2803 = vmatpush.msra.mxu0 0.0
  %2804 = vmatpush.msra.mxu0 0.0
  %2805 = vmatpush.msra.mxu0 0.0
  %2806 = vmatpush.msra.mxu0 0.0
  %2807 = vmatpush.msra.mxu0 0.0
  %2808 = vmatpush.msra.mxu0 0.0
  %2809 = vmatpush.msra.mxu0 0.0
  %2810 = vmatpush.msra.mxu0 %v345
  %2811 = vmatpush.msra.mxu0 %v344
  %2812 = vmatmul.f32.gmra.mxu0 %v2794
  %v2813 = vpop.f32.mrf.mxu0
  %v2814 = vadd.f32 %v2458, %v2813
  %2815 = vdwg.mxu0
  %2816 = vmatpush.msra.mxu0 0.0
  %2817 = vmatpush.msra.mxu0 0.0
  %2818 = vmatpush.msra.mxu0 0.0
  %2819 = vmatpush.msra.mxu0 0.0
  %2820 = vmatpush.msra.mxu0 0.0
  %2821 = vmatpush.msra.mxu0 0.0
  %2822 = vmatpush.msra.mxu0 0.0
  %2823 = vmatpush.msra.mxu0 0.0
  %2824 = vmatpush.msra.mxu0 0.0
  %2825 = vmatpush.msra.mxu0 0.0
  %2826 = vmatpush.msra.mxu0 0.0
  %2827 = vmatpush.msra.mxu0 0.0
  %2828 = vmatpush.msra.mxu0 0.0
  %2829 = vmatpush.msra.mxu0 0.0
  %2830 = vmatpush.msra.mxu0 %v347
  %2831 = vmatpush.msra.mxu0 %v346
  %2832 = vmatmul.f32.gmra.mxu0 %v2794
  %v2833 = vpop.f32.mrf.mxu0
  %v2834 = vadd.f32 %v2481, %v2833
  %2835 = vdwg.mxu0
  %2836 = vmatpush.msra.mxu0 0.0
  %2837 = vmatpush.msra.mxu0 0.0
  %2838 = vmatpush.msra.mxu0 0.0
  %2839 = vmatpush.msra.mxu0 0.0
  %2840 = vmatpush.msra.mxu0 0.0
  %2841 = vmatpush.msra.mxu0 0.0
  %2842 = vmatpush.msra.mxu0 0.0
  %2843 = vmatpush.msra.mxu0 0.0
  %2844 = vmatpush.msra.mxu0 0.0
  %2845 = vmatpush.msra.mxu0 0.0
  %2846 = vmatpush.msra.mxu0 0.0
  %2847 = vmatpush.msra.mxu0 0.0
  %2848 = vmatpush.msra.mxu0 0.0
  %2849 = vmatpush.msra.mxu0 0.0
  %2850 = vmatpush.msra.mxu0 %v349
  %2851 = vmatpush.msra.mxu0 %v348
  %2852 = vmatmul.f32.gmra.mxu0 %v2794
  %v2853 = vpop.f32.mrf.mxu0
  %v2854 = vadd.f32 %v2504, %v2853
  %2855 = vdwg.mxu0
  %v2856 = vadd.f32 %v2296, %v2814
  %v2857 = vxor.u32 %v2856, 2147483648
  %v2858 = vmul.f32 %v2857, 1.442695
  %v2859 = vpow.pop %v2858
  %v2860 = vadd.f32 %v2859, 1.0
  %v2861 = vrcp.pop %v2860
  %v2862 = vmul.f32 %v2860, %v2861
  %v2863 = vsub.f32 1.0, %v2862
  %v2864 = vmul.f32 %v2861, %v2863
  %v2865 = vadd.f32 %v2861, %v2864
  %vm2866 = vweird.f32 %v2860
  %vm2867 = vweird.f32 %v2861
  %vm2868 = vmor %vm2866, %vm2867
  %v2869 = vsel %vm2868, %v2861, %v2865
  %v2870 = vand.u32 2147483647, %v2860
  %vm2871 = vcmp.eq.f32.partialorder %v2870, 8.507059e+37
  %v2872 = vand.u32 %v2860, 2147483648
  %v2873 = vor.u32 1.1754944e-38, %v2872
  %v2874 = vsel %vm2871, %v2873, %v2869
  %v2875 = vmul.f32 1.0, %v2874
  %v2876 = vadd.f32 %v2375, %v2834
  %v2877 = vxor.u32 %v2876, 2147483648
  %v2878 = vmul.f32 %v2877, 1.442695
  %v2879 = vpow.pop %v2878
  %v2880 = vadd.f32 %v2879, 1.0
  %v2881 = vrcp.pop %v2880
  %v2882 = vmul.f32 %v2880, %v2881
  %v2883 = vsub.f32 1.0, %v2882
  %v2884 = vmul.f32 %v2881, %v2883
  %v2885 = vadd.f32 %v2881, %v2884
  %vm2886 = vweird.f32 %v2880
  %vm2887 = vweird.f32 %v2881
  %vm2888 = vmor %vm2886, %vm2887
  %v2889 = vsel %vm2888, %v2881, %v2885
  %v2890 = vand.u32 2147483647, %v2880
  %vm2891 = vcmp.eq.f32.partialorder %v2890, 8.507059e+37
  %v2892 = vand.u32 %v2880, 2147483648
  %v2893 = vor.u32 1.1754944e-38, %v2892
  %v2894 = vsel %vm2891, %v2893, %v2889
  %v2895 = vmul.f32 1.0, %v2894
  %v2896 = vmul.f32 %v2875, %v2854
  %v2897 = vadd.f32 %v2454, %v2896
  %v2898 = vtanh.pop %v2897
  %v2899 = vsub.f32 1.0, %v2895
  %v2900 = vmul.f32 %v2899, %v2898
  %v2901 = vmul.f32 %v2895, %v2792
  %v2902 = vadd.f32 %v2900, %v2901
  %v2904 = vsel %vm644, %v2902, 0
  %2906 = vmatpush.msra.mxu0 0.0
  %2907 = vmatpush.msra.mxu0 0.0
  %2908 = vmatpush.msra.mxu0 0.0
  %2909 = vmatpush.msra.mxu0 0.0
  %2910 = vmatpush.msra.mxu0 0.0
  %2911 = vmatpush.msra.mxu0 0.0
  %2912 = vmatpush.msra.mxu0 0.0
  %2913 = vmatpush.msra.mxu0 0.0
  %2914 = vmatpush.msra.mxu0 0.0
  %2915 = vmatpush.msra.mxu0 0.0
  %2916 = vmatpush.msra.mxu0 0.0
  %2917 = vmatpush.msra.mxu0 0.0
  %2918 = vmatpush.msra.mxu0 0.0
  %2919 = vmatpush.msra.mxu0 0.0
  %2920 = vmatpush.msra.mxu0 %v345
  %2921 = vmatpush.msra.mxu0 %v344
  %2922 = vmatmul.f32.gmra.mxu0 %v2904
  %v2923 = vpop.f32.mrf.mxu0
  %v2924 = vadd.f32 %v2458, %v2923
  %2925 = vdwg.mxu0
  %2926 = vmatpush.msra.mxu0 0.0
  %2927 = vmatpush.msra.mxu0 0.0
  %2928 = vmatpush.msra.mxu0 0.0
  %2929 = vmatpush.msra.mxu0 0.0
  %2930 = vmatpush.msra.mxu0 0.0
  %2931 = vmatpush.msra.mxu0 0.0
  %2932 = vmatpush.msra.mxu0 0.0
  %2933 = vmatpush.msra.mxu0 0.0
  %2934 = vmatpush.msra.mxu0 0.0
  %2935 = vmatpush.msra.mxu0 0.0
  %2936 = vmatpush.msra.mxu0 0.0
  %2937 = vmatpush.msra.mxu0 0.0
  %2938 = vmatpush.msra.mxu0 0.0
  %2939 = vmatpush.msra.mxu0 0.0
  %2940 = vmatpush.msra.mxu0 %v347
  %2941 = vmatpush.msra.mxu0 %v346
  %2942 = vmatmul.f32.gmra.mxu0 %v2904
  %v2943 = vpop.f32.mrf.mxu0
  %v2944 = vadd.f32 %v2481, %v2943
  %2945 = vdwg.mxu0
  %2946 = vmatpush.msra.mxu0 0.0
  %2947 = vmatpush.msra.mxu0 0.0
  %2948 = vmatpush.msra.mxu0 0.0
  %2949 = vmatpush.msra.mxu0 0.0
  %2950 = vmatpush.msra.mxu0 0.0
  %2951 = vmatpush.msra.mxu0 0.0
  %2952 = vmatpush.msra.mxu0 0.0
  %2953 = vmatpush.msra.mxu0 0.0
  %2954 = vmatpush.msra.mxu0 0.0
  %2955 = vmatpush.msra.mxu0 0.0
  %2956 = vmatpush.msra.mxu0 0.0
  %2957 = vmatpush.msra.mxu0 0.0
  %2958 = vmatpush.msra.mxu0 0.0
  %2959 = vmatpush.msra.mxu0 0.0
  %2960 = vmatpush.msra.mxu0 %v349
  %2961 = vmatpush.msra.mxu0 %v348
  %2962 = vmatmul.f32.gmra.mxu0 %v2904
  %v2963 = vpop.f32.mrf.mxu0
  %v2964 = vadd.f32 %v2504, %v2963
  %2965 = vdwg.mxu0
  %v2966 = vadd.f32 %v2297, %v2924
  %v2967 = vxor.u32 %v2966, 2147483648
  %v2968 = vmul.f32 %v2967, 1.442695
  %v2969 = vpow.pop %v2968
  %v2970 = vadd.f32 %v2969, 1.0
  %v2971 = vrcp.pop %v2970
  %v2972 = vmul.f32 %v2970, %v2971
  %v2973 = vsub.f32 1.0, %v2972
  %v2974 = vmul.f32 %v2971, %v2973
  %v2975 = vadd.f32 %v2971, %v2974
  %vm2976 = vweird.f32 %v2970
  %vm2977 = vweird.f32 %v2971
  %vm2978 = vmor %vm2976, %vm2977
  %v2979 = vsel %vm2978, %v2971, %v2975
  %v2980 = vand.u32 2147483647, %v2970
  %vm2981 = vcmp.eq.f32.partialorder %v2980, 8.507059e+37
  %v2982 = vand.u32 %v2970, 2147483648
  %v2983 = vor.u32 1.1754944e-38, %v2982
  %v2984 = vsel %vm2981, %v2983, %v2979
  %v2985 = vmul.f32 1.0, %v2984
  %v2986 = vadd.f32 %v2376, %v2944
  %v2987 = vxor.u32 %v2986, 2147483648
  %v2988 = vmul.f32 %v2987, 1.442695
  %v2989 = vpow.pop %v2988
  %v2990 = vadd.f32 %v2989, 1.0
  %v2991 = vrcp.pop %v2990
  %v2992 = vmul.f32 %v2990, %v2991
  %v2993 = vsub.f32 1.0, %v2992
  %v2994 = vmul.f32 %v2991, %v2993
  %v2995 = vadd.f32 %v2991, %v2994
  %vm2996 = vweird.f32 %v2990
  %vm2997 = vweird.f32 %v2991
  %vm2998 = vmor %vm2996, %vm2997
  %v2999 = vsel %vm2998, %v2991, %v2995
  %v3000 = vand.u32 2147483647, %v2990
  %vm3001 = vcmp.eq.f32.partialorder %v3000, 8.507059e+37
  %v3002 = vand.u32 %v2990, 2147483648
  %v3003 = vor.u32 1.1754944e-38, %v3002
  %v3004 = vsel %vm3001, %v3003, %v2999
  %v3005 = vmul.f32 1.0, %v3004
  %v3006 = vmul.f32 %v2985, %v2964
  %v3007 = vadd.f32 %v2455, %v3006
  %v3008 = vtanh.pop %v3007
  %v3009 = vsub.f32 1.0, %v3005
  %v3010 = vmul.f32 %v3009, %v3008
  %v3011 = vmul.f32 %v3005, %v2902
  %v3012 = vadd.f32 %v3010, %v3011
  %v3014 = vsel %vm644, %v3012, 0
  %3016 = vmatpush.msra.mxu0 0.0
  %3017 = vmatpush.msra.mxu0 0.0
  %3018 = vmatpush.msra.mxu0 0.0
  %3019 = vmatpush.msra.mxu0 0.0
  %3020 = vmatpush.msra.mxu0 0.0
  %3021 = vmatpush.msra.mxu0 0.0
  %3022 = vmatpush.msra.mxu0 0.0
  %3023 = vmatpush.msra.mxu0 0.0
  %3024 = vmatpush.msra.mxu0 0.0
  %3025 = vmatpush.msra.mxu0 0.0
  %3026 = vmatpush.msra.mxu0 0.0
  %3027 = vmatpush.msra.mxu0 0.0
  %3028 = vmatpush.msra.mxu0 0.0
  %3029 = vmatpush.msra.mxu0 0.0
  %3030 = vmatpush.msra.mxu0 %v345
  %3031 = vmatpush.msra.mxu0 %v344
  %3032 = vmatmul.f32.gmra.mxu0 %v3014
  %v3033 = vpop.f32.mrf.mxu0
  %v3034 = vadd.f32 %v2458, %v3033
  %3035 = vdwg.mxu0
  %3036 = vmatpush.msra.mxu0 0.0
  %3037 = vmatpush.msra.mxu0 0.0
  %3038 = vmatpush.msra.mxu0 0.0
  %3039 = vmatpush.msra.mxu0 0.0
  %3040 = vmatpush.msra.mxu0 0.0
  %3041 = vmatpush.msra.mxu0 0.0
  %3042 = vmatpush.msra.mxu0 0.0
  %3043 = vmatpush.msra.mxu0 0.0
  %3044 = vmatpush.msra.mxu0 0.0
  %3045 = vmatpush.msra.mxu0 0.0
  %3046 = vmatpush.msra.mxu0 0.0
  %3047 = vmatpush.msra.mxu0 0.0
  %3048 = vmatpush.msra.mxu0 0.0
  %3049 = vmatpush.msra.mxu0 0.0
  %3050 = vmatpush.msra.mxu0 %v347
  %3051 = vmatpush.msra.mxu0 %v346
  %3052 = vmatmul.f32.gmra.mxu0 %v3014
  %v3053 = vpop.f32.mrf.mxu0
  %v3054 = vadd.f32 %v2481, %v3053
  %3055 = vdwg.mxu0
  %3056 = vmatpush.msra.mxu0 0.0
  %3057 = vmatpush.msra.mxu0 0.0
  %3058 = vmatpush.msra.mxu0 0.0
  %3059 = vmatpush.msra.mxu0 0.0
  %3060 = vmatpush.msra.mxu0 0.0
  %3061 = vmatpush.msra.mxu0 0.0
  %3062 = vmatpush.msra.mxu0 0.0
  %3063 = vmatpush.msra.mxu0 0.0
  %3064 = vmatpush.msra.mxu0 0.0
  %3065 = vmatpush.msra.mxu0 0.0
  %3066 = vmatpush.msra.mxu0 0.0
  %3067 = vmatpush.msra.mxu0 0.0
  %3068 = vmatpush.msra.mxu0 0.0
  %3069 = vmatpush.msra.mxu0 0.0
  %3070 = vmatpush.msra.mxu0 %v349
  %3071 = vmatpush.msra.mxu0 %v348
  %3072 = vmatmul.f32.gmra.mxu0 %v3014
  %v3073 = vpop.f32.mrf.mxu0
  %v3074 = vadd.f32 %v2504, %v3073
  %3075 = vdwg.mxu0
  %v3076 = vadd.f32 %v2298, %v3034
  %v3077 = vxor.u32 %v3076, 2147483648
  %v3078 = vmul.f32 %v3077, 1.442695
  %v3079 = vpow.pop %v3078
  %v3080 = vadd.f32 %v3079, 1.0
  %v3081 = vrcp.pop %v3080
  %v3082 = vmul.f32 %v3080, %v3081
  %v3083 = vsub.f32 1.0, %v3082
  %v3084 = vmul.f32 %v3081, %v3083
  %v3085 = vadd.f32 %v3081, %v3084
  %vm3086 = vweird.f32 %v3080
  %vm3087 = vweird.f32 %v3081
  %vm3088 = vmor %vm3086, %vm3087
  %v3089 = vsel %vm3088, %v3081, %v3085
  %v3090 = vand.u32 2147483647, %v3080
  %vm3091 = vcmp.eq.f32.partialorder %v3090, 8.507059e+37
  %v3092 = vand.u32 %v3080, 2147483648
  %v3093 = vor.u32 1.1754944e-38, %v3092
  %v3094 = vsel %vm3091, %v3093, %v3089
  %v3095 = vmul.f32 1.0, %v3094
  %v3096 = vadd.f32 %v2377, %v3054
  %v3097 = vxor.u32 %v3096, 2147483648
  %v3098 = vmul.f32 %v3097, 1.442695
  %v3099 = vpow.pop %v3098
  %v3100 = vadd.f32 %v3099, 1.0
  %v3101 = vrcp.pop %v3100
  %v3102 = vmul.f32 %v3100, %v3101
  %v3103 = vsub.f32 1.0, %v3102
  %v3104 = vmul.f32 %v3101, %v3103
  %v3105 = vadd.f32 %v3101, %v3104
  %vm3106 = vweird.f32 %v3100
  %vm3107 = vweird.f32 %v3101
  %vm3108 = vmor %vm3106, %vm3107
  %v3109 = vsel %vm3108, %v3101, %v3105
  %v3110 = vand.u32 2147483647, %v3100
  %vm3111 = vcmp.eq.f32.partialorder %v3110, 8.507059e+37
  %v3112 = vand.u32 %v3100, 2147483648
  %v3113 = vor.u32 1.1754944e-38, %v3112
  %v3114 = vsel %vm3111, %v3113, %v3109
  %v3115 = vmul.f32 1.0, %v3114
  %v3116 = vmul.f32 %v3095, %v3074
  %v3117 = vadd.f32 %v2456, %v3116
  %v3118 = vtanh.pop %v3117
  %v3119 = vsub.f32 1.0, %v3115
  %v3120 = vmul.f32 %v3119, %v3118
  %v3121 = vmul.f32 %v3115, %v3012
  %v3122 = vadd.f32 %v3120, %v3121
  %3123 = vmatpush.msra.mxu0 0.0
  %3124 = vmatpush.msra.mxu0 0.0
  %3125 = vmatpush.msra.mxu0 0.0
  %3126 = vmatpush.msra.mxu0 0.0
  %3127 = vmatpush.msra.mxu0 0.0
  %3128 = vmatpush.msra.mxu0 0.0
  %3129 = vmatpush.msra.mxu0 0.0
  %3130 = vmatpush.msra.mxu0 0.0
  %3131 = vmatpush.msra.mxu0 0.0
  %3132 = vmatpush.msra.mxu0 0.0
  %3133 = vmatpush.msra.mxu0 0.0
  %3134 = vmatpush.msra.mxu0 0.0
  %3135 = vmatpush.msra.mxu0 0.0
  %3136 = vmatpush.msra.mxu0 0.0
  %3137 = vmatpush.msra.mxu0 %v339
  %3138 = vmatpush.msra.mxu0 %v338
  %3139 = vmatmul.f32.gmra.mxu0 %v2215
  %v3140 = vpop.f32.mrf.mxu0
  %v3141 = vadd.f32 0.0, %v3140
  %3142 = vmatmul.f32.gmra.mxu0 %v2105
  %v3143 = vpop.f32.mrf.mxu0
  %v3144 = vadd.f32 0.0, %v3143
  %3145 = vmatmul.f32.gmra.mxu0 %v1995
  %v3146 = vpop.f32.mrf.mxu0
  %v3147 = vadd.f32 0.0, %v3146
  %3148 = vmatmul.f32.gmra.mxu0 %v1885
  %v3149 = vpop.f32.mrf.mxu0
  %v3150 = vadd.f32 0.0, %v3149
  %3151 = vmatmul.f32.gmra.mxu0 %v1775
  %v3152 = vpop.f32.mrf.mxu0
  %v3153 = vadd.f32 0.0, %v3152
  %3154 = vmatmul.f32.gmra.mxu0 %v1665
  %v3155 = vpop.f32.mrf.mxu0
  %v3156 = vadd.f32 0.0, %v3155
  %3157 = vdwg.mxu0
  %3158 = vmatpush.msra.mxu0 0.0
  %3159 = vmatpush.msra.mxu0 0.0
  %3160 = vmatpush.msra.mxu0 0.0
  %3161 = vmatpush.msra.mxu0 0.0
  %3162 = vmatpush.msra.mxu0 0.0
  %3163 = vmatpush.msra.mxu0 0.0
  %3164 = vmatpush.msra.mxu0 0.0
  %3165 = vmatpush.msra.mxu0 0.0
  %3166 = vmatpush.msra.mxu0 0.0
  %3167 = vmatpush.msra.mxu0 0.0
  %3168 = vmatpush.msra.mxu0 0.0
  %3169 = vmatpush.msra.mxu0 0.0
  %3170 = vmatpush.msra.mxu0 0.0
  %3171 = vmatpush.msra.mxu0 0.0
  %3172 = vmatpush.msra.mxu0 %v327
  %3173 = vmatpush.msra.mxu0 %v326
  %3174 = vmatmul.f32.gmra.mxu0 %v762
  %v3175 = vpop.f32.mrf.mxu0
  %v3176 = vadd.f32 %v3141, %v3175
  %3177 = vmatmul.f32.gmra.mxu0 %v872
  %v3178 = vpop.f32.mrf.mxu0
  %v3179 = vadd.f32 %v3144, %v3178
  %3180 = vmatmul.f32.gmra.mxu0 %v982
  %v3181 = vpop.f32.mrf.mxu0
  %v3182 = vadd.f32 %v3147, %v3181
  %3183 = vmatmul.f32.gmra.mxu0 %v1092
  %v3184 = vpop.f32.mrf.mxu0
  %v3185 = vadd.f32 %v3150, %v3184
  %3186 = vmatmul.f32.gmra.mxu0 %v1202
  %v3187 = vpop.f32.mrf.mxu0
  %v3188 = vadd.f32 %v3153, %v3187
  %3189 = vmatmul.f32.gmra.mxu0 %v2253
  %v3190 = vpop.f32.mrf.mxu0
  %v3191 = vadd.f32 %v3156, %v3190
  %3192 = vdwg.mxu0
  %v3194 = vperm.slane %v359, 0
  %v3196 = vadd.f32 %v3176, %v3194
  %v3197 = vadd.f32 %v3179, %v3194
  %v3198 = vadd.f32 %v3182, %v3194
  %v3199 = vadd.f32 %v3185, %v3194
  %v3200 = vadd.f32 %v3188, %v3194
  %v3201 = vadd.f32 %v3191, %v3194
  %3202 = vmatpush.msra.mxu0 0.0
  %3203 = vmatpush.msra.mxu0 0.0
  %3204 = vmatpush.msra.mxu0 0.0
  %3205 = vmatpush.msra.mxu0 0.0
  %3206 = vmatpush.msra.mxu0 0.0
  %3207 = vmatpush.msra.mxu0 0.0
  %3208 = vmatpush.msra.mxu0 0.0
  %3209 = vmatpush.msra.mxu0 0.0
  %3210 = vmatpush.msra.mxu0 0.0
  %3211 = vmatpush.msra.mxu0 0.0
  %3212 = vmatpush.msra.mxu0 0.0
  %3213 = vmatpush.msra.mxu0 0.0
  %3214 = vmatpush.msra.mxu0 0.0
  %3215 = vmatpush.msra.mxu0 0.0
  %3216 = vmatpush.msra.mxu0 %v341
  %3217 = vmatpush.msra.mxu0 %v340
  %3218 = vmatmul.f32.gmra.mxu0 %v2215
  %v3219 = vpop.f32.mrf.mxu0
  %v3220 = vadd.f32 0.0, %v3219
  %3221 = vmatmul.f32.gmra.mxu0 %v2105
  %v3222 = vpop.f32.mrf.mxu0
  %v3223 = vadd.f32 0.0, %v3222
  %3224 = vmatmul.f32.gmra.mxu0 %v1995
  %v3225 = vpop.f32.mrf.mxu0
  %v3226 = vadd.f32 0.0, %v3225
  %3227 = vmatmul.f32.gmra.mxu0 %v1885
  %v3228 = vpop.f32.mrf.mxu0
  %v3229 = vadd.f32 0.0, %v3228
  %3230 = vmatmul.f32.gmra.mxu0 %v1775
  %v3231 = vpop.f32.mrf.mxu0
  %v3232 = vadd.f32 0.0, %v3231
  %3233 = vmatmul.f32.gmra.mxu0 %v1665
  %v3234 = vpop.f32.mrf.mxu0
  %v3235 = vadd.f32 0.0, %v3234
  %3236 = vdwg.mxu0
  %3237 = vmatpush.msra.mxu0 0.0
  %3238 = vmatpush.msra.mxu0 0.0
  %3239 = vmatpush.msra.mxu0 0.0
  %3240 = vmatpush.msra.mxu0 0.0
  %3241 = vmatpush.msra.mxu0 0.0
  %3242 = vmatpush.msra.mxu0 0.0
  %3243 = vmatpush.msra.mxu0 0.0
  %3244 = vmatpush.msra.mxu0 0.0
  %3245 = vmatpush.msra.mxu0 0.0
  %3246 = vmatpush.msra.mxu0 0.0
  %3247 = vmatpush.msra.mxu0 0.0
  %3248 = vmatpush.msra.mxu0 0.0
  %3249 = vmatpush.msra.mxu0 0.0
  %3250 = vmatpush.msra.mxu0 0.0
  %3251 = vmatpush.msra.mxu0 %v329
  %3252 = vmatpush.msra.mxu0 %v328
  %3253 = vmatmul.f32.gmra.mxu0 %v762
  %v3254 = vpop.f32.mrf.mxu0
  %v3255 = vadd.f32 %v3220, %v3254
  %3256 = vmatmul.f32.gmra.mxu0 %v872
  %v3257 = vpop.f32.mrf.mxu0
  %v3258 = vadd.f32 %v3223, %v3257
  %3259 = vmatmul.f32.gmra.mxu0 %v982
  %v3260 = vpop.f32.mrf.mxu0
  %v3261 = vadd.f32 %v3226, %v3260
  %3262 = vmatmul.f32.gmra.mxu0 %v1092
  %v3263 = vpop.f32.mrf.mxu0
  %v3264 = vadd.f32 %v3229, %v3263
  %3265 = vmatmul.f32.gmra.mxu0 %v1202
  %v3266 = vpop.f32.mrf.mxu0
  %v3267 = vadd.f32 %v3232, %v3266
  %3268 = vmatmul.f32.gmra.mxu0 %v2253
  %v3269 = vpop.f32.mrf.mxu0
  %v3270 = vadd.f32 %v3235, %v3269
  %3271 = vdwg.mxu0
  %v3273 = vperm.slane %v360, 0
  %v3275 = vadd.f32 %v3255, %v3273
  %v3276 = vadd.f32 %v3258, %v3273
  %v3277 = vadd.f32 %v3261, %v3273
  %v3278 = vadd.f32 %v3264, %v3273
  %v3279 = vadd.f32 %v3267, %v3273
  %v3280 = vadd.f32 %v3270, %v3273
  %3281 = vmatpush.msra.mxu0 0.0
  %3282 = vmatpush.msra.mxu0 0.0
  %3283 = vmatpush.msra.mxu0 0.0
  %3284 = vmatpush.msra.mxu0 0.0
  %3285 = vmatpush.msra.mxu0 0.0
  %3286 = vmatpush.msra.mxu0 0.0
  %3287 = vmatpush.msra.mxu0 0.0
  %3288 = vmatpush.msra.mxu0 0.0
  %3289 = vmatpush.msra.mxu0 0.0
  %3290 = vmatpush.msra.mxu0 0.0
  %3291 = vmatpush.msra.mxu0 0.0
  %3292 = vmatpush.msra.mxu0 0.0
  %3293 = vmatpush.msra.mxu0 0.0
  %3294 = vmatpush.msra.mxu0 0.0
  %3295 = vmatpush.msra.mxu0 %v343
  %3296 = vmatpush.msra.mxu0 %v342
  %3297 = vmatmul.f32.gmra.mxu0 %v2215
  %v3298 = vpop.f32.mrf.mxu0
  %v3299 = vadd.f32 0.0, %v3298
  %3300 = vmatmul.f32.gmra.mxu0 %v2105
  %v3301 = vpop.f32.mrf.mxu0
  %v3302 = vadd.f32 0.0, %v3301
  %3303 = vmatmul.f32.gmra.mxu0 %v1995
  %v3304 = vpop.f32.mrf.mxu0
  %v3305 = vadd.f32 0.0, %v3304
  %3306 = vmatmul.f32.gmra.mxu0 %v1885
  %v3307 = vpop.f32.mrf.mxu0
  %v3308 = vadd.f32 0.0, %v3307
  %3309 = vmatmul.f32.gmra.mxu0 %v1775
  %v3310 = vpop.f32.mrf.mxu0
  %v3311 = vadd.f32 0.0, %v3310
  %3312 = vmatmul.f32.gmra.mxu0 %v1665
  %v3313 = vpop.f32.mrf.mxu0
  %v3314 = vadd.f32 0.0, %v3313
  %3315 = vdwg.mxu0
  %3316 = vmatpush.msra.mxu0 0.0
  %3317 = vmatpush.msra.mxu0 0.0
  %3318 = vmatpush.msra.mxu0 0.0
  %3319 = vmatpush.msra.mxu0 0.0
  %3320 = vmatpush.msra.mxu0 0.0
  %3321 = vmatpush.msra.mxu0 0.0
  %3322 = vmatpush.msra.mxu0 0.0
  %3323 = vmatpush.msra.mxu0 0.0
  %3324 = vmatpush.msra.mxu0 0.0
  %3325 = vmatpush.msra.mxu0 0.0
  %3326 = vmatpush.msra.mxu0 0.0
  %3327 = vmatpush.msra.mxu0 0.0
  %3328 = vmatpush.msra.mxu0 0.0
  %3329 = vmatpush.msra.mxu0 0.0
  %3330 = vmatpush.msra.mxu0 %v331
  %3331 = vmatpush.msra.mxu0 %v330
  %3332 = vmatmul.f32.gmra.mxu0 %v762
  %v3333 = vpop.f32.mrf.mxu0
  %v3334 = vadd.f32 %v3299, %v3333
  %3335 = vmatmul.f32.gmra.mxu0 %v872
  %v3336 = vpop.f32.mrf.mxu0
  %v3337 = vadd.f32 %v3302, %v3336
  %3338 = vmatmul.f32.gmra.mxu0 %v982
  %v3339 = vpop.f32.mrf.mxu0
  %v3340 = vadd.f32 %v3305, %v3339
  %3341 = vmatmul.f32.gmra.mxu0 %v1092
  %v3342 = vpop.f32.mrf.mxu0
  %v3343 = vadd.f32 %v3308, %v3342
  %3344 = vmatmul.f32.gmra.mxu0 %v1202
  %v3345 = vpop.f32.mrf.mxu0
  %v3346 = vadd.f32 %v3311, %v3345
  %3347 = vmatmul.f32.gmra.mxu0 %v2253
  %v3348 = vpop.f32.mrf.mxu0
  %v3349 = vadd.f32 %v3314, %v3348
  %3350 = vdwg.mxu0
  %v3352 = vperm.slane %v361, 0
  %v3354 = vadd.f32 %v3334, %v3352
  %v3355 = vadd.f32 %v3337, %v3352
  %v3356 = vadd.f32 %v3340, %v3352
  %v3357 = vadd.f32 %v3343, %v3352
  %v3358 = vadd.f32 %v3346, %v3352
  %v3359 = vadd.f32 %v3349, %v3352
  %v3361 = vperm.slane %v365, 0
  %3363 = vmatpush.msra.mxu0 0.0
  %3364 = vmatpush.msra.mxu0 0.0
  %3365 = vmatpush.msra.mxu0 0.0
  %3366 = vmatpush.msra.mxu0 0.0
  %3367 = vmatpush.msra.mxu0 0.0
  %3368 = vmatpush.msra.mxu0 0.0
  %3369 = vmatpush.msra.mxu0 0.0
  %3370 = vmatpush.msra.mxu0 0.0
  %3371 = vmatpush.msra.mxu0 0.0
  %3372 = vmatpush.msra.mxu0 0.0
  %3373 = vmatpush.msra.mxu0 0.0
  %3374 = vmatpush.msra.mxu0 0.0
  %3375 = vmatpush.msra.mxu0 0.0
  %3376 = vmatpush.msra.mxu0 0.0
  %3377 = vmatpush.msra.mxu0 %v351
  %3378 = vmatpush.msra.mxu0 %v350
  %3379 = vmatmul.f32.gmra.mxu0 %v646
  %v3380 = vpop.f32.mrf.mxu0
  %v3381 = vadd.f32 %v3361, %v3380
  %3382 = vdwg.mxu0
  %v3384 = vperm.slane %v366, 0
  %3386 = vmatpush.msra.mxu0 0.0
  %3387 = vmatpush.msra.mxu0 0.0
  %3388 = vmatpush.msra.mxu0 0.0
  %3389 = vmatpush.msra.mxu0 0.0
  %3390 = vmatpush.msra.mxu0 0.0
  %3391 = vmatpush.msra.mxu0 0.0
  %3392 = vmatpush.msra.mxu0 0.0
  %3393 = vmatpush.msra.mxu0 0.0
  %3394 = vmatpush.msra.mxu0 0.0
  %3395 = vmatpush.msra.mxu0 0.0
  %3396 = vmatpush.msra.mxu0 0.0
  %3397 = vmatpush.msra.mxu0 0.0
  %3398 = vmatpush.msra.mxu0 0.0
  %3399 = vmatpush.msra.mxu0 0.0
  %3400 = vmatpush.msra.mxu0 %v353
  %3401 = vmatpush.msra.mxu0 %v352
  %3402 = vmatmul.f32.gmra.mxu0 %v646
  %v3403 = vpop.f32.mrf.mxu0
  %v3404 = vadd.f32 %v3384, %v3403
  %3405 = vdwg.mxu0
  %v3407 = vperm.slane %v367, 0
  %3409 = vmatpush.msra.mxu0 0.0
  %3410 = vmatpush.msra.mxu0 0.0
  %3411 = vmatpush.msra.mxu0 0.0
  %3412 = vmatpush.msra.mxu0 0.0
  %3413 = vmatpush.msra.mxu0 0.0
  %3414 = vmatpush.msra.mxu0 0.0
  %3415 = vmatpush.msra.mxu0 0.0
  %3416 = vmatpush.msra.mxu0 0.0
  %3417 = vmatpush.msra.mxu0 0.0
  %3418 = vmatpush.msra.mxu0 0.0
  %3419 = vmatpush.msra.mxu0 0.0
  %3420 = vmatpush.msra.mxu0 0.0
  %3421 = vmatpush.msra.mxu0 0.0
  %3422 = vmatpush.msra.mxu0 0.0
  %3423 = vmatpush.msra.mxu0 %v355
  %3424 = vmatpush.msra.mxu0 %v354
  %3425 = vmatmul.f32.gmra.mxu0 %v646
  %v3426 = vpop.f32.mrf.mxu0
  %v3427 = vadd.f32 %v3407, %v3426
  %3428 = vdwg.mxu0
  %v3429 = vadd.f32 %v3201, %v3381
  %v3430 = vxor.u32 %v3429, 2147483648
  %v3431 = vmul.f32 %v3430, 1.442695
  %v3432 = vpow.pop %v3431
  %v3433 = vadd.f32 %v3432, 1.0
  %v3434 = vrcp.pop %v3433
  %v3435 = vmul.f32 %v3433, %v3434
  %v3436 = vsub.f32 1.0, %v3435
  %v3437 = vmul.f32 %v3434, %v3436
  %v3438 = vadd.f32 %v3434, %v3437
  %vm3439 = vweird.f32 %v3433
  %vm3440 = vweird.f32 %v3434
  %vm3441 = vmor %vm3439, %vm3440
  %v3442 = vsel %vm3441, %v3434, %v3438
  %v3443 = vand.u32 2147483647, %v3433
  %vm3444 = vcmp.eq.f32.partialorder %v3443, 8.507059e+37
  %v3445 = vand.u32 %v3433, 2147483648
  %v3446 = vor.u32 1.1754944e-38, %v3445
  %v3447 = vsel %vm3444, %v3446, %v3442
  %v3448 = vmul.f32 1.0, %v3447
  %v3449 = vadd.f32 %v3280, %v3404
  %v3450 = vxor.u32 %v3449, 2147483648
  %v3451 = vmul.f32 %v3450, 1.442695
  %v3452 = vpow.pop %v3451
  %v3453 = vadd.f32 %v3452, 1.0
  %v3454 = vrcp.pop %v3453
  %v3455 = vmul.f32 %v3453, %v3454
  %v3456 = vsub.f32 1.0, %v3455
  %v3457 = vmul.f32 %v3454, %v3456
  %v3458 = vadd.f32 %v3454, %v3457
  %vm3459 = vweird.f32 %v3453
  %vm3460 = vweird.f32 %v3454
  %vm3461 = vmor %vm3459, %vm3460
  %v3462 = vsel %vm3461, %v3454, %v3458
  %v3463 = vand.u32 2147483647, %v3453
  %vm3464 = vcmp.eq.f32.partialorder %v3463, 8.507059e+37
  %v3465 = vand.u32 %v3453, 2147483648
  %v3466 = vor.u32 1.1754944e-38, %v3465
  %v3467 = vsel %vm3464, %v3466, %v3462
  %v3468 = vmul.f32 1.0, %v3467
  %v3469 = vmul.f32 %v3448, %v3427
  %v3470 = vadd.f32 %v3359, %v3469
  %v3471 = vtanh.pop %v3470
  %v3472 = vsub.f32 1.0, %v3468
  %v3473 = vmul.f32 %v3472, %v3471
  %v3474 = vmul.f32 %v3468, 0.0
  %v3475 = vadd.f32 %v3473, %v3474
  %v3477 = vsel %vm644, %v3475, 0
  %3479 = vmatpush.msra.mxu0 0.0
  %3480 = vmatpush.msra.mxu0 0.0
  %3481 = vmatpush.msra.mxu0 0.0
  %3482 = vmatpush.msra.mxu0 0.0
  %3483 = vmatpush.msra.mxu0 0.0
  %3484 = vmatpush.msra.mxu0 0.0
  %3485 = vmatpush.msra.mxu0 0.0
  %3486 = vmatpush.msra.mxu0 0.0
  %3487 = vmatpush.msra.mxu0 0.0
  %3488 = vmatpush.msra.mxu0 0.0
  %3489 = vmatpush.msra.mxu0 0.0
  %3490 = vmatpush.msra.mxu0 0.0
  %3491 = vmatpush.msra.mxu0 0.0
  %3492 = vmatpush.msra.mxu0 0.0
  %3493 = vmatpush.msra.mxu0 %v351
  %3494 = vmatpush.msra.mxu0 %v350
  %3495 = vmatmul.f32.gmra.mxu0 %v3477
  %v3496 = vpop.f32.mrf.mxu0
  %v3497 = vadd.f32 %v3361, %v3496
  %3498 = vdwg.mxu0
  %3499 = vmatpush.msra.mxu0 0.0
  %3500 = vmatpush.msra.mxu0 0.0
  %3501 = vmatpush.msra.mxu0 0.0
  %3502 = vmatpush.msra.mxu0 0.0
  %3503 = vmatpush.msra.mxu0 0.0
  %3504 = vmatpush.msra.mxu0 0.0
  %3505 = vmatpush.msra.mxu0 0.0
  %3506 = vmatpush.msra.mxu0 0.0
  %3507 = vmatpush.msra.mxu0 0.0
  %3508 = vmatpush.msra.mxu0 0.0
  %3509 = vmatpush.msra.mxu0 0.0
  %3510 = vmatpush.msra.mxu0 0.0
  %3511 = vmatpush.msra.mxu0 0.0
  %3512 = vmatpush.msra.mxu0 0.0
  %3513 = vmatpush.msra.mxu0 %v353
  %3514 = vmatpush.msra.mxu0 %v352
  %3515 = vmatmul.f32.gmra.mxu0 %v3477
  %v3516 = vpop.f32.mrf.mxu0
  %v3517 = vadd.f32 %v3384, %v3516
  %3518 = vdwg.mxu0
  %3519 = vmatpush.msra.mxu0 0.0
  %3520 = vmatpush.msra.mxu0 0.0
  %3521 = vmatpush.msra.mxu0 0.0
  %3522 = vmatpush.msra.mxu0 0.0
  %3523 = vmatpush.msra.mxu0 0.0
  %3524 = vmatpush.msra.mxu0 0.0
  %3525 = vmatpush.msra.mxu0 0.0
  %3526 = vmatpush.msra.mxu0 0.0
  %3527 = vmatpush.msra.mxu0 0.0
  %3528 = vmatpush.msra.mxu0 0.0
  %3529 = vmatpush.msra.mxu0 0.0
  %3530 = vmatpush.msra.mxu0 0.0
  %3531 = vmatpush.msra.mxu0 0.0
  %3532 = vmatpush.msra.mxu0 0.0
  %3533 = vmatpush.msra.mxu0 %v355
  %3534 = vmatpush.msra.mxu0 %v354
  %3535 = vmatmul.f32.gmra.mxu0 %v3477
  %v3536 = vpop.f32.mrf.mxu0
  %v3537 = vadd.f32 %v3407, %v3536
  %3538 = vdwg.mxu0
  %v3539 = vadd.f32 %v3200, %v3497
  %v3540 = vxor.u32 %v3539, 2147483648
  %v3541 = vmul.f32 %v3540, 1.442695
  %v3542 = vpow.pop %v3541
  %v3543 = vadd.f32 %v3542, 1.0
  %v3544 = vrcp.pop %v3543
  %v3545 = vmul.f32 %v3543, %v3544
  %v3546 = vsub.f32 1.0, %v3545
  %v3547 = vmul.f32 %v3544, %v3546
  %v3548 = vadd.f32 %v3544, %v3547
  %vm3549 = vweird.f32 %v3543
  %vm3550 = vweird.f32 %v3544
  %vm3551 = vmor %vm3549, %vm3550
  %v3552 = vsel %vm3551, %v3544, %v3548
  %v3553 = vand.u32 2147483647, %v3543
  %vm3554 = vcmp.eq.f32.partialorder %v3553, 8.507059e+37
  %v3555 = vand.u32 %v3543, 2147483648
  %v3556 = vor.u32 1.1754944e-38, %v3555
  %v3557 = vsel %vm3554, %v3556, %v3552
  %v3558 = vmul.f32 1.0, %v3557
  %v3559 = vadd.f32 %v3279, %v3517
  %v3560 = vxor.u32 %v3559, 2147483648
  %v3561 = vmul.f32 %v3560, 1.442695
  %v3562 = vpow.pop %v3561
  %v3563 = vadd.f32 %v3562, 1.0
  %v3564 = vrcp.pop %v3563
  %v3565 = vmul.f32 %v3563, %v3564
  %v3566 = vsub.f32 1.0, %v3565
  %v3567 = vmul.f32 %v3564, %v3566
  %v3568 = vadd.f32 %v3564, %v3567
  %vm3569 = vweird.f32 %v3563
  %vm3570 = vweird.f32 %v3564
  %vm3571 = vmor %vm3569, %vm3570
  %v3572 = vsel %vm3571, %v3564, %v3568
  %v3573 = vand.u32 2147483647, %v3563
  %vm3574 = vcmp.eq.f32.partialorder %v3573, 8.507059e+37
  %v3575 = vand.u32 %v3563, 2147483648
  %v3576 = vor.u32 1.1754944e-38, %v3575
  %v3577 = vsel %vm3574, %v3576, %v3572
  %v3578 = vmul.f32 1.0, %v3577
  %v3579 = vmul.f32 %v3558, %v3537
  %v3580 = vadd.f32 %v3358, %v3579
  %v3581 = vtanh.pop %v3580
  %v3582 = vsub.f32 1.0, %v3578
  %v3583 = vmul.f32 %v3582, %v3581
  %v3584 = vmul.f32 %v3578, %v3475
  %v3585 = vadd.f32 %v3583, %v3584
  %v3587 = vsel %vm644, %v3585, 0
  %3589 = vmatpush.msra.mxu0 0.0
  %3590 = vmatpush.msra.mxu0 0.0
  %3591 = vmatpush.msra.mxu0 0.0
  %3592 = vmatpush.msra.mxu0 0.0
  %3593 = vmatpush.msra.mxu0 0.0
  %3594 = vmatpush.msra.mxu0 0.0
  %3595 = vmatpush.msra.mxu0 0.0
  %3596 = vmatpush.msra.mxu0 0.0
  %3597 = vmatpush.msra.mxu0 0.0
  %3598 = vmatpush.msra.mxu0 0.0
  %3599 = vmatpush.msra.mxu0 0.0
  %3600 = vmatpush.msra.mxu0 0.0
  %3601 = vmatpush.msra.mxu0 0.0
  %3602 = vmatpush.msra.mxu0 0.0
  %3603 = vmatpush.msra.mxu0 %v351
  %3604 = vmatpush.msra.mxu0 %v350
  %3605 = vmatmul.f32.gmra.mxu0 %v3587
  %v3606 = vpop.f32.mrf.mxu0
  %v3607 = vadd.f32 %v3361, %v3606
  %3608 = vdwg.mxu0
  %3609 = vmatpush.msra.mxu0 0.0
  %3610 = vmatpush.msra.mxu0 0.0
  %3611 = vmatpush.msra.mxu0 0.0
  %3612 = vmatpush.msra.mxu0 0.0
  %3613 = vmatpush.msra.mxu0 0.0
  %3614 = vmatpush.msra.mxu0 0.0
  %3615 = vmatpush.msra.mxu0 0.0
  %3616 = vmatpush.msra.mxu0 0.0
  %3617 = vmatpush.msra.mxu0 0.0
  %3618 = vmatpush.msra.mxu0 0.0
  %3619 = vmatpush.msra.mxu0 0.0
  %3620 = vmatpush.msra.mxu0 0.0
  %3621 = vmatpush.msra.mxu0 0.0
  %3622 = vmatpush.msra.mxu0 0.0
  %3623 = vmatpush.msra.mxu0 %v353
  %3624 = vmatpush.msra.mxu0 %v352
  %3625 = vmatmul.f32.gmra.mxu0 %v3587
  %v3626 = vpop.f32.mrf.mxu0
  %v3627 = vadd.f32 %v3384, %v3626
  %3628 = vdwg.mxu0
  %3629 = vmatpush.msra.mxu0 0.0
  %3630 = vmatpush.msra.mxu0 0.0
  %3631 = vmatpush.msra.mxu0 0.0
  %3632 = vmatpush.msra.mxu0 0.0
  %3633 = vmatpush.msra.mxu0 0.0
  %3634 = vmatpush.msra.mxu0 0.0
  %3635 = vmatpush.msra.mxu0 0.0
  %3636 = vmatpush.msra.mxu0 0.0
  %3637 = vmatpush.msra.mxu0 0.0
  %3638 = vmatpush.msra.mxu0 0.0
  %3639 = vmatpush.msra.mxu0 0.0
  %3640 = vmatpush.msra.mxu0 0.0
  %3641 = vmatpush.msra.mxu0 0.0
  %3642 = vmatpush.msra.mxu0 0.0
  %3643 = vmatpush.msra.mxu0 %v355
  %3644 = vmatpush.msra.mxu0 %v354
  %3645 = vmatmul.f32.gmra.mxu0 %v3587
  %v3646 = vpop.f32.mrf.mxu0
  %v3647 = vadd.f32 %v3407, %v3646
  %3648 = vdwg.mxu0
  %v3649 = vadd.f32 %v3199, %v3607
  %v3650 = vxor.u32 %v3649, 2147483648
  %v3651 = vmul.f32 %v3650, 1.442695
  %v3652 = vpow.pop %v3651
  %v3653 = vadd.f32 %v3652, 1.0
  %v3654 = vrcp.pop %v3653
  %v3655 = vmul.f32 %v3653, %v3654
  %v3656 = vsub.f32 1.0, %v3655
  %v3657 = vmul.f32 %v3654, %v3656
  %v3658 = vadd.f32 %v3654, %v3657
  %vm3659 = vweird.f32 %v3653
  %vm3660 = vweird.f32 %v3654
  %vm3661 = vmor %vm3659, %vm3660
  %v3662 = vsel %vm3661, %v3654, %v3658
  %v3663 = vand.u32 2147483647, %v3653
  %vm3664 = vcmp.eq.f32.partialorder %v3663, 8.507059e+37
  %v3665 = vand.u32 %v3653, 2147483648
  %v3666 = vor.u32 1.1754944e-38, %v3665
  %v3667 = vsel %vm3664, %v3666, %v3662
  %v3668 = vmul.f32 1.0, %v3667
  %v3669 = vadd.f32 %v3278, %v3627
  %v3670 = vxor.u32 %v3669, 2147483648
  %v3671 = vmul.f32 %v3670, 1.442695
  %v3672 = vpow.pop %v3671
  %v3673 = vadd.f32 %v3672, 1.0
  %v3674 = vrcp.pop %v3673
  %v3675 = vmul.f32 %v3673, %v3674
  %v3676 = vsub.f32 1.0, %v3675
  %v3677 = vmul.f32 %v3674, %v3676
  %v3678 = vadd.f32 %v3674, %v3677
  %vm3679 = vweird.f32 %v3673
  %vm3680 = vweird.f32 %v3674
  %vm3681 = vmor %vm3679, %vm3680
  %v3682 = vsel %vm3681, %v3674, %v3678
  %v3683 = vand.u32 2147483647, %v3673
  %vm3684 = vcmp.eq.f32.partialorder %v3683, 8.507059e+37
  %v3685 = vand.u32 %v3673, 2147483648
  %v3686 = vor.u32 1.1754944e-38, %v3685
  %v3687 = vsel %vm3684, %v3686, %v3682
  %v3688 = vmul.f32 1.0, %v3687
  %v3689 = vmul.f32 %v3668, %v3647
  %v3690 = vadd.f32 %v3357, %v3689
  %v3691 = vtanh.pop %v3690
  %v3692 = vsub.f32 1.0, %v3688
  %v3693 = vmul.f32 %v3692, %v3691
  %v3694 = vmul.f32 %v3688, %v3585
  %v3695 = vadd.f32 %v3693, %v3694
  %v3697 = vsel %vm644, %v3695, 0
  %3699 = vmatpush.msra.mxu0 0.0
  %3700 = vmatpush.msra.mxu0 0.0
  %3701 = vmatpush.msra.mxu0 0.0
  %3702 = vmatpush.msra.mxu0 0.0
  %3703 = vmatpush.msra.mxu0 0.0
  %3704 = vmatpush.msra.mxu0 0.0
  %3705 = vmatpush.msra.mxu0 0.0
  %3706 = vmatpush.msra.mxu0 0.0
  %3707 = vmatpush.msra.mxu0 0.0
  %3708 = vmatpush.msra.mxu0 0.0
  %3709 = vmatpush.msra.mxu0 0.0
  %3710 = vmatpush.msra.mxu0 0.0
  %3711 = vmatpush.msra.mxu0 0.0
  %3712 = vmatpush.msra.mxu0 0.0
  %3713 = vmatpush.msra.mxu0 %v351
  %3714 = vmatpush.msra.mxu0 %v350
  %3715 = vmatmul.f32.gmra.mxu0 %v3697
  %v3716 = vpop.f32.mrf.mxu0
  %v3717 = vadd.f32 %v3361, %v3716
  %3718 = vdwg.mxu0
  %3719 = vmatpush.msra.mxu0 0.0
  %3720 = vmatpush.msra.mxu0 0.0
  %3721 = vmatpush.msra.mxu0 0.0
  %3722 = vmatpush.msra.mxu0 0.0
  %3723 = vmatpush.msra.mxu0 0.0
  %3724 = vmatpush.msra.mxu0 0.0
  %3725 = vmatpush.msra.mxu0 0.0
  %3726 = vmatpush.msra.mxu0 0.0
  %3727 = vmatpush.msra.mxu0 0.0
  %3728 = vmatpush.msra.mxu0 0.0
  %3729 = vmatpush.msra.mxu0 0.0
  %3730 = vmatpush.msra.mxu0 0.0
  %3731 = vmatpush.msra.mxu0 0.0
  %3732 = vmatpush.msra.mxu0 0.0
  %3733 = vmatpush.msra.mxu0 %v353
  %3734 = vmatpush.msra.mxu0 %v352
  %3735 = vmatmul.f32.gmra.mxu0 %v3697
  %v3736 = vpop.f32.mrf.mxu0
  %v3737 = vadd.f32 %v3384, %v3736
  %3738 = vdwg.mxu0
  %3739 = vmatpush.msra.mxu0 0.0
  %3740 = vmatpush.msra.mxu0 0.0
  %3741 = vmatpush.msra.mxu0 0.0
  %3742 = vmatpush.msra.mxu0 0.0
  %3743 = vmatpush.msra.mxu0 0.0
  %3744 = vmatpush.msra.mxu0 0.0
  %3745 = vmatpush.msra.mxu0 0.0
  %3746 = vmatpush.msra.mxu0 0.0
  %3747 = vmatpush.msra.mxu0 0.0
  %3748 = vmatpush.msra.mxu0 0.0
  %3749 = vmatpush.msra.mxu0 0.0
  %3750 = vmatpush.msra.mxu0 0.0
  %3751 = vmatpush.msra.mxu0 0.0
  %3752 = vmatpush.msra.mxu0 0.0
  %3753 = vmatpush.msra.mxu0 %v355
  %3754 = vmatpush.msra.mxu0 %v354
  %3755 = vmatmul.f32.gmra.mxu0 %v3697
  %v3756 = vpop.f32.mrf.mxu0
  %v3757 = vadd.f32 %v3407, %v3756
  %3758 = vdwg.mxu0
  %v3759 = vadd.f32 %v3198, %v3717
  %v3760 = vxor.u32 %v3759, 2147483648
  %v3761 = vmul.f32 %v3760, 1.442695
  %v3762 = vpow.pop %v3761
  %v3763 = vadd.f32 %v3762, 1.0
  %v3764 = vrcp.pop %v3763
  %v3765 = vmul.f32 %v3763, %v3764
  %v3766 = vsub.f32 1.0, %v3765
  %v3767 = vmul.f32 %v3764, %v3766
  %v3768 = vadd.f32 %v3764, %v3767
  %vm3769 = vweird.f32 %v3763
  %vm3770 = vweird.f32 %v3764
  %vm3771 = vmor %vm3769, %vm3770
  %v3772 = vsel %vm3771, %v3764, %v3768
  %v3773 = vand.u32 2147483647, %v3763
  %vm3774 = vcmp.eq.f32.partialorder %v3773, 8.507059e+37
  %v3775 = vand.u32 %v3763, 2147483648
  %v3776 = vor.u32 1.1754944e-38, %v3775
  %v3777 = vsel %vm3774, %v3776, %v3772
  %v3778 = vmul.f32 1.0, %v3777
  %v3779 = vadd.f32 %v3277, %v3737
  %v3780 = vxor.u32 %v3779, 2147483648
  %v3781 = vmul.f32 %v3780, 1.442695
  %v3782 = vpow.pop %v3781
  %v3783 = vadd.f32 %v3782, 1.0
  %v3784 = vrcp.pop %v3783
  %v3785 = vmul.f32 %v3783, %v3784
  %v3786 = vsub.f32 1.0, %v3785
  %v3787 = vmul.f32 %v3784, %v3786
  %v3788 = vadd.f32 %v3784, %v3787
  %vm3789 = vweird.f32 %v3783
  %vm3790 = vweird.f32 %v3784
  %vm3791 = vmor %vm3789, %vm3790
  %v3792 = vsel %vm3791, %v3784, %v3788
  %v3793 = vand.u32 2147483647, %v3783
  %vm3794 = vcmp.eq.f32.partialorder %v3793, 8.507059e+37
  %v3795 = vand.u32 %v3783, 2147483648
  %v3796 = vor.u32 1.1754944e-38, %v3795
  %v3797 = vsel %vm3794, %v3796, %v3792
  %v3798 = vmul.f32 1.0, %v3797
  %v3799 = vmul.f32 %v3778, %v3757
  %v3800 = vadd.f32 %v3356, %v3799
  %v3801 = vtanh.pop %v3800
  %v3802 = vsub.f32 1.0, %v3798
  %v3803 = vmul.f32 %v3802, %v3801
  %v3804 = vmul.f32 %v3798, %v3695
  %v3805 = vadd.f32 %v3803, %v3804
  %v3807 = vsel %vm644, %v3805, 0
  %3809 = vmatpush.msra.mxu0 0.0
  %3810 = vmatpush.msra.mxu0 0.0
  %3811 = vmatpush.msra.mxu0 0.0
  %3812 = vmatpush.msra.mxu0 0.0
  %3813 = vmatpush.msra.mxu0 0.0
  %3814 = vmatpush.msra.mxu0 0.0
  %3815 = vmatpush.msra.mxu0 0.0
  %3816 = vmatpush.msra.mxu0 0.0
  %3817 = vmatpush.msra.mxu0 0.0
  %3818 = vmatpush.msra.mxu0 0.0
  %3819 = vmatpush.msra.mxu0 0.0
  %3820 = vmatpush.msra.mxu0 0.0
  %3821 = vmatpush.msra.mxu0 0.0
  %3822 = vmatpush.msra.mxu0 0.0
  %3823 = vmatpush.msra.mxu0 %v351
  %3824 = vmatpush.msra.mxu0 %v350
  %3825 = vmatmul.f32.gmra.mxu0 %v3807
  %v3826 = vpop.f32.mrf.mxu0
  %v3827 = vadd.f32 %v3361, %v3826
  %3828 = vdwg.mxu0
  %3829 = vmatpush.msra.mxu0 0.0
  %3830 = vmatpush.msra.mxu0 0.0
  %3831 = vmatpush.msra.mxu0 0.0
  %3832 = vmatpush.msra.mxu0 0.0
  %3833 = vmatpush.msra.mxu0 0.0
  %3834 = vmatpush.msra.mxu0 0.0
  %3835 = vmatpush.msra.mxu0 0.0
  %3836 = vmatpush.msra.mxu0 0.0
  %3837 = vmatpush.msra.mxu0 0.0
  %3838 = vmatpush.msra.mxu0 0.0
  %3839 = vmatpush.msra.mxu0 0.0
  %3840 = vmatpush.msra.mxu0 0.0
  %3841 = vmatpush.msra.mxu0 0.0
  %3842 = vmatpush.msra.mxu0 0.0
  %3843 = vmatpush.msra.mxu0 %v353
  %3844 = vmatpush.msra.mxu0 %v352
  %3845 = vmatmul.f32.gmra.mxu0 %v3807
  %v3846 = vpop.f32.mrf.mxu0
  %v3847 = vadd.f32 %v3384, %v3846
  %3848 = vdwg.mxu0
  %3849 = vmatpush.msra.mxu0 0.0
  %3850 = vmatpush.msra.mxu0 0.0
  %3851 = vmatpush.msra.mxu0 0.0
  %3852 = vmatpush.msra.mxu0 0.0
  %3853 = vmatpush.msra.mxu0 0.0
  %3854 = vmatpush.msra.mxu0 0.0
  %3855 = vmatpush.msra.mxu0 0.0
  %3856 = vmatpush.msra.mxu0 0.0
  %3857 = vmatpush.msra.mxu0 0.0
  %3858 = vmatpush.msra.mxu0 0.0
  %3859 = vmatpush.msra.mxu0 0.0
  %3860 = vmatpush.msra.mxu0 0.0
  %3861 = vmatpush.msra.mxu0 0.0
  %3862 = vmatpush.msra.mxu0 0.0
  %3863 = vmatpush.msra.mxu0 %v355
  %3864 = vmatpush.msra.mxu0 %v354
  %3865 = vmatmul.f32.gmra.mxu0 %v3807
  %v3866 = vpop.f32.mrf.mxu0
  %v3867 = vadd.f32 %v3407, %v3866
  %3868 = vdwg.mxu0
  %v3869 = vadd.f32 %v3197, %v3827
  %v3870 = vxor.u32 %v3869, 2147483648
  %v3871 = vmul.f32 %v3870, 1.442695
  %v3872 = vpow.pop %v3871
  %v3873 = vadd.f32 %v3872, 1.0
  %v3874 = vrcp.pop %v3873
  %v3875 = vmul.f32 %v3873, %v3874
  %v3876 = vsub.f32 1.0, %v3875
  %v3877 = vmul.f32 %v3874, %v3876
  %v3878 = vadd.f32 %v3874, %v3877
  %vm3879 = vweird.f32 %v3873
  %vm3880 = vweird.f32 %v3874
  %vm3881 = vmor %vm3879, %vm3880
  %v3882 = vsel %vm3881, %v3874, %v3878
  %v3883 = vand.u32 2147483647, %v3873
  %vm3884 = vcmp.eq.f32.partialorder %v3883, 8.507059e+37
  %v3885 = vand.u32 %v3873, 2147483648
  %v3886 = vor.u32 1.1754944e-38, %v3885
  %v3887 = vsel %vm3884, %v3886, %v3882
  %v3888 = vmul.f32 1.0, %v3887
  %v3889 = vadd.f32 %v3276, %v3847
  %v3890 = vxor.u32 %v3889, 2147483648
  %v3891 = vmul.f32 %v3890, 1.442695
  %v3892 = vpow.pop %v3891
  %v3893 = vadd.f32 %v3892, 1.0
  %v3894 = vrcp.pop %v3893
  %v3895 = vmul.f32 %v3893, %v3894
  %v3896 = vsub.f32 1.0, %v3895
  %v3897 = vmul.f32 %v3894, %v3896
  %v3898 = vadd.f32 %v3894, %v3897
  %vm3899 = vweird.f32 %v3893
  %vm3900 = vweird.f32 %v3894
  %vm3901 = vmor %vm3899, %vm3900
  %v3902 = vsel %vm3901, %v3894, %v3898
  %v3903 = vand.u32 2147483647, %v3893
  %vm3904 = vcmp.eq.f32.partialorder %v3903, 8.507059e+37
  %v3905 = vand.u32 %v3893, 2147483648
  %v3906 = vor.u32 1.1754944e-38, %v3905
  %v3907 = vsel %vm3904, %v3906, %v3902
  %v3908 = vmul.f32 1.0, %v3907
  %v3909 = vmul.f32 %v3888, %v3867
  %v3910 = vadd.f32 %v3355, %v3909
  %v3911 = vtanh.pop %v3910
  %v3912 = vsub.f32 1.0, %v3908
  %v3913 = vmul.f32 %v3912, %v3911
  %v3914 = vmul.f32 %v3908, %v3805
  %v3915 = vadd.f32 %v3913, %v3914
  %v3917 = vsel %vm644, %v3915, 0
  %3919 = vmatpush.msra.mxu0 0.0
  %3920 = vmatpush.msra.mxu0 0.0
  %3921 = vmatpush.msra.mxu0 0.0
  %3922 = vmatpush.msra.mxu0 0.0
  %3923 = vmatpush.msra.mxu0 0.0
  %3924 = vmatpush.msra.mxu0 0.0
  %3925 = vmatpush.msra.mxu0 0.0
  %3926 = vmatpush.msra.mxu0 0.0
  %3927 = vmatpush.msra.mxu0 0.0
  %3928 = vmatpush.msra.mxu0 0.0
  %3929 = vmatpush.msra.mxu0 0.0
  %3930 = vmatpush.msra.mxu0 0.0
  %3931 = vmatpush.msra.mxu0 0.0
  %3932 = vmatpush.msra.mxu0 0.0
  %3933 = vmatpush.msra.mxu0 %v351
  %3934 = vmatpush.msra.mxu0 %v350
  %3935 = vmatmul.f32.gmra.mxu0 %v3917
  %v3936 = vpop.f32.mrf.mxu0
  %v3937 = vadd.f32 %v3361, %v3936
  %3938 = vdwg.mxu0
  %3939 = vmatpush.msra.mxu0 0.0
  %3940 = vmatpush.msra.mxu0 0.0
  %3941 = vmatpush.msra.mxu0 0.0
  %3942 = vmatpush.msra.mxu0 0.0
  %3943 = vmatpush.msra.mxu0 0.0
  %3944 = vmatpush.msra.mxu0 0.0
  %3945 = vmatpush.msra.mxu0 0.0
  %3946 = vmatpush.msra.mxu0 0.0
  %3947 = vmatpush.msra.mxu0 0.0
  %3948 = vmatpush.msra.mxu0 0.0
  %3949 = vmatpush.msra.mxu0 0.0
  %3950 = vmatpush.msra.mxu0 0.0
  %3951 = vmatpush.msra.mxu0 0.0
  %3952 = vmatpush.msra.mxu0 0.0
  %3953 = vmatpush.msra.mxu0 %v353
  %3954 = vmatpush.msra.mxu0 %v352
  %3955 = vmatmul.f32.gmra.mxu0 %v3917
  %v3956 = vpop.f32.mrf.mxu0
  %v3957 = vadd.f32 %v3384, %v3956
  %3958 = vdwg.mxu0
  %3959 = vmatpush.msra.mxu0 0.0
  %3960 = vmatpush.msra.mxu0 0.0
  %3961 = vmatpush.msra.mxu0 0.0
  %3962 = vmatpush.msra.mxu0 0.0
  %3963 = vmatpush.msra.mxu0 0.0
  %3964 = vmatpush.msra.mxu0 0.0
  %3965 = vmatpush.msra.mxu0 0.0
  %3966 = vmatpush.msra.mxu0 0.0
  %3967 = vmatpush.msra.mxu0 0.0
  %3968 = vmatpush.msra.mxu0 0.0
  %3969 = vmatpush.msra.mxu0 0.0
  %3970 = vmatpush.msra.mxu0 0.0
  %3971 = vmatpush.msra.mxu0 0.0
  %3972 = vmatpush.msra.mxu0 0.0
  %3973 = vmatpush.msra.mxu0 %v355
  %3974 = vmatpush.msra.mxu0 %v354
  %3975 = vmatmul.f32.gmra.mxu0 %v3917
  %v3976 = vpop.f32.mrf.mxu0
  %v3977 = vadd.f32 %v3407, %v3976
  %3978 = vdwg.mxu0
  %v3979 = vadd.f32 %v3196, %v3937
  %v3980 = vxor.u32 %v3979, 2147483648
  %v3981 = vmul.f32 %v3980, 1.442695
  %v3982 = vpow.pop %v3981
  %v3983 = vadd.f32 %v3982, 1.0
  %v3984 = vrcp.pop %v3983
  %v3985 = vmul.f32 %v3983, %v3984
  %v3986 = vsub.f32 1.0, %v3985
  %v3987 = vmul.f32 %v3984, %v3986
  %v3988 = vadd.f32 %v3984, %v3987
  %vm3989 = vweird.f32 %v3983
  %vm3990 = vweird.f32 %v3984
  %vm3991 = vmor %vm3989, %vm3990
  %v3992 = vsel %vm3991, %v3984, %v3988
  %v3993 = vand.u32 2147483647, %v3983
  %vm3994 = vcmp.eq.f32.partialorder %v3993, 8.507059e+37
  %v3995 = vand.u32 %v3983, 2147483648
  %v3996 = vor.u32 1.1754944e-38, %v3995
  %v3997 = vsel %vm3994, %v3996, %v3992
  %v3998 = vmul.f32 1.0, %v3997
  %v3999 = vadd.f32 %v3275, %v3957
  %v4000 = vxor.u32 %v3999, 2147483648
  %v4001 = vmul.f32 %v4000, 1.442695
  %v4002 = vpow.pop %v4001
  %v4003 = vadd.f32 %v4002, 1.0
  %v4004 = vrcp.pop %v4003
  %v4005 = vmul.f32 %v4003, %v4004
  %v4006 = vsub.f32 1.0, %v4005
  %v4007 = vmul.f32 %v4004, %v4006
  %v4008 = vadd.f32 %v4004, %v4007
  %vm4009 = vweird.f32 %v4003
  %vm4010 = vweird.f32 %v4004
  %vm4011 = vmor %vm4009, %vm4010
  %v4012 = vsel %vm4011, %v4004, %v4008
  %v4013 = vand.u32 2147483647, %v4003
  %vm4014 = vcmp.eq.f32.partialorder %v4013, 8.507059e+37
  %v4015 = vand.u32 %v4003, 2147483648
  %v4016 = vor.u32 1.1754944e-38, %v4015
  %v4017 = vsel %vm4014, %v4016, %v4012
  %v4018 = vmul.f32 1.0, %v4017
  %v4019 = vmul.f32 %v3998, %v3977
  %v4020 = vadd.f32 %v3354, %v4019
  %v4021 = vtanh.pop %v4020
  %v4022 = vsub.f32 1.0, %v4018
  %v4023 = vmul.f32 %v4022, %v4021
  %v4024 = vmul.f32 %v4018, %v3915
  %v4025 = vadd.f32 %v4023, %v4024
  %v4026 = vmax.f32 %v2572, %v2682
  %v4027 = vmax.f32 %v4025, %v3915
  %v4028 = vmax.f32 %v4026, %v2792
  %v4029 = vmax.f32 %v4027, %v3805
  %v4030 = vmax.f32 %v4028, %v2902
  %v4031 = vmax.f32 %v4029, %v3695
  %v4032 = vmax.f32 %v4030, %v3012
  %v4033 = vmax.f32 %v4031, %v3585
  %v4034 = vmax.f32 %v4032, %v3122
  %v4035 = vmax.f32 %v4033, %v3475
  %vm4044 = vcmask 1041409
  %v4045 = vsel %vm4044, %v183, %v176
  %vm4046 = vcmask 1042434
  %v4047 = vsel %vm4046, %v190, %v4045
  %vm4048 = vcmask 1043459
  %v4049 = vsel %vm4048, %v197, %v4047
  %vm4050 = vcmask 1044484
  %v4051 = vsel %vm4050, %v204, %v4049
  %vm4052 = vcmask 1045509
  %v4053 = vsel %vm4052, %v211, %v4051
  %vm4054 = vcmask 1046534
  %v4055 = vsel %vm4054, %v218, %v4053
  %vm4056 = vcmask 1047559
  %v4057 = vsel %vm4056, %v225, %v4055
  %v4059 = vmul.f32 %v160, %v4057
  %v4060 = vmul.f32 %v160, %v228
  %v4061 = vmul.f32 %v160, %v230
  %v4062 = vmul.f32 %v229, %v232
  %v4063 = vsel %vm169, %v160, 0.0
  %4064 = vadd.xlane.f32.xlu0 %v4063
  %v4065 = vpop.xlane.xlu0 %4064
  %v4066 = vmul.f32 %v160, %v160
  %v4067 = vsel %vm169, %v4066, 0.0
  %4068 = vadd.xlane.f32.xlu0 %v4067
  %v4069 = vpop.xlane.xlu0 %4068
  %v4070 = vsel %vm169, %v4057, 0.0
  %4071 = vadd.xlane.f32.xlu0 %v4070
  %v4072 = vpop.xlane.xlu0 %4071
  %v4073 = vadd.f32 %v4065, %v4072
  %v4074 = vmul.f32 %v176, %v176
  %v4075 = vmul.f32 %v183, %v183
  %v4076 = vmul.f32 %v190, %v190
  %v4077 = vmul.f32 %v197, %v197
  %v4078 = vmul.f32 %v204, %v204
  %v4079 = vmul.f32 %v211, %v211
  %v4080 = vmul.f32 %v218, %v218
  %v4081 = vmul.f32 %v225, %v225
  %v4090 = vsel %vm4044, %v4075, %v4074
  %v4091 = vsel %vm4046, %v4076, %v4090
  %v4092 = vsel %vm4048, %v4077, %v4091
  %v4093 = vsel %vm4050, %v4078, %v4092
  %v4094 = vsel %vm4052, %v4079, %v4093
  %v4095 = vsel %vm4054, %v4080, %v4094
  %v4096 = vsel %vm4056, %v4081, %v4095
  %v4098 = vsel %vm169, %v4096, 0.0
  %4099 = vadd.xlane.f32.xlu0 %v4098
  %v4100 = vpop.xlane.xlu0 %4099
  %v4101 = vadd.f32 %v4069, %v4100
  %v4102 = vsel %vm169, %v226, 0.0
  %4103 = vadd.xlane.f32.xlu0 %v4102
  %v4104 = vpop.xlane.xlu0 %4103
  %v4105 = vadd.f32 %v4073, %v4104
  %v4106 = vmul.f32 %v226, %v226
  %v4107 = vsel %vm169, %v4106, 0.0
  %4108 = vadd.xlane.f32.xlu0 %v4107
  %v4109 = vpop.xlane.xlu0 %4108
  %v4110 = vadd.f32 %v4101, %v4109
  %v4111 = vsel %vm169, %v227, 0.0
  %4112 = vadd.xlane.f32.xlu0 %v4111
  %v4113 = vpop.xlane.xlu0 %4112
  %v4114 = vadd.f32 %v4105, %v4113
  %v4115 = vmul.f32 %v227, %v227
  %v4116 = vsel %vm169, %v4115, 0.0
  %4117 = vadd.xlane.f32.xlu0 %v4116
  %v4118 = vpop.xlane.xlu0 %4117
  %v4119 = vadd.f32 %v4110, %v4118
  %v4120 = vsel %vm169, %v228, 0.0
  %4121 = vadd.xlane.f32.xlu0 %v4120
  %v4122 = vpop.xlane.xlu0 %4121
  %v4123 = vadd.f32 %v4114, %v4122
  %v4124 = vmul.f32 %v228, %v228
  %v4125 = vsel %vm169, %v4124, 0.0
  %4126 = vadd.xlane.f32.xlu0 %v4125
  %v4127 = vpop.xlane.xlu0 %4126
  %v4128 = vadd.f32 %v4119, %v4127
  %v4129 = vsel %vm169, %v229, 0.0
  %4130 = vadd.xlane.f32.xlu0 %v4129
  %v4131 = vpop.xlane.xlu0 %4130
  %v4132 = vadd.f32 %v4123, %v4131
  %v4133 = vmul.f32 %v229, %v229
  %v4134 = vsel %vm169, %v4133, 0.0
  %4135 = vadd.xlane.f32.xlu0 %v4134
  %v4136 = vpop.xlane.xlu0 %4135
  %v4137 = vadd.f32 %v4128, %v4136
  %v4138 = vmul.f32 %v4132, %v4132
  %v4139 = vsub.f32 %v4138, %v4137
  %v4140 = vmul.f32 %v4139, 0.5
  %v4141 = vmul.f32 %v234, %v234
  %v4142 = vld [vmem:[%s49] sm:$0xff]
  %v4143 = vld [vmem:[%s49 + $0x8] sm:$0xff]
  %v4144 = vld [vmem:[%s49 + $0x10] sm:$0xff]
  %v4145 = vld [vmem:[%s49 + $0x18] sm:$0xff]
  %v4146 = vld [vmem:[%s49 + $0x20] sm:$0xff]
  %v4147 = vld [vmem:[%s49 + $0x28] sm:$0xff]
  %v4148 = vld [vmem:[%s49 + $0x30] sm:$0xff]
  %v4149 = vld [vmem:[%s49 + $0x38] sm:$0xff]
  %v4150 = vld [vmem:[%s49 + $0x40] sm:$0xff]
  %v4151 = vld [vmem:[%s49 + $0x48] sm:$0xff]
  %v4152 = vld [vmem:[%s49 + $0x50] sm:$0xff]
  %v4153 = vld [vmem:[%s49 + $0x58] sm:$0xff]
  %v4154 = vld [vmem:[%s49 + $0x60] sm:$0xff]
  %v4155 = vld [vmem:[%s49 + $0x68] sm:$0xff]
  %v4156 = vld [vmem:[%s49 + $0x70] sm:$0xff]
  %v4157 = vld [vmem:[%s49 + $0x78] sm:$0xff]
  %v4158 = vld [vmem:[%s49 + $0x80] sm:$0xff]
  %v4159 = vld [vmem:[%s49 + $0x88] sm:$0xff]
  %v4160 = vld [vmem:[%s49 + $0x90] sm:$0xff]
  %v4161 = vld [vmem:[%s49 + $0x98] sm:$0xff]
  %v4162 = vld [vmem:[%s49 + $0xa0] sm:$0xff]
  %v4163 = vld [vmem:[%s49 + $0xa8] sm:$0xff]
  %v4164 = vld [vmem:[%s49 + $0xb0] sm:$0xff]
  %v4165 = vld [vmem:[%s49 + $0xb8] sm:$0xff]
  %v4166 = vld [vmem:[%s49 + $0xc0] sm:$0xff]
  %v4167 = vld [vmem:[%s49 + $0xc8] sm:$0xff]
  %v4168 = vld [vmem:[%s49 + $0xd0] sm:$0xff]
  %v4169 = vld [vmem:[%s49 + $0xd8] sm:$0xff]
  %v4170 = vld [vmem:[%s49 + $0xe0] sm:$0xff]
  %v4171 = vld [vmem:[%s49 + $0xe8] sm:$0xff]
  %v4172 = vld [vmem:[%s49 + $0xf0] sm:$0xff]
  %v4173 = vld [vmem:[%s49 + $0xf8] sm:$0xff]
  %v4174 = vld [vmem:[%s49 + $0x100] sm:$0xff]
  %v4175 = vld [vmem:[%s49 + $0x108] sm:$0xff]
  %v4176 = vld [vmem:[%s49 + $0x110] sm:$0xff]
  %v4177 = vld [vmem:[%s49 + $0x118] sm:$0xff]
  %v4178 = vld [vmem:[%s49 + $0x120] sm:$0xff]
  %v4179 = vld [vmem:[%s49 + $0x128] sm:$0xff]
  %v4180 = vld [vmem:[%s49 + $0x130] sm:$0xff]
  %v4181 = vld [vmem:[%s49 + $0x138] sm:$0xff]
  %v4182 = vld [vmem:[%s49 + $0x140] sm:$0xff]
  %v4183 = vld [vmem:[%s49 + $0x148] sm:$0xff]
  %v4184 = vld [vmem:[%s49 + $0x150] sm:$0xff]
  %v4185 = vld [vmem:[%s49 + $0x158] sm:$0xff]
  %v4186 = vld [vmem:[%s49 + $0x160] sm:$0xff]
  %v4187 = vld [vmem:[%s49 + $0x168] sm:$0xff]
  %v4188 = vld [vmem:[%s49 + $0x170] sm:$0xff]
  %v4189 = vld [vmem:[%s49 + $0x178] sm:$0xff]
  %v4190 = vld [vmem:[%s49 + $0x180] sm:$0xff]
  %v4191 = vld [vmem:[%s49 + $0x188] sm:$0xff]
  %v4192 = vld [vmem:[%s49 + $0x190] sm:$0xff]
  %v4193 = vld [vmem:[%s49 + $0x198] sm:$0xff]
  %v4194 = vld [vmem:[%s49 + $0x1a0] sm:$0xff]
  %v4195 = vld [vmem:[%s49 + $0x1a8] sm:$0xff]
  %v4196 = vld [vmem:[%s49 + $0x1b0] sm:$0xff]
  %v4197 = vld [vmem:[%s49 + $0x1b8] sm:$0xff]
  %v4198 = vsel %vm169, %v4057, 0
  %4200 = vmatpush.msra.mxu0 0.0
  %4201 = vmatpush.msra.mxu0 0.0
  %4202 = vmatpush.msra.mxu0 0.0
  %4203 = vmatpush.msra.mxu0 0.0
  %4204 = vmatpush.msra.mxu0 0.0
  %4205 = vmatpush.msra.mxu0 0.0
  %4206 = vmatpush.msra.mxu0 0.0
  %4207 = vmatpush.msra.mxu0 0.0
  %4208 = vmatpush.msra.mxu0 0.0
  %4209 = vmatpush.msra.mxu0 0.0
  %4210 = vmatpush.msra.mxu0 0.0
  %4211 = vmatpush.msra.mxu0 0.0
  %4212 = vmatpush.msra.mxu0 %v4149
  %4213 = vmatpush.msra.mxu0 %v4148
  %4214 = vmatpush.msra.mxu0 %v4147
  %4215 = vmatpush.msra.mxu0 %v4146
  %4216 = vmatmul.f32.gmra.mxu0 %v4198
  %v4217 = vpop.f32.mrf.mxu0
  %v4218 = vadd.f32 0.0, %v4217
  %4219 = vdwg.mxu0
  %v4221 = vsel %vm169, %v160, 0
  %4223 = vmatpush.msra.mxu0 0.0
  %4224 = vmatpush.msra.mxu0 0.0
  %4225 = vmatpush.msra.mxu0 0.0
  %4226 = vmatpush.msra.mxu0 0.0
  %4227 = vmatpush.msra.mxu0 0.0
  %4228 = vmatpush.msra.mxu0 0.0
  %4229 = vmatpush.msra.mxu0 0.0
  %4230 = vmatpush.msra.mxu0 0.0
  %4231 = vmatpush.msra.mxu0 0.0
  %4232 = vmatpush.msra.mxu0 0.0
  %4233 = vmatpush.msra.mxu0 0.0
  %4234 = vmatpush.msra.mxu0 0.0
  %4235 = vmatpush.msra.mxu0 %v4145
  %4236 = vmatpush.msra.mxu0 %v4144
  %4237 = vmatpush.msra.mxu0 %v4143
  %4238 = vmatpush.msra.mxu0 %v4142
  %4239 = vmatmul.f32.gmra.mxu0 %v4221
  %v4240 = vpop.f32.mrf.mxu0
  %v4241 = vadd.f32 %v4218, %v4240
  %4242 = vdwg.mxu0
  %v4244 = vsel %vm169, %v226, 0
  %4246 = vmatpush.msra.mxu0 0.0
  %4247 = vmatpush.msra.mxu0 0.0
  %4248 = vmatpush.msra.mxu0 0.0
  %4249 = vmatpush.msra.mxu0 0.0
  %4250 = vmatpush.msra.mxu0 0.0
  %4251 = vmatpush.msra.mxu0 0.0
  %4252 = vmatpush.msra.mxu0 0.0
  %4253 = vmatpush.msra.mxu0 0.0
  %4254 = vmatpush.msra.mxu0 0.0
  %4255 = vmatpush.msra.mxu0 0.0
  %4256 = vmatpush.msra.mxu0 0.0
  %4257 = vmatpush.msra.mxu0 0.0
  %4258 = vmatpush.msra.mxu0 %v4153
  %4259 = vmatpush.msra.mxu0 %v4152
  %4260 = vmatpush.msra.mxu0 %v4151
  %4261 = vmatpush.msra.mxu0 %v4150
  %4262 = vmatmul.f32.gmra.mxu0 %v4244
  %v4263 = vpop.f32.mrf.mxu0
  %v4264 = vadd.f32 0.0, %v4263
  %4265 = vdwg.mxu0
  %v4266 = vadd.f32 %v4241, %v4264
  %v4268 = vsel %vm169, %v227, 0
  %4270 = vmatpush.msra.mxu0 0.0
  %4271 = vmatpush.msra.mxu0 0.0
  %4272 = vmatpush.msra.mxu0 0.0
  %4273 = vmatpush.msra.mxu0 0.0
  %4274 = vmatpush.msra.mxu0 0.0
  %4275 = vmatpush.msra.mxu0 0.0
  %4276 = vmatpush.msra.mxu0 0.0
  %4277 = vmatpush.msra.mxu0 0.0
  %4278 = vmatpush.msra.mxu0 0.0
  %4279 = vmatpush.msra.mxu0 0.0
  %4280 = vmatpush.msra.mxu0 0.0
  %4281 = vmatpush.msra.mxu0 0.0
  %4282 = vmatpush.msra.mxu0 %v4157
  %4283 = vmatpush.msra.mxu0 %v4156
  %4284 = vmatpush.msra.mxu0 %v4155
  %4285 = vmatpush.msra.mxu0 %v4154
  %4286 = vmatmul.f32.gmra.mxu0 %v4268
  %v4287 = vpop.f32.mrf.mxu0
  %v4288 = vadd.f32 0.0, %v4287
  %4289 = vdwg.mxu0
  %v4290 = vadd.f32 %v4266, %v4288
  %v4292 = vsel %vm169, %v228, 0
  %4294 = vmatpush.msra.mxu0 0.0
  %4295 = vmatpush.msra.mxu0 0.0
  %4296 = vmatpush.msra.mxu0 0.0
  %4297 = vmatpush.msra.mxu0 0.0
  %4298 = vmatpush.msra.mxu0 0.0
  %4299 = vmatpush.msra.mxu0 0.0
  %4300 = vmatpush.msra.mxu0 0.0
  %4301 = vmatpush.msra.mxu0 0.0
  %4302 = vmatpush.msra.mxu0 0.0
  %4303 = vmatpush.msra.mxu0 0.0
  %4304 = vmatpush.msra.mxu0 0.0
  %4305 = vmatpush.msra.mxu0 0.0
  %4306 = vmatpush.msra.mxu0 %v4161
  %4307 = vmatpush.msra.mxu0 %v4160
  %4308 = vmatpush.msra.mxu0 %v4159
  %4309 = vmatpush.msra.mxu0 %v4158
  %4310 = vmatmul.f32.gmra.mxu0 %v4292
  %v4311 = vpop.f32.mrf.mxu0
  %v4312 = vadd.f32 0.0, %v4311
  %4313 = vdwg.mxu0
  %v4314 = vadd.f32 %v4290, %v4312
  %v4316 = vsel %vm169, %v229, 0
  %4318 = vmatpush.msra.mxu0 0.0
  %4319 = vmatpush.msra.mxu0 0.0
  %4320 = vmatpush.msra.mxu0 0.0
  %4321 = vmatpush.msra.mxu0 0.0
  %4322 = vmatpush.msra.mxu0 0.0
  %4323 = vmatpush.msra.mxu0 0.0
  %4324 = vmatpush.msra.mxu0 0.0
  %4325 = vmatpush.msra.mxu0 0.0
  %4326 = vmatpush.msra.mxu0 0.0
  %4327 = vmatpush.msra.mxu0 0.0
  %4328 = vmatpush.msra.mxu0 0.0
  %4329 = vmatpush.msra.mxu0 0.0
  %4330 = vmatpush.msra.mxu0 %v4165
  %4331 = vmatpush.msra.mxu0 %v4164
  %4332 = vmatpush.msra.mxu0 %v4163
  %4333 = vmatpush.msra.mxu0 %v4162
  %4334 = vmatmul.f32.gmra.mxu0 %v4316
  %v4335 = vpop.f32.mrf.mxu0
  %v4336 = vadd.f32 0.0, %v4335
  %4337 = vdwg.mxu0
  %v4338 = vadd.f32 %v4314, %v4336
  %v4340 = vsel %vm169, %v4059, 0
  %4342 = vmatpush.msra.mxu0 0.0
  %4343 = vmatpush.msra.mxu0 0.0
  %4344 = vmatpush.msra.mxu0 0.0
  %4345 = vmatpush.msra.mxu0 0.0
  %4346 = vmatpush.msra.mxu0 0.0
  %4347 = vmatpush.msra.mxu0 0.0
  %4348 = vmatpush.msra.mxu0 0.0
  %4349 = vmatpush.msra.mxu0 0.0
  %4350 = vmatpush.msra.mxu0 0.0
  %4351 = vmatpush.msra.mxu0 0.0
  %4352 = vmatpush.msra.mxu0 0.0
  %4353 = vmatpush.msra.mxu0 0.0
  %4354 = vmatpush.msra.mxu0 %v4169
  %4355 = vmatpush.msra.mxu0 %v4168
  %4356 = vmatpush.msra.mxu0 %v4167
  %4357 = vmatpush.msra.mxu0 %v4166
  %4358 = vmatmul.f32.gmra.mxu0 %v4340
  %v4359 = vpop.f32.mrf.mxu0
  %v4360 = vadd.f32 0.0, %v4359
  %4361 = vdwg.mxu0
  %v4362 = vadd.f32 %v4338, %v4360
  %v4364 = vsel %vm169, %v4060, 0
  %4366 = vmatpush.msra.mxu0 0.0
  %4367 = vmatpush.msra.mxu0 0.0
  %4368 = vmatpush.msra.mxu0 0.0
  %4369 = vmatpush.msra.mxu0 0.0
  %4370 = vmatpush.msra.mxu0 0.0
  %4371 = vmatpush.msra.mxu0 0.0
  %4372 = vmatpush.msra.mxu0 0.0
  %4373 = vmatpush.msra.mxu0 0.0
  %4374 = vmatpush.msra.mxu0 0.0
  %4375 = vmatpush.msra.mxu0 0.0
  %4376 = vmatpush.msra.mxu0 0.0
  %4377 = vmatpush.msra.mxu0 0.0
  %4378 = vmatpush.msra.mxu0 %v4173
  %4379 = vmatpush.msra.mxu0 %v4172
  %4380 = vmatpush.msra.mxu0 %v4171
  %4381 = vmatpush.msra.mxu0 %v4170
  %4382 = vmatmul.f32.gmra.mxu0 %v4364
  %v4383 = vpop.f32.mrf.mxu0
  %v4384 = vadd.f32 0.0, %v4383
  %4385 = vdwg.mxu0
  %v4386 = vadd.f32 %v4362, %v4384
  %v4388 = vsel %vm169, %v230, 0
  %4390 = vmatpush.msra.mxu0 0.0
  %4391 = vmatpush.msra.mxu0 0.0
  %4392 = vmatpush.msra.mxu0 0.0
  %4393 = vmatpush.msra.mxu0 0.0
  %4394 = vmatpush.msra.mxu0 0.0
  %4395 = vmatpush.msra.mxu0 0.0
  %4396 = vmatpush.msra.mxu0 0.0
  %4397 = vmatpush.msra.mxu0 0.0
  %4398 = vmatpush.msra.mxu0 0.0
  %4399 = vmatpush.msra.mxu0 0.0
  %4400 = vmatpush.msra.mxu0 0.0
  %4401 = vmatpush.msra.mxu0 0.0
  %4402 = vmatpush.msra.mxu0 %v4177
  %4403 = vmatpush.msra.mxu0 %v4176
  %4404 = vmatpush.msra.mxu0 %v4175
  %4405 = vmatpush.msra.mxu0 %v4174
  %4406 = vmatmul.f32.gmra.mxu0 %v4388
  %v4407 = vpop.f32.mrf.mxu0
  %v4408 = vadd.f32 0.0, %v4407
  %4409 = vdwg.mxu0
  %v4410 = vadd.f32 %v4386, %v4408
  %v4412 = vsel %vm169, %v231, 0
  %4414 = vmatpush.msra.mxu0 0.0
  %4415 = vmatpush.msra.mxu0 0.0
  %4416 = vmatpush.msra.mxu0 0.0
  %4417 = vmatpush.msra.mxu0 0.0
  %4418 = vmatpush.msra.mxu0 0.0
  %4419 = vmatpush.msra.mxu0 0.0
  %4420 = vmatpush.msra.mxu0 0.0
  %4421 = vmatpush.msra.mxu0 0.0
  %4422 = vmatpush.msra.mxu0 0.0
  %4423 = vmatpush.msra.mxu0 0.0
  %4424 = vmatpush.msra.mxu0 0.0
  %4425 = vmatpush.msra.mxu0 0.0
  %4426 = vmatpush.msra.mxu0 %v4181
  %4427 = vmatpush.msra.mxu0 %v4180
  %4428 = vmatpush.msra.mxu0 %v4179
  %4429 = vmatpush.msra.mxu0 %v4178
  %4430 = vmatmul.f32.gmra.mxu0 %v4412
  %v4431 = vpop.f32.mrf.mxu0
  %v4432 = vadd.f32 0.0, %v4431
  %4433 = vdwg.mxu0
  %v4434 = vadd.f32 %v4410, %v4432
  %v4436 = vsel %vm169, %v232, 0
  %4438 = vmatpush.msra.mxu0 0.0
  %4439 = vmatpush.msra.mxu0 0.0
  %4440 = vmatpush.msra.mxu0 0.0
  %4441 = vmatpush.msra.mxu0 0.0
  %4442 = vmatpush.msra.mxu0 0.0
  %4443 = vmatpush.msra.mxu0 0.0
  %4444 = vmatpush.msra.mxu0 0.0
  %4445 = vmatpush.msra.mxu0 0.0
  %4446 = vmatpush.msra.mxu0 0.0
  %4447 = vmatpush.msra.mxu0 0.0
  %4448 = vmatpush.msra.mxu0 0.0
  %4449 = vmatpush.msra.mxu0 0.0
  %4450 = vmatpush.msra.mxu0 %v4185
  %4451 = vmatpush.msra.mxu0 %v4184
  %4452 = vmatpush.msra.mxu0 %v4183
  %4453 = vmatpush.msra.mxu0 %v4182
  %4454 = vmatmul.f32.gmra.mxu0 %v4436
  %v4455 = vpop.f32.mrf.mxu0
  %v4456 = vadd.f32 0.0, %v4455
  %4457 = vdwg.mxu0
  %v4458 = vadd.f32 %v4434, %v4456
  %v4460 = vsel %vm169, %v4061, 0
  %4462 = vmatpush.msra.mxu0 0.0
  %4463 = vmatpush.msra.mxu0 0.0
  %4464 = vmatpush.msra.mxu0 0.0
  %4465 = vmatpush.msra.mxu0 0.0
  %4466 = vmatpush.msra.mxu0 0.0
  %4467 = vmatpush.msra.mxu0 0.0
  %4468 = vmatpush.msra.mxu0 0.0
  %4469 = vmatpush.msra.mxu0 0.0
  %4470 = vmatpush.msra.mxu0 0.0
  %4471 = vmatpush.msra.mxu0 0.0
  %4472 = vmatpush.msra.mxu0 0.0
  %4473 = vmatpush.msra.mxu0 0.0
  %4474 = vmatpush.msra.mxu0 %v4189
  %4475 = vmatpush.msra.mxu0 %v4188
  %4476 = vmatpush.msra.mxu0 %v4187
  %4477 = vmatpush.msra.mxu0 %v4186
  %4478 = vmatmul.f32.gmra.mxu0 %v4460
  %v4479 = vpop.f32.mrf.mxu0
  %v4480 = vadd.f32 0.0, %v4479
  %4481 = vdwg.mxu0
  %v4482 = vadd.f32 %v4458, %v4480
  %v4484 = vsel %vm169, %v4062, 0
  %4486 = vmatpush.msra.mxu0 0.0
  %4487 = vmatpush.msra.mxu0 0.0
  %4488 = vmatpush.msra.mxu0 0.0
  %4489 = vmatpush.msra.mxu0 0.0
  %4490 = vmatpush.msra.mxu0 0.0
  %4491 = vmatpush.msra.mxu0 0.0
  %4492 = vmatpush.msra.mxu0 0.0
  %4493 = vmatpush.msra.mxu0 0.0
  %4494 = vmatpush.msra.mxu0 0.0
  %4495 = vmatpush.msra.mxu0 0.0
  %4496 = vmatpush.msra.mxu0 0.0
  %4497 = vmatpush.msra.mxu0 0.0
  %4498 = vmatpush.msra.mxu0 %v4193
  %4499 = vmatpush.msra.mxu0 %v4192
  %4500 = vmatpush.msra.mxu0 %v4191
  %4501 = vmatpush.msra.mxu0 %v4190
  %4502 = vmatmul.f32.gmra.mxu0 %v4484
  %v4503 = vpop.f32.mrf.mxu0
  %v4504 = vadd.f32 0.0, %v4503
  %4505 = vdwg.mxu0
  %v4506 = vadd.f32 %v4482, %v4504
  %v4508 = vsel %vm169, %v233, 0
  %4510 = vmatpush.msra.mxu0 0.0
  %4511 = vmatpush.msra.mxu0 0.0
  %4512 = vmatpush.msra.mxu0 0.0
  %4513 = vmatpush.msra.mxu0 0.0
  %4514 = vmatpush.msra.mxu0 0.0
  %4515 = vmatpush.msra.mxu0 0.0
  %4516 = vmatpush.msra.mxu0 0.0
  %4517 = vmatpush.msra.mxu0 0.0
  %4518 = vmatpush.msra.mxu0 0.0
  %4519 = vmatpush.msra.mxu0 0.0
  %4520 = vmatpush.msra.mxu0 0.0
  %4521 = vmatpush.msra.mxu0 0.0
  %4522 = vmatpush.msra.mxu0 %v4197
  %4523 = vmatpush.msra.mxu0 %v4196
  %4524 = vmatpush.msra.mxu0 %v4195
  %4525 = vmatpush.msra.mxu0 %v4194
  %4526 = vmatmul.f32.gmra.mxu0 %v4508
  %v4527 = vpop.f32.mrf.mxu0
  %v4528 = vadd.f32 0.0, %v4527
  %4529 = vdwg.mxu0
  %v4530 = vadd.f32 %v4506, %v4528
  %v4531 = vld [vmem:[%s51] sm:$0xff]
  %v4532 = vld [vmem:[%s51 + $0x8] sm:$0xff]
  %v4534 = vsel %vm644, %v4034, 0
  %4536 = vmatpush.msra.mxu0 0.0
  %4537 = vmatpush.msra.mxu0 0.0
  %4538 = vmatpush.msra.mxu0 0.0
  %4539 = vmatpush.msra.mxu0 0.0
  %4540 = vmatpush.msra.mxu0 0.0
  %4541 = vmatpush.msra.mxu0 0.0
  %4542 = vmatpush.msra.mxu0 0.0
  %4543 = vmatpush.msra.mxu0 0.0
  %4544 = vmatpush.msra.mxu0 0.0
  %4545 = vmatpush.msra.mxu0 0.0
  %4546 = vmatpush.msra.mxu0 0.0
  %4547 = vmatpush.msra.mxu0 0.0
  %4548 = vmatpush.msra.mxu0 0.0
  %4549 = vmatpush.msra.mxu0 0.0
  %4550 = vmatpush.msra.mxu0 %v4532
  %4551 = vmatpush.msra.mxu0 %v4531
  %4552 = vmatmul.f32.gmra.mxu0 %v4534
  %v4553 = vpop.f32.mrf.mxu0
  %v4554 = vadd.f32 0.0, %v4553
  %4555 = vdwg.mxu0
  %v4556 = vadd.f32 %v4530, %v4554
  %v4557 = vld [vmem:[%s53] sm:$0xff]
  %v4558 = vld [vmem:[%s53 + $0x8] sm:$0xff]
  %v4560 = vsel %vm644, %v4035, 0
  %4562 = vmatpush.msra.mxu0 0.0
  %4563 = vmatpush.msra.mxu0 0.0
  %4564 = vmatpush.msra.mxu0 0.0
  %4565 = vmatpush.msra.mxu0 0.0
  %4566 = vmatpush.msra.mxu0 0.0
  %4567 = vmatpush.msra.mxu0 0.0
  %4568 = vmatpush.msra.mxu0 0.0
  %4569 = vmatpush.msra.mxu0 0.0
  %4570 = vmatpush.msra.mxu0 0.0
  %4571 = vmatpush.msra.mxu0 0.0
  %4572 = vmatpush.msra.mxu0 0.0
  %4573 = vmatpush.msra.mxu0 0.0
  %4574 = vmatpush.msra.mxu0 0.0
  %4575 = vmatpush.msra.mxu0 0.0
  %4576 = vmatpush.msra.mxu0 %v4558
  %4577 = vmatpush.msra.mxu0 %v4557
  %4578 = vmatmul.f32.gmra.mxu0 %v4560
  %v4579 = vpop.f32.mrf.mxu0
  %v4580 = vadd.f32 0.0, %v4579
  %4581 = vdwg.mxu0
  %v4582 = vadd.f32 %v4556, %v4580
  %v4583 = vld [vmem:[%s55] sm:$0x1]
  %v4585 = vperm.slane %v4583, 0
  %v4587 = vadd.f32 %v4582, %v4585
  %v4588 = vmax.f32 %v4587, 0.0
  %v4589 = vld [vmem:[%s57] sm:$0xff]
  %v4590 = vld [vmem:[%s59] sm:$0xff]
  %v4591 = vld [vmem:[%s59 + $0x8] sm:$0xff]
  %v4592 = vld [vmem:[%s59 + $0x10] sm:$0xff]
  %v4593 = vld [vmem:[%s59 + $0x18] sm:$0xff]
  %v4594 = vld [vmem:[%s59 + $0x20] sm:$0xff]
  %v4595 = vld [vmem:[%s59 + $0x28] sm:$0xff]
  %v4596 = vld [vmem:[%s59 + $0x30] sm:$0xff]
  %v4597 = vld [vmem:[%s59 + $0x38] sm:$0xff]
  %vm4598 = vcmask 523264
  %v4600 = vsel %vm4598, %v4588, 0
  %4602 = vmatpush.msra.mxu0 0.0
  %4603 = vmatpush.msra.mxu0 0.0
  %4604 = vmatpush.msra.mxu0 0.0
  %4605 = vmatpush.msra.mxu0 0.0
  %4606 = vmatpush.msra.mxu0 0.0
  %4607 = vmatpush.msra.mxu0 0.0
  %4608 = vmatpush.msra.mxu0 0.0
  %4609 = vmatpush.msra.mxu0 0.0
  %4610 = vmatpush.msra.mxu0 %v4597
  %4611 = vmatpush.msra.mxu0 %v4596
  %4612 = vmatpush.msra.mxu0 %v4595
  %4613 = vmatpush.msra.mxu0 %v4594
  %4614 = vmatpush.msra.mxu0 %v4593
  %4615 = vmatpush.msra.mxu0 %v4592
  %4616 = vmatpush.msra.mxu0 %v4591
  %4617 = vmatpush.msra.mxu0 %v4590
  %4618 = vmatmul.f32.gmra.mxu0 %v4600
  %v4619 = vpop.f32.mrf.mxu0
  %v4620 = vadd.f32 0.0, %v4619
  %4621 = vdwg.mxu0
  %vm4622 = vcmask 64512
  %v4624 = vsel %vm4622, %v234, 0
  %4626 = vmatpush.msra.mxu0 0.0
  %4627 = vmatpush.msra.mxu0 0.0
  %4628 = vmatpush.msra.mxu0 0.0
  %4629 = vmatpush.msra.mxu0 0.0
  %4630 = vmatpush.msra.mxu0 0.0
  %4631 = vmatpush.msra.mxu0 0.0
  %4632 = vmatpush.msra.mxu0 0.0
  %4633 = vmatpush.msra.mxu0 0.0
  %4634 = vmatpush.msra.mxu0 0.0
  %4635 = vmatpush.msra.mxu0 0.0
  %4636 = vmatpush.msra.mxu0 0.0
  %4637 = vmatpush.msra.mxu0 0.0
  %4638 = vmatpush.msra.mxu0 0.0
  %4639 = vmatpush.msra.mxu0 0.0
  %4640 = vmatpush.msra.mxu0 0.0
  %4641 = vmatpush.msra.mxu0 %v4589
  %4642 = vmatmul.f32.gmra.mxu0 %v4624
  %v4643 = vpop.f32.mrf.mxu0
  %v4644 = vadd.f32 %v4620, %v4643
  %4645 = vdwg.mxu0
  %v4646 = vld [vmem:[%s61] sm:$0x1]
  %v4648 = vperm.slane %v4646, 0
  %v4650 = vmul.f32 %v4138, %v4648
  %v4651 = vadd.f32 %v4644, %v4650
  %v4652 = vld [vmem:[%s63] sm:$0x1]
  %v4654 = vperm.slane %v4652, 0
  %v4656 = vmul.f32 %v4137, %v4654
  %v4657 = vadd.f32 %v4651, %v4656
  %v4658 = vld [vmem:[%s65] sm:$0x1]
  %v4660 = vperm.slane %v4658, 0
  %v4662 = vmul.f32 %v4140, %v4660
  %v4663 = vadd.f32 %v4657, %v4662
  %v4664 = vld [vmem:[%s67] sm:$0xff]
  %v4666 = vsel %vm4622, %v4141, 0
  %4668 = vmatpush.msra.mxu0 0.0
  %4669 = vmatpush.msra.mxu0 0.0
  %4670 = vmatpush.msra.mxu0 0.0
  %4671 = vmatpush.msra.mxu0 0.0
  %4672 = vmatpush.msra.mxu0 0.0
  %4673 = vmatpush.msra.mxu0 0.0
  %4674 = vmatpush.msra.mxu0 0.0
  %4675 = vmatpush.msra.mxu0 0.0
  %4676 = vmatpush.msra.mxu0 0.0
  %4677 = vmatpush.msra.mxu0 0.0
  %4678 = vmatpush.msra.mxu0 0.0
  %4679 = vmatpush.msra.mxu0 0.0
  %4680 = vmatpush.msra.mxu0 0.0
  %4681 = vmatpush.msra.mxu0 0.0
  %4682 = vmatpush.msra.mxu0 0.0
  %4683 = vmatpush.msra.mxu0 %v4664
  %4684 = vmatmul.f32.gmra.mxu0 %v4666
  %v4685 = vpop.f32.mrf.mxu0
  %v4686 = vadd.f32 0.0, %v4685
  %4687 = vdwg.mxu0
  %v4688 = vadd.f32 %v4663, %v4686
  %v4689 = vld [vmem:[%s69] sm:$0x1f]
  %vm4690 = vcmask 39936
  %v4692 = vsel %vm4690, %v235, 0
  %vm4694 = vcmask 1044480
  %v4696 = vsel %vm4694, %v4689, 0
  %4698 = vmatpush.msra.mxu0 0.0
  %4699 = vmatpush.msra.mxu0 0.0
  %4700 = vmatpush.msra.mxu0 0.0
  %4701 = vmatpush.msra.mxu0 0.0
  %4702 = vmatpush.msra.mxu0 0.0
  %4703 = vmatpush.msra.mxu0 0.0
  %4704 = vmatpush.msra.mxu0 0.0
  %4705 = vmatpush.msra.mxu0 0.0
  %4706 = vmatpush.msra.mxu0 0.0
  %4707 = vmatpush.msra.mxu0 0.0
  %4708 = vmatpush.msra.mxu0 0.0
  %4709 = vmatpush.msra.mxu0 0.0
  %4710 = vmatpush.msra.mxu0 0.0
  %4711 = vmatpush.msra.mxu0 0.0
  %4712 = vmatpush.msra.mxu0 0.0
  %4713 = vmatpush.msra.mxu0 %v4696
  %4714 = vmatmul.f32.gmra.mxu0 %v4692
  %v4715 = vpop.f32.mrf.mxu0
  %v4716 = vadd.f32 0.0, %v4715
  %4717 = vdwg.mxu0
  %v4718 = vadd.f32 %v4688, %v4716
  %v4719 = vld [vmem:[%s71] sm:$0x1]
  %v4721 = vperm.slane %v4719, 0
  %v4723 = vadd.f32 %v4718, %v4721
  %v4724 = vmax.f32 %v4723, 0.0
  %v4725 = vld [vmem:[%s73] sm:$0xff]
  %v4726 = vld [vmem:[%s73 + $0x8] sm:$0xff]
  %v4727 = vld [vmem:[%s73 + $0x10] sm:$0xff]
  %v4728 = vld [vmem:[%s73 + $0x18] sm:$0xff]
  %v4729 = vld [vmem:[#allocation2] sm:$0x1]
  %v4731 = vperm.slane %v4729, 0
  %v4734 = vsel %vm169, %v4724, 0
  %4736 = vmatpush.msra.mxu0 0.0
  %4737 = vmatpush.msra.mxu0 0.0
  %4738 = vmatpush.msra.mxu0 0.0
  %4739 = vmatpush.msra.mxu0 0.0
  %4740 = vmatpush.msra.mxu0 0.0
  %4741 = vmatpush.msra.mxu0 0.0
  %4742 = vmatpush.msra.mxu0 0.0
  %4743 = vmatpush.msra.mxu0 0.0
  %4744 = vmatpush.msra.mxu0 0.0
  %4745 = vmatpush.msra.mxu0 0.0
  %4746 = vmatpush.msra.mxu0 0.0
  %4747 = vmatpush.msra.mxu0 0.0
  %4748 = vmatpush.msra.mxu0 %v4728
  %4749 = vmatpush.msra.mxu0 %v4727
  %4750 = vmatpush.msra.mxu0 %v4726
  %4751 = vmatpush.msra.mxu0 %v4725
  %4752 = vmatmul.f32.gmra.mxu0 %v4734
  %v4753 = vpop.f32.mrf.mxu0
  %v4754 = vadd.f32 %v4731, %v4753
  %4755 = vdwg.mxu0
  %v4756 = vxor.u32 %v4754, 2147483648
  %v4757 = vmul.f32 %v4756, 1.442695
  %v4758 = vpow.pop %v4757
  %v4759 = vadd.f32 %v4758, 1.0
  %v4760 = vrcp.pop %v4759
  %v4761 = vmul.f32 %v4759, %v4760
  %v4762 = vsub.f32 1.0, %v4761
  %v4763 = vmul.f32 %v4760, %v4762
  %v4764 = vadd.f32 %v4760, %v4763
  %vm4765 = vweird.f32 %v4759
  %vm4766 = vweird.f32 %v4760
  %vm4767 = vmor %vm4765, %vm4766
  %v4768 = vsel %vm4767, %v4760, %v4764
  %v4769 = vand.u32 2147483647, %v4759
  %vm4770 = vcmp.eq.f32.partialorder %v4769, 8.507059e+37
  %v4771 = vand.u32 %v4759, 2147483648
  %v4772 = vor.u32 1.1754944e-38, %v4771
  %v4773 = vsel %vm4770, %v4772, %v4768
  %v4774 = vmul.f32 1.0, %v4773
  %vm4775 = vcmask 7168
  %4776 = vst.msk [vmem:[%s77] sm:$0xff] %vm4775, %v4774
  // Predicated region
  $region154: #{net_forward.1} parent=0 // pred_check
    _
  $region155: #{net_forward.1} parent=0 // pred_check_branch
    %4778 = sbr.rel (0) target = $region157
  $region156: #{net_forward.1} parent=0 // pred_region
    _
  $region157: #{net_forward.1} parent=0 // pred_fallthru
    _
  // Predicated region
  $region158: #{net_forward.1} parent=0 // pred_check
    _
  $region159: #{net_forward.1} parent=0 // pred_check_branch
    %4780 = sbr.rel (0) target = $region161
  $region160: #{net_forward.1} parent=0 // pred_region
    _
  $region161: #{net_forward.1} parent=0 // pred_fallthru
    _

</llo_original>
